<compile_context>
chip_gen: v6e
topology: v6e:2x2x1
jax: 0.10.0
libtpu: 0.0.40
codegen_flags: <defaults>
</compile_context>

<pallas_src>
import functools
import math

import jax
import jax.numpy as jnp
from jax.experimental import pallas as pl
from jax.experimental.pallas import tpu as pltpu

# Matmul operands (fc1 / fc2) and the stored hidden activation use bf16 with
# f32 accumulation on the MXU; set to jnp.float32 for full-precision runs.
MATMUL_DTYPE = jnp.bfloat16
_VMEM_LIMIT = 32 * 1024 * 1024


# ---------------------------------------------------------------------------
# fc1: tiled matmul + bias,  y = x @ W + b
# ---------------------------------------------------------------------------
def _linear_kernel(x_ref, w_ref, b_ref, o_ref, acc_ref):
    @pl.when(pl.program_id(2) == 0)
    def _init():
        acc_ref[...] = jnp.zeros_like(acc_ref)

    acc_ref[...] += jnp.dot(x_ref[...], w_ref[...],
                            preferred_element_type=jnp.float32)

    @pl.when(pl.program_id(2) == pl.num_programs(2) - 1)
    def _finalize():
        o_ref[...] = (acc_ref[...] + b_ref[...]).astype(o_ref.dtype)


def _reduction_tile(k, cap=512):
    if k <= cap:
        return k
    for t in (512, 256, 128):
        if t <= cap and k % t == 0:
            return t
    return k


def linear(x, w, b, *, out_dtype, tm=256, tn=256):
    """Tiled, pipelined y = x @ w + b (bf16 operands, f32 accumulation)."""
    M, K = x.shape
    _, N = w.shape
    tm = min(tm, M)
    tn = min(tn, N)
    tk = _reduction_tile(K)
    assert K % tk == 0  # partial K blocks would pollute the accumulator

    x = x.astype(MATMUL_DTYPE)
    w = w.astype(MATMUL_DTYPE)
    b = b.astype(jnp.float32)

    return pl.pallas_call(
        _linear_kernel,
        out_shape=jax.ShapeDtypeStruct((M, N), out_dtype),
        grid=(pl.cdiv(M, tm), pl.cdiv(N, tn), K // tk),
        in_specs=[
            pl.BlockSpec((tm, tk), lambda i, j, k: (i, k)),
            pl.BlockSpec((tk, tn), lambda i, j, k: (k, j)),
            pl.BlockSpec((1, tn), lambda i, j, k: (0, j)),
        ],
        out_specs=pl.BlockSpec((tm, tn), lambda i, j, k: (i, j)),
        scratch_shapes=[pltpu.VMEM((tm, tn), jnp.float32)],
        compiler_params=pltpu.CompilerParams(
            dimension_semantics=("parallel", "parallel", "arbitrary"),
            vmem_limit_bytes=_VMEM_LIMIT),
        cost_estimate=pl.CostEstimate(
            flops=2 * M * K * N,
            transcendentals=0,
            bytes_accessed=(M * K + K * N) * x.dtype.itemsize
                           + M * N * jnp.dtype(out_dtype).itemsize),
    )(x, w, b)


# ---------------------------------------------------------------------------
# Fused depthwise 3x3 conv + bias + exact GELU + fc2 (one pyramid level)
# ---------------------------------------------------------------------------
def _gelu_exact(x):
    """nn.GELU(approximate='none'): 0.5*x*(1+erf(x/sqrt(2))) in f32.

    erf via Abramowitz & Stegun 7.1.26 (|err| < 1.5e-7).  The divide uses
    pl.reciprocal(approx=True) so it runs on the EUP, off the VALU path.
    """
    z = x * 0.7071067811865476
    az = jnp.abs(z)
    t = pl.reciprocal(1.0 + 0.3275911 * az, approx=True)
    poly = t * (0.254829592 + t * (-0.284496736 + t * (1.421413741
              + t * (-1.453152027 + t * 1.061405429))))
    erf_az = 1.0 - poly * jnp.exp(-az * az)
    erf_z = jnp.where(z >= 0.0, erf_az, -erf_az)
    return 0.5 * x * (1.0 + erf_z)


def _dwconv_gelu_fc2_kernel(x_ref, lm_ref, rm_ref, wdw_ref, bdw_ref, w2_ref,
                            b2_ref, *rest, Wl):
    """One (batch, channel-block) step of dwconv3x3 + bias + GELU + fc2.

    x_ref   : (T, ck)   level tokens (flattened H*W), one Chid block
    lm_ref  : (T, 1) f32  1.0 where col(t) > 0      (left-tap validity)
    rm_ref  : (T, 1) f32  1.0 where col(t) < Wl-1   (right-tap validity)
    wdw_ref : (9, ck) f32 depthwise taps, row index = kh*3 + kw
    bdw_ref : (1, ck) f32
    w2_ref  : (ck, Cout)  fc2 weight block
    b2_ref  : (1, Cout) f32
    rest    : (out_ref, acc_ref) or (prev_out_ref[unused], out_ref, acc_ref)
    """
    out_ref, acc_ref = rest[-2], rest[-1]
    kc = pl.program_id(1)

    @pl.when(kc == 0)
    def _init():
        acc_ref[...] = jnp.zeros_like(acc_ref)

    ck = x_ref.shape[1]
    x = x_ref[...].astype(jnp.float32)
    lm = lm_ref[...]
    rm = rm_ref[...]
    w = wdw_ref[...].astype(jnp.float32)

    def shift(v, s):
        # z[t] = v[t + s] if 0 <= t + s < T else 0   (s is a static int)
        if s == 0:
            return v
        pad = jnp.zeros((abs(s), ck), jnp.float32)
        if s > 0:
            return jnp.concatenate([v[s:, :], pad], axis=0)
        return jnp.concatenate([pad, v[:s, :]], axis=0)

    # Horizontal (W) taps computed once and reused for every vertical offset.
    # Column masks kill row-wrap tokens; out-of-range rows come back as zero
    # fill from the shifts, so together this reproduces Conv2d(padding=1)
    # without ever materializing a padded copy in HBM.
    xl = shift(x, -1) * lm     # in[h, w-1]
    xr = shift(x, +1) * rm     # in[h, w+1]

    conv = jnp.zeros(x.shape, jnp.float32)
    for dh in (-1, 0, 1):
        s = dh * Wl
        row = 3 * (dh + 1)
        conv = conv + shift(xl, s) * w[row + 0]
        conv = conv + shift(x, s) * w[row + 1]
        conv = conv + shift(xr, s) * w[row + 2]
    conv = conv + bdw_ref[...].astype(jnp.float32)

    act = _gelu_exact(conv)

    # fc2 contribution of this channel block, accumulated over kc.
    acc_ref[...] += jnp.dot(act.astype(w2_ref.dtype), w2_ref[...],
                            preferred_element_type=jnp.float32)

    @pl.when(kc == pl.num_programs(1) - 1)
    def _finalize():
        out_ref[...] = (acc_ref[...] + b2_ref[...]).astype(out_ref.dtype)


def _channel_block(chid):
    if chid % 256 == 0 and chid >= 512:
        return 256
    if chid % 128 == 0:
        return 128
    return chid


def _dwconv_gelu_fc2_level(hidden, wdw, bdw, w2, b2, out_prev, *,
                           Hl, Wl, tok_off, out_dtype, ck):
    """Fused conv+GELU+fc2 for one pyramid level.

    Reads the level's tokens straight out of the full (B, N, Chid) hidden
    tensor (token-offset index_map -> no per-level slice copy) and writes the
    level's rows of the (B, N, Cout) output.  When `out_prev` is given, the
    output aliases it (input_output_aliases) so the three levels fill a single
    buffer in place -> no jnp.concatenate pass over HBM.
    """
    B, N, Chid = hidden.shape
    Cout = w2.shape[1]
    T = Hl * Wl
    assert T % 8 == 0, "level token count must be a multiple of 8"
    assert tok_off % T == 0, "level token offset must be block aligned"
    assert Chid % ck == 0
    kc_blocks = Chid // ck
    off_blk = tok_off // T

    col = jnp.arange(T, dtype=jnp.int32) % Wl
    lmask = (col > 0).astype(jnp.float32).reshape(T, 1)
    rmask = (col < Wl - 1).astype(jnp.float32).reshape(T, 1)

    in_specs = [
        pl.BlockSpec((None, T, ck), lambda b, k: (b, off_blk, k)),
        pl.BlockSpec((T, 1), lambda b, k: (0, 0)),
        pl.BlockSpec((T, 1), lambda b, k: (0, 0)),
        pl.BlockSpec((9, ck), lambda b, k: (0, k)),
        pl.BlockSpec((1, ck), lambda b, k: (0, k)),
        pl.BlockSpec((ck, Cout), lambda b, k: (k, 0)),
        pl.BlockSpec((1, Cout), lambda b, k: (0, 0)),
    ]
    inputs = [hidden, lmask, rmask, wdw, bdw, w2, b2]
    io_aliases = {}
    if out_prev is not None:
        in_specs.append(pl.BlockSpec(memory_space=pl.ANY))  # raw HBM, no DMA
        inputs.append(out_prev)
        io_aliases = {len(inputs) - 1: 0}

    return pl.pallas_call(
        functools.partial(_dwconv_gelu_fc2_kernel, Wl=Wl),
        out_shape=jax.ShapeDtypeStruct((B, N, Cout), out_dtype),
        grid=(B, kc_blocks),
        in_specs=in_specs,
        out_specs=pl.BlockSpec((None, T, Cout), lambda b, k: (b, off_blk, 0)),
        scratch_shapes=[pltpu.VMEM((T, Cout), jnp.float32)],
        input_output_aliases=io_aliases,
        compiler_params=pltpu.CompilerParams(
            dimension_semantics=("parallel", "arbitrary"),
            vmem_limit_bytes=_VMEM_LIMIT),
        cost_estimate=pl.CostEstimate(
            flops=B * T * Chid * 18 + 2 * B * T * Chid * Cout,
            transcendentals=B * T * Chid,
            bytes_accessed=B * T * Chid * hidden.dtype.itemsize
                           + B * T * Cout * jnp.dtype(out_dtype).itemsize
                           + Chid * Cout * w2.dtype.itemsize),
    )(*inputs)


# ---------------------------------------------------------------------------
# ConvFFN forward
# ---------------------------------------------------------------------------
def conv_ffn_forward(x, params, H, W):
    """ConvFFN.forward (drop=0.0 -> nn.Dropout is the identity)."""
    B, N, Cin = x.shape
    n = N // 21
    assert 21 * n == N and 4 * n == H * W, "token count must be 21 * H*W / 4"
    assert n % 8 == 0, "H*W must be a multiple of 32 (sublane tiling)"
    assert H % 2 == 0 and W % 2 == 0
    Chid = params["w1"].shape[1]
    Cout = params["w2"].shape[1]

    # fc1: tiled MXU matmul -> bf16 hidden activation.
    h = linear(x.reshape(B * N, Cin), params["w1"], params["b1"],
               out_dtype=MATMUL_DTYPE)
    h = h.reshape(B, N, Chid)

    ck = _channel_block(Chid)
    wdw = params["wdw"].astype(jnp.float32)                 # (9, Chid)
    bdw = params["bdw"].reshape(1, Chid).astype(jnp.float32)
    w2 = params["w2"].astype(MATMUL_DTYPE)
    b2 = params["b2"].reshape(1, Cout).astype(jnp.float32)

    # Three pyramid levels share the depthwise weights and fc2; each call
    # consumes its token range of `h` in place and fills its token range of
    # the common (B, N, Cout) output (aliased across calls).
    # TODO(synk): for very large levels (e.g. 128x128 spatial) add row tiling
    # with a 1-row halo inside the fused kernel to bound the VMEM working set,
    # and optionally pull fc1 into the same kernel to drop the hidden-tensor
    # HBM round-trip entirely.
    out = None
    for Hl, Wl, off in ((2 * H, 2 * W, 0),
                        (H, W, 16 * n),
                        (H // 2, W // 2, 20 * n)):
        out = _dwconv_gelu_fc2_level(h, wdw, bdw, w2, b2, out,
                                     Hl=Hl, Wl=Wl, tok_off=off,
                                     out_dtype=x.dtype, ck=ck)
    return out


# ---------------------------------------------------------------------------
# Pure-XLA f32 reference (matches the PyTorch module) for a sanity check.
# ---------------------------------------------------------------------------
def conv_ffn_reference(x, params, H, W):
    B, N, _ = x.shape
    n = N // 21
    Chid = params["w1"].shape[1]
    h = x @ params["w1"] + params["b1"]
    wdw = params["wdw"].reshape(3, 3, Chid)
    bdw = params["bdw"].reshape(Chid)

    def level(tokens, Hl, Wl):
        z = tokens.reshape(B, Hl, Wl, Chid)
        zp = jnp.pad(z, ((0, 0), (1, 1), (1, 1), (0, 0)))
        acc = jnp.zeros_like(z)
        for kh in range(3):
            for kw in range(3):
                acc = acc + zp[:, kh:kh + Hl, kw:kw + Wl, :] * wdw[kh, kw]
        return (acc + bdw).reshape(B, Hl * Wl, Chid)

    y = jnp.concatenate([
        level(h[:, :16 * n], 2 * H, 2 * W),
        level(h[:, 16 * n:20 * n], H, W),
        level(h[:, 20 * n:], H // 2, W // 2),
    ], axis=1)
    y = jax.nn.gelu(y, approximate=False)
    return y @ params["w2"] + params["b2"]


# ---------------------------------------------------------------------------
if __name__ == "__main__":
    # Small but lane-dense shapes: channel dims are multiples of 128 so every
    # out_spec last dim fills whole vregs (no masked vst partial stores).
    B, Cin, Chid, Cout, H, W = 2, 128, 256, 128, 8, 8
    n = (H * W) // 4
    N = 21 * n                       # 16n + 4n + n tokens (3 pyramid levels)

    key = jax.random.PRNGKey(0)
    keys = jax.random.split(key, 7)

    def uinit(k, shape, fan_in):
        bound = 1.0 / math.sqrt(fan_in)
        return jax.random.uniform(k, shape, jnp.float32, -bound, bound)

    # Synthetic parameters.  wdw is the PyTorch depthwise weight (C,1,3,3)
    # rearranged as weight[:, 0].permute(1, 2, 0).reshape(9, C)  (= kh*3+kw, C).
    params = dict(
        w1=uinit(keys[1], (Cin, Chid), Cin),      # fc1.weight.T
        b1=uinit(keys[2], (1, Chid), Cin),        # fc1.bias
        wdw=uinit(keys[3], (9, Chid), 9),         # dwconv.weight (see above)
        bdw=uinit(keys[4], (1, Chid), 9),         # dwconv.bias
        w2=uinit(keys[5], (Chid, Cout), Chid),    # fc2.weight.T
        b2=uinit(keys[6], (1, Cout), Chid),       # fc2.bias
    )
    x = jax.random.normal(keys[0], (B, N, Cin), jnp.float32)

    fwd = jax.jit(functools.partial(conv_ffn_forward, H=H, W=W))
    out = fwd(x, params)
    jax.block_until_ready(out)
    assert out.shape == (B, N, Cout) and out.dtype == jnp.float32

    ref = conv_ffn_reference(x, params, H, W)
    max_err = float(jnp.max(jnp.abs(out - ref)))
    assert jnp.allclose(out, ref, atol=5e-2, rtol=5e-2), \
        f"mismatch vs reference (max abs err {max_err})"
    print("KERNEL_OK")
</pallas_src>

<mosaic_0001>
module attributes {stable_mosaic.version = 11 : i64} {
  func.func @_linear_kernel(%arg0: i32, %arg1: i32, %arg2: i32, %arg3: memref<256x128xbf16, #tpu.memory_space<vmem>>, %arg4: memref<128x256xbf16, #tpu.memory_space<vmem>>, %arg5: memref<1x256xf32, #tpu.memory_space<vmem>>, %arg6: memref<256x256xbf16, #tpu.memory_space<vmem>>, %arg7: memref<256x256xf32, #tpu.memory_space<vmem>>) attributes {dimension_semantics = [#tpu.dimension_semantics<parallel>, #tpu.dimension_semantics<parallel>, #tpu.dimension_semantics<arbitrary>], iteration_bounds = array<i64: 3, 1, 1>, scalar_prefetch = 0 : i64, scratch_operands = 1 : i64, tpu.core_type = #tpu.core_type<tc>, window_params = [{transform_indices = @transform_0, window_bounds = array<i64: 256, 128>}, {transform_indices = @transform_1, window_bounds = array<i64: 128, 256>}, {transform_indices = @transform_2, window_bounds = array<i64: 1, 256>}, {transform_indices = @transform_3, window_bounds = array<i64: 256, 256>}]} {
    %c0_i32 = arith.constant 0 : i32
    %0 = arith.cmpi eq, %arg2, %c0_i32 : i32
    %1 = arith.extui %0 : i1 to i32
    %c0_i32_0 = arith.constant 0 : i32
    %2 = arith.cmpi ne, %1, %c0_i32_0 : i32
    scf.if %2 {
      %cst_10 = arith.constant 0.000000e+00 : f32
      %12 = vector.broadcast %cst_10 : f32 to vector<256x256xf32>
      %c0_11 = arith.constant 0 : index
      %c0_12 = arith.constant 0 : index
      %13 = vector.load %arg7[%c0_11, %c0_12] : memref<256x256xf32, #tpu.memory_space<vmem>>, vector<256x256xf32>
      tpu.vector_store %arg7[%c0_11, %c0_12], %12 {strides = array<i32>} : memref<256x256xf32, #tpu.memory_space<vmem>>, vector<256x256xf32>,
    } else {
    }
    %c0 = arith.constant 0 : index
    %c0_1 = arith.constant 0 : index
    %3 = vector.load %arg7[%c0, %c0_1] : memref<256x256xf32, #tpu.memory_space<vmem>>, vector<256x256xf32>
    %c0_2 = arith.constant 0 : index
    %c0_3 = arith.constant 0 : index
    %4 = vector.load %arg3[%c0_2, %c0_3] : memref<256x128xbf16, #tpu.memory_space<vmem>>, vector<256x128xbf16>
    %c0_4 = arith.constant 0 : index
    %c0_5 = arith.constant 0 : index
    %5 = vector.load %arg4[%c0_4, %c0_5] : memref<128x256xbf16, #tpu.memory_space<vmem>>, vector<128x256xbf16>
    %cst = arith.constant dense<0.000000e+00> : vector<256x256xf32>
    %6 = tpu.matmul %4, %5, %cst {dimension_numbers = #tpu.dot_dimension_numbers<[1], [0], [0], [1], [0, 0, 1, 1], [], []>} : vector<256x128xbf16>, vector<128x256xbf16>, vector<256x256xf32> -> vector<256x256xf32>
    %7 = arith.addf %3, %6 : vector<256x256xf32>
    %c0_6 = arith.constant 0 : index
    %c0_7 = arith.constant 0 : index
    %8 = vector.load %arg7[%c0_6, %c0_7] : memref<256x256xf32, #tpu.memory_space<vmem>>, vector<256x256xf32>
    tpu.vector_store %arg7[%c0_6, %c0_7], %7 {strides = array<i32>} : memref<256x256xf32, #tpu.memory_space<vmem>>, vector<256x256xf32>,
    %c0_i32_8 = arith.constant 0 : i32
    %9 = arith.cmpi eq, %arg2, %c0_i32_8 : i32
    %10 = arith.extui %9 : i1 to i32
    %c0_i32_9 = arith.constant 0 : i32
    %11 = arith.cmpi ne, %10, %c0_i32_9 : i32
    scf.if %11 {
      %c0_10 = arith.constant 0 : index
      %c0_11 = arith.constant 0 : index
      %12 = vector.load %arg7[%c0_10, %c0_11] : memref<256x256xf32, #tpu.memory_space<vmem>>, vector<256x256xf32>
      %c0_12 = arith.constant 0 : index
      %c0_13 = arith.constant 0 : index
      %13 = vector.load %arg5[%c0_12, %c0_13] : memref<1x256xf32, #tpu.memory_space<vmem>>, vector<1x256xf32>
      %14 = vector.broadcast %13 : vector<1x256xf32> to vector<256x256xf32>
      %15 = arith.addf %12, %14 : vector<256x256xf32>
      %16 = arith.truncf %15 : vector<256x256xf32> to vector<256x256xbf16>
      %c0_14 = arith.constant 0 : index
      %c0_15 = arith.constant 0 : index
      %17 = vector.load %arg6[%c0_14, %c0_15] : memref<256x256xbf16, #tpu.memory_space<vmem>>, vector<256x256xbf16>
      tpu.vector_store %arg6[%c0_14, %c0_15], %16 {strides = array<i32>} : memref<256x256xbf16, #tpu.memory_space<vmem>>, vector<256x256xbf16>,
    } else {
    }
    return
  }
  func.func @transform_0(%arg0: i32, %arg1: i32, %arg2: i32) -> (i32, i32) {
    %c0_i32 = arith.constant 0 : i32
    return %arg0, %arg2 : i32, i32
  }
  func.func @transform_1(%arg0: i32, %arg1: i32, %arg2: i32) -> (i32, i32) {
    %c0_i32 = arith.constant 0 : i32
    return %arg2, %arg1 : i32, i32
  }
  func.func @transform_2(%arg0: i32, %arg1: i32, %arg2: i32) -> (i32, i32) {
    %c0_i32 = arith.constant 0 : i32
    %c0_i32_0 = arith.constant 0 : i32
    return %c0_i32, %arg1 : i32, i32
  }
  func.func @transform_3(%arg0: i32, %arg1: i32, %arg2: i32) -> (i32, i32) {
    %c0_i32 = arith.constant 0 : i32
    return %arg0, %arg1 : i32, i32
  }
}

module attributes {stable_mosaic.version = 11 : i64} {
  func.func @_dwconv_gelu_fc2_kernel(%arg0: i32, %arg1: i32, %arg2: memref<1x256x128xbf16, #tpu.memory_space<vmem>>, %arg3: memref<256x1xf32, #tpu.memory_space<vmem>>, %arg4: memref<256x1xf32, #tpu.memory_space<vmem>>, %arg5: memref<9x128xf32, #tpu.memory_space<vmem>>, %arg6: memref<1x128xf32, #tpu.memory_space<vmem>>, %arg7: memref<128x128xbf16, #tpu.memory_space<vmem>>, %arg8: memref<1x128xf32, #tpu.memory_space<vmem>>, %arg9: memref<1x256x128xf32, #tpu.memory_space<vmem>>, %arg10: memref<256x128xf32, #tpu.memory_space<vmem>>) attributes {dimension_semantics = [#tpu.dimension_semantics<parallel>, #tpu.dimension_semantics<arbitrary>], iteration_bounds = array<i64: 2, 2>, scalar_prefetch = 0 : i64, scratch_operands = 1 : i64, tpu.core_type = #tpu.core_type<tc>, window_params = [{transform_indices = @transform_0, window_bounds = array<i64: 1, 256, 128>}, {pipeline_mode = #tpu.pipeline_mode<synchronous>, transform_indices = @transform_1, window_bounds = array<i64: 256, 1>}, {pipeline_mode = #tpu.pipeline_mode<synchronous>, transform_indices = @transform_2, window_bounds = array<i64: 256, 1>}, {transform_indices = @transform_3, window_bounds = array<i64: 9, 128>}, {transform_indices = @transform_4, window_bounds = array<i64: 1, 128>}, {transform_indices = @transform_5, window_bounds = array<i64: 128, 128>}, {pipeline_mode = #tpu.pipeline_mode<synchronous>, transform_indices = @transform_6, window_bounds = array<i64: 1, 128>}, {transform_indices = @transform_7, window_bounds = array<i64: 1, 256, 128>}]} {
    %c0_i32 = arith.constant 0 : i32
    %0 = arith.cmpi eq, %arg1, %c0_i32 : i32
    %1 = arith.extui %0 : i1 to i32
    %c0_i32_0 = arith.constant 0 : i32
    %2 = arith.cmpi ne, %1, %c0_i32_0 : i32
    scf.if %2 {
      %cst_41 = arith.constant 0.000000e+00 : f32
      %143 = vector.broadcast %cst_41 : f32 to vector<256x128xf32>
      %c0_42 = arith.constant 0 : index
      %c0_43 = arith.constant 0 : index
      %144 = vector.load %arg10[%c0_42, %c0_43] : memref<256x128xf32, #tpu.memory_space<vmem>>, vector<256x128xf32>
      tpu.vector_store %arg10[%c0_42, %c0_43], %143 {strides = array<i32>} : memref<256x128xf32, #tpu.memory_space<vmem>>, vector<256x128xf32>,
    } else {
    }
    %c0 = arith.constant 0 : index
    %c0_1 = arith.constant 0 : index
    %c0_2 = arith.constant 0 : index
    %3 = vector.load %arg2[%c0, %c0_1, %c0_2] : memref<1x256x128xbf16, #tpu.memory_space<vmem>>, vector<1x256x128xbf16>
    %4 = vector.shape_cast %3 : vector<1x256x128xbf16> to vector<256x128xbf16>
    %5 = arith.extf %4 : vector<256x128xbf16> to vector<256x128xf32>
    %c0_3 = arith.constant 0 : index
    %c0_4 = arith.constant 0 : index
    %6 = vector.load %arg3[%c0_3, %c0_4] : memref<256x1xf32, #tpu.memory_space<vmem>>, vector<256x1xf32>
    %c0_5 = arith.constant 0 : index
    %c0_6 = arith.constant 0 : index
    %7 = vector.load %arg4[%c0_5, %c0_6] : memref<256x1xf32, #tpu.memory_space<vmem>>, vector<256x1xf32>
    %c0_7 = arith.constant 0 : index
    %c0_8 = arith.constant 0 : index
    %8 = vector.load %arg5[%c0_7, %c0_8] : memref<9x128xf32, #tpu.memory_space<vmem>>, vector<9x128xf32>
    %cst = arith.constant 0.000000e+00 : f32
    %9 = vector.broadcast %cst : f32 to vector<1x128xf32>
    %10 = vector.extract_strided_slice %5 {offsets = [0, 0], sizes = [255, 128], strides = [1, 1]} : vector<256x128xf32> to vector<255x128xf32>
    %11 = tpu.concatenate %9, %10 in 0 : vector<1x128xf32>, vector<255x128xf32> -> vector<256x128xf32>
    %12 = vector.broadcast %6 : vector<256x1xf32> to vector<256x128xf32>
    %13 = arith.mulf %11, %12 : vector<256x128xf32>
    %cst_9 = arith.constant 0.000000e+00 : f32
    %14 = vector.broadcast %cst_9 : f32 to vector<1x128xf32>
    %15 = vector.extract_strided_slice %5 {offsets = [1, 0], sizes = [255, 128], strides = [1, 1]} : vector<256x128xf32> to vector<255x128xf32>
    %16 = tpu.concatenate %15, %14 in 0 : vector<255x128xf32>, vector<1x128xf32> -> vector<256x128xf32>
    %17 = vector.broadcast %7 : vector<256x1xf32> to vector<256x128xf32>
    %18 = arith.mulf %16, %17 : vector<256x128xf32>
    %cst_10 = arith.constant 0.000000e+00 : f32
    %19 = vector.broadcast %cst_10 : f32 to vector<256x128xf32>
    %cst_11 = arith.constant 0.000000e+00 : f32
    %20 = vector.broadcast %cst_11 : f32 to vector<16x128xf32>
    %21 = vector.extract_strided_slice %13 {offsets = [0, 0], sizes = [240, 128], strides = [1, 1]} : vector<256x128xf32> to vector<240x128xf32>
    %22 = tpu.concatenate %20, %21 in 0 : vector<16x128xf32>, vector<240x128xf32> -> vector<256x128xf32>
    %23 = vector.extract_strided_slice %8 {offsets = [0, 0], sizes = [1, 128], strides = [1, 1]} : vector<9x128xf32> to vector<1x128xf32>
    %24 = vector.shape_cast %23 : vector<1x128xf32> to vector<128xf32>
    %25 = vector.shape_cast %24 : vector<128xf32> to vector<1x128xf32>
    %26 = vector.broadcast %25 : vector<1x128xf32> to vector<256x128xf32>
    %27 = arith.mulf %22, %26 : vector<256x128xf32>
    %28 = arith.addf %19, %27 : vector<256x128xf32>
    %cst_12 = arith.constant 0.000000e+00 : f32
    %29 = vector.broadcast %cst_12 : f32 to vector<16x128xf32>
    %30 = vector.extract_strided_slice %5 {offsets = [0, 0], sizes = [240, 128], strides = [1, 1]} : vector<256x128xf32> to vector<240x128xf32>
    %31 = tpu.concatenate %29, %30 in 0 : vector<16x128xf32>, vector<240x128xf32> -> vector<256x128xf32>
    %32 = vector.extract_strided_slice %8 {offsets = [1, 0], sizes = [1, 128], strides = [1, 1]} : vector<9x128xf32> to vector<1x128xf32>
    %33 = vector.shape_cast %32 : vector<1x128xf32> to vector<128xf32>
    %34 = vector.shape_cast %33 : vector<128xf32> to vector<1x128xf32>
    %35 = vector.broadcast %34 : vector<1x128xf32> to vector<256x128xf32>
    %36 = arith.mulf %31, %35 : vector<256x128xf32>
    %37 = arith.addf %28, %36 : vector<256x128xf32>
    %cst_13 = arith.constant 0.000000e+00 : f32
    %38 = vector.broadcast %cst_13 : f32 to vector<16x128xf32>
    %39 = vector.extract_strided_slice %18 {offsets = [0, 0], sizes = [240, 128], strides = [1, 1]} : vector<256x128xf32> to vector<240x128xf32>
    %40 = tpu.concatenate %38, %39 in 0 : vector<16x128xf32>, vector<240x128xf32> -> vector<256x128xf32>
    %41 = vector.extract_strided_slice %8 {offsets = [2, 0], sizes = [1, 128], strides = [1, 1]} : vector<9x128xf32> to vector<1x128xf32>
    %42 = vector.shape_cast %41 : vector<1x128xf32> to vector<128xf32>
    %43 = vector.shape_cast %42 : vector<128xf32> to vector<1x128xf32>
    %44 = vector.broadcast %43 : vector<1x128xf32> to vector<256x128xf32>
    %45 = arith.mulf %40, %44 : vector<256x128xf32>
    %46 = arith.addf %37, %45 : vector<256x128xf32>
    %47 = vector.extract_strided_slice %8 {offsets = [3, 0], sizes = [1, 128], strides = [1, 1]} : vector<9x128xf32> to vector<1x128xf32>
    %48 = vector.shape_cast %47 : vector<1x128xf32> to vector<128xf32>
    %49 = vector.shape_cast %48 : vector<128xf32> to vector<1x128xf32>
    %50 = vector.broadcast %49 : vector<1x128xf32> to vector<256x128xf32>
    %51 = arith.mulf %13, %50 : vector<256x128xf32>
    %52 = arith.addf %46, %51 : vector<256x128xf32>
    %53 = vector.extract_strided_slice %8 {offsets = [4, 0], sizes = [1, 128], strides = [1, 1]} : vector<9x128xf32> to vector<1x128xf32>
    %54 = vector.shape_cast %53 : vector<1x128xf32> to vector<128xf32>
    %55 = vector.shape_cast %54 : vector<128xf32> to vector<1x128xf32>
    %56 = vector.broadcast %55 : vector<1x128xf32> to vector<256x128xf32>
    %57 = arith.mulf %5, %56 : vector<256x128xf32>
    %58 = arith.addf %52, %57 : vector<256x128xf32>
    %59 = vector.extract_strided_slice %8 {offsets = [5, 0], sizes = [1, 128], strides = [1, 1]} : vector<9x128xf32> to vector<1x128xf32>
    %60 = vector.shape_cast %59 : vector<1x128xf32> to vector<128xf32>
    %61 = vector.shape_cast %60 : vector<128xf32> to vector<1x128xf32>
    %62 = vector.broadcast %61 : vector<1x128xf32> to vector<256x128xf32>
    %63 = arith.mulf %18, %62 : vector<256x128xf32>
    %64 = arith.addf %58, %63 : vector<256x128xf32>
    %cst_14 = arith.constant 0.000000e+00 : f32
    %65 = vector.broadcast %cst_14 : f32 to vector<16x128xf32>
    %66 = vector.extract_strided_slice %13 {offsets = [16, 0], sizes = [240, 128], strides = [1, 1]} : vector<256x128xf32> to vector<240x128xf32>
    %67 = tpu.concatenate %66, %65 in 0 : vector<240x128xf32>, vector<16x128xf32> -> vector<256x128xf32>
    %68 = vector.extract_strided_slice %8 {offsets = [6, 0], sizes = [1, 128], strides = [1, 1]} : vector<9x128xf32> to vector<1x128xf32>
    %69 = vector.shape_cast %68 : vector<1x128xf32> to vector<128xf32>
    %70 = vector.shape_cast %69 : vector<128xf32> to vector<1x128xf32>
    %71 = vector.broadcast %70 : vector<1x128xf32> to vector<256x128xf32>
    %72 = arith.mulf %67, %71 : vector<256x128xf32>
    %73 = arith.addf %64, %72 : vector<256x128xf32>
    %cst_15 = arith.constant 0.000000e+00 : f32
    %74 = vector.broadcast %cst_15 : f32 to vector<16x128xf32>
    %75 = vector.extract_strided_slice %5 {offsets = [16, 0], sizes = [240, 128], strides = [1, 1]} : vector<256x128xf32> to vector<240x128xf32>
    %76 = tpu.concatenate %75, %74 in 0 : vector<240x128xf32>, vector<16x128xf32> -> vector<256x128xf32>
    %77 = vector.extract_strided_slice %8 {offsets = [7, 0], sizes = [1, 128], strides = [1, 1]} : vector<9x128xf32> to vector<1x128xf32>
    %78 = vector.shape_cast %77 : vector<1x128xf32> to vector<128xf32>
    %79 = vector.shape_cast %78 : vector<128xf32> to vector<1x128xf32>
    %80 = vector.broadcast %79 : vector<1x128xf32> to vector<256x128xf32>
    %81 = arith.mulf %76, %80 : vector<256x128xf32>
    %82 = arith.addf %73, %81 : vector<256x128xf32>
    %cst_16 = arith.constant 0.000000e+00 : f32
    %83 = vector.broadcast %cst_16 : f32 to vector<16x128xf32>
    %84 = vector.extract_strided_slice %18 {offsets = [16, 0], sizes = [240, 128], strides = [1, 1]} : vector<256x128xf32> to vector<240x128xf32>
    %85 = tpu.concatenate %84, %83 in 0 : vector<240x128xf32>, vector<16x128xf32> -> vector<256x128xf32>
    %86 = vector.extract_strided_slice %8 {offsets = [8, 0], sizes = [1, 128], strides = [1, 1]} : vector<9x128xf32> to vector<1x128xf32>
    %87 = vector.shape_cast %86 : vector<1x128xf32> to vector<128xf32>
    %88 = vector.shape_cast %87 : vector<128xf32> to vector<1x128xf32>
    %89 = vector.broadcast %88 : vector<1x128xf32> to vector<256x128xf32>
    %90 = arith.mulf %85, %89 : vector<256x128xf32>
    %91 = arith.addf %82, %90 : vector<256x128xf32>
    %c0_17 = arith.constant 0 : index
    %c0_18 = arith.constant 0 : index
    %92 = vector.load %arg6[%c0_17, %c0_18] : memref<1x128xf32, #tpu.memory_space<vmem>>, vector<1x128xf32>
    %93 = vector.broadcast %92 : vector<1x128xf32> to vector<256x128xf32>
    %94 = arith.addf %91, %93 : vector<256x128xf32>
    %cst_19 = arith.constant 0.707106769 : f32
    %95 = vector.broadcast %cst_19 : f32 to vector<256x128xf32>
    %96 = arith.mulf %94, %95 : vector<256x128xf32>
    %97 = math.absf %96 : vector<256x128xf32>
    %cst_20 = arith.constant 0.327591091 : f32
    %98 = vector.broadcast %cst_20 : f32 to vector<256x128xf32>
    %99 = arith.mulf %98, %97 : vector<256x128xf32>
    %cst_21 = arith.constant 1.000000e+00 : f32
    %100 = vector.broadcast %cst_21 : f32 to vector<256x128xf32>
    %101 = arith.addf %100, %99 : vector<256x128xf32>
    %102 = tpu.reciprocal %101 {approx = true} : vector<256x128xf32> -> vector<256x128xf32>
    %cst_22 = arith.constant 1.06140542 : f32
    %103 = vector.broadcast %cst_22 : f32 to vector<256x128xf32>
    %104 = arith.mulf %102, %103 : vector<256x128xf32>
    %cst_23 = arith.constant -1.45315206 : f32
    %105 = vector.broadcast %cst_23 : f32 to vector<256x128xf32>
    %106 = arith.addf %105, %104 : vector<256x128xf32>
    %107 = arith.mulf %102, %106 : vector<256x128xf32>
    %cst_24 = arith.constant 1.42141378 : f32
    %108 = vector.broadcast %cst_24 : f32 to vector<256x128xf32>
    %109 = arith.addf %108, %107 : vector<256x128xf32>
    %110 = arith.mulf %102, %109 : vector<256x128xf32>
    %cst_25 = arith.constant -0.284496725 : f32
    %111 = vector.broadcast %cst_25 : f32 to vector<256x128xf32>
    %112 = arith.addf %111, %110 : vector<256x128xf32>
    %113 = arith.mulf %102, %112 : vector<256x128xf32>
    %cst_26 = arith.constant 0.254829586 : f32
    %114 = vector.broadcast %cst_26 : f32 to vector<256x128xf32>
    %115 = arith.addf %114, %113 : vector<256x128xf32>
    %116 = arith.mulf %102, %115 : vector<256x128xf32>
    %cst_27 = arith.constant 0.000000e+00 : f32
    %117 = vector.broadcast %cst_27 : f32 to vector<256x128xf32>
    %118 = arith.subf %117, %97 : vector<256x128xf32>
    %119 = arith.mulf %118, %97 : vector<256x128xf32>
    %120 = math.exp %119 : vector<256x128xf32>
    %121 = arith.mulf %116, %120 : vector<256x128xf32>
    %cst_28 = arith.constant 1.000000e+00 : f32
    %122 = vector.broadcast %cst_28 : f32 to vector<256x128xf32>
    %123 = arith.subf %122, %121 : vector<256x128xf32>
    %cst_29 = arith.constant 0.000000e+00 : f32
    %124 = vector.broadcast %cst_29 : f32 to vector<256x128xf32>
    %125 = arith.cmpf oge, %96, %124 : vector<256x128xf32>
    %cst_30 = arith.constant 0.000000e+00 : f32
    %126 = vector.broadcast %cst_30 : f32 to vector<256x128xf32>
    %127 = arith.subf %126, %123 : vector<256x128xf32>
    %128 = arith.select %125, %123, %127 : vector<256x128xi1>, vector<256x128xf32>
    %cst_31 = arith.constant 5.000000e-01 : f32
    %129 = vector.broadcast %cst_31 : f32 to vector<256x128xf32>
    %130 = arith.mulf %129, %94 : vector<256x128xf32>
    %cst_32 = arith.constant 1.000000e+00 : f32
    %131 = vector.broadcast %cst_32 : f32 to vector<256x128xf32>
    %132 = arith.addf %131, %128 : vector<256x128xf32>
    %133 = arith.mulf %130, %132 : vector<256x128xf32>
    %c0_33 = arith.constant 0 : index
    %c0_34 = arith.constant 0 : index
    %134 = vector.load %arg10[%c0_33, %c0_34] : memref<256x128xf32, #tpu.memory_space<vmem>>, vector<256x128xf32>
    %135 = arith.truncf %133 : vector<256x128xf32> to vector<256x128xbf16>
    %c0_35 = arith.constant 0 : index
    %c0_36 = arith.constant 0 : index
    %136 = vector.load %arg7[%c0_35, %c0_36] : memref<128x128xbf16, #tpu.memory_space<vmem>>, vector<128x128xbf16>
    %cst_37 = arith.constant dense<0.000000e+00> : vector<256x128xf32>
    %137 = tpu.matmul %135, %136, %cst_37 {dimension_numbers = #tpu.dot_dimension_numbers<[1], [0], [0], [1], [0, 0, 1, 1], [], []>} : vector<256x128xbf16>, vector<128x128xbf16>, vector<256x128xf32> -> vector<256x128xf32>
    %138 = arith.addf %134, %137 : vector<256x128xf32>
    %c0_38 = arith.constant 0 : index
    %c0_39 = arith.constant 0 : index
    %139 = vector.load %arg10[%c0_38, %c0_39] : memref<256x128xf32, #tpu.memory_space<vmem>>, vector<256x128xf32>
    tpu.vector_store %arg10[%c0_38, %c0_39], %138 {strides = array<i32>} : memref<256x128xf32, #tpu.memory_space<vmem>>, vector<256x128xf32>,
    %c1_i32 = arith.constant 1 : i32
    %140 = arith.cmpi eq, %arg1, %c1_i32 : i32
    %141 = arith.extui %140 : i1 to i32
    %c0_i32_40 = arith.constant 0 : i32
    %142 = arith.cmpi ne, %141, %c0_i32_40 : i32
    scf.if %142 {
      %c0_41 = arith.constant 0 : index
      %c0_42 = arith.constant 0 : index
      %143 = vector.load %arg10[%c0_41, %c0_42] : memref<256x128xf32, #tpu.memory_space<vmem>>, vector<256x128xf32>
      %c0_43 = arith.constant 0 : index
      %c0_44 = arith.constant 0 : index
      %144 = vector.load %arg8[%c0_43, %c0_44] : memref<1x128xf32, #tpu.memory_space<vmem>>, vector<1x128xf32>
      %145 = vector.broadcast %144 : vector<1x128xf32> to vector<256x128xf32>
      %146 = arith.addf %143, %145 : vector<256x128xf32>
      %c0_45 = arith.constant 0 : index
      %c0_46 = arith.constant 0 : index
      %c0_47 = arith.constant 0 : index
      %147 = vector.load %arg9[%c0_45, %c0_46, %c0_47] : memref<1x256x128xf32, #tpu.memory_space<vmem>>, vector<1x256x128xf32>
      %148 = vector.shape_cast %147 : vector<1x256x128xf32> to vector<256x128xf32>
      %149 = vector.shape_cast %146 : vector<256x128xf32> to vector<1x256x128xf32>
      tpu.vector_store %arg9[%c0_45, %c0_46, %c0_47], %149 {strides = array<i32>} : memref<1x256x128xf32, #tpu.memory_space<vmem>>, vector<1x256x128xf32>,
    } else {
    }
    return
  }
  func.func @transform_0(%arg0: i32, %arg1: i32) -> (i32, i32, i32) {
    %c0_i32 = arith.constant 0 : i32
    %c0_i32_0 = arith.constant 0 : i32
    return %arg0, %c0_i32, %arg1 : i32, i32, i32
  }
  func.func @transform_1(%arg0: i32, %arg1: i32) -> (i32, i32) {
    %c0_i32 = arith.constant 0 : i32
    %c0_i32_0 = arith.constant 0 : i32
    %c0_i32_1 = arith.constant 0 : i32
    return %c0_i32, %c0_i32_0 : i32, i32
  }
  func.func @transform_2(%arg0: i32, %arg1: i32) -> (i32, i32) {
    %c0_i32 = arith.constant 0 : i32
    %c0_i32_0 = arith.constant 0 : i32
    %c0_i32_1 = arith.constant 0 : i32
    return %c0_i32, %c0_i32_0 : i32, i32
  }
  func.func @transform_3(%arg0: i32, %arg1: i32) -> (i32, i32) {
    %c0_i32 = arith.constant 0 : i32
    %c0_i32_0 = arith.constant 0 : i32
    return %c0_i32, %arg1 : i32, i32
  }
  func.func @transform_4(%arg0: i32, %arg1: i32) -> (i32, i32) {
    %c0_i32 = arith.constant 0 : i32
    %c0_i32_0 = arith.constant 0 : i32
    return %c0_i32, %arg1 : i32, i32
  }
  func.func @transform_5(%arg0: i32, %arg1: i32) -> (i32, i32) {
    %c0_i32 = arith.constant 0 : i32
    %c0_i32_0 = arith.constant 0 : i32
    return %arg1, %c0_i32 : i32, i32
  }
  func.func @transform_6(%arg0: i32, %arg1: i32) -> (i32, i32) {
    %c0_i32 = arith.constant 0 : i32
    %c0_i32_0 = arith.constant 0 : i32
    %c0_i32_1 = arith.constant 0 : i32
    return %c0_i32, %c0_i32_0 : i32, i32
  }
  func.func @transform_7(%arg0: i32, %arg1: i32) -> (i32, i32, i32) {
    %c0_i32 = arith.constant 0 : i32
    %c0_i32_0 = arith.constant 0 : i32
    %c0_i32_1 = arith.constant 0 : i32
    return %arg0, %c0_i32, %c0_i32_0 : i32, i32, i32
  }
}

module attributes {stable_mosaic.version = 11 : i64} {
  func.func @_dwconv_gelu_fc2_kernel(%arg0: i32, %arg1: i32, %arg2: memref<1x64x128xbf16, #tpu.memory_space<vmem>>, %arg3: memref<64x1xf32, #tpu.memory_space<vmem>>, %arg4: memref<64x1xf32, #tpu.memory_space<vmem>>, %arg5: memref<9x128xf32, #tpu.memory_space<vmem>>, %arg6: memref<1x128xf32, #tpu.memory_space<vmem>>, %arg7: memref<128x128xbf16, #tpu.memory_space<vmem>>, %arg8: memref<1x128xf32, #tpu.memory_space<vmem>>, %arg9: memref<2x336x128xf32, #tpu.memory_space<any>>, %arg10: memref<1x64x128xf32, #tpu.memory_space<vmem>>, %arg11: memref<64x128xf32, #tpu.memory_space<vmem>>) attributes {dimension_semantics = [#tpu.dimension_semantics<parallel>, #tpu.dimension_semantics<arbitrary>], iteration_bounds = array<i64: 2, 2>, scalar_prefetch = 0 : i64, scratch_operands = 1 : i64, tpu.core_type = #tpu.core_type<tc>, window_params = [{transform_indices = @transform_0, window_bounds = array<i64: 1, 64, 128>}, {pipeline_mode = #tpu.pipeline_mode<synchronous>, transform_indices = @transform_1, window_bounds = array<i64: 64, 1>}, {pipeline_mode = #tpu.pipeline_mode<synchronous>, transform_indices = @transform_2, window_bounds = array<i64: 64, 1>}, {transform_indices = @transform_3, window_bounds = array<i64: 9, 128>}, {transform_indices = @transform_4, window_bounds = array<i64: 1, 128>}, {transform_indices = @transform_5, window_bounds = array<i64: 128, 128>}, {pipeline_mode = #tpu.pipeline_mode<synchronous>, transform_indices = @transform_6, window_bounds = array<i64: 1, 128>}, {}, {transform_indices = @transform_8, window_bounds = array<i64: 1, 64, 128>}]} {
    %c0_i32 = arith.constant 0 : i32
    %0 = arith.cmpi eq, %arg1, %c0_i32 : i32
    %1 = arith.extui %0 : i1 to i32
    %c0_i32_0 = arith.constant 0 : i32
    %2 = arith.cmpi ne, %1, %c0_i32_0 : i32
    scf.if %2 {
      %cst_41 = arith.constant 0.000000e+00 : f32
      %143 = vector.broadcast %cst_41 : f32 to vector<64x128xf32>
      %c0_42 = arith.constant 0 : index
      %c0_43 = arith.constant 0 : index
      %144 = vector.load %arg11[%c0_42, %c0_43] : memref<64x128xf32, #tpu.memory_space<vmem>>, vector<64x128xf32>
      tpu.vector_store %arg11[%c0_42, %c0_43], %143 {strides = array<i32>} : memref<64x128xf32, #tpu.memory_space<vmem>>, vector<64x128xf32>,
    } else {
    }
    %c0 = arith.constant 0 : index
    %c0_1 = arith.constant 0 : index
    %c0_2 = arith.constant 0 : index
    %3 = vector.load %arg2[%c0, %c0_1, %c0_2] : memref<1x64x128xbf16, #tpu.memory_space<vmem>>, vector<1x64x128xbf16>
    %4 = vector.shape_cast %3 : vector<1x64x128xbf16> to vector<64x128xbf16>
    %5 = arith.extf %4 : vector<64x128xbf16> to vector<64x128xf32>
    %c0_3 = arith.constant 0 : index
    %c0_4 = arith.constant 0 : index
    %6 = vector.load %arg3[%c0_3, %c0_4] : memref<64x1xf32, #tpu.memory_space<vmem>>, vector<64x1xf32>
    %c0_5 = arith.constant 0 : index
    %c0_6 = arith.constant 0 : index
    %7 = vector.load %arg4[%c0_5, %c0_6] : memref<64x1xf32, #tpu.memory_space<vmem>>, vector<64x1xf32>
    %c0_7 = arith.constant 0 : index
    %c0_8 = arith.constant 0 : index
    %8 = vector.load %arg5[%c0_7, %c0_8] : memref<9x128xf32, #tpu.memory_space<vmem>>, vector<9x128xf32>
    %cst = arith.constant 0.000000e+00 : f32
    %9 = vector.broadcast %cst : f32 to vector<1x128xf32>
    %10 = vector.extract_strided_slice %5 {offsets = [0, 0], sizes = [63, 128], strides = [1, 1]} : vector<64x128xf32> to vector<63x128xf32>
    %11 = tpu.concatenate %9, %10 in 0 : vector<1x128xf32>, vector<63x128xf32> -> vector<64x128xf32>
    %12 = vector.broadcast %6 : vector<64x1xf32> to vector<64x128xf32>
    %13 = arith.mulf %11, %12 : vector<64x128xf32>
    %cst_9 = arith.constant 0.000000e+00 : f32
    %14 = vector.broadcast %cst_9 : f32 to vector<1x128xf32>
    %15 = vector.extract_strided_slice %5 {offsets = [1, 0], sizes = [63, 128], strides = [1, 1]} : vector<64x128xf32> to vector<63x128xf32>
    %16 = tpu.concatenate %15, %14 in 0 : vector<63x128xf32>, vector<1x128xf32> -> vector<64x128xf32>
    %17 = vector.broadcast %7 : vector<64x1xf32> to vector<64x128xf32>
    %18 = arith.mulf %16, %17 : vector<64x128xf32>
    %cst_10 = arith.constant 0.000000e+00 : f32
    %19 = vector.broadcast %cst_10 : f32 to vector<64x128xf32>
    %cst_11 = arith.constant 0.000000e+00 : f32
    %20 = vector.broadcast %cst_11 : f32 to vector<8x128xf32>
    %21 = vector.extract_strided_slice %13 {offsets = [0, 0], sizes = [56, 128], strides = [1, 1]} : vector<64x128xf32> to vector<56x128xf32>
    %22 = tpu.concatenate %20, %21 in 0 : vector<8x128xf32>, vector<56x128xf32> -> vector<64x128xf32>
    %23 = vector.extract_strided_slice %8 {offsets = [0, 0], sizes = [1, 128], strides = [1, 1]} : vector<9x128xf32> to vector<1x128xf32>
    %24 = vector.shape_cast %23 : vector<1x128xf32> to vector<128xf32>
    %25 = vector.shape_cast %24 : vector<128xf32> to vector<1x128xf32>
    %26 = vector.broadcast %25 : vector<1x128xf32> to vector<64x128xf32>
    %27 = arith.mulf %22, %26 : vector<64x128xf32>
    %28 = arith.addf %19, %27 : vector<64x128xf32>
    %cst_12 = arith.constant 0.000000e+00 : f32
    %29 = vector.broadcast %cst_12 : f32 to vector<8x128xf32>
    %30 = vector.extract_strided_slice %5 {offsets = [0, 0], sizes = [56, 128], strides = [1, 1]} : vector<64x128xf32> to vector<56x128xf32>
    %31 = tpu.concatenate %29, %30 in 0 : vector<8x128xf32>, vector<56x128xf32> -> vector<64x128xf32>
    %32 = vector.extract_strided_slice %8 {offsets = [1, 0], sizes = [1, 128], strides = [1, 1]} : vector<9x128xf32> to vector<1x128xf32>
    %33 = vector.shape_cast %32 : vector<1x128xf32> to vector<128xf32>
    %34 = vector.shape_cast %33 : vector<128xf32> to vector<1x128xf32>
    %35 = vector.broadcast %34 : vector<1x128xf32> to vector<64x128xf32>
    %36 = arith.mulf %31, %35 : vector<64x128xf32>
    %37 = arith.addf %28, %36 : vector<64x128xf32>
    %cst_13 = arith.constant 0.000000e+00 : f32
    %38 = vector.broadcast %cst_13 : f32 to vector<8x128xf32>
    %39 = vector.extract_strided_slice %18 {offsets = [0, 0], sizes = [56, 128], strides = [1, 1]} : vector<64x128xf32> to vector<56x128xf32>
    %40 = tpu.concatenate %38, %39 in 0 : vector<8x128xf32>, vector<56x128xf32> -> vector<64x128xf32>
    %41 = vector.extract_strided_slice %8 {offsets = [2, 0], sizes = [1, 128], strides = [1, 1]} : vector<9x128xf32> to vector<1x128xf32>
    %42 = vector.shape_cast %41 : vector<1x128xf32> to vector<128xf32>
    %43 = vector.shape_cast %42 : vector<128xf32> to vector<1x128xf32>
    %44 = vector.broadcast %43 : vector<1x128xf32> to vector<64x128xf32>
    %45 = arith.mulf %40, %44 : vector<64x128xf32>
    %46 = arith.addf %37, %45 : vector<64x128xf32>
    %47 = vector.extract_strided_slice %8 {offsets = [3, 0], sizes = [1, 128], strides = [1, 1]} : vector<9x128xf32> to vector<1x128xf32>
    %48 = vector.shape_cast %47 : vector<1x128xf32> to vector<128xf32>
    %49 = vector.shape_cast %48 : vector<128xf32> to vector<1x128xf32>
    %50 = vector.broadcast %49 : vector<1x128xf32> to vector<64x128xf32>
    %51 = arith.mulf %13, %50 : vector<64x128xf32>
    %52 = arith.addf %46, %51 : vector<64x128xf32>
    %53 = vector.extract_strided_slice %8 {offsets = [4, 0], sizes = [1, 128], strides = [1, 1]} : vector<9x128xf32> to vector<1x128xf32>
    %54 = vector.shape_cast %53 : vector<1x128xf32> to vector<128xf32>
    %55 = vector.shape_cast %54 : vector<128xf32> to vector<1x128xf32>
    %56 = vector.broadcast %55 : vector<1x128xf32> to vector<64x128xf32>
    %57 = arith.mulf %5, %56 : vector<64x128xf32>
    %58 = arith.addf %52, %57 : vector<64x128xf32>
    %59 = vector.extract_strided_slice %8 {offsets = [5, 0], sizes = [1, 128], strides = [1, 1]} : vector<9x128xf32> to vector<1x128xf32>
    %60 = vector.shape_cast %59 : vector<1x128xf32> to vector<128xf32>
    %61 = vector.shape_cast %60 : vector<128xf32> to vector<1x128xf32>
    %62 = vector.broadcast %61 : vector<1x128xf32> to vector<64x128xf32>
    %63 = arith.mulf %18, %62 : vector<64x128xf32>
    %64 = arith.addf %58, %63 : vector<64x128xf32>
    %cst_14 = arith.constant 0.000000e+00 : f32
    %65 = vector.broadcast %cst_14 : f32 to vector<8x128xf32>
    %66 = vector.extract_strided_slice %13 {offsets = [8, 0], sizes = [56, 128], strides = [1, 1]} : vector<64x128xf32> to vector<56x128xf32>
    %67 = tpu.concatenate %66, %65 in 0 : vector<56x128xf32>, vector<8x128xf32> -> vector<64x128xf32>
    %68 = vector.extract_strided_slice %8 {offsets = [6, 0], sizes = [1, 128], strides = [1, 1]} : vector<9x128xf32> to vector<1x128xf32>
    %69 = vector.shape_cast %68 : vector<1x128xf32> to vector<128xf32>
    %70 = vector.shape_cast %69 : vector<128xf32> to vector<1x128xf32>
    %71 = vector.broadcast %70 : vector<1x128xf32> to vector<64x128xf32>
    %72 = arith.mulf %67, %71 : vector<64x128xf32>
    %73 = arith.addf %64, %72 : vector<64x128xf32>
    %cst_15 = arith.constant 0.000000e+00 : f32
    %74 = vector.broadcast %cst_15 : f32 to vector<8x128xf32>
    %75 = vector.extract_strided_slice %5 {offsets = [8, 0], sizes = [56, 128], strides = [1, 1]} : vector<64x128xf32> to vector<56x128xf32>
    %76 = tpu.concatenate %75, %74 in 0 : vector<56x128xf32>, vector<8x128xf32> -> vector<64x128xf32>
    %77 = vector.extract_strided_slice %8 {offsets = [7, 0], sizes = [1, 128], strides = [1, 1]} : vector<9x128xf32> to vector<1x128xf32>
    %78 = vector.shape_cast %77 : vector<1x128xf32> to vector<128xf32>
    %79 = vector.shape_cast %78 : vector<128xf32> to vector<1x128xf32>
    %80 = vector.broadcast %79 : vector<1x128xf32> to vector<64x128xf32>
    %81 = arith.mulf %76, %80 : vector<64x128xf32>
    %82 = arith.addf %73, %81 : vector<64x128xf32>
    %cst_16 = arith.constant 0.000000e+00 : f32
    %83 = vector.broadcast %cst_16 : f32 to vector<8x128xf32>
    %84 = vector.extract_strided_slice %18 {offsets = [8, 0], sizes = [56, 128], strides = [1, 1]} : vector<64x128xf32> to vector<56x128xf32>
    %85 = tpu.concatenate %84, %83 in 0 : vector<56x128xf32>, vector<8x128xf32> -> vector<64x128xf32>
    %86 = vector.extract_strided_slice %8 {offsets = [8, 0], sizes = [1, 128], strides = [1, 1]} : vector<9x128xf32> to vector<1x128xf32>
    %87 = vector.shape_cast %86 : vector<1x128xf32> to vector<128xf32>
    %88 = vector.shape_cast %87 : vector<128xf32> to vector<1x128xf32>
    %89 = vector.broadcast %88 : vector<1x128xf32> to vector<64x128xf32>
    %90 = arith.mulf %85, %89 : vector<64x128xf32>
    %91 = arith.addf %82, %90 : vector<64x128xf32>
    %c0_17 = arith.constant 0 : index
    %c0_18 = arith.constant 0 : index
    %92 = vector.load %arg6[%c0_17, %c0_18] : memref<1x128xf32, #tpu.memory_space<vmem>>, vector<1x128xf32>
    %93 = vector.broadcast %92 : vector<1x128xf32> to vector<64x128xf32>
    %94 = arith.addf %91, %93 : vector<64x128xf32>
    %cst_19 = arith.constant 0.707106769 : f32
    %95 = vector.broadcast %cst_19 : f32 to vector<64x128xf32>
    %96 = arith.mulf %94, %95 : vector<64x128xf32>
    %97 = math.absf %96 : vector<64x128xf32>
    %cst_20 = arith.constant 0.327591091 : f32
    %98 = vector.broadcast %cst_20 : f32 to vector<64x128xf32>
    %99 = arith.mulf %98, %97 : vector<64x128xf32>
    %cst_21 = arith.constant 1.000000e+00 : f32
    %100 = vector.broadcast %cst_21 : f32 to vector<64x128xf32>
    %101 = arith.addf %100, %99 : vector<64x128xf32>
    %102 = tpu.reciprocal %101 {approx = true} : vector<64x128xf32> -> vector<64x128xf32>
    %cst_22 = arith.constant 1.06140542 : f32
    %103 = vector.broadcast %cst_22 : f32 to vector<64x128xf32>
    %104 = arith.mulf %102, %103 : vector<64x128xf32>
    %cst_23 = arith.constant -1.45315206 : f32
    %105 = vector.broadcast %cst_23 : f32 to vector<64x128xf32>
    %106 = arith.addf %105, %104 : vector<64x128xf32>
    %107 = arith.mulf %102, %106 : vector<64x128xf32>
    %cst_24 = arith.constant 1.42141378 : f32
    %108 = vector.broadcast %cst_24 : f32 to vector<64x128xf32>
    %109 = arith.addf %108, %107 : vector<64x128xf32>
    %110 = arith.mulf %102, %109 : vector<64x128xf32>
    %cst_25 = arith.constant -0.284496725 : f32
    %111 = vector.broadcast %cst_25 : f32 to vector<64x128xf32>
    %112 = arith.addf %111, %110 : vector<64x128xf32>
    %113 = arith.mulf %102, %112 : vector<64x128xf32>
    %cst_26 = arith.constant 0.254829586 : f32
    %114 = vector.broadcast %cst_26 : f32 to vector<64x128xf32>
    %115 = arith.addf %114, %113 : vector<64x128xf32>
    %116 = arith.mulf %102, %115 : vector<64x128xf32>
    %cst_27 = arith.constant 0.000000e+00 : f32
    %117 = vector.broadcast %cst_27 : f32 to vector<64x128xf32>
    %118 = arith.subf %117, %97 : vector<64x128xf32>
    %119 = arith.mulf %118, %97 : vector<64x128xf32>
    %120 = math.exp %119 : vector<64x128xf32>
    %121 = arith.mulf %116, %120 : vector<64x128xf32>
    %cst_28 = arith.constant 1.000000e+00 : f32
    %122 = vector.broadcast %cst_28 : f32 to vector<64x128xf32>
    %123 = arith.subf %122, %121 : vector<64x128xf32>
    %cst_29 = arith.constant 0.000000e+00 : f32
    %124 = vector.broadcast %cst_29 : f32 to vector<64x128xf32>
    %125 = arith.cmpf oge, %96, %124 : vector<64x128xf32>
    %cst_30 = arith.constant 0.000000e+00 : f32
    %126 = vector.broadcast %cst_30 : f32 to vector<64x128xf32>
    %127 = arith.subf %126, %123 : vector<64x128xf32>
    %128 = arith.select %125, %123, %127 : vector<64x128xi1>, vector<64x128xf32>
    %cst_31 = arith.constant 5.000000e-01 : f32
    %129 = vector.broadcast %cst_31 : f32 to vector<64x128xf32>
    %130 = arith.mulf %129, %94 : vector<64x128xf32>
    %cst_32 = arith.constant 1.000000e+00 : f32
    %131 = vector.broadcast %cst_32 : f32 to vector<64x128xf32>
    %132 = arith.addf %131, %128 : vector<64x128xf32>
    %133 = arith.mulf %130, %132 : vector<64x128xf32>
    %c0_33 = arith.constant 0 : index
    %c0_34 = arith.constant 0 : index
    %134 = vector.load %arg11[%c0_33, %c0_34] : memref<64x128xf32, #tpu.memory_space<vmem>>, vector<64x128xf32>
    %135 = arith.truncf %133 : vector<64x128xf32> to vector<64x128xbf16>
    %c0_35 = arith.constant 0 : index
    %c0_36 = arith.constant 0 : index
    %136 = vector.load %arg7[%c0_35, %c0_36] : memref<128x128xbf16, #tpu.memory_space<vmem>>, vector<128x128xbf16>
    %cst_37 = arith.constant dense<0.000000e+00> : vector<64x128xf32>
    %137 = tpu.matmul %135, %136, %cst_37 {dimension_numbers = #tpu.dot_dimension_numbers<[1], [0], [0], [1], [0, 0, 1, 1], [], []>} : vector<64x128xbf16>, vector<128x128xbf16>, vector<64x128xf32> -> vector<64x128xf32>
    %138 = arith.addf %134, %137 : vector<64x128xf32>
    %c0_38 = arith.constant 0 : index
    %c0_39 = arith.constant 0 : index
    %139 = vector.load %arg11[%c0_38, %c0_39] : memref<64x128xf32, #tpu.memory_space<vmem>>, vector<64x128xf32>
    tpu.vector_store %arg11[%c0_38, %c0_39], %138 {strides = array<i32>} : memref<64x128xf32, #tpu.memory_space<vmem>>, vector<64x128xf32>,
    %c1_i32 = arith.constant 1 : i32
    %140 = arith.cmpi eq, %arg1, %c1_i32 : i32
    %141 = arith.extui %140 : i1 to i32
    %c0_i32_40 = arith.constant 0 : i32
    %142 = arith.cmpi ne, %141, %c0_i32_40 : i32
    scf.if %142 {
      %c0_41 = arith.constant 0 : index
      %c0_42 = arith.constant 0 : index
      %143 = vector.load %arg11[%c0_41, %c0_42] : memref<64x128xf32, #tpu.memory_space<vmem>>, vector<64x128xf32>
      %c0_43 = arith.constant 0 : index
      %c0_44 = arith.constant 0 : index
      %144 = vector.load %arg8[%c0_43, %c0_44] : memref<1x128xf32, #tpu.memory_space<vmem>>, vector<1x128xf32>
      %145 = vector.broadcast %144 : vector<1x128xf32> to vector<64x128xf32>
      %146 = arith.addf %143, %145 : vector<64x128xf32>
      %c0_45 = arith.constant 0 : index
      %c0_46 = arith.constant 0 : index
      %c0_47 = arith.constant 0 : index
      %147 = vector.load %arg10[%c0_45, %c0_46, %c0_47] : memref<1x64x128xf32, #tpu.memory_space<vmem>>, vector<1x64x128xf32>
      %148 = vector.shape_cast %147 : vector<1x64x128xf32> to vector<64x128xf32>
      %149 = vector.shape_cast %146 : vector<64x128xf32> to vector<1x64x128xf32>
      tpu.vector_store %arg10[%c0_45, %c0_46, %c0_47], %149 {strides = array<i32>} : memref<1x64x128xf32, #tpu.memory_space<vmem>>, vector<1x64x128xf32>,
    } else {
    }
    return
  }
  func.func @transform_0(%arg0: i32, %arg1: i32) -> (i32, i32, i32) {
    %c4_i32 = arith.constant 4 : i32
    %c0_i32 = arith.constant 0 : i32
    return %arg0, %c4_i32, %arg1 : i32, i32, i32
  }
  func.func @transform_1(%arg0: i32, %arg1: i32) -> (i32, i32) {
    %c0_i32 = arith.constant 0 : i32
    %c0_i32_0 = arith.constant 0 : i32
    %c0_i32_1 = arith.constant 0 : i32
    return %c0_i32, %c0_i32_0 : i32, i32
  }
  func.func @transform_2(%arg0: i32, %arg1: i32) -> (i32, i32) {
    %c0_i32 = arith.constant 0 : i32
    %c0_i32_0 = arith.constant 0 : i32
    %c0_i32_1 = arith.constant 0 : i32
    return %c0_i32, %c0_i32_0 : i32, i32
  }
  func.func @transform_3(%arg0: i32, %arg1: i32) -> (i32, i32) {
    %c0_i32 = arith.constant 0 : i32
    %c0_i32_0 = arith.constant 0 : i32
    return %c0_i32, %arg1 : i32, i32
  }
  func.func @transform_4(%arg0: i32, %arg1: i32) -> (i32, i32) {
    %c0_i32 = arith.constant 0 : i32
    %c0_i32_0 = arith.constant 0 : i32
    return %c0_i32, %arg1 : i32, i32
  }
  func.func @transform_5(%arg0: i32, %arg1: i32) -> (i32, i32) {
    %c0_i32 = arith.constant 0 : i32
    %c0_i32_0 = arith.constant 0 : i32
    return %arg1, %c0_i32 : i32, i32
  }
  func.func @transform_6(%arg0: i32, %arg1: i32) -> (i32, i32) {
    %c0_i32 = arith.constant 0 : i32
    %c0_i32_0 = arith.constant 0 : i32
    %c0_i32_1 = arith.constant 0 : i32
    return %c0_i32, %c0_i32_0 : i32, i32
  }
  func.func @transform_8(%arg0: i32, %arg1: i32) -> (i32, i32, i32) {
    %c4_i32 = arith.constant 4 : i32
    %c0_i32 = arith.constant 0 : i32
    %c0_i32_0 = arith.constant 0 : i32
    return %arg0, %c4_i32, %c0_i32 : i32, i32, i32
  }
}

module attributes {stable_mosaic.version = 11 : i64} {
  func.func @_dwconv_gelu_fc2_kernel(%arg0: i32, %arg1: i32, %arg2: memref<1x16x128xbf16, #tpu.memory_space<vmem>>, %arg3: memref<16x1xf32, #tpu.memory_space<vmem>>, %arg4: memref<16x1xf32, #tpu.memory_space<vmem>>, %arg5: memref<9x128xf32, #tpu.memory_space<vmem>>, %arg6: memref<1x128xf32, #tpu.memory_space<vmem>>, %arg7: memref<128x128xbf16, #tpu.memory_space<vmem>>, %arg8: memref<1x128xf32, #tpu.memory_space<vmem>>, %arg9: memref<2x336x128xf32, #tpu.memory_space<any>>, %arg10: memref<1x16x128xf32, #tpu.memory_space<vmem>>, %arg11: memref<16x128xf32, #tpu.memory_space<vmem>>) attributes {dimension_semantics = [#tpu.dimension_semantics<parallel>, #tpu.dimension_semantics<arbitrary>], iteration_bounds = array<i64: 2, 2>, scalar_prefetch = 0 : i64, scratch_operands = 1 : i64, tpu.core_type = #tpu.core_type<tc>, window_params = [{transform_indices = @transform_0, window_bounds = array<i64: 1, 16, 128>}, {pipeline_mode = #tpu.pipeline_mode<synchronous>, transform_indices = @transform_1, window_bounds = array<i64: 16, 1>}, {pipeline_mode = #tpu.pipeline_mode<synchronous>, transform_indices = @transform_2, window_bounds = array<i64: 16, 1>}, {transform_indices = @transform_3, window_bounds = array<i64: 9, 128>}, {transform_indices = @transform_4, window_bounds = array<i64: 1, 128>}, {transform_indices = @transform_5, window_bounds = array<i64: 128, 128>}, {pipeline_mode = #tpu.pipeline_mode<synchronous>, transform_indices = @transform_6, window_bounds = array<i64: 1, 128>}, {}, {transform_indices = @transform_8, window_bounds = array<i64: 1, 16, 128>}]} {
    %c0_i32 = arith.constant 0 : i32
    %0 = arith.cmpi eq, %arg1, %c0_i32 : i32
    %1 = arith.extui %0 : i1 to i32
    %c0_i32_0 = arith.constant 0 : i32
    %2 = arith.cmpi ne, %1, %c0_i32_0 : i32
    scf.if %2 {
      %cst_41 = arith.constant 0.000000e+00 : f32
      %143 = vector.broadcast %cst_41 : f32 to vector<16x128xf32>
      %c0_42 = arith.constant 0 : index
      %c0_43 = arith.constant 0 : index
      %144 = vector.load %arg11[%c0_42, %c0_43] : memref<16x128xf32, #tpu.memory_space<vmem>>, vector<16x128xf32>
      tpu.vector_store %arg11[%c0_42, %c0_43], %143 {strides = array<i32>} : memref<16x128xf32, #tpu.memory_space<vmem>>, vector<16x128xf32>,
    } else {
    }
    %c0 = arith.constant 0 : index
    %c0_1 = arith.constant 0 : index
    %c0_2 = arith.constant 0 : index
    %3 = vector.load %arg2[%c0, %c0_1, %c0_2] : memref<1x16x128xbf16, #tpu.memory_space<vmem>>, vector<1x16x128xbf16>
    %4 = vector.shape_cast %3 : vector<1x16x128xbf16> to vector<16x128xbf16>
    %5 = arith.extf %4 : vector<16x128xbf16> to vector<16x128xf32>
    %c0_3 = arith.constant 0 : index
    %c0_4 = arith.constant 0 : index
    %6 = vector.load %arg3[%c0_3, %c0_4] : memref<16x1xf32, #tpu.memory_space<vmem>>, vector<16x1xf32>
    %c0_5 = arith.constant 0 : index
    %c0_6 = arith.constant 0 : index
    %7 = vector.load %arg4[%c0_5, %c0_6] : memref<16x1xf32, #tpu.memory_space<vmem>>, vector<16x1xf32>
    %c0_7 = arith.constant 0 : index
    %c0_8 = arith.constant 0 : index
    %8 = vector.load %arg5[%c0_7, %c0_8] : memref<9x128xf32, #tpu.memory_space<vmem>>, vector<9x128xf32>
    %cst = arith.constant 0.000000e+00 : f32
    %9 = vector.broadcast %cst : f32 to vector<1x128xf32>
    %10 = vector.extract_strided_slice %5 {offsets = [0, 0], sizes = [15, 128], strides = [1, 1]} : vector<16x128xf32> to vector<15x128xf32>
    %11 = tpu.concatenate %9, %10 in 0 : vector<1x128xf32>, vector<15x128xf32> -> vector<16x128xf32>
    %12 = vector.broadcast %6 : vector<16x1xf32> to vector<16x128xf32>
    %13 = arith.mulf %11, %12 : vector<16x128xf32>
    %cst_9 = arith.constant 0.000000e+00 : f32
    %14 = vector.broadcast %cst_9 : f32 to vector<1x128xf32>
    %15 = vector.extract_strided_slice %5 {offsets = [1, 0], sizes = [15, 128], strides = [1, 1]} : vector<16x128xf32> to vector<15x128xf32>
    %16 = tpu.concatenate %15, %14 in 0 : vector<15x128xf32>, vector<1x128xf32> -> vector<16x128xf32>
    %17 = vector.broadcast %7 : vector<16x1xf32> to vector<16x128xf32>
    %18 = arith.mulf %16, %17 : vector<16x128xf32>
    %cst_10 = arith.constant 0.000000e+00 : f32
    %19 = vector.broadcast %cst_10 : f32 to vector<16x128xf32>
    %cst_11 = arith.constant 0.000000e+00 : f32
    %20 = vector.broadcast %cst_11 : f32 to vector<4x128xf32>
    %21 = vector.extract_strided_slice %13 {offsets = [0, 0], sizes = [12, 128], strides = [1, 1]} : vector<16x128xf32> to vector<12x128xf32>
    %22 = tpu.concatenate %20, %21 in 0 : vector<4x128xf32>, vector<12x128xf32> -> vector<16x128xf32>
    %23 = vector.extract_strided_slice %8 {offsets = [0, 0], sizes = [1, 128], strides = [1, 1]} : vector<9x128xf32> to vector<1x128xf32>
    %24 = vector.shape_cast %23 : vector<1x128xf32> to vector<128xf32>
    %25 = vector.shape_cast %24 : vector<128xf32> to vector<1x128xf32>
    %26 = vector.broadcast %25 : vector<1x128xf32> to vector<16x128xf32>
    %27 = arith.mulf %22, %26 : vector<16x128xf32>
    %28 = arith.addf %19, %27 : vector<16x128xf32>
    %cst_12 = arith.constant 0.000000e+00 : f32
    %29 = vector.broadcast %cst_12 : f32 to vector<4x128xf32>
    %30 = vector.extract_strided_slice %5 {offsets = [0, 0], sizes = [12, 128], strides = [1, 1]} : vector<16x128xf32> to vector<12x128xf32>
    %31 = tpu.concatenate %29, %30 in 0 : vector<4x128xf32>, vector<12x128xf32> -> vector<16x128xf32>
    %32 = vector.extract_strided_slice %8 {offsets = [1, 0], sizes = [1, 128], strides = [1, 1]} : vector<9x128xf32> to vector<1x128xf32>
    %33 = vector.shape_cast %32 : vector<1x128xf32> to vector<128xf32>
    %34 = vector.shape_cast %33 : vector<128xf32> to vector<1x128xf32>
    %35 = vector.broadcast %34 : vector<1x128xf32> to vector<16x128xf32>
    %36 = arith.mulf %31, %35 : vector<16x128xf32>
    %37 = arith.addf %28, %36 : vector<16x128xf32>
    %cst_13 = arith.constant 0.000000e+00 : f32
    %38 = vector.broadcast %cst_13 : f32 to vector<4x128xf32>
    %39 = vector.extract_strided_slice %18 {offsets = [0, 0], sizes = [12, 128], strides = [1, 1]} : vector<16x128xf32> to vector<12x128xf32>
    %40 = tpu.concatenate %38, %39 in 0 : vector<4x128xf32>, vector<12x128xf32> -> vector<16x128xf32>
    %41 = vector.extract_strided_slice %8 {offsets = [2, 0], sizes = [1, 128], strides = [1, 1]} : vector<9x128xf32> to vector<1x128xf32>
    %42 = vector.shape_cast %41 : vector<1x128xf32> to vector<128xf32>
    %43 = vector.shape_cast %42 : vector<128xf32> to vector<1x128xf32>
    %44 = vector.broadcast %43 : vector<1x128xf32> to vector<16x128xf32>
    %45 = arith.mulf %40, %44 : vector<16x128xf32>
    %46 = arith.addf %37, %45 : vector<16x128xf32>
    %47 = vector.extract_strided_slice %8 {offsets = [3, 0], sizes = [1, 128], strides = [1, 1]} : vector<9x128xf32> to vector<1x128xf32>
    %48 = vector.shape_cast %47 : vector<1x128xf32> to vector<128xf32>
    %49 = vector.shape_cast %48 : vector<128xf32> to vector<1x128xf32>
    %50 = vector.broadcast %49 : vector<1x128xf32> to vector<16x128xf32>
    %51 = arith.mulf %13, %50 : vector<16x128xf32>
    %52 = arith.addf %46, %51 : vector<16x128xf32>
    %53 = vector.extract_strided_slice %8 {offsets = [4, 0], sizes = [1, 128], strides = [1, 1]} : vector<9x128xf32> to vector<1x128xf32>
    %54 = vector.shape_cast %53 : vector<1x128xf32> to vector<128xf32>
    %55 = vector.shape_cast %54 : vector<128xf32> to vector<1x128xf32>
    %56 = vector.broadcast %55 : vector<1x128xf32> to vector<16x128xf32>
    %57 = arith.mulf %5, %56 : vector<16x128xf32>
    %58 = arith.addf %52, %57 : vector<16x128xf32>
    %59 = vector.extract_strided_slice %8 {offsets = [5, 0], sizes = [1, 128], strides = [1, 1]} : vector<9x128xf32> to vector<1x128xf32>
    %60 = vector.shape_cast %59 : vector<1x128xf32> to vector<128xf32>
    %61 = vector.shape_cast %60 : vector<128xf32> to vector<1x128xf32>
    %62 = vector.broadcast %61 : vector<1x128xf32> to vector<16x128xf32>
    %63 = arith.mulf %18, %62 : vector<16x128xf32>
    %64 = arith.addf %58, %63 : vector<16x128xf32>
    %cst_14 = arith.constant 0.000000e+00 : f32
    %65 = vector.broadcast %cst_14 : f32 to vector<4x128xf32>
    %66 = vector.extract_strided_slice %13 {offsets = [4, 0], sizes = [12, 128], strides = [1, 1]} : vector<16x128xf32> to vector<12x128xf32>
    %67 = tpu.concatenate %66, %65 in 0 : vector<12x128xf32>, vector<4x128xf32> -> vector<16x128xf32>
    %68 = vector.extract_strided_slice %8 {offsets = [6, 0], sizes = [1, 128], strides = [1, 1]} : vector<9x128xf32> to vector<1x128xf32>
    %69 = vector.shape_cast %68 : vector<1x128xf32> to vector<128xf32>
    %70 = vector.shape_cast %69 : vector<128xf32> to vector<1x128xf32>
    %71 = vector.broadcast %70 : vector<1x128xf32> to vector<16x128xf32>
    %72 = arith.mulf %67, %71 : vector<16x128xf32>
    %73 = arith.addf %64, %72 : vector<16x128xf32>
    %cst_15 = arith.constant 0.000000e+00 : f32
    %74 = vector.broadcast %cst_15 : f32 to vector<4x128xf32>
    %75 = vector.extract_strided_slice %5 {offsets = [4, 0], sizes = [12, 128], strides = [1, 1]} : vector<16x128xf32> to vector<12x128xf32>
    %76 = tpu.concatenate %75, %74 in 0 : vector<12x128xf32>, vector<4x128xf32> -> vector<16x128xf32>
    %77 = vector.extract_strided_slice %8 {offsets = [7, 0], sizes = [1, 128], strides = [1, 1]} : vector<9x128xf32> to vector<1x128xf32>
    %78 = vector.shape_cast %77 : vector<1x128xf32> to vector<128xf32>
    %79 = vector.shape_cast %78 : vector<128xf32> to vector<1x128xf32>
    %80 = vector.broadcast %79 : vector<1x128xf32> to vector<16x128xf32>
    %81 = arith.mulf %76, %80 : vector<16x128xf32>
    %82 = arith.addf %73, %81 : vector<16x128xf32>
    %cst_16 = arith.constant 0.000000e+00 : f32
    %83 = vector.broadcast %cst_16 : f32 to vector<4x128xf32>
    %84 = vector.extract_strided_slice %18 {offsets = [4, 0], sizes = [12, 128], strides = [1, 1]} : vector<16x128xf32> to vector<12x128xf32>
    %85 = tpu.concatenate %84, %83 in 0 : vector<12x128xf32>, vector<4x128xf32> -> vector<16x128xf32>
    %86 = vector.extract_strided_slice %8 {offsets = [8, 0], sizes = [1, 128], strides = [1, 1]} : vector<9x128xf32> to vector<1x128xf32>
    %87 = vector.shape_cast %86 : vector<1x128xf32> to vector<128xf32>
    %88 = vector.shape_cast %87 : vector<128xf32> to vector<1x128xf32>
    %89 = vector.broadcast %88 : vector<1x128xf32> to vector<16x128xf32>
    %90 = arith.mulf %85, %89 : vector<16x128xf32>
    %91 = arith.addf %82, %90 : vector<16x128xf32>
    %c0_17 = arith.constant 0 : index
    %c0_18 = arith.constant 0 : index
    %92 = vector.load %arg6[%c0_17, %c0_18] : memref<1x128xf32, #tpu.memory_space<vmem>>, vector<1x128xf32>
    %93 = vector.broadcast %92 : vector<1x128xf32> to vector<16x128xf32>
    %94 = arith.addf %91, %93 : vector<16x128xf32>
    %cst_19 = arith.constant 0.707106769 : f32
    %95 = vector.broadcast %cst_19 : f32 to vector<16x128xf32>
    %96 = arith.mulf %94, %95 : vector<16x128xf32>
    %97 = math.absf %96 : vector<16x128xf32>
    %cst_20 = arith.constant 0.327591091 : f32
    %98 = vector.broadcast %cst_20 : f32 to vector<16x128xf32>
    %99 = arith.mulf %98, %97 : vector<16x128xf32>
    %cst_21 = arith.constant 1.000000e+00 : f32
    %100 = vector.broadcast %cst_21 : f32 to vector<16x128xf32>
    %101 = arith.addf %100, %99 : vector<16x128xf32>
    %102 = tpu.reciprocal %101 {approx = true} : vector<16x128xf32> -> vector<16x128xf32>
    %cst_22 = arith.constant 1.06140542 : f32
    %103 = vector.broadcast %cst_22 : f32 to vector<16x128xf32>
    %104 = arith.mulf %102, %103 : vector<16x128xf32>
    %cst_23 = arith.constant -1.45315206 : f32
    %105 = vector.broadcast %cst_23 : f32 to vector<16x128xf32>
    %106 = arith.addf %105, %104 : vector<16x128xf32>
    %107 = arith.mulf %102, %106 : vector<16x128xf32>
    %cst_24 = arith.constant 1.42141378 : f32
    %108 = vector.broadcast %cst_24 : f32 to vector<16x128xf32>
    %109 = arith.addf %108, %107 : vector<16x128xf32>
    %110 = arith.mulf %102, %109 : vector<16x128xf32>
    %cst_25 = arith.constant -0.284496725 : f32
    %111 = vector.broadcast %cst_25 : f32 to vector<16x128xf32>
    %112 = arith.addf %111, %110 : vector<16x128xf32>
    %113 = arith.mulf %102, %112 : vector<16x128xf32>
    %cst_26 = arith.constant 0.254829586 : f32
    %114 = vector.broadcast %cst_26 : f32 to vector<16x128xf32>
    %115 = arith.addf %114, %113 : vector<16x128xf32>
    %116 = arith.mulf %102, %115 : vector<16x128xf32>
    %cst_27 = arith.constant 0.000000e+00 : f32
    %117 = vector.broadcast %cst_27 : f32 to vector<16x128xf32>
    %118 = arith.subf %117, %97 : vector<16x128xf32>
    %119 = arith.mulf %118, %97 : vector<16x128xf32>
    %120 = math.exp %119 : vector<16x128xf32>
    %121 = arith.mulf %116, %120 : vector<16x128xf32>
    %cst_28 = arith.constant 1.000000e+00 : f32
    %122 = vector.broadcast %cst_28 : f32 to vector<16x128xf32>
    %123 = arith.subf %122, %121 : vector<16x128xf32>
    %cst_29 = arith.constant 0.000000e+00 : f32
    %124 = vector.broadcast %cst_29 : f32 to vector<16x128xf32>
    %125 = arith.cmpf oge, %96, %124 : vector<16x128xf32>
    %cst_30 = arith.constant 0.000000e+00 : f32
    %126 = vector.broadcast %cst_30 : f32 to vector<16x128xf32>
    %127 = arith.subf %126, %123 : vector<16x128xf32>
    %128 = arith.select %125, %123, %127 : vector<16x128xi1>, vector<16x128xf32>
    %cst_31 = arith.constant 5.000000e-01 : f32
    %129 = vector.broadcast %cst_31 : f32 to vector<16x128xf32>
    %130 = arith.mulf %129, %94 : vector<16x128xf32>
    %cst_32 = arith.constant 1.000000e+00 : f32
    %131 = vector.broadcast %cst_32 : f32 to vector<16x128xf32>
    %132 = arith.addf %131, %128 : vector<16x128xf32>
    %133 = arith.mulf %130, %132 : vector<16x128xf32>
    %c0_33 = arith.constant 0 : index
    %c0_34 = arith.constant 0 : index
    %134 = vector.load %arg11[%c0_33, %c0_34] : memref<16x128xf32, #tpu.memory_space<vmem>>, vector<16x128xf32>
    %135 = arith.truncf %133 : vector<16x128xf32> to vector<16x128xbf16>
    %c0_35 = arith.constant 0 : index
    %c0_36 = arith.constant 0 : index
    %136 = vector.load %arg7[%c0_35, %c0_36] : memref<128x128xbf16, #tpu.memory_space<vmem>>, vector<128x128xbf16>
    %cst_37 = arith.constant dense<0.000000e+00> : vector<16x128xf32>
    %137 = tpu.matmul %135, %136, %cst_37 {dimension_numbers = #tpu.dot_dimension_numbers<[1], [0], [0], [1], [0, 0, 1, 1], [], []>} : vector<16x128xbf16>, vector<128x128xbf16>, vector<16x128xf32> -> vector<16x128xf32>
    %138 = arith.addf %134, %137 : vector<16x128xf32>
    %c0_38 = arith.constant 0 : index
    %c0_39 = arith.constant 0 : index
    %139 = vector.load %arg11[%c0_38, %c0_39] : memref<16x128xf32, #tpu.memory_space<vmem>>, vector<16x128xf32>
    tpu.vector_store %arg11[%c0_38, %c0_39], %138 {strides = array<i32>} : memref<16x128xf32, #tpu.memory_space<vmem>>, vector<16x128xf32>,
    %c1_i32 = arith.constant 1 : i32
    %140 = arith.cmpi eq, %arg1, %c1_i32 : i32
    %141 = arith.extui %140 : i1 to i32
    %c0_i32_40 = arith.constant 0 : i32
    %142 = arith.cmpi ne, %141, %c0_i32_40 : i32
    scf.if %142 {
      %c0_41 = arith.constant 0 : index
      %c0_42 = arith.constant 0 : index
      %143 = vector.load %arg11[%c0_41, %c0_42] : memref<16x128xf32, #tpu.memory_space<vmem>>, vector<16x128xf32>
      %c0_43 = arith.constant 0 : index
      %c0_44 = arith.constant 0 : index
      %144 = vector.load %arg8[%c0_43, %c0_44] : memref<1x128xf32, #tpu.memory_space<vmem>>, vector<1x128xf32>
      %145 = vector.broadcast %144 : vector<1x128xf32> to vector<16x128xf32>
      %146 = arith.addf %143, %145 : vector<16x128xf32>
      %c0_45 = arith.constant 0 : index
      %c0_46 = arith.constant 0 : index
      %c0_47 = arith.constant 0 : index
      %147 = vector.load %arg10[%c0_45, %c0_46, %c0_47] : memref<1x16x128xf32, #tpu.memory_space<vmem>>, vector<1x16x128xf32>
      %148 = vector.shape_cast %147 : vector<1x16x128xf32> to vector<16x128xf32>
      %149 = vector.shape_cast %146 : vector<16x128xf32> to vector<1x16x128xf32>
      tpu.vector_store %arg10[%c0_45, %c0_46, %c0_47], %149 {strides = array<i32>} : memref<1x16x128xf32, #tpu.memory_space<vmem>>, vector<1x16x128xf32>,
    } else {
    }
    return
  }
  func.func @transform_0(%arg0: i32, %arg1: i32) -> (i32, i32, i32) {
    %c20_i32 = arith.constant 20 : i32
    %c0_i32 = arith.constant 0 : i32
    return %arg0, %c20_i32, %arg1 : i32, i32, i32
  }
  func.func @transform_1(%arg0: i32, %arg1: i32) -> (i32, i32) {
    %c0_i32 = arith.constant 0 : i32
    %c0_i32_0 = arith.constant 0 : i32
    %c0_i32_1 = arith.constant 0 : i32
    return %c0_i32, %c0_i32_0 : i32, i32
  }
  func.func @transform_2(%arg0: i32, %arg1: i32) -> (i32, i32) {
    %c0_i32 = arith.constant 0 : i32
    %c0_i32_0 = arith.constant 0 : i32
    %c0_i32_1 = arith.constant 0 : i32
    return %c0_i32, %c0_i32_0 : i32, i32
  }
  func.func @transform_3(%arg0: i32, %arg1: i32) -> (i32, i32) {
    %c0_i32 = arith.constant 0 : i32
    %c0_i32_0 = arith.constant 0 : i32
    return %c0_i32, %arg1 : i32, i32
  }
  func.func @transform_4(%arg0: i32, %arg1: i32) -> (i32, i32) {
    %c0_i32 = arith.constant 0 : i32
    %c0_i32_0 = arith.constant 0 : i32
    return %c0_i32, %arg1 : i32, i32
  }
  func.func @transform_5(%arg0: i32, %arg1: i32) -> (i32, i32) {
    %c0_i32 = arith.constant 0 : i32
    %c0_i32_0 = arith.constant 0 : i32
    return %arg1, %c0_i32 : i32, i32
  }
  func.func @transform_6(%arg0: i32, %arg1: i32) -> (i32, i32) {
    %c0_i32 = arith.constant 0 : i32
    %c0_i32_0 = arith.constant 0 : i32
    %c0_i32_1 = arith.constant 0 : i32
    return %c0_i32, %c0_i32_0 : i32, i32
  }
  func.func @transform_8(%arg0: i32, %arg1: i32) -> (i32, i32, i32) {
    %c20_i32 = arith.constant 20 : i32
    %c0_i32 = arith.constant 0 : i32
    %c0_i32_0 = arith.constant 0 : i32
    return %arg0, %c20_i32, %c0_i32 : i32, i32, i32
  }
}

</mosaic_0001>

<llo_original>
// kernel: conv_ffn_forward.6
$region0: #{conv_ffn_forward.6}
  #allocation0 [shape = 'u32[]', space=smem, size = 0x4, offset = 0x4, fixed_abs, tag = 'smem constant byte address 0x4 - core index']
  #allocation1 [shape = 'u32[144,128]{1,0:T(1,128)}', space=vmem, size = 0x12000, scoped, tag = 'internal scratch']
  #allocation2 [shape = 'f32[64,128]{1,0:T(8,128)}', space=vmem, size = 0x8000, scoped, tag = 'scratch operand']
  %s0 = inlined_call_operand.vmem [shape: bf16[2,336,256], index: 0, kind: input, shape index: {}]
  %s1 = inlined_call_operand.vmem [shape: f32[64,1], index: 1, kind: input, shape index: {}]
  %s2 = inlined_call_operand.vmem [shape: f32[64,1], index: 2, kind: input, shape index: {}]
  %s3 = inlined_call_operand.vmem [shape: f32[9,256], index: 3, kind: input, shape index: {}]
  %s4 = inlined_call_operand.vmem [shape: f32[1,256], index: 4, kind: input, shape index: {}]
  %s5 = inlined_call_operand.vmem [shape: bf16[256,128], index: 5, kind: input, shape index: {}]
  %s6 = inlined_call_operand.vmem [shape: f32[1,128], index: 6, kind: input, shape index: {}]
  %s7 = inlined_call_operand.vmem [shape: f32[2,336,128], index: 7, kind: input, shape index: {}, may-alias: {7,8}]
  %s8 = inlined_call_operand.vmem [shape: f32[2,336,128], index: 8, kind: output, shape index: {}, may-alias: {7,8}]
  %s9 = sld [smem:[#allocation0]]
  $region182: #{conv_ffn_forward.6} parent=0
    _
  %s11 = ssub.s32 1, %s9
  %s12 = scalar_select 0, %s11, %s9
  $region1: #{conv_ffn_forward.6} parent=0
    #allocation3 [shape = 'u8[32768]{0}', space=vmem, size = 0x8000, scoped, tag = 'input window, operand 0']
    #allocation4 [shape = 'u8[16384]{0}', space=vmem, size = 0x4000, scoped, tag = 'input window, operand 3']
    #allocation5 [shape = 'u8[65536]{0}', space=vmem, size = 0x10000, scoped, tag = 'output window, operand 0']
    loop: start=0, step=1, limit=6
    $region2: #{conv_ffn_forward.6} parent=1 // loop_pre_header
      _
    $region3: #{conv_ffn_forward.6} parent=1 // loop_header
      %s14 = sphi 0, %s18
      %p15 = scmp.ge.s32.totalorder %s14, 6
      %s21 = sphi 0, %s33
      %s22 = sphi 0, %s29
      %s23 = sphi 0, %s21
      %s24 = sphi 0, %s22
      %s25 = sphi 0, %s23
      %s26 = sphi 0, %s24
      %s38 = sphi 0, %s40
      %s41 = sphi 0, %s38
      %s42 = sphi 0, %s41
      %s58 = sphi 0, %s42
      %s62 = sphi 0, %s62
      %s64 = sphi 0, %s62
      %s65 = sphi 0, %s64
      %s79 = sphi 0, %s65
      %s83 = sphi 0, %s83
      %s85 = sphi 0, %s83
      %s86 = sphi 0, %s85
      %s100 = sphi 0, %s86
      %s106 = sphi 0, %s108
      %s109 = sphi 0, %s106
      %s110 = sphi 0, %s109
      %s126 = sphi 0, %s110
      %s132 = sphi 0, %s134
      %s135 = sphi 0, %s132
      %s136 = sphi 0, %s135
      %s152 = sphi 0, %s136
      %s158 = sphi 0, %s160
      %s161 = sphi 0, %s158
      %s162 = sphi 0, %s161
      %s178 = sphi 0, %s162
      %s182 = sphi 0, %s182
      %s184 = sphi 0, %s182
      %s185 = sphi 0, %s184
      %s199 = sphi 0, %s185
      %s205 = sphi 0, %s207
      %s208 = sphi 0, %s205
      %s209 = sphi 0, %s208
      %s225 = sphi 0, %s209
    $region4: #{conv_ffn_forward.6} parent=1 // loop_header_branch
      %17 = sbr.rel (%p15) target = $region8
    $region5: #{conv_ffn_forward.6} parent=1 // loop_body
      %s19 = ssub.s32 %s14, 1
      %s20 = ssub.s32 %s14, 2
      %s27 = sadd.s32 1, %s22
      %p28 = scmp.ge.s32.totalorder %s27, 2
      %s29 = scalar_select %p28, 0, %s27
      %s30 = sadd.s32 1, %s21
      %s31 = scalar_select %p28, %s30, %s21
      %p32 = scmp.ge.s32.totalorder %s31, 2
      %s33 = scalar_select %p32, 0, %s31
      %s34 = ssub.s32 %s21, %s33
      %s35 = ssub.s32 %s22, %s29
      %s36 = sor.u32 %s34, %s35
      %p37 = scmp.eq.s32.totalorder %s36, 0
      %s39 = sadd.s32 %s38, 1
      %s40 = scalar_select %p37, %s38, %s39
      %p43 = pneg %p37
      %p44 = scmp.eq.s32.totalorder %s14, 3
      %p45 = por %p43, %p44
      %p46 = scmp.ne.s32.totalorder %s38, %s41
      %p47 = scmp.eq.s32.totalorder %s14, 0
      %p48 = por %p46, %p47
      %p49 = scmp.ne.s32.totalorder %s38, %s41
      %p50 = scmp.eq.s32.totalorder %s19, 3
      %p51 = por %p49, %p50
      %p52 = scmp.ne.s32.totalorder %s41, %s42
      %p53 = scmp.eq.s32.totalorder %s19, 0
      %p54 = por %p52, %p53
      %p55 = scmp.ne.s32.totalorder %s41, %s42
      %p56 = scmp.eq.s32.totalorder %s20, 3
      %p57 = por %p55, %p56
      %p59 = scmp.ne.s32.totalorder %s42, %s58
      %p60 = scmp.eq.s32.totalorder %s20, 0
      %p61 = por %p59, %p60
      %s63 = sadd.s32 %s62, 1
      %p66 = scmp.eq.s32.totalorder %s14, 3
      %p67 = scmp.ne.s32.totalorder %s62, %s64
      %p68 = scmp.eq.s32.totalorder %s14, 0
      %p69 = por %p67, %p68
      %p70 = scmp.ne.s32.totalorder %s62, %s64
      %p71 = scmp.eq.s32.totalorder %s19, 3
      %p72 = por %p70, %p71
      %p73 = scmp.ne.s32.totalorder %s64, %s65
      %p74 = scmp.eq.s32.totalorder %s19, 0
      %p75 = por %p73, %p74
      %p76 = scmp.ne.s32.totalorder %s64, %s65
      %p77 = scmp.eq.s32.totalorder %s20, 3
      %p78 = por %p76, %p77
      %p80 = scmp.ne.s32.totalorder %s65, %s79
      %p81 = scmp.eq.s32.totalorder %s20, 0
      %p82 = por %p80, %p81
      %s84 = sadd.s32 %s83, 1
      %p87 = scmp.eq.s32.totalorder %s14, 3
      %p88 = scmp.ne.s32.totalorder %s83, %s85
      %p89 = scmp.eq.s32.totalorder %s14, 0
      %p90 = por %p88, %p89
      %p91 = scmp.ne.s32.totalorder %s83, %s85
      %p92 = scmp.eq.s32.totalorder %s19, 3
      %p93 = por %p91, %p92
      %p94 = scmp.ne.s32.totalorder %s85, %s86
      %p95 = scmp.eq.s32.totalorder %s19, 0
      %p96 = por %p94, %p95
      %p97 = scmp.ne.s32.totalorder %s85, %s86
      %p98 = scmp.eq.s32.totalorder %s20, 3
      %p99 = por %p97, %p98
      %p101 = scmp.ne.s32.totalorder %s86, %s100
      %p102 = scmp.eq.s32.totalorder %s20, 0
      %p103 = por %p101, %p102
      %s104 = ssub.s32 %s22, %s29
      %p105 = scmp.eq.s32.totalorder %s104, 0
      %s107 = sadd.s32 %s106, 1
      %s108 = scalar_select %p105, %s106, %s107
      %p111 = pneg %p105
      %p112 = scmp.eq.s32.totalorder %s14, 3
      %p113 = por %p111, %p112
      %p114 = scmp.ne.s32.totalorder %s106, %s109
      %p115 = scmp.eq.s32.totalorder %s14, 0
      %p116 = por %p114, %p115
      %p117 = scmp.ne.s32.totalorder %s106, %s109
      %p118 = scmp.eq.s32.totalorder %s19, 3
      %p119 = por %p117, %p118
      %p120 = scmp.ne.s32.totalorder %s109, %s110
      %p121 = scmp.eq.s32.totalorder %s19, 0
      %p122 = por %p120, %p121
      %p123 = scmp.ne.s32.totalorder %s109, %s110
      %p124 = scmp.eq.s32.totalorder %s20, 3
      %p125 = por %p123, %p124
      %p127 = scmp.ne.s32.totalorder %s110, %s126
      %p128 = scmp.eq.s32.totalorder %s20, 0
      %p129 = por %p127, %p128
      %s130 = ssub.s32 %s22, %s29
      %p131 = scmp.eq.s32.totalorder %s130, 0
      %s133 = sadd.s32 %s132, 1
      %s134 = scalar_select %p131, %s132, %s133
      %p137 = pneg %p131
      %p138 = scmp.eq.s32.totalorder %s14, 3
      %p139 = por %p137, %p138
      %p140 = scmp.ne.s32.totalorder %s132, %s135
      %p141 = scmp.eq.s32.totalorder %s14, 0
      %p142 = por %p140, %p141
      %p143 = scmp.ne.s32.totalorder %s132, %s135
      %p144 = scmp.eq.s32.totalorder %s19, 3
      %p145 = por %p143, %p144
      %p146 = scmp.ne.s32.totalorder %s135, %s136
      %p147 = scmp.eq.s32.totalorder %s19, 0
      %p148 = por %p146, %p147
      %p149 = scmp.ne.s32.totalorder %s135, %s136
      %p150 = scmp.eq.s32.totalorder %s20, 3
      %p151 = por %p149, %p150
      %p153 = scmp.ne.s32.totalorder %s136, %s152
      %p154 = scmp.eq.s32.totalorder %s20, 0
      %p155 = por %p153, %p154
      %s156 = ssub.s32 %s22, %s29
      %p157 = scmp.eq.s32.totalorder %s156, 0
      %s159 = sadd.s32 %s158, 1
      %s160 = scalar_select %p157, %s158, %s159
      %p163 = pneg %p157
      %p164 = scmp.eq.s32.totalorder %s14, 3
      %p165 = por %p163, %p164
      %p166 = scmp.ne.s32.totalorder %s158, %s161
      %p167 = scmp.eq.s32.totalorder %s14, 0
      %p168 = por %p166, %p167
      %p169 = scmp.ne.s32.totalorder %s158, %s161
      %p170 = scmp.eq.s32.totalorder %s19, 3
      %p171 = por %p169, %p170
      %p172 = scmp.ne.s32.totalorder %s161, %s162
      %p173 = scmp.eq.s32.totalorder %s19, 0
      %p174 = por %p172, %p173
      %p175 = scmp.ne.s32.totalorder %s161, %s162
      %p176 = scmp.eq.s32.totalorder %s20, 3
      %p177 = por %p175, %p176
      %p179 = scmp.ne.s32.totalorder %s162, %s178
      %p180 = scmp.eq.s32.totalorder %s20, 0
      %p181 = por %p179, %p180
      %s183 = sadd.s32 %s182, 1
      %p186 = scmp.eq.s32.totalorder %s14, 3
      %p187 = scmp.ne.s32.totalorder %s182, %s184
      %p188 = scmp.eq.s32.totalorder %s14, 0
      %p189 = por %p187, %p188
      %p190 = scmp.ne.s32.totalorder %s182, %s184
      %p191 = scmp.eq.s32.totalorder %s19, 3
      %p192 = por %p190, %p191
      %p193 = scmp.ne.s32.totalorder %s184, %s185
      %p194 = scmp.eq.s32.totalorder %s19, 0
      %p195 = por %p193, %p194
      %p196 = scmp.ne.s32.totalorder %s184, %s185
      %p197 = scmp.eq.s32.totalorder %s20, 3
      %p198 = por %p196, %p197
      %p200 = scmp.ne.s32.totalorder %s185, %s199
      %p201 = scmp.eq.s32.totalorder %s20, 0
      %p202 = por %p200, %p201
      %s203 = ssub.s32 %s21, %s33
      %p204 = scmp.eq.s32.totalorder %s203, 0
      %s206 = sadd.s32 %s205, 1
      %s207 = scalar_select %p204, %s205, %s206
      %p210 = pneg %p204
      %p211 = scmp.eq.s32.totalorder %s14, 3
      %p212 = por %p210, %p211
      %p213 = scmp.ne.s32.totalorder %s205, %s208
      %p214 = scmp.eq.s32.totalorder %s14, 0
      %p215 = por %p213, %p214
      %p216 = scmp.ne.s32.totalorder %s205, %s208
      %p217 = scmp.eq.s32.totalorder %s19, 3
      %p218 = por %p216, %p217
      %p219 = scmp.ne.s32.totalorder %s208, %s209
      %p220 = scmp.eq.s32.totalorder %s19, 0
      %p221 = por %p219, %p220
      %p222 = scmp.ne.s32.totalorder %s208, %s209
      %p223 = scmp.eq.s32.totalorder %s20, 3
      %p224 = por %p222, %p223
      %p226 = scmp.ne.s32.totalorder %s209, %s225
      %p227 = scmp.eq.s32.totalorder %s20, 0
      %p228 = por %p226, %p227
      %p229 = scmp.le.s32.totalorder 1, %s14
      %p230 = scmp.lt.s32.totalorder %s14, 5
      %p231 = pnand %p229, %p230
      %p232 = pneg %p231
      // Predicated region
      $region9: #{conv_ffn_forward.6} parent=5 // pred_check
        _
      $region10: #{conv_ffn_forward.6} parent=5 // pred_check_branch
        %234 = sbr.rel (%p231) target = $region12
      $region11: #{conv_ffn_forward.6} parent=5 // pred_region
        %s235 = ssub.s32 %s14, 1
        // Predicated region
        $region13: #{conv_ffn_forward.6} parent=11 // pred_check
          %p236 = pneg %p75
        $region14: #{conv_ffn_forward.6} parent=11 // pred_check_branch
          %238 = sbr.rel (%p236) target = $region16
        $region15: #{conv_ffn_forward.6} parent=11 // pred_region
          _
        $region16: #{conv_ffn_forward.6} parent=11 // pred_fallthru
          _
        // Predicated region
        $region17: #{conv_ffn_forward.6} parent=11 // pred_check
          %p239 = pneg %p96
        $region18: #{conv_ffn_forward.6} parent=11 // pred_check_branch
          %241 = sbr.rel (%p239) target = $region20
        $region19: #{conv_ffn_forward.6} parent=11 // pred_region
          _
        $region20: #{conv_ffn_forward.6} parent=11 // pred_fallthru
          _
        // Predicated region
        $region21: #{conv_ffn_forward.6} parent=11 // pred_check
          %p242 = pneg %p195
        $region22: #{conv_ffn_forward.6} parent=11 // pred_check_branch
          %244 = sbr.rel (%p242) target = $region24
        $region23: #{conv_ffn_forward.6} parent=11 // pred_region
          _
        $region24: #{conv_ffn_forward.6} parent=11 // pred_fallthru
          _
      $region12: #{conv_ffn_forward.6} parent=5 // pred_fallthru
        _
      %p245 = scmp.lt.s32.totalorder %s14, 4
      // Predicated region
      $region25: #{conv_ffn_forward.6} parent=5 // pred_check
        %p246 = pneg %p245
      $region26: #{conv_ffn_forward.6} parent=5 // pred_check_branch
        %248 = sbr.rel (%p246) target = $region28
      $region27: #{conv_ffn_forward.6} parent=5 // pred_region
        // Predicated region
        $region29: #{conv_ffn_forward.6} parent=27 // pred_check
          %p249 = pneg %p48
        $region30: #{conv_ffn_forward.6} parent=27 // pred_check_branch
          %251 = sbr.rel (%p249) target = $region32
        $region31: #{conv_ffn_forward.6} parent=27 // pred_region
          %s252 = sand.u32 %s38, 1
          %s253 = sand.u32 %s38, 1
          %s254 = smul.addr %s253, 32
          %s255 = scalar_lea.vmem [#allocation3], %s254
          %s256 = sadd.s32 %s22, 64
          %s257 = smul.addr %s21, 84
          %s258 = sadd.s32 %s256, %s257
          %s259 = smul.addr %s258, 4
          %s260 = scalar_lea.vmem %s0, %s259
          // Predicated region
          $region33: #{conv_ffn_forward.6} parent=31 // pred_check
            _
          $region34: #{conv_ffn_forward.6} parent=31 // pred_check_branch
            %262 = sbr.rel (0) target = $region36
          $region35: #{conv_ffn_forward.6} parent=31 // pred_region
            // Predicated region
            $region37: #{conv_ffn_forward.6} parent=35 // pred_check
              _
            $region38: #{conv_ffn_forward.6} parent=35 // pred_check_branch
              %264 = sbr.rel target = $region40
            $region39: #{conv_ffn_forward.6} parent=35 // pred_region
              // Predicated region
              $region52: #{conv_ffn_forward.6} parent=39 // pred_check
                _
              $region53: #{conv_ffn_forward.6} parent=39 // pred_check_branch
                %294 = sbr.rel (0) target = $region55
              $region54: #{conv_ffn_forward.6} parent=39 // pred_region
                loop: start=0, step=1, limit=1
                $region56: #{conv_ffn_forward.6} parent=54 // loop_pre_header
                  _
                $region57: #{conv_ffn_forward.6} parent=54 // loop_header
                  %s296 = sphi 0, %s300
                  %p297 = scmp.ge.s32.totalorder %s296, 1
                  %s301 = sphi %s260, %s260
                  %s302 = sphi %s255, %s255
                $region58: #{conv_ffn_forward.6} parent=54 // loop_header_branch
                  %299 = sbr.rel (%p297) target = $region62
                $region59: #{conv_ffn_forward.6} parent=54 // loop_body
                  _
                $region60: #{conv_ffn_forward.6} parent=54 // loop_footer
                  %s300 = sadd.s32 1, %s296
                $region61: #{conv_ffn_forward.6} parent=54 // loop_footer_branch
                  %295 = sbr.rel target = $region57
                $region62: #{conv_ffn_forward.6} parent=54 // loop_exit
                  _
                %s304 = ssub.s32 16, 1
                loop: start=0, step=1, limit=1
                $region63: #{conv_ffn_forward.6} parent=54 // loop_pre_header
                  _
                $region64: #{conv_ffn_forward.6} parent=54 // loop_header
                  %s306 = sphi 0, %s310
                  %p307 = scmp.ge.s32.totalorder %s306, 1
                  %s311 = sphi %s260, %s260
                  %s312 = sphi %s255, %s255
                $region65: #{conv_ffn_forward.6} parent=54 // loop_header_branch
                  %309 = sbr.rel (%p307) target = $region69
                $region66: #{conv_ffn_forward.6} parent=54 // loop_body
                  %v313 = vld [vmem:[%s311] sm:%s304]
                  %314 = vst [vmem:[%s312] sm:%s304] %v313
                  %v315 = vld [vmem:[%s311 + $0x8] sm:%s304]
                  %316 = vst [vmem:[%s312 + $0x4] sm:%s304] %v315
                  %v317 = vld [vmem:[%s311 + $0x10] sm:%s304]
                  %318 = vst [vmem:[%s312 + $0x8] sm:%s304] %v317
                  %v319 = vld [vmem:[%s311 + $0x18] sm:%s304]
                  %320 = vst [vmem:[%s312 + $0xc] sm:%s304] %v319
                  %v321 = vld [vmem:[%s311 + $0x20] sm:%s304]
                  %322 = vst [vmem:[%s312 + $0x10] sm:%s304] %v321
                  %v323 = vld [vmem:[%s311 + $0x28] sm:%s304]
                  %324 = vst [vmem:[%s312 + $0x14] sm:%s304] %v323
                  %v325 = vld [vmem:[%s311 + $0x30] sm:%s304]
                  %326 = vst [vmem:[%s312 + $0x18] sm:%s304] %v325
                  %v327 = vld [vmem:[%s311 + $0x38] sm:%s304]
                  %328 = vst [vmem:[%s312 + $0x1c] sm:%s304] %v327
                $region67: #{conv_ffn_forward.6} parent=54 // loop_footer
                  %s310 = sadd.s32 1, %s306
                $region68: #{conv_ffn_forward.6} parent=54 // loop_footer_branch
                  %305 = sbr.rel target = $region64
                $region69: #{conv_ffn_forward.6} parent=54 // loop_exit
                  _
              $region55: #{conv_ffn_forward.6} parent=39 // pred_fallthru
                _
            $region40: #{conv_ffn_forward.6} parent=35 // pred_fallthru
              _
            // Predicated region
            $region41: #{conv_ffn_forward.6} parent=35 // pred_check
              _
            $region42: #{conv_ffn_forward.6} parent=35 // pred_check_branch
              %266 = sbr.rel (0) target = $region44
            $region43: #{conv_ffn_forward.6} parent=35 // pred_region
              %s268 = ssub.s32 16, 1
              loop: start=0, step=1, limit=1
              $region45: #{conv_ffn_forward.6} parent=43 // loop_pre_header
                _
              $region46: #{conv_ffn_forward.6} parent=43 // loop_header
                %s270 = sphi 0, %s274
                %p271 = scmp.ge.s32.totalorder %s270, 1
                %s275 = sphi %s260, %s260
                %s276 = sphi %s255, %s255
              $region47: #{conv_ffn_forward.6} parent=43 // loop_header_branch
                %273 = sbr.rel (%p271) target = $region51
              $region48: #{conv_ffn_forward.6} parent=43 // loop_body
                %v277 = vld [vmem:[%s275] sm:%s268]
                %278 = vst [vmem:[%s276] sm:%s268] %v277
                %v279 = vld [vmem:[%s275 + $0x8] sm:%s268]
                %280 = vst [vmem:[%s276 + $0x4] sm:%s268] %v279
                %v281 = vld [vmem:[%s275 + $0x10] sm:%s268]
                %282 = vst [vmem:[%s276 + $0x8] sm:%s268] %v281
                %v283 = vld [vmem:[%s275 + $0x18] sm:%s268]
                %284 = vst [vmem:[%s276 + $0xc] sm:%s268] %v283
                %v285 = vld [vmem:[%s275 + $0x20] sm:%s268]
                %286 = vst [vmem:[%s276 + $0x10] sm:%s268] %v285
                %v287 = vld [vmem:[%s275 + $0x28] sm:%s268]
                %288 = vst [vmem:[%s276 + $0x14] sm:%s268] %v287
                %v289 = vld [vmem:[%s275 + $0x30] sm:%s268]
                %290 = vst [vmem:[%s276 + $0x18] sm:%s268] %v289
                %v291 = vld [vmem:[%s275 + $0x38] sm:%s268]
                %292 = vst [vmem:[%s276 + $0x1c] sm:%s268] %v291
              $region49: #{conv_ffn_forward.6} parent=43 // loop_footer
                %s274 = sadd.s32 1, %s270
              $region50: #{conv_ffn_forward.6} parent=43 // loop_footer_branch
                %269 = sbr.rel target = $region46
              $region51: #{conv_ffn_forward.6} parent=43 // loop_exit
                _
            $region44: #{conv_ffn_forward.6} parent=35 // pred_fallthru
              _
          $region36: #{conv_ffn_forward.6} parent=31 // pred_fallthru
            _
          %329 = vnop
        $region32: #{conv_ffn_forward.6} parent=27 // pred_fallthru
          _
        // Predicated region
        $region70: #{conv_ffn_forward.6} parent=27 // pred_check
          %p330 = pneg %p116
        $region71: #{conv_ffn_forward.6} parent=27 // pred_check_branch
          %332 = sbr.rel (%p330) target = $region73
        $region72: #{conv_ffn_forward.6} parent=27 // pred_region
          %s333 = sand.u32 %s106, 1
          %s334 = sand.u32 %s106, 1
          %s335 = smul.addr %s334, 16
          %s336 = scalar_lea.vmem [#allocation4], %s335
          %s337 = smul.addr %s22, 8
          %s338 = scalar_lea.vmem %s3, %s337
          // Predicated region
          $region74: #{conv_ffn_forward.6} parent=72 // pred_check
            _
          $region75: #{conv_ffn_forward.6} parent=72 // pred_check_branch
            %340 = sbr.rel (0) target = $region77
          $region76: #{conv_ffn_forward.6} parent=72 // pred_region
            // Predicated region
            $region78: #{conv_ffn_forward.6} parent=76 // pred_check
              _
            $region79: #{conv_ffn_forward.6} parent=76 // pred_check_branch
              %342 = sbr.rel (0) target = $region81
            $region80: #{conv_ffn_forward.6} parent=76 // pred_region
              // Predicated region
              $region93: #{conv_ffn_forward.6} parent=80 // pred_check
                _
              $region94: #{conv_ffn_forward.6} parent=80 // pred_check_branch
                %360 = sbr.rel (0) target = $region96
              $region95: #{conv_ffn_forward.6} parent=80 // pred_region
                loop: start=0, step=1, limit=1
                $region97: #{conv_ffn_forward.6} parent=95 // loop_pre_header
                  _
                $region98: #{conv_ffn_forward.6} parent=95 // loop_header
                  %s362 = sphi 0, %s366
                  %p363 = scmp.ge.s32.totalorder %s362, 1
                  %s367 = sphi %s338, %s338
                  %s368 = sphi %s336, %s336
                $region99: #{conv_ffn_forward.6} parent=95 // loop_header_branch
                  %365 = sbr.rel (%p363) target = $region103
                $region100: #{conv_ffn_forward.6} parent=95 // loop_body
                  %v369 = vld [vmem:[%s367] sm:$0xff]
                  %370 = vst [vmem:[%s368] sm:$0xff] %v369
                  %v371 = vld [vmem:[%s367 + $0x10] sm:$0xff]
                  %372 = vst [vmem:[%s368 + $0x8] sm:$0xff] %v371
                $region101: #{conv_ffn_forward.6} parent=95 // loop_footer
                  %s366 = sadd.s32 1, %s362
                $region102: #{conv_ffn_forward.6} parent=95 // loop_footer_branch
                  %361 = sbr.rel target = $region98
                $region103: #{conv_ffn_forward.6} parent=95 // loop_exit
                  _
              $region96: #{conv_ffn_forward.6} parent=80 // pred_fallthru
                _
              // Predicated region
              $region104: #{conv_ffn_forward.6} parent=80 // pred_check
                _
              $region105: #{conv_ffn_forward.6} parent=80 // pred_check_branch
                %374 = sbr.rel target = $region107
              $region106: #{conv_ffn_forward.6} parent=80 // pred_region
                _
              $region107: #{conv_ffn_forward.6} parent=80 // pred_fallthru
                _
            $region81: #{conv_ffn_forward.6} parent=76 // pred_fallthru
              _
            // Predicated region
            $region82: #{conv_ffn_forward.6} parent=76 // pred_check
              _
            $region83: #{conv_ffn_forward.6} parent=76 // pred_check_branch
              %344 = sbr.rel target = $region85
            $region84: #{conv_ffn_forward.6} parent=76 // pred_region
              %s346 = ssub.s32 256, 1
              loop: start=0, step=1, limit=1
              $region86: #{conv_ffn_forward.6} parent=84 // loop_pre_header
                _
              $region87: #{conv_ffn_forward.6} parent=84 // loop_header
                %s348 = sphi 0, %s352
                %p349 = scmp.ge.s32.totalorder %s348, 1
                %s353 = sphi %s338, %s338
                %s354 = sphi %s336, %s336
              $region88: #{conv_ffn_forward.6} parent=84 // loop_header_branch
                %351 = sbr.rel (%p349) target = $region92
              $region89: #{conv_ffn_forward.6} parent=84 // loop_body
                %v355 = vld [vmem:[%s353] sm:%s346]
                %356 = vst [vmem:[%s354] sm:%s346] %v355
                %v357 = vld [vmem:[%s353 + $0x10] sm:%s346]
                %358 = vst [vmem:[%s354 + $0x8] sm:%s346] %v357
              $region90: #{conv_ffn_forward.6} parent=84 // loop_footer
                %s352 = sadd.s32 1, %s348
              $region91: #{conv_ffn_forward.6} parent=84 // loop_footer_branch
                %347 = sbr.rel target = $region87
              $region92: #{conv_ffn_forward.6} parent=84 // loop_exit
                _
            $region85: #{conv_ffn_forward.6} parent=76 // pred_fallthru
              _
          $region77: #{conv_ffn_forward.6} parent=72 // pred_fallthru
            _
          %375 = vnop
        $region73: #{conv_ffn_forward.6} parent=27 // pred_fallthru
          _
        // Predicated region
        $region108: #{conv_ffn_forward.6} parent=27 // pred_check
          %p376 = pneg %p142
        $region109: #{conv_ffn_forward.6} parent=27 // pred_check_branch
          %378 = sbr.rel (%p376) target = $region111
        $region110: #{conv_ffn_forward.6} parent=27 // pred_region
          %p379 = scmp.lt.s32.totalorder %s22, 1
          %s380 = scalar_select %p379, %s22, 1
          %s381 = scalar_lea.vmem %s4, %s380
        $region111: #{conv_ffn_forward.6} parent=27 // pred_fallthru
          _
        // Predicated region
        $region112: #{conv_ffn_forward.6} parent=27 // pred_check
          %p382 = pneg %p168
        $region113: #{conv_ffn_forward.6} parent=27 // pred_check_branch
          %384 = sbr.rel (%p382) target = $region115
        $region114: #{conv_ffn_forward.6} parent=27 // pred_region
          %s385 = smul.u32 16, %s22
          %p386 = scmp.lt.s32.totalorder %s385, 31
          %s387 = scalar_select %p386, %s385, 31
          %s388 = smul.addr %s387, 4
          %s389 = scalar_lea.vmem %s5, %s388
          %s390 = smul.u32 16, %s22
        $region115: #{conv_ffn_forward.6} parent=27 // pred_fallthru
          _
      $region28: #{conv_ffn_forward.6} parent=5 // pred_fallthru
        _
      %p391 = scmp.le.s32.totalorder 1, %s14
      %p392 = scmp.lt.s32.totalorder %s14, 5
      %p393 = pnand %p391, %p392
      %p394 = pneg %p393
      // Predicated region
      $region116: #{conv_ffn_forward.6} parent=5 // pred_check
        _
      $region117: #{conv_ffn_forward.6} parent=5 // pred_check_branch
        %396 = sbr.rel (%p393) target = $region119
      $region118: #{conv_ffn_forward.6} parent=5 // pred_region
        %s397 = ssub.s32 %s14, 1
        %s398 = sand.u32 %s41, 1
        %s399 = sand.u32 %s41, 1
        %s400 = smul.addr %s399, 32
        %s401 = scalar_lea.vmem [#allocation3], %s400
        // Predicated region
        $region120: #{conv_ffn_forward.6} parent=118 // pred_check
          %p402 = pneg %p54
        $region121: #{conv_ffn_forward.6} parent=118 // pred_check_branch
          %404 = sbr.rel (%p402) target = $region123
        $region122: #{conv_ffn_forward.6} parent=118 // pred_region
          _
        $region123: #{conv_ffn_forward.6} parent=118 // pred_fallthru
          _
        %s405 = sand.u32 %s109, 1
        %s406 = sand.u32 %s109, 1
        %s407 = smul.addr %s406, 16
        %s408 = scalar_lea.vmem [#allocation4], %s407
        // Predicated region
        $region124: #{conv_ffn_forward.6} parent=118 // pred_check
          %p409 = pneg %p122
        $region125: #{conv_ffn_forward.6} parent=118 // pred_check_branch
          %411 = sbr.rel (%p409) target = $region127
        $region126: #{conv_ffn_forward.6} parent=118 // pred_region
          _
        $region127: #{conv_ffn_forward.6} parent=118 // pred_fallthru
          _
        %s412 = sand.u32 %s41, 1
        %s413 = sand.u32 %s41, 1
        %s414 = smul.addr %s413, 32
        %s415 = scalar_lea.vmem [#allocation3], %s414
        %p416 = pneg %p54
        %p417 = pneg %p51
        %p418 = pneg %p75
        %p419 = pneg %p72
        %p420 = pneg %p96
        %p421 = pneg %p93
        %s422 = sand.u32 %s109, 1
        %s423 = sand.u32 %s109, 1
        %s424 = smul.addr %s423, 16
        %s425 = scalar_lea.vmem [#allocation4], %s424
        %p426 = pneg %p122
        %p427 = pneg %p119
        %p428 = scmp.lt.s32.totalorder %s24, 1
        %s429 = scalar_select %p428, %s24, 1
        %s430 = scalar_lea.vmem %s4, %s429
        %p431 = pneg %p148
        %p432 = pneg %p145
        %s433 = smul.u32 16, %s24
        %p434 = scmp.lt.s32.totalorder %s433, 31
        %s435 = scalar_select %p434, %s433, 31
        %s436 = smul.addr %s435, 4
        %s437 = scalar_lea.vmem %s5, %s436
        %p438 = pneg %p174
        %p439 = pneg %p171
        %p440 = pneg %p195
        %p441 = pneg %p192
        %p442 = pneg %p221
        %p443 = pneg %p218
        %s444 = sand.u32 %s208, 1
        %s445 = sand.u32 %s208, 1
        %s446 = smul.addr %s445, 64
        %s447 = scalar_lea.vmem [#allocation5], %s446
        %p448 = scmp.lt.s32.totalorder %s24, 1
        %s449 = scalar_select %p448, %s24, 1
        %s450 = scalar_lea.vmem %s4, %s449
        %s451 = smul.u32 16, %s24
        %p452 = scmp.lt.s32.totalorder %s451, 31
        %s453 = scalar_select %p452, %s451, 31
        %s454 = smul.addr %s453, 4
        %s455 = scalar_lea.vmem %s5, %s454
        %s456 = smul.u32 16, %s24
        %p458 = scmp.eq.s32.totalorder %s24, 0
        // Predicated region
        $region128: #{conv_ffn_forward.6} parent=118 // pred_check
          %p459 = pneg %p458
        $region129: #{conv_ffn_forward.6} parent=118 // pred_check_branch
          %461 = sbr.rel (%p459) target = $region131
        $region130: #{conv_ffn_forward.6} parent=118 // pred_region
          %462 = vst [vmem:[#allocation2] sm:$0xff] 0.0
          %463 = vst [vmem:[#allocation2 + $0x8] sm:$0xff] 0.0
          %464 = vst [vmem:[#allocation2 + $0x10] sm:$0xff] 0.0
          %465 = vst [vmem:[#allocation2 + $0x18] sm:$0xff] 0.0
          %466 = vst [vmem:[#allocation2 + $0x20] sm:$0xff] 0.0
          %467 = vst [vmem:[#allocation2 + $0x28] sm:$0xff] 0.0
          %468 = vst [vmem:[#allocation2 + $0x30] sm:$0xff] 0.0
          %469 = vst [vmem:[#allocation2 + $0x38] sm:$0xff] 0.0
        $region131: #{conv_ffn_forward.6} parent=118 // pred_fallthru
          _
        %v470 = vld [vmem:[%s401] sm:$0xf]
        %v471 = vld [vmem:[%s401 + $0x4] sm:$0xf]
        %v472 = vld [vmem:[%s401 + $0x8] sm:$0xf]
        %v473 = vld [vmem:[%s401 + $0xc] sm:$0xf]
        %v474 = vld [vmem:[%s401 + $0x10] sm:$0xf]
        %v475 = vld [vmem:[%s401 + $0x14] sm:$0xf]
        %v476 = vld [vmem:[%s401 + $0x18] sm:$0xf]
        %v477 = vld [vmem:[%s401 + $0x1c] sm:$0xf]
        %v478 = vunpack.c.l.bf16 %v470
        %v479 = vunpack.c.l.bf16 %v471
        %v480 = vunpack.c.l.bf16 %v472
        %v481 = vunpack.c.l.bf16 %v473
        %v482 = vunpack.c.l.bf16 %v474
        %v483 = vunpack.c.l.bf16 %v475
        %v484 = vunpack.c.l.bf16 %v476
        %v485 = vunpack.c.l.bf16 %v477
        %v486 = vld [vmem:[%s1] sm:$0xff]
        %v487 = vld [vmem:[%s1 + $0x8] sm:$0xff]
        %v488 = vld [vmem:[%s1 + $0x10] sm:$0xff]
        %v489 = vld [vmem:[%s1 + $0x18] sm:$0xff]
        %v490 = vld [vmem:[%s1 + $0x20] sm:$0xff]
        %v491 = vld [vmem:[%s1 + $0x28] sm:$0xff]
        %v492 = vld [vmem:[%s1 + $0x30] sm:$0xff]
        %v493 = vld [vmem:[%s1 + $0x38] sm:$0xff]
        %v494 = vld [vmem:[%s2] sm:$0xff]
        %v495 = vld [vmem:[%s2 + $0x8] sm:$0xff]
        %v496 = vld [vmem:[%s2 + $0x10] sm:$0xff]
        %v497 = vld [vmem:[%s2 + $0x18] sm:$0xff]
        %v498 = vld [vmem:[%s2 + $0x20] sm:$0xff]
        %v499 = vld [vmem:[%s2 + $0x28] sm:$0xff]
        %v500 = vld [vmem:[%s2 + $0x30] sm:$0xff]
        %v501 = vld [vmem:[%s2 + $0x38] sm:$0xff]
        %v502 = vld [vmem:[%s408] sm:$0xff]
        %v503 = vld [vmem:[%s408 + $0x8] sm:$0x1]
        %vm512 = vcmask 1040384
        %v513 = vrot.slane %v478, 7
        %v514 = vrot.slane %v479, 7
        %v515 = vsel %vm512, %v513, %v514
        %v516 = vrot.slane %v480, 7
        %v517 = vsel %vm512, %v514, %v516
        %v518 = vrot.slane %v481, 7
        %v519 = vsel %vm512, %v516, %v518
        %v520 = vrot.slane %v482, 7
        %v521 = vsel %vm512, %v518, %v520
        %v522 = vrot.slane %v483, 7
        %v523 = vsel %vm512, %v520, %v522
        %v524 = vrot.slane %v484, 7
        %v525 = vsel %vm512, %v522, %v524
        %v526 = vrot.slane %v485, 7
        %v527 = vsel %vm512, %v524, %v526
        %v536 = vsel %vm512, 0.0, %v513
        %538 = vset.pattern.permute.xlu0 0
        %539 = vperm.xlu0 %538, %v486
        %v540 = vpop.permute.xlu0 %539
        %543 = vset.pattern.permute.xlu0 0
        %544 = vperm.xlu0 %543, %v487
        %v545 = vpop.permute.xlu0 %544
        %548 = vset.pattern.permute.xlu0 0
        %549 = vperm.xlu0 %548, %v488
        %v550 = vpop.permute.xlu0 %549
        %553 = vset.pattern.permute.xlu0 0
        %554 = vperm.xlu0 %553, %v489
        %v555 = vpop.permute.xlu0 %554
        %558 = vset.pattern.permute.xlu0 0
        %559 = vperm.xlu0 %558, %v490
        %v560 = vpop.permute.xlu0 %559
        %563 = vset.pattern.permute.xlu0 0
        %564 = vperm.xlu0 %563, %v491
        %v565 = vpop.permute.xlu0 %564
        %568 = vset.pattern.permute.xlu0 0
        %569 = vperm.xlu0 %568, %v492
        %v570 = vpop.permute.xlu0 %569
        %573 = vset.pattern.permute.xlu0 0
        %574 = vperm.xlu0 %573, %v493
        %v575 = vpop.permute.xlu0 %574
        %v577 = vmul.f32 %v536, %v540
        %v578 = vmul.f32 %v515, %v545
        %v579 = vmul.f32 %v517, %v550
        %v580 = vmul.f32 %v519, %v555
        %v581 = vmul.f32 %v521, %v560
        %v582 = vmul.f32 %v523, %v565
        %v583 = vmul.f32 %v525, %v570
        %v584 = vmul.f32 %v527, %v575
        %vm585 = vcmask 1046528
        %v586 = vrot.slane %v478, 1
        %v587 = vrot.slane %v479, 1
        %v588 = vsel %vm585, %v586, %v587
        %v589 = vrot.slane %v480, 1
        %v590 = vsel %vm585, %v587, %v589
        %v591 = vrot.slane %v481, 1
        %v592 = vsel %vm585, %v589, %v591
        %v593 = vrot.slane %v482, 1
        %v594 = vsel %vm585, %v591, %v593
        %v595 = vrot.slane %v483, 1
        %v596 = vsel %vm585, %v593, %v595
        %v597 = vrot.slane %v484, 1
        %v598 = vsel %vm585, %v595, %v597
        %v599 = vrot.slane %v485, 1
        %v600 = vsel %vm585, %v597, %v599
        %v609 = vsel %vm585, %v599, 0.0
        %611 = vset.pattern.permute.xlu0 0
        %612 = vperm.xlu0 %611, %v494
        %v613 = vpop.permute.xlu0 %612
        %616 = vset.pattern.permute.xlu0 0
        %617 = vperm.xlu0 %616, %v495
        %v618 = vpop.permute.xlu0 %617
        %621 = vset.pattern.permute.xlu0 0
        %622 = vperm.xlu0 %621, %v496
        %v623 = vpop.permute.xlu0 %622
        %626 = vset.pattern.permute.xlu0 0
        %627 = vperm.xlu0 %626, %v497
        %v628 = vpop.permute.xlu0 %627
        %631 = vset.pattern.permute.xlu0 0
        %632 = vperm.xlu0 %631, %v498
        %v633 = vpop.permute.xlu0 %632
        %636 = vset.pattern.permute.xlu0 0
        %637 = vperm.xlu0 %636, %v499
        %v638 = vpop.permute.xlu0 %637
        %641 = vset.pattern.permute.xlu0 0
        %642 = vperm.xlu0 %641, %v500
        %v643 = vpop.permute.xlu0 %642
        %646 = vset.pattern.permute.xlu0 0
        %647 = vperm.xlu0 %646, %v501
        %v648 = vpop.permute.xlu0 %647
        %v650 = vmul.f32 %v588, %v613
        %v651 = vmul.f32 %v590, %v618
        %v652 = vmul.f32 %v592, %v623
        %v653 = vmul.f32 %v594, %v628
        %v654 = vmul.f32 %v596, %v633
        %v655 = vmul.f32 %v598, %v638
        %v656 = vmul.f32 %v600, %v643
        %v657 = vmul.f32 %v609, %v648
        %v658 = vlaneseq
        %v659 = vshrl.u32 %v658, 7
        %v660 = vsub.s32 0, %v659
        %v661 = vrot.slane %v502, %v660
        %v662 = vmul.f32 %v661, 0.0
        %v663 = vmul.f32 %v577, %v661
        %v664 = vmul.f32 %v578, %v661
        %v665 = vmul.f32 %v579, %v661
        %v666 = vmul.f32 %v580, %v661
        %v667 = vmul.f32 %v581, %v661
        %v668 = vmul.f32 %v582, %v661
        %v669 = vmul.f32 %v583, %v661
        %v670 = vadd.f32 %v662, 0.0
        %v671 = vadd.f32 %v663, 0.0
        %v672 = vadd.f32 %v664, 0.0
        %v673 = vadd.f32 %v665, 0.0
        %v674 = vadd.f32 %v666, 0.0
        %v675 = vadd.f32 %v667, 0.0
        %v676 = vadd.f32 %v668, 0.0
        %v677 = vadd.f32 %v669, 0.0
        %v678 = vlaneseq
        %v679 = vshrl.u32 %v678, 7
        %v680 = vsub.s32 1, %v679
        %v681 = vrot.slane %v502, %v680
        %v682 = vmul.f32 %v681, 0.0
        %v683 = vmul.f32 %v478, %v681
        %v684 = vmul.f32 %v479, %v681
        %v685 = vmul.f32 %v480, %v681
        %v686 = vmul.f32 %v481, %v681
        %v687 = vmul.f32 %v482, %v681
        %v688 = vmul.f32 %v483, %v681
        %v689 = vmul.f32 %v484, %v681
        %v690 = vadd.f32 %v670, %v682
        %v691 = vadd.f32 %v671, %v683
        %v692 = vadd.f32 %v672, %v684
        %v693 = vadd.f32 %v673, %v685
        %v694 = vadd.f32 %v674, %v686
        %v695 = vadd.f32 %v675, %v687
        %v696 = vadd.f32 %v676, %v688
        %v697 = vadd.f32 %v677, %v689
        %v698 = vlaneseq
        %v699 = vshrl.u32 %v698, 7
        %v700 = vsub.s32 2, %v699
        %v701 = vrot.slane %v502, %v700
        %v702 = vmul.f32 %v701, 0.0
        %v703 = vmul.f32 %v650, %v701
        %v704 = vmul.f32 %v651, %v701
        %v705 = vmul.f32 %v652, %v701
        %v706 = vmul.f32 %v653, %v701
        %v707 = vmul.f32 %v654, %v701
        %v708 = vmul.f32 %v655, %v701
        %v709 = vmul.f32 %v656, %v701
        %v710 = vadd.f32 %v690, %v702
        %v711 = vadd.f32 %v691, %v703
        %v712 = vadd.f32 %v692, %v704
        %v713 = vadd.f32 %v693, %v705
        %v714 = vadd.f32 %v694, %v706
        %v715 = vadd.f32 %v695, %v707
        %v716 = vadd.f32 %v696, %v708
        %v717 = vadd.f32 %v697, %v709
        %v718 = vlaneseq
        %v719 = vshrl.u32 %v718, 7
        %v720 = vsub.s32 3, %v719
        %v721 = vrot.slane %v502, %v720
        %v722 = vmul.f32 %v577, %v721
        %v723 = vmul.f32 %v578, %v721
        %v724 = vmul.f32 %v579, %v721
        %v725 = vmul.f32 %v580, %v721
        %v726 = vmul.f32 %v581, %v721
        %v727 = vmul.f32 %v582, %v721
        %v728 = vmul.f32 %v583, %v721
        %v729 = vmul.f32 %v584, %v721
        %v730 = vadd.f32 %v710, %v722
        %v731 = vadd.f32 %v711, %v723
        %v732 = vadd.f32 %v712, %v724
        %v733 = vadd.f32 %v713, %v725
        %v734 = vadd.f32 %v714, %v726
        %v735 = vadd.f32 %v715, %v727
        %v736 = vadd.f32 %v716, %v728
        %v737 = vadd.f32 %v717, %v729
        %v738 = vlaneseq
        %v739 = vshrl.u32 %v738, 7
        %v740 = vsub.s32 4, %v739
        %v741 = vrot.slane %v502, %v740
        %v742 = vmul.f32 %v478, %v741
        %v743 = vmul.f32 %v479, %v741
        %v744 = vmul.f32 %v480, %v741
        %v745 = vmul.f32 %v481, %v741
        %v746 = vmul.f32 %v482, %v741
        %v747 = vmul.f32 %v483, %v741
        %v748 = vmul.f32 %v484, %v741
        %v749 = vmul.f32 %v485, %v741
        %v750 = vadd.f32 %v730, %v742
        %v751 = vadd.f32 %v731, %v743
        %v752 = vadd.f32 %v732, %v744
        %v753 = vadd.f32 %v733, %v745
        %v754 = vadd.f32 %v734, %v746
        %v755 = vadd.f32 %v735, %v747
        %v756 = vadd.f32 %v736, %v748
        %v757 = vadd.f32 %v737, %v749
        %v758 = vlaneseq
        %v759 = vshrl.u32 %v758, 7
        %v760 = vsub.s32 5, %v759
        %v761 = vrot.slane %v502, %v760
        %v762 = vmul.f32 %v650, %v761
        %v763 = vmul.f32 %v651, %v761
        %v764 = vmul.f32 %v652, %v761
        %v765 = vmul.f32 %v653, %v761
        %v766 = vmul.f32 %v654, %v761
        %v767 = vmul.f32 %v655, %v761
        %v768 = vmul.f32 %v656, %v761
        %v769 = vmul.f32 %v657, %v761
        %v770 = vadd.f32 %v750, %v762
        %v771 = vadd.f32 %v751, %v763
        %v772 = vadd.f32 %v752, %v764
        %v773 = vadd.f32 %v753, %v765
        %v774 = vadd.f32 %v754, %v766
        %v775 = vadd.f32 %v755, %v767
        %v776 = vadd.f32 %v756, %v768
        %v777 = vadd.f32 %v757, %v769
        %v778 = vlaneseq
        %v779 = vshrl.u32 %v778, 7
        %v780 = vsub.s32 6, %v779
        %v781 = vrot.slane %v502, %v780
        %v782 = vmul.f32 %v578, %v781
        %v783 = vmul.f32 %v579, %v781
        %v784 = vmul.f32 %v580, %v781
        %v785 = vmul.f32 %v581, %v781
        %v786 = vmul.f32 %v582, %v781
        %v787 = vmul.f32 %v583, %v781
        %v788 = vmul.f32 %v584, %v781
        %v789 = vmul.f32 %v781, 0.0
        %v790 = vadd.f32 %v770, %v782
        %v791 = vadd.f32 %v771, %v783
        %v792 = vadd.f32 %v772, %v784
        %v793 = vadd.f32 %v773, %v785
        %v794 = vadd.f32 %v774, %v786
        %v795 = vadd.f32 %v775, %v787
        %v796 = vadd.f32 %v776, %v788
        %v797 = vadd.f32 %v777, %v789
        %v798 = vlaneseq
        %v799 = vshrl.u32 %v798, 7
        %v800 = vsub.s32 7, %v799
        %v801 = vrot.slane %v502, %v800
        %v802 = vmul.f32 %v479, %v801
        %v803 = vmul.f32 %v480, %v801
        %v804 = vmul.f32 %v481, %v801
        %v805 = vmul.f32 %v482, %v801
        %v806 = vmul.f32 %v483, %v801
        %v807 = vmul.f32 %v484, %v801
        %v808 = vmul.f32 %v485, %v801
        %v809 = vmul.f32 %v801, 0.0
        %v810 = vadd.f32 %v790, %v802
        %v811 = vadd.f32 %v791, %v803
        %v812 = vadd.f32 %v792, %v804
        %v813 = vadd.f32 %v793, %v805
        %v814 = vadd.f32 %v794, %v806
        %v815 = vadd.f32 %v795, %v807
        %v816 = vadd.f32 %v796, %v808
        %v817 = vadd.f32 %v797, %v809
        %v818 = vlaneseq
        %v819 = vshrl.u32 %v818, 7
        %v820 = vsub.s32 0, %v819
        %v821 = vrot.slane %v503, %v820
        %v822 = vmul.f32 %v651, %v821
        %v823 = vmul.f32 %v652, %v821
        %v824 = vmul.f32 %v653, %v821
        %v825 = vmul.f32 %v654, %v821
        %v826 = vmul.f32 %v655, %v821
        %v827 = vmul.f32 %v656, %v821
        %v828 = vmul.f32 %v657, %v821
        %v829 = vmul.f32 %v821, 0.0
        %v830 = vadd.f32 %v810, %v822
        %v831 = vadd.f32 %v811, %v823
        %v832 = vadd.f32 %v812, %v824
        %v833 = vadd.f32 %v813, %v825
        %v834 = vadd.f32 %v814, %v826
        %v835 = vadd.f32 %v815, %v827
        %v836 = vadd.f32 %v816, %v828
        %v837 = vadd.f32 %v817, %v829
        %v838 = vld [vmem:[%s450] sm:$0x1]
        %v840 = vlaneseq
        %v841 = vshrl.u32 %v840, 7
        %v842 = vsub.s32 0, %v841
        %v843 = vrot.slane %v838, %v842
        %v845 = vadd.f32 %v830, %v843
        %v846 = vadd.f32 %v831, %v843
        %v847 = vadd.f32 %v832, %v843
        %v848 = vadd.f32 %v833, %v843
        %v849 = vadd.f32 %v834, %v843
        %v850 = vadd.f32 %v835, %v843
        %v851 = vadd.f32 %v836, %v843
        %v852 = vadd.f32 %v837, %v843
        %v853 = vmul.f32 %v845, 0.70710677
        %v854 = vmul.f32 %v846, 0.70710677
        %v855 = vmul.f32 %v847, 0.70710677
        %v856 = vmul.f32 %v848, 0.70710677
        %v857 = vmul.f32 %v849, 0.70710677
        %v858 = vmul.f32 %v850, 0.70710677
        %v859 = vmul.f32 %v851, 0.70710677
        %v860 = vmul.f32 %v852, 0.70710677
        %v861 = vand.u32 2147483647, %v853
        %v862 = vand.u32 2147483647, %v854
        %v863 = vand.u32 2147483647, %v855
        %v864 = vand.u32 2147483647, %v856
        %v865 = vand.u32 2147483647, %v857
        %v866 = vand.u32 2147483647, %v858
        %v867 = vand.u32 2147483647, %v859
        %v868 = vand.u32 2147483647, %v860
        %v869 = vmul.f32 %v861, 0.3275911
        %v870 = vmul.f32 %v862, 0.3275911
        %v871 = vmul.f32 %v863, 0.3275911
        %v872 = vmul.f32 %v864, 0.3275911
        %v873 = vmul.f32 %v865, 0.3275911
        %v874 = vmul.f32 %v866, 0.3275911
        %v875 = vmul.f32 %v867, 0.3275911
        %v876 = vmul.f32 %v868, 0.3275911
        %v877 = vadd.f32 %v869, 1.0
        %v878 = vadd.f32 %v870, 1.0
        %v879 = vadd.f32 %v871, 1.0
        %v880 = vadd.f32 %v872, 1.0
        %v881 = vadd.f32 %v873, 1.0
        %v882 = vadd.f32 %v874, 1.0
        %v883 = vadd.f32 %v875, 1.0
        %v884 = vadd.f32 %v876, 1.0
        %v885 = vrcp.pop %v877
        %v886 = vrcp.pop %v878
        %v887 = vrcp.pop %v879
        %v888 = vrcp.pop %v880
        %v889 = vrcp.pop %v881
        %v890 = vrcp.pop %v882
        %v891 = vrcp.pop %v883
        %v892 = vrcp.pop %v884
        %v893 = vmul.f32 %v885, 1.0614054
        %v894 = vmul.f32 %v886, 1.0614054
        %v895 = vmul.f32 %v887, 1.0614054
        %v896 = vmul.f32 %v888, 1.0614054
        %v897 = vmul.f32 %v889, 1.0614054
        %v898 = vmul.f32 %v890, 1.0614054
        %v899 = vmul.f32 %v891, 1.0614054
        %v900 = vmul.f32 %v892, 1.0614054
        %v901 = vadd.f32 %v893, -1.4531521
        %v902 = vadd.f32 %v894, -1.4531521
        %v903 = vadd.f32 %v895, -1.4531521
        %v904 = vadd.f32 %v896, -1.4531521
        %v905 = vadd.f32 %v897, -1.4531521
        %v906 = vadd.f32 %v898, -1.4531521
        %v907 = vadd.f32 %v899, -1.4531521
        %v908 = vadd.f32 %v900, -1.4531521
        %v909 = vmul.f32 %v885, %v901
        %v910 = vmul.f32 %v886, %v902
        %v911 = vmul.f32 %v887, %v903
        %v912 = vmul.f32 %v888, %v904
        %v913 = vmul.f32 %v889, %v905
        %v914 = vmul.f32 %v890, %v906
        %v915 = vmul.f32 %v891, %v907
        %v916 = vmul.f32 %v892, %v908
        %v917 = vadd.f32 %v909, 1.4214138
        %v918 = vadd.f32 %v910, 1.4214138
        %v919 = vadd.f32 %v911, 1.4214138
        %v920 = vadd.f32 %v912, 1.4214138
        %v921 = vadd.f32 %v913, 1.4214138
        %v922 = vadd.f32 %v914, 1.4214138
        %v923 = vadd.f32 %v915, 1.4214138
        %v924 = vadd.f32 %v916, 1.4214138
        %v925 = vmul.f32 %v885, %v917
        %v926 = vmul.f32 %v886, %v918
        %v927 = vmul.f32 %v887, %v919
        %v928 = vmul.f32 %v888, %v920
        %v929 = vmul.f32 %v889, %v921
        %v930 = vmul.f32 %v890, %v922
        %v931 = vmul.f32 %v891, %v923
        %v932 = vmul.f32 %v892, %v924
        %v933 = vadd.f32 %v925, -0.28449672
        %v934 = vadd.f32 %v926, -0.28449672
        %v935 = vadd.f32 %v927, -0.28449672
        %v936 = vadd.f32 %v928, -0.28449672
        %v937 = vadd.f32 %v929, -0.28449672
        %v938 = vadd.f32 %v930, -0.28449672
        %v939 = vadd.f32 %v931, -0.28449672
        %v940 = vadd.f32 %v932, -0.28449672
        %v941 = vmul.f32 %v885, %v933
        %v942 = vmul.f32 %v886, %v934
        %v943 = vmul.f32 %v887, %v935
        %v944 = vmul.f32 %v888, %v936
        %v945 = vmul.f32 %v889, %v937
        %v946 = vmul.f32 %v890, %v938
        %v947 = vmul.f32 %v891, %v939
        %v948 = vmul.f32 %v892, %v940
        %v949 = vadd.f32 %v941, 0.2548296
        %v950 = vadd.f32 %v942, 0.2548296
        %v951 = vadd.f32 %v943, 0.2548296
        %v952 = vadd.f32 %v944, 0.2548296
        %v953 = vadd.f32 %v945, 0.2548296
        %v954 = vadd.f32 %v946, 0.2548296
        %v955 = vadd.f32 %v947, 0.2548296
        %v956 = vadd.f32 %v948, 0.2548296
        %v957 = vmul.f32 %v885, %v949
        %v958 = vmul.f32 %v886, %v950
        %v959 = vmul.f32 %v887, %v951
        %v960 = vmul.f32 %v888, %v952
        %v961 = vmul.f32 %v889, %v953
        %v962 = vmul.f32 %v890, %v954
        %v963 = vmul.f32 %v891, %v955
        %v964 = vmul.f32 %v892, %v956
        %v965 = vsub.f32 0.0, %v861
        %v966 = vsub.f32 0.0, %v862
        %v967 = vsub.f32 0.0, %v863
        %v968 = vsub.f32 0.0, %v864
        %v969 = vsub.f32 0.0, %v865
        %v970 = vsub.f32 0.0, %v866
        %v971 = vsub.f32 0.0, %v867
        %v972 = vsub.f32 0.0, %v868
        %v973 = vmul.f32 %v965, %v861
        %v974 = vmul.f32 %v966, %v862
        %v975 = vmul.f32 %v967, %v863
        %v976 = vmul.f32 %v968, %v864
        %v977 = vmul.f32 %v969, %v865
        %v978 = vmul.f32 %v970, %v866
        %v979 = vmul.f32 %v971, %v867
        %v980 = vmul.f32 %v972, %v868
        %v981 = vmul.f32 %v973, 1.442695
        %v982 = vpow.pop %v981
        %v983 = vmul.f32 %v974, 1.442695
        %v984 = vpow.pop %v983
        %v985 = vmul.f32 %v975, 1.442695
        %v986 = vpow.pop %v985
        %v987 = vmul.f32 %v976, 1.442695
        %v988 = vpow.pop %v987
        %v989 = vmul.f32 %v977, 1.442695
        %v990 = vpow.pop %v989
        %v991 = vmul.f32 %v978, 1.442695
        %v992 = vpow.pop %v991
        %v993 = vmul.f32 %v979, 1.442695
        %v994 = vpow.pop %v993
        %v995 = vmul.f32 %v980, 1.442695
        %v996 = vpow.pop %v995
        %v997 = vmul.f32 %v957, %v982
        %v998 = vmul.f32 %v958, %v984
        %v999 = vmul.f32 %v959, %v986
        %v1000 = vmul.f32 %v960, %v988
        %v1001 = vmul.f32 %v961, %v990
        %v1002 = vmul.f32 %v962, %v992
        %v1003 = vmul.f32 %v963, %v994
        %v1004 = vmul.f32 %v964, %v996
        %v1005 = vsub.f32 1.0, %v997
        %v1006 = vsub.f32 1.0, %v998
        %v1007 = vsub.f32 1.0, %v999
        %v1008 = vsub.f32 1.0, %v1000
        %v1009 = vsub.f32 1.0, %v1001
        %v1010 = vsub.f32 1.0, %v1002
        %v1011 = vsub.f32 1.0, %v1003
        %v1012 = vsub.f32 1.0, %v1004
        %vm1013 = vcmp.ge.f32.partialorder %v853, 0.0
        %vm1014 = vcmp.ge.f32.partialorder %v854, 0.0
        %vm1015 = vcmp.ge.f32.partialorder %v855, 0.0
        %vm1016 = vcmp.ge.f32.partialorder %v856, 0.0
        %vm1017 = vcmp.ge.f32.partialorder %v857, 0.0
        %vm1018 = vcmp.ge.f32.partialorder %v858, 0.0
        %vm1019 = vcmp.ge.f32.partialorder %v859, 0.0
        %vm1020 = vcmp.ge.f32.partialorder %v860, 0.0
        %v1021 = vsub.f32 0.0, %v1005
        %v1022 = vsub.f32 0.0, %v1006
        %v1023 = vsub.f32 0.0, %v1007
        %v1024 = vsub.f32 0.0, %v1008
        %v1025 = vsub.f32 0.0, %v1009
        %v1026 = vsub.f32 0.0, %v1010
        %v1027 = vsub.f32 0.0, %v1011
        %v1028 = vsub.f32 0.0, %v1012
        %v1029 = vsel %vm1013, %v1005, %v1021
        %v1030 = vsel %vm1014, %v1006, %v1022
        %v1031 = vsel %vm1015, %v1007, %v1023
        %v1032 = vsel %vm1016, %v1008, %v1024
        %v1033 = vsel %vm1017, %v1009, %v1025
        %v1034 = vsel %vm1018, %v1010, %v1026
        %v1035 = vsel %vm1019, %v1011, %v1027
        %v1036 = vsel %vm1020, %v1012, %v1028
        %v1037 = vmul.f32 %v845, 0.5
        %v1038 = vmul.f32 %v846, 0.5
        %v1039 = vmul.f32 %v847, 0.5
        %v1040 = vmul.f32 %v848, 0.5
        %v1041 = vmul.f32 %v849, 0.5
        %v1042 = vmul.f32 %v850, 0.5
        %v1043 = vmul.f32 %v851, 0.5
        %v1044 = vmul.f32 %v852, 0.5
        %v1045 = vadd.f32 %v1029, 1.0
        %v1046 = vadd.f32 %v1030, 1.0
        %v1047 = vadd.f32 %v1031, 1.0
        %v1048 = vadd.f32 %v1032, 1.0
        %v1049 = vadd.f32 %v1033, 1.0
        %v1050 = vadd.f32 %v1034, 1.0
        %v1051 = vadd.f32 %v1035, 1.0
        %v1052 = vadd.f32 %v1036, 1.0
        %v1053 = vmul.f32 %v1037, %v1045
        %v1054 = vmul.f32 %v1038, %v1046
        %v1055 = vmul.f32 %v1039, %v1047
        %v1056 = vmul.f32 %v1040, %v1048
        %v1057 = vmul.f32 %v1041, %v1049
        %v1058 = vmul.f32 %v1042, %v1050
        %v1059 = vmul.f32 %v1043, %v1051
        %v1060 = vmul.f32 %v1044, %v1052
        %v1061 = vld [vmem:[#allocation2] sm:$0xff]
        %v1062 = vld [vmem:[#allocation2 + $0x8] sm:$0xff]
        %v1063 = vld [vmem:[#allocation2 + $0x10] sm:$0xff]
        %v1064 = vld [vmem:[#allocation2 + $0x18] sm:$0xff]
        %v1065 = vld [vmem:[#allocation2 + $0x20] sm:$0xff]
        %v1066 = vld [vmem:[#allocation2 + $0x28] sm:$0xff]
        %v1067 = vld [vmem:[#allocation2 + $0x30] sm:$0xff]
        %v1068 = vld [vmem:[#allocation2 + $0x38] sm:$0xff]
        %v1069 = vpack.c.bf16 %v1054, %v1053
        %v1070 = vpack.c.bf16 %v1056, %v1055
        %v1071 = vpack.c.bf16 %v1058, %v1057
        %v1072 = vpack.c.bf16 %v1060, %v1059
        %v1073 = vld [vmem:[%s455] sm:$0xf]
        %v1074 = vld [vmem:[%s455 + $0x4] sm:$0xf]
        %v1075 = vld [vmem:[%s455 + $0x8] sm:$0xf]
        %v1076 = vld [vmem:[%s455 + $0xc] sm:$0xf]
        %v1077 = vld [vmem:[%s455 + $0x10] sm:$0xf]
        %v1078 = vld [vmem:[%s455 + $0x14] sm:$0xf]
        %v1079 = vld [vmem:[%s455 + $0x18] sm:$0xf]
        %v1080 = vld [vmem:[%s455 + $0x1c] sm:$0xf]
        %v1081 = vld [vmem:[%s455 + $0x20] sm:$0xf]
        %v1082 = vld [vmem:[%s455 + $0x24] sm:$0xf]
        %v1083 = vld [vmem:[%s455 + $0x28] sm:$0xf]
        %v1084 = vld [vmem:[%s455 + $0x2c] sm:$0xf]
        %v1085 = vld [vmem:[%s455 + $0x30] sm:$0xf]
        %v1086 = vld [vmem:[%s455 + $0x34] sm:$0xf]
        %v1087 = vld [vmem:[%s455 + $0x38] sm:$0xf]
        %v1088 = vld [vmem:[%s455 + $0x3c] sm:$0xf]
        %v1105 = vunpack.c.l.b16 %v1073
        %v1106 = vunpack.c.l.b16 %v1074
        %v1107 = vunpack.c.l.b16 %v1075
        %v1108 = vunpack.c.l.b16 %v1076
        %v1109 = vunpack.c.l.b16 %v1077
        %v1110 = vunpack.c.l.b16 %v1078
        %v1111 = vunpack.c.l.b16 %v1079
        %v1112 = vunpack.c.l.b16 %v1080
        %v1113 = vunpack.c.l.b16 %v1081
        %v1114 = vunpack.c.l.b16 %v1082
        %v1115 = vunpack.c.l.b16 %v1083
        %v1116 = vunpack.c.l.b16 %v1084
        %v1117 = vunpack.c.l.b16 %v1085
        %v1118 = vunpack.c.l.b16 %v1086
        %v1119 = vunpack.c.l.b16 %v1087
        %v1120 = vunpack.c.l.b16 %v1088
        %v1121 = vpack.c.b16 %v1106, %v1105
        %v1122 = vpack.c.b16 %v1108, %v1107
        %v1123 = vpack.c.b16 %v1110, %v1109
        %v1124 = vpack.c.b16 %v1112, %v1111
        %v1125 = vpack.c.b16 %v1114, %v1113
        %v1126 = vpack.c.b16 %v1116, %v1115
        %v1127 = vpack.c.b16 %v1118, %v1117
        %v1128 = vpack.c.b16 %v1120, %v1119
        %1137 = vmatprep.subr.bf16.mxu0 0
        %1138 = vmatpush1.bf16.msra.mxu0 %v1128
        %1139 = vmatprep.subr.bf16.mxu0 0
        %1140 = vmatpush1.bf16.msra.mxu0 %v1127
        %1141 = vmatprep.subr.bf16.mxu0 0
        %1142 = vmatpush1.bf16.msra.mxu0 %v1126
        %1143 = vmatprep.subr.bf16.mxu0 0
        %1144 = vmatpush1.bf16.msra.mxu0 %v1125
        %1145 = vmatprep.subr.bf16.mxu0 0
        %1146 = vmatpush1.bf16.msra.mxu0 %v1124
        %1147 = vmatprep.subr.bf16.mxu0 0
        %1148 = vmatpush1.bf16.msra.mxu0 %v1123
        %1149 = vmatprep.subr.bf16.mxu0 0
        %1150 = vmatpush1.bf16.msra.mxu0 %v1122
        %1151 = vmatprep.subr.bf16.mxu0 0
        %1152 = vmatpush1.bf16.msra.mxu0 %v1121
        %1153 = vmatprep.subr.bf16.mxu0 0
        %1154 = vmatpush2.bf16.msra.mxu0 0
        %1155 = vmatprep.subr.bf16.mxu0 0
        %1156 = vmatpush2.bf16.msra.mxu0 0
        %1157 = vmatprep.subr.bf16.mxu0 0
        %1158 = vmatpush2.bf16.msra.mxu0 0
        %1159 = vmatprep.subr.bf16.mxu0 0
        %1160 = vmatpush2.bf16.msra.mxu0 0
        %1161 = vmatprep.subr.bf16.mxu0 0
        %1162 = vmatpush2.bf16.msra.mxu0 0
        %1163 = vmatprep.subr.bf16.mxu0 0
        %1164 = vmatpush2.bf16.msra.mxu0 0
        %1165 = vmatprep.subr.bf16.mxu0 0
        %1166 = vmatpush2.bf16.msra.mxu0 0
        %1167 = vmatprep.subr.bf16.mxu0 0
        %1168 = vmatpush2.bf16.msra.mxu0 0
        %1169 = vmatprep.mubr.bf16.mxu0 0
        %1170 = vmatmul.mubr.bf16.gmra.mxu0 %v1069
        %v1171 = vpop.f32.mrf.mxu0
        %v1172 = vadd.f32 0.0, %v1171
        %v1173 = vpop.f32.mrf.mxu0
        %v1174 = vpop.f32.mrf.mxu0
        %v1175 = vadd.f32 0.0, %v1174
        %v1176 = vpop.f32.mrf.mxu0
        %1177 = vmatprep.mubr.bf16.mxu0 0
        %1178 = vmatmul.mubr.bf16.gmra.mxu0 %v1070
        %v1179 = vpop.f32.mrf.mxu0
        %v1180 = vadd.f32 0.0, %v1179
        %v1181 = vpop.f32.mrf.mxu0
        %v1182 = vpop.f32.mrf.mxu0
        %v1183 = vadd.f32 0.0, %v1182
        %v1184 = vpop.f32.mrf.mxu0
        %1185 = vmatprep.mubr.bf16.mxu0 0
        %1186 = vmatmul.mubr.bf16.gmra.mxu0 %v1071
        %v1187 = vpop.f32.mrf.mxu0
        %v1188 = vadd.f32 0.0, %v1187
        %v1189 = vpop.f32.mrf.mxu0
        %v1190 = vpop.f32.mrf.mxu0
        %v1191 = vadd.f32 0.0, %v1190
        %v1192 = vpop.f32.mrf.mxu0
        %1193 = vmatprep.mubr.bf16.mxu0 0
        %1194 = vmatmul.mubr.bf16.gmra.mxu0 %v1072
        %v1195 = vpop.f32.mrf.mxu0
        %v1196 = vadd.f32 0.0, %v1195
        %v1197 = vpop.f32.mrf.mxu0
        %v1198 = vpop.f32.mrf.mxu0
        %v1199 = vadd.f32 0.0, %v1198
        %v1200 = vpop.f32.mrf.mxu0
        %1201 = vdwg.mxu0
        %v1202 = vadd.f32 %v1061, %v1172
        %v1203 = vadd.f32 %v1062, %v1175
        %v1204 = vadd.f32 %v1063, %v1180
        %v1205 = vadd.f32 %v1064, %v1183
        %v1206 = vadd.f32 %v1065, %v1188
        %v1207 = vadd.f32 %v1066, %v1191
        %v1208 = vadd.f32 %v1067, %v1196
        %v1209 = vadd.f32 %v1068, %v1199
        %1210 = vst [vmem:[#allocation2] sm:$0xff] %v1202
        %1211 = vst [vmem:[#allocation2 + $0x8] sm:$0xff] %v1203
        %1212 = vst [vmem:[#allocation2 + $0x10] sm:$0xff] %v1204
        %1213 = vst [vmem:[#allocation2 + $0x18] sm:$0xff] %v1205
        %1214 = vst [vmem:[#allocation2 + $0x20] sm:$0xff] %v1206
        %1215 = vst [vmem:[#allocation2 + $0x28] sm:$0xff] %v1207
        %1216 = vst [vmem:[#allocation2 + $0x30] sm:$0xff] %v1208
        %1217 = vst [vmem:[#allocation2 + $0x38] sm:$0xff] %v1209
        %p1218 = scmp.eq.s32.totalorder %s24, 1
        // Predicated region
        $region132: #{conv_ffn_forward.6} parent=118 // pred_check
          %p1219 = pneg %p1218
        $region133: #{conv_ffn_forward.6} parent=118 // pred_check_branch
          %1221 = sbr.rel (%p1219) target = $region135
        $region134: #{conv_ffn_forward.6} parent=118 // pred_region
          %v1222 = vld [vmem:[#allocation2] sm:$0xff]
          %v1223 = vld [vmem:[#allocation2 + $0x8] sm:$0xff]
          %v1224 = vld [vmem:[#allocation2 + $0x10] sm:$0xff]
          %v1225 = vld [vmem:[#allocation2 + $0x18] sm:$0xff]
          %v1226 = vld [vmem:[#allocation2 + $0x20] sm:$0xff]
          %v1227 = vld [vmem:[#allocation2 + $0x28] sm:$0xff]
          %v1228 = vld [vmem:[#allocation2 + $0x30] sm:$0xff]
          %v1229 = vld [vmem:[#allocation2 + $0x38] sm:$0xff]
          %v1230 = vld [vmem:[%s6] sm:$0x1]
          %v1232 = vlaneseq
          %v1233 = vshrl.u32 %v1232, 7
          %v1234 = vsub.s32 0, %v1233
          %v1235 = vrot.slane %v1230, %v1234
          %v1237 = vadd.f32 %v1222, %v1235
          %v1238 = vadd.f32 %v1223, %v1235
          %v1239 = vadd.f32 %v1224, %v1235
          %v1240 = vadd.f32 %v1225, %v1235
          %v1241 = vadd.f32 %v1226, %v1235
          %v1242 = vadd.f32 %v1227, %v1235
          %v1243 = vadd.f32 %v1228, %v1235
          %v1244 = vadd.f32 %v1229, %v1235
          %1245 = vst [vmem:[%s447] sm:$0xff] %v1237
          %1246 = vst [vmem:[%s447 + $0x8] sm:$0xff] %v1238
          %1247 = vst [vmem:[%s447 + $0x10] sm:$0xff] %v1239
          %1248 = vst [vmem:[%s447 + $0x18] sm:$0xff] %v1240
          %1249 = vst [vmem:[%s447 + $0x20] sm:$0xff] %v1241
          %1250 = vst [vmem:[%s447 + $0x28] sm:$0xff] %v1242
          %1251 = vst [vmem:[%s447 + $0x30] sm:$0xff] %v1243
          %1252 = vst [vmem:[%s447 + $0x38] sm:$0xff] %v1244
        $region135: #{conv_ffn_forward.6} parent=118 // pred_fallthru
          _
        %s1253 = sand.u32 %s208, 1
        %s1254 = sand.u32 %s208, 1
        %s1255 = smul.addr %s1254, 64
        %s1256 = scalar_lea.vmem [#allocation5], %s1255
        // Predicated region
        $region136: #{conv_ffn_forward.6} parent=118 // pred_check
          %p1257 = pneg %p218
        $region137: #{conv_ffn_forward.6} parent=118 // pred_check_branch
          %1259 = sbr.rel (%p1257) target = $region139
        $region138: #{conv_ffn_forward.6} parent=118 // pred_region
          %s1260 = smul.addr %s23, 42
          %s1261 = sadd.s32 32, %s1260
          %s1262 = smul.addr %s1261, 8
          %s1263 = scalar_lea.vmem %s8, %s1262
          // Predicated region
          $region140: #{conv_ffn_forward.6} parent=138 // pred_check
            _
          $region141: #{conv_ffn_forward.6} parent=138 // pred_check_branch
            %1265 = sbr.rel (0) target = $region143
          $region142: #{conv_ffn_forward.6} parent=138 // pred_region
            // Predicated region
            $region144: #{conv_ffn_forward.6} parent=142 // pred_check
              _
            $region145: #{conv_ffn_forward.6} parent=142 // pred_check_branch
              %1267 = sbr.rel (0) target = $region147
            $region146: #{conv_ffn_forward.6} parent=142 // pred_region
              // Predicated region
              $region159: #{conv_ffn_forward.6} parent=146 // pred_check
                _
              $region160: #{conv_ffn_forward.6} parent=146 // pred_check_branch
                %1297 = sbr.rel (0) target = $region162
              $region161: #{conv_ffn_forward.6} parent=146 // pred_region
                loop: start=0, step=1, limit=1
                $region163: #{conv_ffn_forward.6} parent=161 // loop_pre_header
                  _
                $region164: #{conv_ffn_forward.6} parent=161 // loop_header
                  %s1299 = sphi 0, %s1303
                  %p1300 = scmp.ge.s32.totalorder %s1299, 1
                  %s1304 = sphi %s1256, %s1256
                  %s1305 = sphi %s1263, %s1263
                $region165: #{conv_ffn_forward.6} parent=161 // loop_header_branch
                  %1302 = sbr.rel (%p1300) target = $region169
                $region166: #{conv_ffn_forward.6} parent=161 // loop_body
                  %v1306 = vld [vmem:[%s1304] sm:$0xff]
                  %1307 = vst [vmem:[%s1305] sm:$0xff] %v1306
                  %v1308 = vld [vmem:[%s1304 + $0x8] sm:$0xff]
                  %1309 = vst [vmem:[%s1305 + $0x8] sm:$0xff] %v1308
                  %v1310 = vld [vmem:[%s1304 + $0x10] sm:$0xff]
                  %1311 = vst [vmem:[%s1305 + $0x10] sm:$0xff] %v1310
                  %v1312 = vld [vmem:[%s1304 + $0x18] sm:$0xff]
                  %1313 = vst [vmem:[%s1305 + $0x18] sm:$0xff] %v1312
                  %v1314 = vld [vmem:[%s1304 + $0x20] sm:$0xff]
                  %1315 = vst [vmem:[%s1305 + $0x20] sm:$0xff] %v1314
                  %v1316 = vld [vmem:[%s1304 + $0x28] sm:$0xff]
                  %1317 = vst [vmem:[%s1305 + $0x28] sm:$0xff] %v1316
                  %v1318 = vld [vmem:[%s1304 + $0x30] sm:$0xff]
                  %1319 = vst [vmem:[%s1305 + $0x30] sm:$0xff] %v1318
                  %v1320 = vld [vmem:[%s1304 + $0x38] sm:$0xff]
                  %1321 = vst [vmem:[%s1305 + $0x38] sm:$0xff] %v1320
                $region167: #{conv_ffn_forward.6} parent=161 // loop_footer
                  %s1303 = sadd.s32 1, %s1299
                $region168: #{conv_ffn_forward.6} parent=161 // loop_footer_branch
                  %1298 = sbr.rel target = $region164
                $region169: #{conv_ffn_forward.6} parent=161 // loop_exit
                  _
              $region162: #{conv_ffn_forward.6} parent=146 // pred_fallthru
                _
              // Predicated region
              $region170: #{conv_ffn_forward.6} parent=146 // pred_check
                _
              $region171: #{conv_ffn_forward.6} parent=146 // pred_check_branch
                %1323 = sbr.rel target = $region173
              $region172: #{conv_ffn_forward.6} parent=146 // pred_region
                _
              $region173: #{conv_ffn_forward.6} parent=146 // pred_fallthru
                _
            $region147: #{conv_ffn_forward.6} parent=142 // pred_fallthru
              _
            // Predicated region
            $region148: #{conv_ffn_forward.6} parent=142 // pred_check
              _
            $region149: #{conv_ffn_forward.6} parent=142 // pred_check_branch
              %1269 = sbr.rel target = $region151
            $region150: #{conv_ffn_forward.6} parent=142 // pred_region
              %s1271 = ssub.s32 256, 1
              loop: start=0, step=1, limit=1
              $region152: #{conv_ffn_forward.6} parent=150 // loop_pre_header
                _
              $region153: #{conv_ffn_forward.6} parent=150 // loop_header
                %s1273 = sphi 0, %s1277
                %p1274 = scmp.ge.s32.totalorder %s1273, 1
                %s1278 = sphi %s1256, %s1256
                %s1279 = sphi %s1263, %s1263
              $region154: #{conv_ffn_forward.6} parent=150 // loop_header_branch
                %1276 = sbr.rel (%p1274) target = $region158
              $region155: #{conv_ffn_forward.6} parent=150 // loop_body
                %v1280 = vld [vmem:[%s1278] sm:%s1271]
                %1281 = vst [vmem:[%s1279] sm:%s1271] %v1280
                %v1282 = vld [vmem:[%s1278 + $0x8] sm:%s1271]
                %1283 = vst [vmem:[%s1279 + $0x8] sm:%s1271] %v1282
                %v1284 = vld [vmem:[%s1278 + $0x10] sm:%s1271]
                %1285 = vst [vmem:[%s1279 + $0x10] sm:%s1271] %v1284
                %v1286 = vld [vmem:[%s1278 + $0x18] sm:%s1271]
                %1287 = vst [vmem:[%s1279 + $0x18] sm:%s1271] %v1286
                %v1288 = vld [vmem:[%s1278 + $0x20] sm:%s1271]
                %1289 = vst [vmem:[%s1279 + $0x20] sm:%s1271] %v1288
                %v1290 = vld [vmem:[%s1278 + $0x28] sm:%s1271]
                %1291 = vst [vmem:[%s1279 + $0x28] sm:%s1271] %v1290
                %v1292 = vld [vmem:[%s1278 + $0x30] sm:%s1271]
                %1293 = vst [vmem:[%s1279 + $0x30] sm:%s1271] %v1292
                %v1294 = vld [vmem:[%s1278 + $0x38] sm:%s1271]
                %1295 = vst [vmem:[%s1279 + $0x38] sm:%s1271] %v1294
              $region156: #{conv_ffn_forward.6} parent=150 // loop_footer
                %s1277 = sadd.s32 1, %s1273
              $region157: #{conv_ffn_forward.6} parent=150 // loop_footer_branch
                %1272 = sbr.rel target = $region153
              $region158: #{conv_ffn_forward.6} parent=150 // loop_exit
                _
            $region151: #{conv_ffn_forward.6} parent=142 // pred_fallthru
              _
          $region143: #{conv_ffn_forward.6} parent=138 // pred_fallthru
            _
          %1324 = vnop
        $region139: #{conv_ffn_forward.6} parent=118 // pred_fallthru
          _
      $region119: #{conv_ffn_forward.6} parent=5 // pred_fallthru
        _
      %p1325 = scmp.le.s32.totalorder 2, %s14
      // Predicated region
      $region174: #{conv_ffn_forward.6} parent=5 // pred_check
        %p1326 = pneg %p1325
      $region175: #{conv_ffn_forward.6} parent=5 // pred_check_branch
        %1328 = sbr.rel (%p1326) target = $region177
      $region176: #{conv_ffn_forward.6} parent=5 // pred_region
        %s1329 = ssub.s32 %s14, 2
        // Predicated region
        $region178: #{conv_ffn_forward.6} parent=176 // pred_check
          %p1330 = pneg %p224
        $region179: #{conv_ffn_forward.6} parent=176 // pred_check_branch
          %1332 = sbr.rel (%p1330) target = $region181
        $region180: #{conv_ffn_forward.6} parent=176 // pred_region
          %s1333 = sand.u32 %s209, 1
          %s1334 = sand.u32 %s209, 1
          %s1335 = smul.addr %s1334, 64
          %s1336 = scalar_lea.vmem [#allocation5], %s1335
        $region181: #{conv_ffn_forward.6} parent=176 // pred_fallthru
          _
      $region177: #{conv_ffn_forward.6} parent=5 // pred_fallthru
        _
    $region6: #{conv_ffn_forward.6} parent=1 // loop_footer
      %s18 = sadd.s32 1, %s14
    $region7: #{conv_ffn_forward.6} parent=1 // loop_footer_branch
      %13 = sbr.rel target = $region3
    $region8: #{conv_ffn_forward.6} parent=1 // loop_exit
      _

// kernel: conv_ffn_forward.4
$region0: #{conv_ffn_forward.4}
  #allocation0 [shape = 'u32[]', space=smem, size = 0x4, offset = 0x4, fixed_abs, tag = 'smem constant byte address 0x4 - core index']
  #allocation1 [shape = 'u32[144,128]{1,0:T(1,128)}', space=vmem, size = 0x12000, scoped, tag = 'internal scratch']
  #allocation2 [shape = 'f32[256,256]{1,0:T(8,128)}', space=vmem, size = 0x40000, scoped, tag = 'scratch operand']
  %s0 = inlined_call_operand.vmem [shape: bf16[672,128], index: 0, kind: input, shape index: {}]
  %s1 = inlined_call_operand.vmem [shape: bf16[128,256], index: 1, kind: input, shape index: {}]
  %s2 = inlined_call_operand.vmem [shape: f32[1,256], index: 2, kind: input, shape index: {}]
  %s3 = inlined_call_operand.vmem [shape: bf16[672,256], index: 3, kind: output, shape index: {}]
  %s4 = sld [smem:[#allocation0]]
  $region101: #{conv_ffn_forward.4} parent=0
    _
  %s6 = ssub.s32 1, %s4
  %s7 = scalar_select 0, %s6, %s4
  $region1: #{conv_ffn_forward.4} parent=0
    #allocation3 [shape = 'u8[262144]{0}', space=vmem, size = 0x40000, scoped, tag = 'output window, operand 0']
    loop: start=0, step=1, limit=5
    $region2: #{conv_ffn_forward.4} parent=1 // loop_pre_header
      _
    $region3: #{conv_ffn_forward.4} parent=1 // loop_header
      %s9 = sphi 0, %s13
      %p10 = scmp.ge.s32.totalorder %s9, 5
      %s16 = sphi 0, %s35
      %s17 = sphi 0, %s31
      %s18 = sphi 0, %s27
      %s19 = sphi 0, %s16
      %s20 = sphi 0, %s17
      %s21 = sphi 0, %s18
      %s22 = sphi 0, %s19
      %s23 = sphi 0, %s20
      %s24 = sphi 0, %s21
      %s40 = sphi 0, %s42
      %s43 = sphi 0, %s40
      %s44 = sphi 0, %s43
      %s60 = sphi 0, %s44
      %s68 = sphi 0, %s70
      %s71 = sphi 0, %s68
      %s72 = sphi 0, %s71
      %s88 = sphi 0, %s72
      %s94 = sphi 0, %s96
      %s97 = sphi 0, %s94
      %s98 = sphi 0, %s97
      %s114 = sphi 0, %s98
      %s122 = sphi 0, %s124
      %s125 = sphi 0, %s122
      %s126 = sphi 0, %s125
      %s142 = sphi 0, %s126
    $region4: #{conv_ffn_forward.4} parent=1 // loop_header_branch
      %12 = sbr.rel (%p10) target = $region8
    $region5: #{conv_ffn_forward.4} parent=1 // loop_body
      %s14 = ssub.s32 %s9, 1
      %s15 = ssub.s32 %s9, 2
      %s25 = sadd.s32 1, %s18
      %p26 = scmp.ge.s32.totalorder %s25, 1
      %s27 = scalar_select %p26, 0, %s25
      %s28 = sadd.s32 1, %s17
      %s29 = scalar_select %p26, %s28, %s17
      %p30 = scmp.ge.s32.totalorder %s29, 1
      %s31 = scalar_select %p30, 0, %s29
      %s32 = sadd.s32 1, %s16
      %s33 = scalar_select %p30, %s32, %s16
      %p34 = scmp.ge.s32.totalorder %s33, 3
      %s35 = scalar_select %p34, 0, %s33
      %s36 = ssub.s32 %s16, %s35
      %s37 = ssub.s32 %s18, %s27
      %s38 = sor.u32 %s36, %s37
      %p39 = scmp.eq.s32.totalorder %s38, 0
      %s41 = sadd.s32 %s40, 1
      %s42 = scalar_select %p39, %s40, %s41
      %p45 = pneg %p39
      %p46 = scmp.eq.s32.totalorder %s9, 2
      %p47 = por %p45, %p46
      %p48 = scmp.ne.s32.totalorder %s40, %s43
      %p49 = scmp.eq.s32.totalorder %s9, 0
      %p50 = por %p48, %p49
      %p51 = scmp.ne.s32.totalorder %s40, %s43
      %p52 = scmp.eq.s32.totalorder %s14, 2
      %p53 = por %p51, %p52
      %p54 = scmp.ne.s32.totalorder %s43, %s44
      %p55 = scmp.eq.s32.totalorder %s14, 0
      %p56 = por %p54, %p55
      %p57 = scmp.ne.s32.totalorder %s43, %s44
      %p58 = scmp.eq.s32.totalorder %s15, 2
      %p59 = por %p57, %p58
      %p61 = scmp.ne.s32.totalorder %s44, %s60
      %p62 = scmp.eq.s32.totalorder %s15, 0
      %p63 = por %p61, %p62
      %s64 = ssub.s32 %s18, %s27
      %s65 = ssub.s32 %s17, %s31
      %s66 = sor.u32 %s64, %s65
      %p67 = scmp.eq.s32.totalorder %s66, 0
      %s69 = sadd.s32 %s68, 1
      %s70 = scalar_select %p67, %s68, %s69
      %p73 = pneg %p67
      %p74 = scmp.eq.s32.totalorder %s9, 2
      %p75 = por %p73, %p74
      %p76 = scmp.ne.s32.totalorder %s68, %s71
      %p77 = scmp.eq.s32.totalorder %s9, 0
      %p78 = por %p76, %p77
      %p79 = scmp.ne.s32.totalorder %s68, %s71
      %p80 = scmp.eq.s32.totalorder %s14, 2
      %p81 = por %p79, %p80
      %p82 = scmp.ne.s32.totalorder %s71, %s72
      %p83 = scmp.eq.s32.totalorder %s14, 0
      %p84 = por %p82, %p83
      %p85 = scmp.ne.s32.totalorder %s71, %s72
      %p86 = scmp.eq.s32.totalorder %s15, 2
      %p87 = por %p85, %p86
      %p89 = scmp.ne.s32.totalorder %s72, %s88
      %p90 = scmp.eq.s32.totalorder %s15, 0
      %p91 = por %p89, %p90
      %s92 = ssub.s32 %s17, %s31
      %p93 = scmp.eq.s32.totalorder %s92, 0
      %s95 = sadd.s32 %s94, 1
      %s96 = scalar_select %p93, %s94, %s95
      %p99 = pneg %p93
      %p100 = scmp.eq.s32.totalorder %s9, 2
      %p101 = por %p99, %p100
      %p102 = scmp.ne.s32.totalorder %s94, %s97
      %p103 = scmp.eq.s32.totalorder %s9, 0
      %p104 = por %p102, %p103
      %p105 = scmp.ne.s32.totalorder %s94, %s97
      %p106 = scmp.eq.s32.totalorder %s14, 2
      %p107 = por %p105, %p106
      %p108 = scmp.ne.s32.totalorder %s97, %s98
      %p109 = scmp.eq.s32.totalorder %s14, 0
      %p110 = por %p108, %p109
      %p111 = scmp.ne.s32.totalorder %s97, %s98
      %p112 = scmp.eq.s32.totalorder %s15, 2
      %p113 = por %p111, %p112
      %p115 = scmp.ne.s32.totalorder %s98, %s114
      %p116 = scmp.eq.s32.totalorder %s15, 0
      %p117 = por %p115, %p116
      %s118 = ssub.s32 %s16, %s35
      %s119 = ssub.s32 %s17, %s31
      %s120 = sor.u32 %s118, %s119
      %p121 = scmp.eq.s32.totalorder %s120, 0
      %s123 = sadd.s32 %s122, 1
      %s124 = scalar_select %p121, %s122, %s123
      %p127 = pneg %p121
      %p128 = scmp.eq.s32.totalorder %s9, 2
      %p129 = por %p127, %p128
      %p130 = scmp.ne.s32.totalorder %s122, %s125
      %p131 = scmp.eq.s32.totalorder %s9, 0
      %p132 = por %p130, %p131
      %p133 = scmp.ne.s32.totalorder %s122, %s125
      %p134 = scmp.eq.s32.totalorder %s14, 2
      %p135 = por %p133, %p134
      %p136 = scmp.ne.s32.totalorder %s125, %s126
      %p137 = scmp.eq.s32.totalorder %s14, 0
      %p138 = por %p136, %p137
      %p139 = scmp.ne.s32.totalorder %s125, %s126
      %p140 = scmp.eq.s32.totalorder %s15, 2
      %p141 = por %p139, %p140
      %p143 = scmp.ne.s32.totalorder %s126, %s142
      %p144 = scmp.eq.s32.totalorder %s15, 0
      %p145 = por %p143, %p144
      %p146 = scmp.le.s32.totalorder 1, %s9
      %p147 = scmp.lt.s32.totalorder %s9, 4
      %p148 = pnand %p146, %p147
      %p149 = pneg %p148
      // Predicated region
      $region9: #{conv_ffn_forward.4} parent=5 // pred_check
        _
      $region10: #{conv_ffn_forward.4} parent=5 // pred_check_branch
        %151 = sbr.rel (%p148) target = $region12
      $region11: #{conv_ffn_forward.4} parent=5 // pred_region
        %s152 = ssub.s32 %s9, 1
        // Predicated region
        $region13: #{conv_ffn_forward.4} parent=11 // pred_check
          %p153 = pneg %p84
        $region14: #{conv_ffn_forward.4} parent=11 // pred_check_branch
          %155 = sbr.rel (%p153) target = $region16
        $region15: #{conv_ffn_forward.4} parent=11 // pred_region
          %s156 = smul.u32 16, %s21
          %s157 = smul.u32 2, %s20
          %p158 = scmp.lt.s32.totalorder %s156, 15
          %s159 = scalar_select %p158, %s156, 15
          %p160 = scmp.lt.s32.totalorder %s157, 1
          %s161 = scalar_select %p160, %s157, 1
          %s162 = smul.addr %s159, 2
          %s163 = sadd.s32 %s161, %s162
          %s164 = smul.addr %s163, 4
          %s165 = scalar_lea.vmem %s1, %s164
          %s166 = smul.u32 16, %s21
          %s167 = smul.u32 2, %s20
        $region16: #{conv_ffn_forward.4} parent=11 // pred_fallthru
          _
        // Predicated region
        $region17: #{conv_ffn_forward.4} parent=11 // pred_check
          %p168 = pneg %p110
        $region18: #{conv_ffn_forward.4} parent=11 // pred_check_branch
          %170 = sbr.rel (%p168) target = $region20
        $region19: #{conv_ffn_forward.4} parent=11 // pred_region
          %s171 = smul.u32 2, %s20
          %p172 = scmp.lt.s32.totalorder %s171, 1
          %s173 = scalar_select %p172, %s171, 1
          %s174 = scalar_lea.vmem %s2, %s173
          %s175 = smul.u32 2, %s20
        $region20: #{conv_ffn_forward.4} parent=11 // pred_fallthru
          _
      $region12: #{conv_ffn_forward.4} parent=5 // pred_fallthru
        _
      %p176 = scmp.lt.s32.totalorder %s9, 3
      // Predicated region
      $region21: #{conv_ffn_forward.4} parent=5 // pred_check
        %p177 = pneg %p176
      $region22: #{conv_ffn_forward.4} parent=5 // pred_check_branch
        %179 = sbr.rel (%p177) target = $region24
      $region23: #{conv_ffn_forward.4} parent=5 // pred_region
        // Predicated region
        $region25: #{conv_ffn_forward.4} parent=23 // pred_check
          %p180 = pneg %p50
        $region26: #{conv_ffn_forward.4} parent=23 // pred_check_branch
          %182 = sbr.rel (%p180) target = $region28
        $region27: #{conv_ffn_forward.4} parent=23 // pred_region
          %s183 = smul.u32 32, %s16
          %s184 = ssub.s32 84, %s183
          %p185 = scmp.lt.s32.totalorder %s184, 32
          %s186 = scalar_select %p185, %s184, 32
          %s187 = smul.u32 64, %s186
          %p188 = scmp.lt.s32.totalorder %s183, 83
          %s189 = scalar_select %p188, %s183, 83
          %p190 = scmp.lt.s32.totalorder %s18, 0
          %s191 = scalar_select %p190, %s18, 0
          %s192 = sadd.s32 %s191, %s189
          %s193 = smul.addr %s192, 4
          %s194 = scalar_lea.vmem %s0, %s193
          %s195 = smul.u32 32, %s16
          %s196 = ssub.s32 84, %s195
          %p197 = scmp.lt.s32.totalorder %s196, 32
          %s198 = scalar_select %p197, %s196, 32
          %s199 = smul.u32 64, %s198
        $region28: #{conv_ffn_forward.4} parent=23 // pred_fallthru
          _
      $region24: #{conv_ffn_forward.4} parent=5 // pred_fallthru
        _
      %p200 = scmp.le.s32.totalorder 1, %s9
      %p201 = scmp.lt.s32.totalorder %s9, 4
      %p202 = pnand %p200, %p201
      %p203 = pneg %p202
      // Predicated region
      $region29: #{conv_ffn_forward.4} parent=5 // pred_check
        _
      $region30: #{conv_ffn_forward.4} parent=5 // pred_check_branch
        %205 = sbr.rel (%p202) target = $region32
      $region31: #{conv_ffn_forward.4} parent=5 // pred_region
        %s206 = ssub.s32 %s9, 1
        %s207 = smul.u32 32, %s19
        %s208 = ssub.s32 84, %s207
        %p209 = scmp.lt.s32.totalorder %s208, 32
        %s210 = scalar_select %p209, %s208, 32
        %s211 = smul.u32 64, %s210
        %p212 = scmp.lt.s32.totalorder %s207, 83
        %s213 = scalar_select %p212, %s207, 83
        %p214 = scmp.lt.s32.totalorder %s21, 0
        %s215 = scalar_select %p214, %s21, 0
        %s216 = sadd.s32 %s215, %s213
        %s217 = smul.addr %s216, 4
        %s218 = scalar_lea.vmem %s0, %s217
        %p219 = pneg %p56
        %p220 = pneg %p53
        %s221 = smul.u32 16, %s21
        %s222 = smul.u32 2, %s20
        %p223 = scmp.lt.s32.totalorder %s221, 15
        %s224 = scalar_select %p223, %s221, 15
        %p225 = scmp.lt.s32.totalorder %s222, 1
        %s226 = scalar_select %p225, %s222, 1
        %s227 = smul.addr %s224, 2
        %s228 = sadd.s32 %s226, %s227
        %s229 = smul.addr %s228, 4
        %s230 = scalar_lea.vmem %s1, %s229
        %p231 = pneg %p84
        %p232 = pneg %p81
        %s233 = smul.u32 2, %s20
        %p234 = scmp.lt.s32.totalorder %s233, 1
        %s235 = scalar_select %p234, %s233, 1
        %s236 = scalar_lea.vmem %s2, %s235
        %p237 = pneg %p110
        %p238 = pneg %p107
        %p239 = pneg %p138
        %p240 = pneg %p135
        %s241 = sand.u32 %s125, 1
        %s242 = sand.u32 %s125, 1
        %s243 = smul.addr %s242, 256
        %s244 = scalar_lea.vmem [#allocation3], %s243
        %s245 = smul.u32 32, %s19
        %s246 = ssub.s32 84, %s245
        %p247 = scmp.lt.s32.totalorder %s246, 32
        %s248 = scalar_select %p247, %s246, 32
        %s249 = smul.u32 64, %s248
        %p250 = scmp.lt.s32.totalorder %s245, 83
        %s251 = scalar_select %p250, %s245, 83
        %p252 = scmp.lt.s32.totalorder %s21, 0
        %s253 = scalar_select %p252, %s21, 0
        %s254 = sadd.s32 %s253, %s251
        %s255 = smul.addr %s254, 4
        %s256 = scalar_lea.vmem %s0, %s255
        %s257 = smul.u32 32, %s19
        %s258 = ssub.s32 84, %s257
        %p259 = scmp.lt.s32.totalorder %s258, 32
        %s260 = scalar_select %p259, %s258, 32
        %s261 = smul.u32 64, %s260
        %s262 = smul.u32 16, %s21
        %s263 = smul.u32 2, %s20
        %p264 = scmp.lt.s32.totalorder %s262, 15
        %s265 = scalar_select %p264, %s262, 15
        %p266 = scmp.lt.s32.totalorder %s263, 1
        %s267 = scalar_select %p266, %s263, 1
        %s268 = smul.addr %s265, 2
        %s269 = sadd.s32 %s267, %s268
        %s270 = smul.addr %s269, 4
        %s271 = scalar_lea.vmem %s1, %s270
        %s272 = smul.u32 16, %s21
        %s273 = smul.u32 2, %s20
        %s274 = smul.u32 2, %s20
        %p275 = scmp.lt.s32.totalorder %s274, 1
        %s276 = scalar_select %p275, %s274, 1
        %s277 = scalar_lea.vmem %s2, %s276
        %s278 = smul.u32 2, %s20
        %s279 = smul.u32 32, %s19
        %s280 = smul.u32 2, %s20
        %s281 = ssub.s32 84, %s279
        %p282 = scmp.lt.s32.totalorder %s281, 32
        %s283 = scalar_select %p282, %s281, 32
        %s284 = smul.u32 64, %s283
        %s285 = smul.u32 %s284, 2
        %p287 = scmp.eq.s32.totalorder %s21, 0
        // Predicated region
        $region33: #{conv_ffn_forward.4} parent=31 // pred_check
          %p288 = pneg %p287
        $region34: #{conv_ffn_forward.4} parent=31 // pred_check_branch
          %290 = sbr.rel (%p288) target = $region36
        $region35: #{conv_ffn_forward.4} parent=31 // pred_region
          %291 = vst [vmem:[#allocation2] sm:$0xff] 0.0
          %292 = vst [vmem:[#allocation2 + $0x8] sm:$0xff] 0.0
          %293 = vst [vmem:[#allocation2 + $0x10] sm:$0xff] 0.0
          %294 = vst [vmem:[#allocation2 + $0x18] sm:$0xff] 0.0
          %295 = vst [vmem:[#allocation2 + $0x20] sm:$0xff] 0.0
          %296 = vst [vmem:[#allocation2 + $0x28] sm:$0xff] 0.0
          %297 = vst [vmem:[#allocation2 + $0x30] sm:$0xff] 0.0
          %298 = vst [vmem:[#allocation2 + $0x38] sm:$0xff] 0.0
          %299 = vst [vmem:[#allocation2 + $0x40] sm:$0xff] 0.0
          %300 = vst [vmem:[#allocation2 + $0x48] sm:$0xff] 0.0
          %301 = vst [vmem:[#allocation2 + $0x50] sm:$0xff] 0.0
          %302 = vst [vmem:[#allocation2 + $0x58] sm:$0xff] 0.0
          %303 = vst [vmem:[#allocation2 + $0x60] sm:$0xff] 0.0
          %304 = vst [vmem:[#allocation2 + $0x68] sm:$0xff] 0.0
          %305 = vst [vmem:[#allocation2 + $0x70] sm:$0xff] 0.0
          %306 = vst [vmem:[#allocation2 + $0x78] sm:$0xff] 0.0
          %307 = vst [vmem:[#allocation2 + $0x80] sm:$0xff] 0.0
          %308 = vst [vmem:[#allocation2 + $0x88] sm:$0xff] 0.0
          %309 = vst [vmem:[#allocation2 + $0x90] sm:$0xff] 0.0
          %310 = vst [vmem:[#allocation2 + $0x98] sm:$0xff] 0.0
          %311 = vst [vmem:[#allocation2 + $0xa0] sm:$0xff] 0.0
          %312 = vst [vmem:[#allocation2 + $0xa8] sm:$0xff] 0.0
          %313 = vst [vmem:[#allocation2 + $0xb0] sm:$0xff] 0.0
          %314 = vst [vmem:[#allocation2 + $0xb8] sm:$0xff] 0.0
          %315 = vst [vmem:[#allocation2 + $0xc0] sm:$0xff] 0.0
          %316 = vst [vmem:[#allocation2 + $0xc8] sm:$0xff] 0.0
          %317 = vst [vmem:[#allocation2 + $0xd0] sm:$0xff] 0.0
          %318 = vst [vmem:[#allocation2 + $0xd8] sm:$0xff] 0.0
          %319 = vst [vmem:[#allocation2 + $0xe0] sm:$0xff] 0.0
          %320 = vst [vmem:[#allocation2 + $0xe8] sm:$0xff] 0.0
          %321 = vst [vmem:[#allocation2 + $0xf0] sm:$0xff] 0.0
          %322 = vst [vmem:[#allocation2 + $0xf8] sm:$0xff] 0.0
          %323 = vst [vmem:[#allocation2 + $0x100] sm:$0xff] 0.0
          %324 = vst [vmem:[#allocation2 + $0x108] sm:$0xff] 0.0
          %325 = vst [vmem:[#allocation2 + $0x110] sm:$0xff] 0.0
          %326 = vst [vmem:[#allocation2 + $0x118] sm:$0xff] 0.0
          %327 = vst [vmem:[#allocation2 + $0x120] sm:$0xff] 0.0
          %328 = vst [vmem:[#allocation2 + $0x128] sm:$0xff] 0.0
          %329 = vst [vmem:[#allocation2 + $0x130] sm:$0xff] 0.0
          %330 = vst [vmem:[#allocation2 + $0x138] sm:$0xff] 0.0
          %331 = vst [vmem:[#allocation2 + $0x140] sm:$0xff] 0.0
          %332 = vst [vmem:[#allocation2 + $0x148] sm:$0xff] 0.0
          %333 = vst [vmem:[#allocation2 + $0x150] sm:$0xff] 0.0
          %334 = vst [vmem:[#allocation2 + $0x158] sm:$0xff] 0.0
          %335 = vst [vmem:[#allocation2 + $0x160] sm:$0xff] 0.0
          %336 = vst [vmem:[#allocation2 + $0x168] sm:$0xff] 0.0
          %337 = vst [vmem:[#allocation2 + $0x170] sm:$0xff] 0.0
          %338 = vst [vmem:[#allocation2 + $0x178] sm:$0xff] 0.0
          %339 = vst [vmem:[#allocation2 + $0x180] sm:$0xff] 0.0
          %340 = vst [vmem:[#allocation2 + $0x188] sm:$0xff] 0.0
          %341 = vst [vmem:[#allocation2 + $0x190] sm:$0xff] 0.0
          %342 = vst [vmem:[#allocation2 + $0x198] sm:$0xff] 0.0
          %343 = vst [vmem:[#allocation2 + $0x1a0] sm:$0xff] 0.0
          %344 = vst [vmem:[#allocation2 + $0x1a8] sm:$0xff] 0.0
          %345 = vst [vmem:[#allocation2 + $0x1b0] sm:$0xff] 0.0
          %346 = vst [vmem:[#allocation2 + $0x1b8] sm:$0xff] 0.0
          %347 = vst [vmem:[#allocation2 + $0x1c0] sm:$0xff] 0.0
          %348 = vst [vmem:[#allocation2 + $0x1c8] sm:$0xff] 0.0
          %349 = vst [vmem:[#allocation2 + $0x1d0] sm:$0xff] 0.0
          %350 = vst [vmem:[#allocation2 + $0x1d8] sm:$0xff] 0.0
          %351 = vst [vmem:[#allocation2 + $0x1e0] sm:$0xff] 0.0
          %352 = vst [vmem:[#allocation2 + $0x1e8] sm:$0xff] 0.0
          %353 = vst [vmem:[#allocation2 + $0x1f0] sm:$0xff] 0.0
          %354 = vst [vmem:[#allocation2 + $0x1f8] sm:$0xff] 0.0
        $region36: #{conv_ffn_forward.4} parent=31 // pred_fallthru
          _
        %v355 = vld [vmem:[#allocation2] sm:$0xff]
        %v356 = vld [vmem:[#allocation2 + $0x8] sm:$0xff]
        %v357 = vld [vmem:[#allocation2 + $0x10] sm:$0xff]
        %v358 = vld [vmem:[#allocation2 + $0x18] sm:$0xff]
        %v359 = vld [vmem:[#allocation2 + $0x20] sm:$0xff]
        %v360 = vld [vmem:[#allocation2 + $0x28] sm:$0xff]
        %v361 = vld [vmem:[#allocation2 + $0x30] sm:$0xff]
        %v362 = vld [vmem:[#allocation2 + $0x38] sm:$0xff]
        %v363 = vld [vmem:[#allocation2 + $0x40] sm:$0xff]
        %v364 = vld [vmem:[#allocation2 + $0x48] sm:$0xff]
        %v365 = vld [vmem:[#allocation2 + $0x50] sm:$0xff]
        %v366 = vld [vmem:[#allocation2 + $0x58] sm:$0xff]
        %v367 = vld [vmem:[#allocation2 + $0x60] sm:$0xff]
        %v368 = vld [vmem:[#allocation2 + $0x68] sm:$0xff]
        %v369 = vld [vmem:[#allocation2 + $0x70] sm:$0xff]
        %v370 = vld [vmem:[#allocation2 + $0x78] sm:$0xff]
        %v371 = vld [vmem:[#allocation2 + $0x80] sm:$0xff]
        %v372 = vld [vmem:[#allocation2 + $0x88] sm:$0xff]
        %v373 = vld [vmem:[#allocation2 + $0x90] sm:$0xff]
        %v374 = vld [vmem:[#allocation2 + $0x98] sm:$0xff]
        %v375 = vld [vmem:[#allocation2 + $0xa0] sm:$0xff]
        %v376 = vld [vmem:[#allocation2 + $0xa8] sm:$0xff]
        %v377 = vld [vmem:[#allocation2 + $0xb0] sm:$0xff]
        %v378 = vld [vmem:[#allocation2 + $0xb8] sm:$0xff]
        %v379 = vld [vmem:[#allocation2 + $0xc0] sm:$0xff]
        %v380 = vld [vmem:[#allocation2 + $0xc8] sm:$0xff]
        %v381 = vld [vmem:[#allocation2 + $0xd0] sm:$0xff]
        %v382 = vld [vmem:[#allocation2 + $0xd8] sm:$0xff]
        %v383 = vld [vmem:[#allocation2 + $0xe0] sm:$0xff]
        %v384 = vld [vmem:[#allocation2 + $0xe8] sm:$0xff]
        %v385 = vld [vmem:[#allocation2 + $0xf0] sm:$0xff]
        %v386 = vld [vmem:[#allocation2 + $0xf8] sm:$0xff]
        %v387 = vld [vmem:[#allocation2 + $0x100] sm:$0xff]
        %v388 = vld [vmem:[#allocation2 + $0x108] sm:$0xff]
        %v389 = vld [vmem:[#allocation2 + $0x110] sm:$0xff]
        %v390 = vld [vmem:[#allocation2 + $0x118] sm:$0xff]
        %v391 = vld [vmem:[#allocation2 + $0x120] sm:$0xff]
        %v392 = vld [vmem:[#allocation2 + $0x128] sm:$0xff]
        %v393 = vld [vmem:[#allocation2 + $0x130] sm:$0xff]
        %v394 = vld [vmem:[#allocation2 + $0x138] sm:$0xff]
        %v395 = vld [vmem:[#allocation2 + $0x140] sm:$0xff]
        %v396 = vld [vmem:[#allocation2 + $0x148] sm:$0xff]
        %v397 = vld [vmem:[#allocation2 + $0x150] sm:$0xff]
        %v398 = vld [vmem:[#allocation2 + $0x158] sm:$0xff]
        %v399 = vld [vmem:[#allocation2 + $0x160] sm:$0xff]
        %v400 = vld [vmem:[#allocation2 + $0x168] sm:$0xff]
        %v401 = vld [vmem:[#allocation2 + $0x170] sm:$0xff]
        %v402 = vld [vmem:[#allocation2 + $0x178] sm:$0xff]
        %v403 = vld [vmem:[#allocation2 + $0x180] sm:$0xff]
        %v404 = vld [vmem:[#allocation2 + $0x188] sm:$0xff]
        %v405 = vld [vmem:[#allocation2 + $0x190] sm:$0xff]
        %v406 = vld [vmem:[#allocation2 + $0x198] sm:$0xff]
        %v407 = vld [vmem:[#allocation2 + $0x1a0] sm:$0xff]
        %v408 = vld [vmem:[#allocation2 + $0x1a8] sm:$0xff]
        %v409 = vld [vmem:[#allocation2 + $0x1b0] sm:$0xff]
        %v410 = vld [vmem:[#allocation2 + $0x1b8] sm:$0xff]
        %v411 = vld [vmem:[#allocation2 + $0x1c0] sm:$0xff]
        %v412 = vld [vmem:[#allocation2 + $0x1c8] sm:$0xff]
        %v413 = vld [vmem:[#allocation2 + $0x1d0] sm:$0xff]
        %v414 = vld [vmem:[#allocation2 + $0x1d8] sm:$0xff]
        %v415 = vld [vmem:[#allocation2 + $0x1e0] sm:$0xff]
        %v416 = vld [vmem:[#allocation2 + $0x1e8] sm:$0xff]
        %v417 = vld [vmem:[#allocation2 + $0x1f0] sm:$0xff]
        %v418 = vld [vmem:[#allocation2 + $0x1f8] sm:$0xff]
        %v419 = vld [vmem:[%s256] sm:$0xf]
        %v420 = vld [vmem:[%s256 + $0x4] sm:$0xf]
        %v421 = vld [vmem:[%s256 + $0x8] sm:$0xf]
        %v422 = vld [vmem:[%s256 + $0xc] sm:$0xf]
        %v423 = vld [vmem:[%s256 + $0x10] sm:$0xf]
        %v424 = vld [vmem:[%s256 + $0x14] sm:$0xf]
        %v425 = vld [vmem:[%s256 + $0x18] sm:$0xf]
        %v426 = vld [vmem:[%s256 + $0x1c] sm:$0xf]
        %v427 = vld [vmem:[%s256 + $0x20] sm:$0xf]
        %v428 = vld [vmem:[%s256 + $0x24] sm:$0xf]
        %v429 = vld [vmem:[%s256 + $0x28] sm:$0xf]
        %v430 = vld [vmem:[%s256 + $0x2c] sm:$0xf]
        %v431 = vld [vmem:[%s256 + $0x30] sm:$0xf]
        %v432 = vld [vmem:[%s256 + $0x34] sm:$0xf]
        %v433 = vld [vmem:[%s256 + $0x38] sm:$0xf]
        %v434 = vld [vmem:[%s256 + $0x3c] sm:$0xf]
        %v435 = vld [vmem:[%s256 + $0x40] sm:$0xf]
        %v436 = vld [vmem:[%s256 + $0x44] sm:$0xf]
        %v437 = vld [vmem:[%s256 + $0x48] sm:$0xf]
        %v438 = vld [vmem:[%s256 + $0x4c] sm:$0xf]
        %v439 = vld [vmem:[%s256 + $0x50] sm:$0xf]
        %v440 = vld [vmem:[%s256 + $0x54] sm:$0xf]
        %v441 = vld [vmem:[%s256 + $0x58] sm:$0xf]
        %v442 = vld [vmem:[%s256 + $0x5c] sm:$0xf]
        %v443 = vld [vmem:[%s256 + $0x60] sm:$0xf]
        %v444 = vld [vmem:[%s256 + $0x64] sm:$0xf]
        %v445 = vld [vmem:[%s256 + $0x68] sm:$0xf]
        %v446 = vld [vmem:[%s256 + $0x6c] sm:$0xf]
        %v447 = vld [vmem:[%s256 + $0x70] sm:$0xf]
        %v448 = vld [vmem:[%s256 + $0x74] sm:$0xf]
        %v449 = vld [vmem:[%s256 + $0x78] sm:$0xf]
        %v450 = vld [vmem:[%s256 + $0x7c] sm:$0xf]
        %v451 = vld [vmem:[%s271] sm:$0xff]
        %v452 = vld [vmem:[%s271 + $0x8] sm:$0xff]
        %v453 = vld [vmem:[%s271 + $0x10] sm:$0xff]
        %v454 = vld [vmem:[%s271 + $0x18] sm:$0xff]
        %v455 = vld [vmem:[%s271 + $0x20] sm:$0xff]
        %v456 = vld [vmem:[%s271 + $0x28] sm:$0xff]
        %v457 = vld [vmem:[%s271 + $0x30] sm:$0xff]
        %v458 = vld [vmem:[%s271 + $0x38] sm:$0xff]
        %v459 = vld [vmem:[%s271 + $0x40] sm:$0xff]
        %v460 = vld [vmem:[%s271 + $0x48] sm:$0xff]
        %v461 = vld [vmem:[%s271 + $0x50] sm:$0xff]
        %v462 = vld [vmem:[%s271 + $0x58] sm:$0xff]
        %v463 = vld [vmem:[%s271 + $0x60] sm:$0xff]
        %v464 = vld [vmem:[%s271 + $0x68] sm:$0xff]
        %v465 = vld [vmem:[%s271 + $0x70] sm:$0xff]
        %v466 = vld [vmem:[%s271 + $0x78] sm:$0xff]
        %v499 = vunpack.c.l.b16 %v419
        %v500 = vunpack.c.l.b16 %v420
        %v501 = vunpack.c.l.b16 %v421
        %v502 = vunpack.c.l.b16 %v422
        %v503 = vunpack.c.l.b16 %v423
        %v504 = vunpack.c.l.b16 %v424
        %v505 = vunpack.c.l.b16 %v425
        %v506 = vunpack.c.l.b16 %v426
        %v507 = vunpack.c.l.b16 %v427
        %v508 = vunpack.c.l.b16 %v428
        %v509 = vunpack.c.l.b16 %v429
        %v510 = vunpack.c.l.b16 %v430
        %v511 = vunpack.c.l.b16 %v431
        %v512 = vunpack.c.l.b16 %v432
        %v513 = vunpack.c.l.b16 %v433
        %v514 = vunpack.c.l.b16 %v434
        %v515 = vunpack.c.l.b16 %v435
        %v516 = vunpack.c.l.b16 %v436
        %v517 = vunpack.c.l.b16 %v437
        %v518 = vunpack.c.l.b16 %v438
        %v519 = vunpack.c.l.b16 %v439
        %v520 = vunpack.c.l.b16 %v440
        %v521 = vunpack.c.l.b16 %v441
        %v522 = vunpack.c.l.b16 %v442
        %v523 = vunpack.c.l.b16 %v443
        %v524 = vunpack.c.l.b16 %v444
        %v525 = vunpack.c.l.b16 %v445
        %v526 = vunpack.c.l.b16 %v446
        %v527 = vunpack.c.l.b16 %v447
        %v528 = vunpack.c.l.b16 %v448
        %v529 = vunpack.c.l.b16 %v449
        %v530 = vunpack.c.l.b16 %v450
        %v531 = vpack.c.b16 %v500, %v499
        %v532 = vpack.c.b16 %v502, %v501
        %v533 = vpack.c.b16 %v504, %v503
        %v534 = vpack.c.b16 %v506, %v505
        %v535 = vpack.c.b16 %v508, %v507
        %v536 = vpack.c.b16 %v510, %v509
        %v537 = vpack.c.b16 %v512, %v511
        %v538 = vpack.c.b16 %v514, %v513
        %v539 = vpack.c.b16 %v516, %v515
        %v540 = vpack.c.b16 %v518, %v517
        %v541 = vpack.c.b16 %v520, %v519
        %v542 = vpack.c.b16 %v522, %v521
        %v543 = vpack.c.b16 %v524, %v523
        %v544 = vpack.c.b16 %v526, %v525
        %v545 = vpack.c.b16 %v528, %v527
        %v546 = vpack.c.b16 %v530, %v529
        %v579 = vunpack.c.l.b16 %v451
        %v580 = vunpack.c.h.b16 %v451
        %v581 = vunpack.c.l.b16 %v452
        %v582 = vunpack.c.h.b16 %v452
        %v583 = vunpack.c.l.b16 %v453
        %v584 = vunpack.c.h.b16 %v453
        %v585 = vunpack.c.l.b16 %v454
        %v586 = vunpack.c.h.b16 %v454
        %v587 = vunpack.c.l.b16 %v455
        %v588 = vunpack.c.h.b16 %v455
        %v589 = vunpack.c.l.b16 %v456
        %v590 = vunpack.c.h.b16 %v456
        %v591 = vunpack.c.l.b16 %v457
        %v592 = vunpack.c.h.b16 %v457
        %v593 = vunpack.c.l.b16 %v458
        %v594 = vunpack.c.h.b16 %v458
        %v595 = vunpack.c.l.b16 %v459
        %v596 = vunpack.c.h.b16 %v459
        %v597 = vunpack.c.l.b16 %v460
        %v598 = vunpack.c.h.b16 %v460
        %v599 = vunpack.c.l.b16 %v461
        %v600 = vunpack.c.h.b16 %v461
        %v601 = vunpack.c.l.b16 %v462
        %v602 = vunpack.c.h.b16 %v462
        %v603 = vunpack.c.l.b16 %v463
        %v604 = vunpack.c.h.b16 %v463
        %v605 = vunpack.c.l.b16 %v464
        %v606 = vunpack.c.h.b16 %v464
        %v607 = vunpack.c.l.b16 %v465
        %v608 = vunpack.c.h.b16 %v465
        %v609 = vunpack.c.l.b16 %v466
        %v610 = vunpack.c.h.b16 %v466
        %v611 = vpack.c.b16 %v581, %v579
        %v612 = vpack.c.b16 %v582, %v580
        %v613 = vpack.c.b16 %v585, %v583
        %v614 = vpack.c.b16 %v586, %v584
        %v615 = vpack.c.b16 %v589, %v587
        %v616 = vpack.c.b16 %v590, %v588
        %v617 = vpack.c.b16 %v593, %v591
        %v618 = vpack.c.b16 %v594, %v592
        %v619 = vpack.c.b16 %v597, %v595
        %v620 = vpack.c.b16 %v598, %v596
        %v621 = vpack.c.b16 %v601, %v599
        %v622 = vpack.c.b16 %v602, %v600
        %v623 = vpack.c.b16 %v605, %v603
        %v624 = vpack.c.b16 %v606, %v604
        %v625 = vpack.c.b16 %v609, %v607
        %v626 = vpack.c.b16 %v610, %v608
        %643 = vmatprep.subr.bf16.mxu0 %v626
        %644 = vmatpush1.bf16.msra.mxu0 %v625
        %645 = vmatprep.subr.bf16.mxu0 %v624
        %646 = vmatpush1.bf16.msra.mxu0 %v623
        %647 = vmatprep.subr.bf16.mxu0 %v622
        %648 = vmatpush1.bf16.msra.mxu0 %v621
        %649 = vmatprep.subr.bf16.mxu0 %v620
        %650 = vmatpush1.bf16.msra.mxu0 %v619
        %651 = vmatprep.subr.bf16.mxu0 %v618
        %652 = vmatpush1.bf16.msra.mxu0 %v617
        %653 = vmatprep.subr.bf16.mxu0 %v616
        %654 = vmatpush1.bf16.msra.mxu0 %v615
        %655 = vmatprep.subr.bf16.mxu0 %v614
        %656 = vmatpush1.bf16.msra.mxu0 %v613
        %657 = vmatprep.subr.bf16.mxu0 %v612
        %658 = vmatpush1.bf16.msra.mxu0 %v611
        %659 = vmatprep.subr.bf16.mxu0 0
        %660 = vmatpush2.bf16.msra.mxu0 0
        %661 = vmatprep.subr.bf16.mxu0 0
        %662 = vmatpush2.bf16.msra.mxu0 0
        %663 = vmatprep.subr.bf16.mxu0 0
        %664 = vmatpush2.bf16.msra.mxu0 0
        %665 = vmatprep.subr.bf16.mxu0 0
        %666 = vmatpush2.bf16.msra.mxu0 0
        %667 = vmatprep.subr.bf16.mxu0 0
        %668 = vmatpush2.bf16.msra.mxu0 0
        %669 = vmatprep.subr.bf16.mxu0 0
        %670 = vmatpush2.bf16.msra.mxu0 0
        %671 = vmatprep.subr.bf16.mxu0 0
        %672 = vmatpush2.bf16.msra.mxu0 0
        %673 = vmatprep.subr.bf16.mxu0 0
        %674 = vmatpush2.bf16.msra.mxu0 0
        %675 = vmatprep.mubr.bf16.mxu0 0
        %676 = vmatmul.mubr.bf16.gmra.mxu0 %v531
        %v677 = vpop.f32.mrf.mxu0
        %v678 = vadd.f32 0.0, %v677
        %v679 = vpop.f32.mrf.mxu0
        %v680 = vadd.f32 0.0, %v679
        %v681 = vpop.f32.mrf.mxu0
        %v682 = vadd.f32 0.0, %v681
        %v683 = vpop.f32.mrf.mxu0
        %v684 = vadd.f32 0.0, %v683
        %685 = vmatprep.mubr.bf16.mxu0 0
        %686 = vmatmul.mubr.bf16.gmra.mxu0 %v532
        %v687 = vpop.f32.mrf.mxu0
        %v688 = vadd.f32 0.0, %v687
        %v689 = vpop.f32.mrf.mxu0
        %v690 = vadd.f32 0.0, %v689
        %v691 = vpop.f32.mrf.mxu0
        %v692 = vadd.f32 0.0, %v691
        %v693 = vpop.f32.mrf.mxu0
        %v694 = vadd.f32 0.0, %v693
        %695 = vmatprep.mubr.bf16.mxu0 0
        %696 = vmatmul.mubr.bf16.gmra.mxu0 %v533
        %v697 = vpop.f32.mrf.mxu0
        %v698 = vadd.f32 0.0, %v697
        %v699 = vpop.f32.mrf.mxu0
        %v700 = vadd.f32 0.0, %v699
        %v701 = vpop.f32.mrf.mxu0
        %v702 = vadd.f32 0.0, %v701
        %v703 = vpop.f32.mrf.mxu0
        %v704 = vadd.f32 0.0, %v703
        %705 = vmatprep.mubr.bf16.mxu0 0
        %706 = vmatmul.mubr.bf16.gmra.mxu0 %v534
        %v707 = vpop.f32.mrf.mxu0
        %v708 = vadd.f32 0.0, %v707
        %v709 = vpop.f32.mrf.mxu0
        %v710 = vadd.f32 0.0, %v709
        %v711 = vpop.f32.mrf.mxu0
        %v712 = vadd.f32 0.0, %v711
        %v713 = vpop.f32.mrf.mxu0
        %v714 = vadd.f32 0.0, %v713
        %715 = vmatprep.mubr.bf16.mxu0 0
        %716 = vmatmul.mubr.bf16.gmra.mxu0 %v535
        %v717 = vpop.f32.mrf.mxu0
        %v718 = vadd.f32 0.0, %v717
        %v719 = vpop.f32.mrf.mxu0
        %v720 = vadd.f32 0.0, %v719
        %v721 = vpop.f32.mrf.mxu0
        %v722 = vadd.f32 0.0, %v721
        %v723 = vpop.f32.mrf.mxu0
        %v724 = vadd.f32 0.0, %v723
        %725 = vmatprep.mubr.bf16.mxu0 0
        %726 = vmatmul.mubr.bf16.gmra.mxu0 %v536
        %v727 = vpop.f32.mrf.mxu0
        %v728 = vadd.f32 0.0, %v727
        %v729 = vpop.f32.mrf.mxu0
        %v730 = vadd.f32 0.0, %v729
        %v731 = vpop.f32.mrf.mxu0
        %v732 = vadd.f32 0.0, %v731
        %v733 = vpop.f32.mrf.mxu0
        %v734 = vadd.f32 0.0, %v733
        %735 = vmatprep.mubr.bf16.mxu0 0
        %736 = vmatmul.mubr.bf16.gmra.mxu0 %v537
        %v737 = vpop.f32.mrf.mxu0
        %v738 = vadd.f32 0.0, %v737
        %v739 = vpop.f32.mrf.mxu0
        %v740 = vadd.f32 0.0, %v739
        %v741 = vpop.f32.mrf.mxu0
        %v742 = vadd.f32 0.0, %v741
        %v743 = vpop.f32.mrf.mxu0
        %v744 = vadd.f32 0.0, %v743
        %745 = vmatprep.mubr.bf16.mxu0 0
        %746 = vmatmul.mubr.bf16.gmra.mxu0 %v538
        %v747 = vpop.f32.mrf.mxu0
        %v748 = vadd.f32 0.0, %v747
        %v749 = vpop.f32.mrf.mxu0
        %v750 = vadd.f32 0.0, %v749
        %v751 = vpop.f32.mrf.mxu0
        %v752 = vadd.f32 0.0, %v751
        %v753 = vpop.f32.mrf.mxu0
        %v754 = vadd.f32 0.0, %v753
        %755 = vmatprep.mubr.bf16.mxu0 0
        %756 = vmatmul.mubr.bf16.gmra.mxu0 %v539
        %v757 = vpop.f32.mrf.mxu0
        %v758 = vadd.f32 0.0, %v757
        %v759 = vpop.f32.mrf.mxu0
        %v760 = vadd.f32 0.0, %v759
        %v761 = vpop.f32.mrf.mxu0
        %v762 = vadd.f32 0.0, %v761
        %v763 = vpop.f32.mrf.mxu0
        %v764 = vadd.f32 0.0, %v763
        %765 = vmatprep.mubr.bf16.mxu0 0
        %766 = vmatmul.mubr.bf16.gmra.mxu0 %v540
        %v767 = vpop.f32.mrf.mxu0
        %v768 = vadd.f32 0.0, %v767
        %v769 = vpop.f32.mrf.mxu0
        %v770 = vadd.f32 0.0, %v769
        %v771 = vpop.f32.mrf.mxu0
        %v772 = vadd.f32 0.0, %v771
        %v773 = vpop.f32.mrf.mxu0
        %v774 = vadd.f32 0.0, %v773
        %775 = vmatprep.mubr.bf16.mxu0 0
        %776 = vmatmul.mubr.bf16.gmra.mxu0 %v541
        %v777 = vpop.f32.mrf.mxu0
        %v778 = vadd.f32 0.0, %v777
        %v779 = vpop.f32.mrf.mxu0
        %v780 = vadd.f32 0.0, %v779
        %v781 = vpop.f32.mrf.mxu0
        %v782 = vadd.f32 0.0, %v781
        %v783 = vpop.f32.mrf.mxu0
        %v784 = vadd.f32 0.0, %v783
        %785 = vmatprep.mubr.bf16.mxu0 0
        %786 = vmatmul.mubr.bf16.gmra.mxu0 %v542
        %v787 = vpop.f32.mrf.mxu0
        %v788 = vadd.f32 0.0, %v787
        %v789 = vpop.f32.mrf.mxu0
        %v790 = vadd.f32 0.0, %v789
        %v791 = vpop.f32.mrf.mxu0
        %v792 = vadd.f32 0.0, %v791
        %v793 = vpop.f32.mrf.mxu0
        %v794 = vadd.f32 0.0, %v793
        %795 = vmatprep.mubr.bf16.mxu0 0
        %796 = vmatmul.mubr.bf16.gmra.mxu0 %v543
        %v797 = vpop.f32.mrf.mxu0
        %v798 = vadd.f32 0.0, %v797
        %v799 = vpop.f32.mrf.mxu0
        %v800 = vadd.f32 0.0, %v799
        %v801 = vpop.f32.mrf.mxu0
        %v802 = vadd.f32 0.0, %v801
        %v803 = vpop.f32.mrf.mxu0
        %v804 = vadd.f32 0.0, %v803
        %805 = vmatprep.mubr.bf16.mxu0 0
        %806 = vmatmul.mubr.bf16.gmra.mxu0 %v544
        %v807 = vpop.f32.mrf.mxu0
        %v808 = vadd.f32 0.0, %v807
        %v809 = vpop.f32.mrf.mxu0
        %v810 = vadd.f32 0.0, %v809
        %v811 = vpop.f32.mrf.mxu0
        %v812 = vadd.f32 0.0, %v811
        %v813 = vpop.f32.mrf.mxu0
        %v814 = vadd.f32 0.0, %v813
        %815 = vmatprep.mubr.bf16.mxu0 0
        %816 = vmatmul.mubr.bf16.gmra.mxu0 %v545
        %v817 = vpop.f32.mrf.mxu0
        %v818 = vadd.f32 0.0, %v817
        %v819 = vpop.f32.mrf.mxu0
        %v820 = vadd.f32 0.0, %v819
        %v821 = vpop.f32.mrf.mxu0
        %v822 = vadd.f32 0.0, %v821
        %v823 = vpop.f32.mrf.mxu0
        %v824 = vadd.f32 0.0, %v823
        %825 = vmatprep.mubr.bf16.mxu0 0
        %826 = vmatmul.mubr.bf16.gmra.mxu0 %v546
        %v827 = vpop.f32.mrf.mxu0
        %v828 = vadd.f32 0.0, %v827
        %v829 = vpop.f32.mrf.mxu0
        %v830 = vadd.f32 0.0, %v829
        %v831 = vpop.f32.mrf.mxu0
        %v832 = vadd.f32 0.0, %v831
        %v833 = vpop.f32.mrf.mxu0
        %v834 = vadd.f32 0.0, %v833
        %835 = vdwg.mxu0
        %v836 = vadd.f32 %v355, %v678
        %v837 = vadd.f32 %v356, %v680
        %v838 = vadd.f32 %v357, %v682
        %v839 = vadd.f32 %v358, %v684
        %v840 = vadd.f32 %v359, %v688
        %v841 = vadd.f32 %v360, %v690
        %v842 = vadd.f32 %v361, %v692
        %v843 = vadd.f32 %v362, %v694
        %v844 = vadd.f32 %v363, %v698
        %v845 = vadd.f32 %v364, %v700
        %v846 = vadd.f32 %v365, %v702
        %v847 = vadd.f32 %v366, %v704
        %v848 = vadd.f32 %v367, %v708
        %v849 = vadd.f32 %v368, %v710
        %v850 = vadd.f32 %v369, %v712
        %v851 = vadd.f32 %v370, %v714
        %v852 = vadd.f32 %v371, %v718
        %v853 = vadd.f32 %v372, %v720
        %v854 = vadd.f32 %v373, %v722
        %v855 = vadd.f32 %v374, %v724
        %v856 = vadd.f32 %v375, %v728
        %v857 = vadd.f32 %v376, %v730
        %v858 = vadd.f32 %v377, %v732
        %v859 = vadd.f32 %v378, %v734
        %v860 = vadd.f32 %v379, %v738
        %v861 = vadd.f32 %v380, %v740
        %v862 = vadd.f32 %v381, %v742
        %v863 = vadd.f32 %v382, %v744
        %v864 = vadd.f32 %v383, %v748
        %v865 = vadd.f32 %v384, %v750
        %v866 = vadd.f32 %v385, %v752
        %v867 = vadd.f32 %v386, %v754
        %v868 = vadd.f32 %v387, %v758
        %v869 = vadd.f32 %v388, %v760
        %v870 = vadd.f32 %v389, %v762
        %v871 = vadd.f32 %v390, %v764
        %v872 = vadd.f32 %v391, %v768
        %v873 = vadd.f32 %v392, %v770
        %v874 = vadd.f32 %v393, %v772
        %v875 = vadd.f32 %v394, %v774
        %v876 = vadd.f32 %v395, %v778
        %v877 = vadd.f32 %v396, %v780
        %v878 = vadd.f32 %v397, %v782
        %v879 = vadd.f32 %v398, %v784
        %v880 = vadd.f32 %v399, %v788
        %v881 = vadd.f32 %v400, %v790
        %v882 = vadd.f32 %v401, %v792
        %v883 = vadd.f32 %v402, %v794
        %v884 = vadd.f32 %v403, %v798
        %v885 = vadd.f32 %v404, %v800
        %v886 = vadd.f32 %v405, %v802
        %v887 = vadd.f32 %v406, %v804
        %v888 = vadd.f32 %v407, %v808
        %v889 = vadd.f32 %v408, %v810
        %v890 = vadd.f32 %v409, %v812
        %v891 = vadd.f32 %v410, %v814
        %v892 = vadd.f32 %v411, %v818
        %v893 = vadd.f32 %v412, %v820
        %v894 = vadd.f32 %v413, %v822
        %v895 = vadd.f32 %v414, %v824
        %v896 = vadd.f32 %v415, %v828
        %v897 = vadd.f32 %v416, %v830
        %v898 = vadd.f32 %v417, %v832
        %v899 = vadd.f32 %v418, %v834
        %900 = vst [vmem:[#allocation2] sm:$0xff] %v836
        %901 = vst [vmem:[#allocation2 + $0x8] sm:$0xff] %v837
        %902 = vst [vmem:[#allocation2 + $0x10] sm:$0xff] %v838
        %903 = vst [vmem:[#allocation2 + $0x18] sm:$0xff] %v839
        %904 = vst [vmem:[#allocation2 + $0x20] sm:$0xff] %v840
        %905 = vst [vmem:[#allocation2 + $0x28] sm:$0xff] %v841
        %906 = vst [vmem:[#allocation2 + $0x30] sm:$0xff] %v842
        %907 = vst [vmem:[#allocation2 + $0x38] sm:$0xff] %v843
        %908 = vst [vmem:[#allocation2 + $0x40] sm:$0xff] %v844
        %909 = vst [vmem:[#allocation2 + $0x48] sm:$0xff] %v845
        %910 = vst [vmem:[#allocation2 + $0x50] sm:$0xff] %v846
        %911 = vst [vmem:[#allocation2 + $0x58] sm:$0xff] %v847
        %912 = vst [vmem:[#allocation2 + $0x60] sm:$0xff] %v848
        %913 = vst [vmem:[#allocation2 + $0x68] sm:$0xff] %v849
        %914 = vst [vmem:[#allocation2 + $0x70] sm:$0xff] %v850
        %915 = vst [vmem:[#allocation2 + $0x78] sm:$0xff] %v851
        %916 = vst [vmem:[#allocation2 + $0x80] sm:$0xff] %v852
        %917 = vst [vmem:[#allocation2 + $0x88] sm:$0xff] %v853
        %918 = vst [vmem:[#allocation2 + $0x90] sm:$0xff] %v854
        %919 = vst [vmem:[#allocation2 + $0x98] sm:$0xff] %v855
        %920 = vst [vmem:[#allocation2 + $0xa0] sm:$0xff] %v856
        %921 = vst [vmem:[#allocation2 + $0xa8] sm:$0xff] %v857
        %922 = vst [vmem:[#allocation2 + $0xb0] sm:$0xff] %v858
        %923 = vst [vmem:[#allocation2 + $0xb8] sm:$0xff] %v859
        %924 = vst [vmem:[#allocation2 + $0xc0] sm:$0xff] %v860
        %925 = vst [vmem:[#allocation2 + $0xc8] sm:$0xff] %v861
        %926 = vst [vmem:[#allocation2 + $0xd0] sm:$0xff] %v862
        %927 = vst [vmem:[#allocation2 + $0xd8] sm:$0xff] %v863
        %928 = vst [vmem:[#allocation2 + $0xe0] sm:$0xff] %v864
        %929 = vst [vmem:[#allocation2 + $0xe8] sm:$0xff] %v865
        %930 = vst [vmem:[#allocation2 + $0xf0] sm:$0xff] %v866
        %931 = vst [vmem:[#allocation2 + $0xf8] sm:$0xff] %v867
        %932 = vst [vmem:[#allocation2 + $0x100] sm:$0xff] %v868
        %933 = vst [vmem:[#allocation2 + $0x108] sm:$0xff] %v869
        %934 = vst [vmem:[#allocation2 + $0x110] sm:$0xff] %v870
        %935 = vst [vmem:[#allocation2 + $0x118] sm:$0xff] %v871
        %936 = vst [vmem:[#allocation2 + $0x120] sm:$0xff] %v872
        %937 = vst [vmem:[#allocation2 + $0x128] sm:$0xff] %v873
        %938 = vst [vmem:[#allocation2 + $0x130] sm:$0xff] %v874
        %939 = vst [vmem:[#allocation2 + $0x138] sm:$0xff] %v875
        %940 = vst [vmem:[#allocation2 + $0x140] sm:$0xff] %v876
        %941 = vst [vmem:[#allocation2 + $0x148] sm:$0xff] %v877
        %942 = vst [vmem:[#allocation2 + $0x150] sm:$0xff] %v878
        %943 = vst [vmem:[#allocation2 + $0x158] sm:$0xff] %v879
        %944 = vst [vmem:[#allocation2 + $0x160] sm:$0xff] %v880
        %945 = vst [vmem:[#allocation2 + $0x168] sm:$0xff] %v881
        %946 = vst [vmem:[#allocation2 + $0x170] sm:$0xff] %v882
        %947 = vst [vmem:[#allocation2 + $0x178] sm:$0xff] %v883
        %948 = vst [vmem:[#allocation2 + $0x180] sm:$0xff] %v884
        %949 = vst [vmem:[#allocation2 + $0x188] sm:$0xff] %v885
        %950 = vst [vmem:[#allocation2 + $0x190] sm:$0xff] %v886
        %951 = vst [vmem:[#allocation2 + $0x198] sm:$0xff] %v887
        %952 = vst [vmem:[#allocation2 + $0x1a0] sm:$0xff] %v888
        %953 = vst [vmem:[#allocation2 + $0x1a8] sm:$0xff] %v889
        %954 = vst [vmem:[#allocation2 + $0x1b0] sm:$0xff] %v890
        %955 = vst [vmem:[#allocation2 + $0x1b8] sm:$0xff] %v891
        %956 = vst [vmem:[#allocation2 + $0x1c0] sm:$0xff] %v892
        %957 = vst [vmem:[#allocation2 + $0x1c8] sm:$0xff] %v893
        %958 = vst [vmem:[#allocation2 + $0x1d0] sm:$0xff] %v894
        %959 = vst [vmem:[#allocation2 + $0x1d8] sm:$0xff] %v895
        %960 = vst [vmem:[#allocation2 + $0x1e0] sm:$0xff] %v896
        %961 = vst [vmem:[#allocation2 + $0x1e8] sm:$0xff] %v897
        %962 = vst [vmem:[#allocation2 + $0x1f0] sm:$0xff] %v898
        %963 = vst [vmem:[#allocation2 + $0x1f8] sm:$0xff] %v899
        // Predicated region
        $region37: #{conv_ffn_forward.4} parent=31 // pred_check
          %p964 = pneg %p287
        $region38: #{conv_ffn_forward.4} parent=31 // pred_check_branch
          %966 = sbr.rel (%p964) target = $region40
        $region39: #{conv_ffn_forward.4} parent=31 // pred_region
          %v967 = vld [vmem:[#allocation2] sm:$0xff]
          %v968 = vld [vmem:[#allocation2 + $0x8] sm:$0xff]
          %v969 = vld [vmem:[#allocation2 + $0x10] sm:$0xff]
          %v970 = vld [vmem:[#allocation2 + $0x18] sm:$0xff]
          %v971 = vld [vmem:[#allocation2 + $0x20] sm:$0xff]
          %v972 = vld [vmem:[#allocation2 + $0x28] sm:$0xff]
          %v973 = vld [vmem:[#allocation2 + $0x30] sm:$0xff]
          %v974 = vld [vmem:[#allocation2 + $0x38] sm:$0xff]
          %v975 = vld [vmem:[#allocation2 + $0x40] sm:$0xff]
          %v976 = vld [vmem:[#allocation2 + $0x48] sm:$0xff]
          %v977 = vld [vmem:[#allocation2 + $0x50] sm:$0xff]
          %v978 = vld [vmem:[#allocation2 + $0x58] sm:$0xff]
          %v979 = vld [vmem:[#allocation2 + $0x60] sm:$0xff]
          %v980 = vld [vmem:[#allocation2 + $0x68] sm:$0xff]
          %v981 = vld [vmem:[#allocation2 + $0x70] sm:$0xff]
          %v982 = vld [vmem:[#allocation2 + $0x78] sm:$0xff]
          %v983 = vld [vmem:[#allocation2 + $0x80] sm:$0xff]
          %v984 = vld [vmem:[#allocation2 + $0x88] sm:$0xff]
          %v985 = vld [vmem:[#allocation2 + $0x90] sm:$0xff]
          %v986 = vld [vmem:[#allocation2 + $0x98] sm:$0xff]
          %v987 = vld [vmem:[#allocation2 + $0xa0] sm:$0xff]
          %v988 = vld [vmem:[#allocation2 + $0xa8] sm:$0xff]
          %v989 = vld [vmem:[#allocation2 + $0xb0] sm:$0xff]
          %v990 = vld [vmem:[#allocation2 + $0xb8] sm:$0xff]
          %v991 = vld [vmem:[#allocation2 + $0xc0] sm:$0xff]
          %v992 = vld [vmem:[#allocation2 + $0xc8] sm:$0xff]
          %v993 = vld [vmem:[#allocation2 + $0xd0] sm:$0xff]
          %v994 = vld [vmem:[#allocation2 + $0xd8] sm:$0xff]
          %v995 = vld [vmem:[#allocation2 + $0xe0] sm:$0xff]
          %v996 = vld [vmem:[#allocation2 + $0xe8] sm:$0xff]
          %v997 = vld [vmem:[#allocation2 + $0xf0] sm:$0xff]
          %v998 = vld [vmem:[#allocation2 + $0xf8] sm:$0xff]
          %v999 = vld [vmem:[#allocation2 + $0x100] sm:$0xff]
          %v1000 = vld [vmem:[#allocation2 + $0x108] sm:$0xff]
          %v1001 = vld [vmem:[#allocation2 + $0x110] sm:$0xff]
          %v1002 = vld [vmem:[#allocation2 + $0x118] sm:$0xff]
          %v1003 = vld [vmem:[#allocation2 + $0x120] sm:$0xff]
          %v1004 = vld [vmem:[#allocation2 + $0x128] sm:$0xff]
          %v1005 = vld [vmem:[#allocation2 + $0x130] sm:$0xff]
          %v1006 = vld [vmem:[#allocation2 + $0x138] sm:$0xff]
          %v1007 = vld [vmem:[#allocation2 + $0x140] sm:$0xff]
          %v1008 = vld [vmem:[#allocation2 + $0x148] sm:$0xff]
          %v1009 = vld [vmem:[#allocation2 + $0x150] sm:$0xff]
          %v1010 = vld [vmem:[#allocation2 + $0x158] sm:$0xff]
          %v1011 = vld [vmem:[#allocation2 + $0x160] sm:$0xff]
          %v1012 = vld [vmem:[#allocation2 + $0x168] sm:$0xff]
          %v1013 = vld [vmem:[#allocation2 + $0x170] sm:$0xff]
          %v1014 = vld [vmem:[#allocation2 + $0x178] sm:$0xff]
          %v1015 = vld [vmem:[#allocation2 + $0x180] sm:$0xff]
          %v1016 = vld [vmem:[#allocation2 + $0x188] sm:$0xff]
          %v1017 = vld [vmem:[#allocation2 + $0x190] sm:$0xff]
          %v1018 = vld [vmem:[#allocation2 + $0x198] sm:$0xff]
          %v1019 = vld [vmem:[#allocation2 + $0x1a0] sm:$0xff]
          %v1020 = vld [vmem:[#allocation2 + $0x1a8] sm:$0xff]
          %v1021 = vld [vmem:[#allocation2 + $0x1b0] sm:$0xff]
          %v1022 = vld [vmem:[#allocation2 + $0x1b8] sm:$0xff]
          %v1023 = vld [vmem:[#allocation2 + $0x1c0] sm:$0xff]
          %v1024 = vld [vmem:[#allocation2 + $0x1c8] sm:$0xff]
          %v1025 = vld [vmem:[#allocation2 + $0x1d0] sm:$0xff]
          %v1026 = vld [vmem:[#allocation2 + $0x1d8] sm:$0xff]
          %v1027 = vld [vmem:[#allocation2 + $0x1e0] sm:$0xff]
          %v1028 = vld [vmem:[#allocation2 + $0x1e8] sm:$0xff]
          %v1029 = vld [vmem:[#allocation2 + $0x1f0] sm:$0xff]
          %v1030 = vld [vmem:[#allocation2 + $0x1f8] sm:$0xff]
          %v1031 = vld [vmem:[%s277] sm:$0x3]
          %v1033 = vlaneseq
          %v1034 = vshrl.u32 %v1033, 7
          %v1035 = vsub.s32 0, %v1034
          %v1036 = vrot.slane %v1031, %v1035
          %v1037 = vlaneseq
          %v1038 = vshrl.u32 %v1037, 7
          %v1039 = vsub.s32 1, %v1038
          %v1040 = vrot.slane %v1031, %v1039
          %v1043 = vadd.f32 %v967, %v1036
          %v1044 = vadd.f32 %v968, %v1040
          %v1045 = vadd.f32 %v969, %v1036
          %v1046 = vadd.f32 %v970, %v1040
          %v1047 = vadd.f32 %v971, %v1036
          %v1048 = vadd.f32 %v972, %v1040
          %v1049 = vadd.f32 %v973, %v1036
          %v1050 = vadd.f32 %v974, %v1040
          %v1051 = vadd.f32 %v975, %v1036
          %v1052 = vadd.f32 %v976, %v1040
          %v1053 = vadd.f32 %v977, %v1036
          %v1054 = vadd.f32 %v978, %v1040
          %v1055 = vadd.f32 %v979, %v1036
          %v1056 = vadd.f32 %v980, %v1040
          %v1057 = vadd.f32 %v981, %v1036
          %v1058 = vadd.f32 %v982, %v1040
          %v1059 = vadd.f32 %v983, %v1036
          %v1060 = vadd.f32 %v984, %v1040
          %v1061 = vadd.f32 %v985, %v1036
          %v1062 = vadd.f32 %v986, %v1040
          %v1063 = vadd.f32 %v987, %v1036
          %v1064 = vadd.f32 %v988, %v1040
          %v1065 = vadd.f32 %v989, %v1036
          %v1066 = vadd.f32 %v990, %v1040
          %v1067 = vadd.f32 %v991, %v1036
          %v1068 = vadd.f32 %v992, %v1040
          %v1069 = vadd.f32 %v993, %v1036
          %v1070 = vadd.f32 %v994, %v1040
          %v1071 = vadd.f32 %v995, %v1036
          %v1072 = vadd.f32 %v996, %v1040
          %v1073 = vadd.f32 %v997, %v1036
          %v1074 = vadd.f32 %v998, %v1040
          %v1075 = vadd.f32 %v999, %v1036
          %v1076 = vadd.f32 %v1000, %v1040
          %v1077 = vadd.f32 %v1001, %v1036
          %v1078 = vadd.f32 %v1002, %v1040
          %v1079 = vadd.f32 %v1003, %v1036
          %v1080 = vadd.f32 %v1004, %v1040
          %v1081 = vadd.f32 %v1005, %v1036
          %v1082 = vadd.f32 %v1006, %v1040
          %v1083 = vadd.f32 %v1007, %v1036
          %v1084 = vadd.f32 %v1008, %v1040
          %v1085 = vadd.f32 %v1009, %v1036
          %v1086 = vadd.f32 %v1010, %v1040
          %v1087 = vadd.f32 %v1011, %v1036
          %v1088 = vadd.f32 %v1012, %v1040
          %v1089 = vadd.f32 %v1013, %v1036
          %v1090 = vadd.f32 %v1014, %v1040
          %v1091 = vadd.f32 %v1015, %v1036
          %v1092 = vadd.f32 %v1016, %v1040
          %v1093 = vadd.f32 %v1017, %v1036
          %v1094 = vadd.f32 %v1018, %v1040
          %v1095 = vadd.f32 %v1019, %v1036
          %v1096 = vadd.f32 %v1020, %v1040
          %v1097 = vadd.f32 %v1021, %v1036
          %v1098 = vadd.f32 %v1022, %v1040
          %v1099 = vadd.f32 %v1023, %v1036
          %v1100 = vadd.f32 %v1024, %v1040
          %v1101 = vadd.f32 %v1025, %v1036
          %v1102 = vadd.f32 %v1026, %v1040
          %v1103 = vadd.f32 %v1027, %v1036
          %v1104 = vadd.f32 %v1028, %v1040
          %v1105 = vadd.f32 %v1029, %v1036
          %v1106 = vadd.f32 %v1030, %v1040
          %v1107 = vpack.c.bf16 %v1045, %v1043
          %v1108 = vpack.c.bf16 %v1046, %v1044
          %v1109 = vpack.c.bf16 %v1049, %v1047
          %v1110 = vpack.c.bf16 %v1050, %v1048
          %v1111 = vpack.c.bf16 %v1053, %v1051
          %v1112 = vpack.c.bf16 %v1054, %v1052
          %v1113 = vpack.c.bf16 %v1057, %v1055
          %v1114 = vpack.c.bf16 %v1058, %v1056
          %v1115 = vpack.c.bf16 %v1061, %v1059
          %v1116 = vpack.c.bf16 %v1062, %v1060
          %v1117 = vpack.c.bf16 %v1065, %v1063
          %v1118 = vpack.c.bf16 %v1066, %v1064
          %v1119 = vpack.c.bf16 %v1069, %v1067
          %v1120 = vpack.c.bf16 %v1070, %v1068
          %v1121 = vpack.c.bf16 %v1073, %v1071
          %v1122 = vpack.c.bf16 %v1074, %v1072
          %v1123 = vpack.c.bf16 %v1077, %v1075
          %v1124 = vpack.c.bf16 %v1078, %v1076
          %v1125 = vpack.c.bf16 %v1081, %v1079
          %v1126 = vpack.c.bf16 %v1082, %v1080
          %v1127 = vpack.c.bf16 %v1085, %v1083
          %v1128 = vpack.c.bf16 %v1086, %v1084
          %v1129 = vpack.c.bf16 %v1089, %v1087
          %v1130 = vpack.c.bf16 %v1090, %v1088
          %v1131 = vpack.c.bf16 %v1093, %v1091
          %v1132 = vpack.c.bf16 %v1094, %v1092
          %v1133 = vpack.c.bf16 %v1097, %v1095
          %v1134 = vpack.c.bf16 %v1098, %v1096
          %v1135 = vpack.c.bf16 %v1101, %v1099
          %v1136 = vpack.c.bf16 %v1102, %v1100
          %v1137 = vpack.c.bf16 %v1105, %v1103
          %v1138 = vpack.c.bf16 %v1106, %v1104
          %v1171 = vunpack.c.l.b16 %v1107
          %v1172 = vunpack.c.l.b16 %v1108
          %v1173 = vunpack.c.h.b16 %v1107
          %v1174 = vunpack.c.h.b16 %v1108
          %v1175 = vunpack.c.l.b16 %v1109
          %v1176 = vunpack.c.l.b16 %v1110
          %v1177 = vunpack.c.h.b16 %v1109
          %v1178 = vunpack.c.h.b16 %v1110
          %v1179 = vunpack.c.l.b16 %v1111
          %v1180 = vunpack.c.l.b16 %v1112
          %v1181 = vunpack.c.h.b16 %v1111
          %v1182 = vunpack.c.h.b16 %v1112
          %v1183 = vunpack.c.l.b16 %v1113
          %v1184 = vunpack.c.l.b16 %v1114
          %v1185 = vunpack.c.h.b16 %v1113
          %v1186 = vunpack.c.h.b16 %v1114
          %v1187 = vunpack.c.l.b16 %v1115
          %v1188 = vunpack.c.l.b16 %v1116
          %v1189 = vunpack.c.h.b16 %v1115
          %v1190 = vunpack.c.h.b16 %v1116
          %v1191 = vunpack.c.l.b16 %v1117
          %v1192 = vunpack.c.l.b16 %v1118
          %v1193 = vunpack.c.h.b16 %v1117
          %v1194 = vunpack.c.h.b16 %v1118
          %v1195 = vunpack.c.l.b16 %v1119
          %v1196 = vunpack.c.l.b16 %v1120
          %v1197 = vunpack.c.h.b16 %v1119
          %v1198 = vunpack.c.h.b16 %v1120
          %v1199 = vunpack.c.l.b16 %v1121
          %v1200 = vunpack.c.l.b16 %v1122
          %v1201 = vunpack.c.h.b16 %v1121
          %v1202 = vunpack.c.h.b16 %v1122
          %v1203 = vunpack.c.l.b16 %v1123
          %v1204 = vunpack.c.l.b16 %v1124
          %v1205 = vunpack.c.h.b16 %v1123
          %v1206 = vunpack.c.h.b16 %v1124
          %v1207 = vunpack.c.l.b16 %v1125
          %v1208 = vunpack.c.l.b16 %v1126
          %v1209 = vunpack.c.h.b16 %v1125
          %v1210 = vunpack.c.h.b16 %v1126
          %v1211 = vunpack.c.l.b16 %v1127
          %v1212 = vunpack.c.l.b16 %v1128
          %v1213 = vunpack.c.h.b16 %v1127
          %v1214 = vunpack.c.h.b16 %v1128
          %v1215 = vunpack.c.l.b16 %v1129
          %v1216 = vunpack.c.l.b16 %v1130
          %v1217 = vunpack.c.h.b16 %v1129
          %v1218 = vunpack.c.h.b16 %v1130
          %v1219 = vunpack.c.l.b16 %v1131
          %v1220 = vunpack.c.l.b16 %v1132
          %v1221 = vunpack.c.h.b16 %v1131
          %v1222 = vunpack.c.h.b16 %v1132
          %v1223 = vunpack.c.l.b16 %v1133
          %v1224 = vunpack.c.l.b16 %v1134
          %v1225 = vunpack.c.h.b16 %v1133
          %v1226 = vunpack.c.h.b16 %v1134
          %v1227 = vunpack.c.l.b16 %v1135
          %v1228 = vunpack.c.l.b16 %v1136
          %v1229 = vunpack.c.h.b16 %v1135
          %v1230 = vunpack.c.h.b16 %v1136
          %v1231 = vunpack.c.l.b16 %v1137
          %v1232 = vunpack.c.l.b16 %v1138
          %v1233 = vunpack.c.h.b16 %v1137
          %v1234 = vunpack.c.h.b16 %v1138
          %v1235 = vpack.c.b16 %v1172, %v1171
          %v1236 = vpack.c.b16 %v1174, %v1173
          %v1237 = vpack.c.b16 %v1176, %v1175
          %v1238 = vpack.c.b16 %v1178, %v1177
          %v1239 = vpack.c.b16 %v1180, %v1179
          %v1240 = vpack.c.b16 %v1182, %v1181
          %v1241 = vpack.c.b16 %v1184, %v1183
          %v1242 = vpack.c.b16 %v1186, %v1185
          %v1243 = vpack.c.b16 %v1188, %v1187
          %v1244 = vpack.c.b16 %v1190, %v1189
          %v1245 = vpack.c.b16 %v1192, %v1191
          %v1246 = vpack.c.b16 %v1194, %v1193
          %v1247 = vpack.c.b16 %v1196, %v1195
          %v1248 = vpack.c.b16 %v1198, %v1197
          %v1249 = vpack.c.b16 %v1200, %v1199
          %v1250 = vpack.c.b16 %v1202, %v1201
          %v1251 = vpack.c.b16 %v1204, %v1203
          %v1252 = vpack.c.b16 %v1206, %v1205
          %v1253 = vpack.c.b16 %v1208, %v1207
          %v1254 = vpack.c.b16 %v1210, %v1209
          %v1255 = vpack.c.b16 %v1212, %v1211
          %v1256 = vpack.c.b16 %v1214, %v1213
          %v1257 = vpack.c.b16 %v1216, %v1215
          %v1258 = vpack.c.b16 %v1218, %v1217
          %v1259 = vpack.c.b16 %v1220, %v1219
          %v1260 = vpack.c.b16 %v1222, %v1221
          %v1261 = vpack.c.b16 %v1224, %v1223
          %v1262 = vpack.c.b16 %v1226, %v1225
          %v1263 = vpack.c.b16 %v1228, %v1227
          %v1264 = vpack.c.b16 %v1230, %v1229
          %v1265 = vpack.c.b16 %v1232, %v1231
          %v1266 = vpack.c.b16 %v1234, %v1233
          %1299 = vst [vmem:[%s244] sm:$0xff] %v1235
          %1300 = vst [vmem:[%s244 + $0x8] sm:$0xff] %v1236
          %1301 = vst [vmem:[%s244 + $0x10] sm:$0xff] %v1237
          %1302 = vst [vmem:[%s244 + $0x18] sm:$0xff] %v1238
          %1303 = vst [vmem:[%s244 + $0x20] sm:$0xff] %v1239
          %1304 = vst [vmem:[%s244 + $0x28] sm:$0xff] %v1240
          %1305 = vst [vmem:[%s244 + $0x30] sm:$0xff] %v1241
          %1306 = vst [vmem:[%s244 + $0x38] sm:$0xff] %v1242
          %1307 = vst [vmem:[%s244 + $0x40] sm:$0xff] %v1243
          %1308 = vst [vmem:[%s244 + $0x48] sm:$0xff] %v1244
          %1309 = vst [vmem:[%s244 + $0x50] sm:$0xff] %v1245
          %1310 = vst [vmem:[%s244 + $0x58] sm:$0xff] %v1246
          %1311 = vst [vmem:[%s244 + $0x60] sm:$0xff] %v1247
          %1312 = vst [vmem:[%s244 + $0x68] sm:$0xff] %v1248
          %1313 = vst [vmem:[%s244 + $0x70] sm:$0xff] %v1249
          %1314 = vst [vmem:[%s244 + $0x78] sm:$0xff] %v1250
          %1315 = vst [vmem:[%s244 + $0x80] sm:$0xff] %v1251
          %1316 = vst [vmem:[%s244 + $0x88] sm:$0xff] %v1252
          %1317 = vst [vmem:[%s244 + $0x90] sm:$0xff] %v1253
          %1318 = vst [vmem:[%s244 + $0x98] sm:$0xff] %v1254
          %1319 = vst [vmem:[%s244 + $0xa0] sm:$0xff] %v1255
          %1320 = vst [vmem:[%s244 + $0xa8] sm:$0xff] %v1256
          %1321 = vst [vmem:[%s244 + $0xb0] sm:$0xff] %v1257
          %1322 = vst [vmem:[%s244 + $0xb8] sm:$0xff] %v1258
          %1323 = vst [vmem:[%s244 + $0xc0] sm:$0xff] %v1259
          %1324 = vst [vmem:[%s244 + $0xc8] sm:$0xff] %v1260
          %1325 = vst [vmem:[%s244 + $0xd0] sm:$0xff] %v1261
          %1326 = vst [vmem:[%s244 + $0xd8] sm:$0xff] %v1262
          %1327 = vst [vmem:[%s244 + $0xe0] sm:$0xff] %v1263
          %1328 = vst [vmem:[%s244 + $0xe8] sm:$0xff] %v1264
          %1329 = vst [vmem:[%s244 + $0xf0] sm:$0xff] %v1265
          %1330 = vst [vmem:[%s244 + $0xf8] sm:$0xff] %v1266
        $region40: #{conv_ffn_forward.4} parent=31 // pred_fallthru
          _
        %s1331 = sand.u32 %s125, 1
        %s1332 = sand.u32 %s125, 1
        %s1333 = smul.addr %s1332, 256
        %s1334 = scalar_lea.vmem [#allocation3], %s1333
        // Predicated region
        $region41: #{conv_ffn_forward.4} parent=31 // pred_check
          %p1335 = pneg %p135
        $region42: #{conv_ffn_forward.4} parent=31 // pred_check_branch
          %1337 = sbr.rel (%p1335) target = $region44
        $region43: #{conv_ffn_forward.4} parent=31 // pred_region
          %s1338 = smul.u32 32, %s19
          %s1339 = smul.u32 2, %s20
          %s1340 = ssub.s32 84, %s1338
          %p1341 = scmp.lt.s32.totalorder %s1340, 32
          %s1342 = scalar_select %p1341, %s1340, 32
          %s1343 = smul.u32 64, %s1342
          %s1344 = smul.u32 %s1343, 2
          %p1345 = scmp.ne.s32.totalorder 0, %s1344
          %s1346 = smul.addr %s1338, 2
          %s1347 = sadd.s32 %s1339, %s1346
          %s1348 = smul.addr %s1347, 4
          %s1349 = scalar_lea.vmem %s3, %s1348
          // Predicated region
          $region45: #{conv_ffn_forward.4} parent=43 // pred_check
            %p1350 = pneg %p1345
          $region46: #{conv_ffn_forward.4} parent=43 // pred_check_branch
            %1352 = sbr.rel (%p1350) target = $region48
          $region47: #{conv_ffn_forward.4} parent=43 // pred_region
            // Predicated region
            $region49: #{conv_ffn_forward.4} parent=47 // pred_check
              _
            $region50: #{conv_ffn_forward.4} parent=47 // pred_check_branch
              %1354 = sbr.rel (0) target = $region52
            $region51: #{conv_ffn_forward.4} parent=47 // pred_region
              // Predicated region
              $region71: #{conv_ffn_forward.4} parent=51 // pred_check
                _
              $region72: #{conv_ffn_forward.4} parent=51 // pred_check_branch
                %1466 = sbr.rel (0) target = $region74
              $region73: #{conv_ffn_forward.4} parent=51 // pred_region
                %s1467 = sshrl.u32 %s1342, 5
                // While loop
                $region75: #{conv_ffn_forward.4} parent=73 // loop_pre_header
                  _
                $region76: #{conv_ffn_forward.4} parent=73 // loop_header
                  %s1469 = sphi 0, %s1471
                  %p1470 = scmp.ge.s32.totalorder %s1469, %s1467
                  %s1474 = sphi 0, %s1543
                  %s1475 = sphi %s1334, %s1546
                  %s1476 = sphi %s1349, %s1547
                $region77: #{conv_ffn_forward.4} parent=73 // loop_header_branch
                  %1473 = sbr.rel (%p1470) target = $region81
                $region78: #{conv_ffn_forward.4} parent=73 // loop_body
                  %v1477 = vld [vmem:[%s1475] sm:$0xff]
                  %1478 = vst [vmem:[%s1476] sm:$0xff] %v1477
                  %v1479 = vld [vmem:[%s1475 + $0x8] sm:$0xff]
                  %1480 = vst [vmem:[%s1476 + $0x8] sm:$0xff] %v1479
                  %v1481 = vld [vmem:[%s1475 + $0x10] sm:$0xff]
                  %1482 = vst [vmem:[%s1476 + $0x10] sm:$0xff] %v1481
                  %v1483 = vld [vmem:[%s1475 + $0x18] sm:$0xff]
                  %1484 = vst [vmem:[%s1476 + $0x18] sm:$0xff] %v1483
                  %v1485 = vld [vmem:[%s1475 + $0x20] sm:$0xff]
                  %1486 = vst [vmem:[%s1476 + $0x20] sm:$0xff] %v1485
                  %v1487 = vld [vmem:[%s1475 + $0x28] sm:$0xff]
                  %1488 = vst [vmem:[%s1476 + $0x28] sm:$0xff] %v1487
                  %v1489 = vld [vmem:[%s1475 + $0x30] sm:$0xff]
                  %1490 = vst [vmem:[%s1476 + $0x30] sm:$0xff] %v1489
                  %v1491 = vld [vmem:[%s1475 + $0x38] sm:$0xff]
                  %1492 = vst [vmem:[%s1476 + $0x38] sm:$0xff] %v1491
                  %v1493 = vld [vmem:[%s1475 + $0x40] sm:$0xff]
                  %1494 = vst [vmem:[%s1476 + $0x40] sm:$0xff] %v1493
                  %v1495 = vld [vmem:[%s1475 + $0x48] sm:$0xff]
                  %1496 = vst [vmem:[%s1476 + $0x48] sm:$0xff] %v1495
                  %v1497 = vld [vmem:[%s1475 + $0x50] sm:$0xff]
                  %1498 = vst [vmem:[%s1476 + $0x50] sm:$0xff] %v1497
                  %v1499 = vld [vmem:[%s1475 + $0x58] sm:$0xff]
                  %1500 = vst [vmem:[%s1476 + $0x58] sm:$0xff] %v1499
                  %v1501 = vld [vmem:[%s1475 + $0x60] sm:$0xff]
                  %1502 = vst [vmem:[%s1476 + $0x60] sm:$0xff] %v1501
                  %v1503 = vld [vmem:[%s1475 + $0x68] sm:$0xff]
                  %1504 = vst [vmem:[%s1476 + $0x68] sm:$0xff] %v1503
                  %v1505 = vld [vmem:[%s1475 + $0x70] sm:$0xff]
                  %1506 = vst [vmem:[%s1476 + $0x70] sm:$0xff] %v1505
                  %v1507 = vld [vmem:[%s1475 + $0x78] sm:$0xff]
                  %1508 = vst [vmem:[%s1476 + $0x78] sm:$0xff] %v1507
                  %v1509 = vld [vmem:[%s1475 + $0x80] sm:$0xff]
                  %1510 = vst [vmem:[%s1476 + $0x80] sm:$0xff] %v1509
                  %v1511 = vld [vmem:[%s1475 + $0x88] sm:$0xff]
                  %1512 = vst [vmem:[%s1476 + $0x88] sm:$0xff] %v1511
                  %v1513 = vld [vmem:[%s1475 + $0x90] sm:$0xff]
                  %1514 = vst [vmem:[%s1476 + $0x90] sm:$0xff] %v1513
                  %v1515 = vld [vmem:[%s1475 + $0x98] sm:$0xff]
                  %1516 = vst [vmem:[%s1476 + $0x98] sm:$0xff] %v1515
                  %v1517 = vld [vmem:[%s1475 + $0xa0] sm:$0xff]
                  %1518 = vst [vmem:[%s1476 + $0xa0] sm:$0xff] %v1517
                  %v1519 = vld [vmem:[%s1475 + $0xa8] sm:$0xff]
                  %1520 = vst [vmem:[%s1476 + $0xa8] sm:$0xff] %v1519
                  %v1521 = vld [vmem:[%s1475 + $0xb0] sm:$0xff]
                  %1522 = vst [vmem:[%s1476 + $0xb0] sm:$0xff] %v1521
                  %v1523 = vld [vmem:[%s1475 + $0xb8] sm:$0xff]
                  %1524 = vst [vmem:[%s1476 + $0xb8] sm:$0xff] %v1523
                  %v1525 = vld [vmem:[%s1475 + $0xc0] sm:$0xff]
                  %1526 = vst [vmem:[%s1476 + $0xc0] sm:$0xff] %v1525
                  %v1527 = vld [vmem:[%s1475 + $0xc8] sm:$0xff]
                  %1528 = vst [vmem:[%s1476 + $0xc8] sm:$0xff] %v1527
                  %v1529 = vld [vmem:[%s1475 + $0xd0] sm:$0xff]
                  %1530 = vst [vmem:[%s1476 + $0xd0] sm:$0xff] %v1529
                  %v1531 = vld [vmem:[%s1475 + $0xd8] sm:$0xff]
                  %1532 = vst [vmem:[%s1476 + $0xd8] sm:$0xff] %v1531
                  %v1533 = vld [vmem:[%s1475 + $0xe0] sm:$0xff]
                  %1534 = vst [vmem:[%s1476 + $0xe0] sm:$0xff] %v1533
                  %v1535 = vld [vmem:[%s1475 + $0xe8] sm:$0xff]
                  %1536 = vst [vmem:[%s1476 + $0xe8] sm:$0xff] %v1535
                  %v1537 = vld [vmem:[%s1475 + $0xf0] sm:$0xff]
                  %1538 = vst [vmem:[%s1476 + $0xf0] sm:$0xff] %v1537
                  %v1539 = vld [vmem:[%s1475 + $0xf8] sm:$0xff]
                  %1540 = vst [vmem:[%s1476 + $0xf8] sm:$0xff] %v1539
                  %s1541 = sadd.s32 1, %s1474
                  %p1542 = scmp.ge.s32.totalorder %s1541, %s1467
                  %s1543 = scalar_select %p1542, 0, %s1541
                  %s1544 = smul.u32 %s1543, 256
                  %s1545 = smul.u32 %s1543, 256
                  %s1546 = scalar_lea.vmem %s1334, %s1544 [#allocation3]
                  %s1547 = scalar_lea.vmem %s1349, %s1545
                $region79: #{conv_ffn_forward.4} parent=73 // loop_footer
                  %s1471 = sadd.s32 %s1469, 1
                $region80: #{conv_ffn_forward.4} parent=73 // loop_footer_branch
                  %1468 = sbr.rel target = $region76
                $region81: #{conv_ffn_forward.4} parent=73 // loop_exit
                  _
                %s1548 = sshrl.u32 %s1342, 5
                %s1549 = sand.u32 %s1342, 31
                %s1550 = smul.u32 %s1548, 32
                %s1551 = smul.u32 8, %s1550
                %s1552 = scalar_lea.vmem %s1334, %s1551 [#allocation3]
                %s1553 = smul.u32 8, %s1550
                %s1554 = scalar_lea.vmem %s1349, %s1553
                // While loop
                $region82: #{conv_ffn_forward.4} parent=73 // loop_pre_header
                  _
                $region83: #{conv_ffn_forward.4} parent=73 // loop_header
                  %s1556 = sphi 0, %s1558
                  %p1557 = scmp.ge.s32.totalorder %s1556, %s1549
                  %s1561 = sphi 0, %s1568
                  %s1562 = sphi %s1552, %s1571
                  %s1563 = sphi %s1554, %s1572
                $region84: #{conv_ffn_forward.4} parent=73 // loop_header_branch
                  %1560 = sbr.rel (%p1557) target = $region88
                $region85: #{conv_ffn_forward.4} parent=73 // loop_body
                  %v1564 = vld [vmem:[%s1562] sm:$0xff]
                  %1565 = vst [vmem:[%s1563] sm:$0xff] %v1564
                  %s1566 = sadd.s32 1, %s1561
                  %p1567 = scmp.ge.s32.totalorder %s1566, %s1549
                  %s1568 = scalar_select %p1567, 0, %s1566
                  %s1569 = smul.u32 %s1568, 8
                  %s1570 = smul.u32 %s1568, 8
                  %s1571 = scalar_lea.vmem %s1552, %s1569 [#allocation3]
                  %s1572 = scalar_lea.vmem %s1554, %s1570
                $region86: #{conv_ffn_forward.4} parent=73 // loop_footer
                  %s1558 = sadd.s32 %s1556, 1
                $region87: #{conv_ffn_forward.4} parent=73 // loop_footer_branch
                  %1555 = sbr.rel target = $region83
                $region88: #{conv_ffn_forward.4} parent=73 // loop_exit
                  _
              $region74: #{conv_ffn_forward.4} parent=51 // pred_fallthru
                _
              // Predicated region
              $region89: #{conv_ffn_forward.4} parent=51 // pred_check
                _
              $region90: #{conv_ffn_forward.4} parent=51 // pred_check_branch
                %1574 = sbr.rel target = $region92
              $region91: #{conv_ffn_forward.4} parent=51 // pred_region
                _
              $region92: #{conv_ffn_forward.4} parent=51 // pred_fallthru
                _
            $region52: #{conv_ffn_forward.4} parent=47 // pred_fallthru
              _
            // Predicated region
            $region53: #{conv_ffn_forward.4} parent=47 // pred_check
              _
            $region54: #{conv_ffn_forward.4} parent=47 // pred_check_branch
              %1356 = sbr.rel target = $region56
            $region55: #{conv_ffn_forward.4} parent=47 // pred_region
              %s1358 = ssub.s32 256, 1
              %s1359 = sshrl.u32 %s1342, 5
              // While loop
              $region57: #{conv_ffn_forward.4} parent=55 // loop_pre_header
                _
              $region58: #{conv_ffn_forward.4} parent=55 // loop_header
                %s1361 = sphi 0, %s1363
                %p1362 = scmp.ge.s32.totalorder %s1361, %s1359
                %s1366 = sphi 0, %s1435
                %s1367 = sphi %s1334, %s1438
                %s1368 = sphi %s1349, %s1439
              $region59: #{conv_ffn_forward.4} parent=55 // loop_header_branch
                %1365 = sbr.rel (%p1362) target = $region63
              $region60: #{conv_ffn_forward.4} parent=55 // loop_body
                %v1369 = vld [vmem:[%s1367] sm:%s1358]
                %1370 = vst [vmem:[%s1368] sm:%s1358] %v1369
                %v1371 = vld [vmem:[%s1367 + $0x8] sm:%s1358]
                %1372 = vst [vmem:[%s1368 + $0x8] sm:%s1358] %v1371
                %v1373 = vld [vmem:[%s1367 + $0x10] sm:%s1358]
                %1374 = vst [vmem:[%s1368 + $0x10] sm:%s1358] %v1373
                %v1375 = vld [vmem:[%s1367 + $0x18] sm:%s1358]
                %1376 = vst [vmem:[%s1368 + $0x18] sm:%s1358] %v1375
                %v1377 = vld [vmem:[%s1367 + $0x20] sm:%s1358]
                %1378 = vst [vmem:[%s1368 + $0x20] sm:%s1358] %v1377
                %v1379 = vld [vmem:[%s1367 + $0x28] sm:%s1358]
                %1380 = vst [vmem:[%s1368 + $0x28] sm:%s1358] %v1379
                %v1381 = vld [vmem:[%s1367 + $0x30] sm:%s1358]
                %1382 = vst [vmem:[%s1368 + $0x30] sm:%s1358] %v1381
                %v1383 = vld [vmem:[%s1367 + $0x38] sm:%s1358]
                %1384 = vst [vmem:[%s1368 + $0x38] sm:%s1358] %v1383
                %v1385 = vld [vmem:[%s1367 + $0x40] sm:%s1358]
                %1386 = vst [vmem:[%s1368 + $0x40] sm:%s1358] %v1385
                %v1387 = vld [vmem:[%s1367 + $0x48] sm:%s1358]
                %1388 = vst [vmem:[%s1368 + $0x48] sm:%s1358] %v1387
                %v1389 = vld [vmem:[%s1367 + $0x50] sm:%s1358]
                %1390 = vst [vmem:[%s1368 + $0x50] sm:%s1358] %v1389
                %v1391 = vld [vmem:[%s1367 + $0x58] sm:%s1358]
                %1392 = vst [vmem:[%s1368 + $0x58] sm:%s1358] %v1391
                %v1393 = vld [vmem:[%s1367 + $0x60] sm:%s1358]
                %1394 = vst [vmem:[%s1368 + $0x60] sm:%s1358] %v1393
                %v1395 = vld [vmem:[%s1367 + $0x68] sm:%s1358]
                %1396 = vst [vmem:[%s1368 + $0x68] sm:%s1358] %v1395
                %v1397 = vld [vmem:[%s1367 + $0x70] sm:%s1358]
                %1398 = vst [vmem:[%s1368 + $0x70] sm:%s1358] %v1397
                %v1399 = vld [vmem:[%s1367 + $0x78] sm:%s1358]
                %1400 = vst [vmem:[%s1368 + $0x78] sm:%s1358] %v1399
                %v1401 = vld [vmem:[%s1367 + $0x80] sm:%s1358]
                %1402 = vst [vmem:[%s1368 + $0x80] sm:%s1358] %v1401
                %v1403 = vld [vmem:[%s1367 + $0x88] sm:%s1358]
                %1404 = vst [vmem:[%s1368 + $0x88] sm:%s1358] %v1403
                %v1405 = vld [vmem:[%s1367 + $0x90] sm:%s1358]
                %1406 = vst [vmem:[%s1368 + $0x90] sm:%s1358] %v1405
                %v1407 = vld [vmem:[%s1367 + $0x98] sm:%s1358]
                %1408 = vst [vmem:[%s1368 + $0x98] sm:%s1358] %v1407
                %v1409 = vld [vmem:[%s1367 + $0xa0] sm:%s1358]
                %1410 = vst [vmem:[%s1368 + $0xa0] sm:%s1358] %v1409
                %v1411 = vld [vmem:[%s1367 + $0xa8] sm:%s1358]
                %1412 = vst [vmem:[%s1368 + $0xa8] sm:%s1358] %v1411
                %v1413 = vld [vmem:[%s1367 + $0xb0] sm:%s1358]
                %1414 = vst [vmem:[%s1368 + $0xb0] sm:%s1358] %v1413
                %v1415 = vld [vmem:[%s1367 + $0xb8] sm:%s1358]
                %1416 = vst [vmem:[%s1368 + $0xb8] sm:%s1358] %v1415
                %v1417 = vld [vmem:[%s1367 + $0xc0] sm:%s1358]
                %1418 = vst [vmem:[%s1368 + $0xc0] sm:%s1358] %v1417
                %v1419 = vld [vmem:[%s1367 + $0xc8] sm:%s1358]
                %1420 = vst [vmem:[%s1368 + $0xc8] sm:%s1358] %v1419
                %v1421 = vld [vmem:[%s1367 + $0xd0] sm:%s1358]
                %1422 = vst [vmem:[%s1368 + $0xd0] sm:%s1358] %v1421
                %v1423 = vld [vmem:[%s1367 + $0xd8] sm:%s1358]
                %1424 = vst [vmem:[%s1368 + $0xd8] sm:%s1358] %v1423
                %v1425 = vld [vmem:[%s1367 + $0xe0] sm:%s1358]
                %1426 = vst [vmem:[%s1368 + $0xe0] sm:%s1358] %v1425
                %v1427 = vld [vmem:[%s1367 + $0xe8] sm:%s1358]
                %1428 = vst [vmem:[%s1368 + $0xe8] sm:%s1358] %v1427
                %v1429 = vld [vmem:[%s1367 + $0xf0] sm:%s1358]
                %1430 = vst [vmem:[%s1368 + $0xf0] sm:%s1358] %v1429
                %v1431 = vld [vmem:[%s1367 + $0xf8] sm:%s1358]
                %1432 = vst [vmem:[%s1368 + $0xf8] sm:%s1358] %v1431
                %s1433 = sadd.s32 1, %s1366
                %p1434 = scmp.ge.s32.totalorder %s1433, %s1359
                %s1435 = scalar_select %p1434, 0, %s1433
                %s1436 = smul.u32 %s1435, 256
                %s1437 = smul.u32 %s1435, 256
                %s1438 = scalar_lea.vmem %s1334, %s1436 [#allocation3]
                %s1439 = scalar_lea.vmem %s1349, %s1437
              $region61: #{conv_ffn_forward.4} parent=55 // loop_footer
                %s1363 = sadd.s32 %s1361, 1
              $region62: #{conv_ffn_forward.4} parent=55 // loop_footer_branch
                %1360 = sbr.rel target = $region58
              $region63: #{conv_ffn_forward.4} parent=55 // loop_exit
                _
              %s1440 = sshrl.u32 %s1342, 5
              %s1441 = sand.u32 %s1342, 31
              %s1442 = smul.u32 %s1440, 32
              %s1443 = smul.u32 8, %s1442
              %s1444 = scalar_lea.vmem %s1334, %s1443 [#allocation3]
              %s1445 = smul.u32 8, %s1442
              %s1446 = scalar_lea.vmem %s1349, %s1445
              // While loop
              $region64: #{conv_ffn_forward.4} parent=55 // loop_pre_header
                _
              $region65: #{conv_ffn_forward.4} parent=55 // loop_header
                %s1448 = sphi 0, %s1450
                %p1449 = scmp.ge.s32.totalorder %s1448, %s1441
                %s1453 = sphi 0, %s1460
                %s1454 = sphi %s1444, %s1463
                %s1455 = sphi %s1446, %s1464
              $region66: #{conv_ffn_forward.4} parent=55 // loop_header_branch
                %1452 = sbr.rel (%p1449) target = $region70
              $region67: #{conv_ffn_forward.4} parent=55 // loop_body
                %v1456 = vld [vmem:[%s1454] sm:%s1358]
                %1457 = vst [vmem:[%s1455] sm:%s1358] %v1456
                %s1458 = sadd.s32 1, %s1453
                %p1459 = scmp.ge.s32.totalorder %s1458, %s1441
                %s1460 = scalar_select %p1459, 0, %s1458
                %s1461 = smul.u32 %s1460, 8
                %s1462 = smul.u32 %s1460, 8
                %s1463 = scalar_lea.vmem %s1444, %s1461 [#allocation3]
                %s1464 = scalar_lea.vmem %s1446, %s1462
              $region68: #{conv_ffn_forward.4} parent=55 // loop_footer
                %s1450 = sadd.s32 %s1448, 1
              $region69: #{conv_ffn_forward.4} parent=55 // loop_footer_branch
                %1447 = sbr.rel target = $region65
              $region70: #{conv_ffn_forward.4} parent=55 // loop_exit
                _
            $region56: #{conv_ffn_forward.4} parent=47 // pred_fallthru
              _
          $region48: #{conv_ffn_forward.4} parent=43 // pred_fallthru
            _
          %1575 = vnop
        $region44: #{conv_ffn_forward.4} parent=31 // pred_fallthru
          _
      $region32: #{conv_ffn_forward.4} parent=5 // pred_fallthru
        _
      %p1576 = scmp.le.s32.totalorder 2, %s9
      // Predicated region
      $region93: #{conv_ffn_forward.4} parent=5 // pred_check
        %p1577 = pneg %p1576
      $region94: #{conv_ffn_forward.4} parent=5 // pred_check_branch
        %1579 = sbr.rel (%p1577) target = $region96
      $region95: #{conv_ffn_forward.4} parent=5 // pred_region
        %s1580 = ssub.s32 %s9, 2
        // Predicated region
        $region97: #{conv_ffn_forward.4} parent=95 // pred_check
          %p1581 = pneg %p141
        $region98: #{conv_ffn_forward.4} parent=95 // pred_check_branch
          %1583 = sbr.rel (%p1581) target = $region100
        $region99: #{conv_ffn_forward.4} parent=95 // pred_region
          %s1584 = sand.u32 %s126, 1
          %s1585 = sand.u32 %s126, 1
          %s1586 = smul.addr %s1585, 256
          %s1587 = scalar_lea.vmem [#allocation3], %s1586
        $region100: #{conv_ffn_forward.4} parent=95 // pred_fallthru
          _
      $region96: #{conv_ffn_forward.4} parent=5 // pred_fallthru
        _
    $region6: #{conv_ffn_forward.4} parent=1 // loop_footer
      %s13 = sadd.s32 1, %s9
    $region7: #{conv_ffn_forward.4} parent=1 // loop_footer_branch
      %8 = sbr.rel target = $region3
    $region8: #{conv_ffn_forward.4} parent=1 // loop_exit
      _

// kernel: conv_ffn_forward.7
$region0: #{conv_ffn_forward.7}
  #allocation0 [shape = 'u32[]', space=smem, size = 0x4, offset = 0x4, fixed_abs, tag = 'smem constant byte address 0x4 - core index']
  #allocation1 [shape = 'u32[144,128]{1,0:T(1,128)}', space=vmem, size = 0x12000, scoped, tag = 'internal scratch']
  #allocation2 [shape = 'f32[16,128]{1,0:T(8,128)}', space=vmem, size = 0x2000, scoped, tag = 'scratch operand']
  %s0 = inlined_call_operand.vmem [shape: bf16[2,336,256], index: 0, kind: input, shape index: {}]
  %s1 = inlined_call_operand.vmem [shape: f32[16,1], index: 1, kind: input, shape index: {}]
  %s2 = inlined_call_operand.vmem [shape: f32[16,1], index: 2, kind: input, shape index: {}]
  %s3 = inlined_call_operand.vmem [shape: f32[9,256], index: 3, kind: input, shape index: {}]
  %s4 = inlined_call_operand.vmem [shape: f32[1,256], index: 4, kind: input, shape index: {}]
  %s5 = inlined_call_operand.vmem [shape: bf16[256,128], index: 5, kind: input, shape index: {}]
  %s6 = inlined_call_operand.vmem [shape: f32[1,128], index: 6, kind: input, shape index: {}]
  %s7 = inlined_call_operand.hbm [shape: f32[2,336,128], index: 7, kind: input, shape index: {}, may-alias: {7,8}]
  %s8 = inlined_call_operand.hbm [shape: f32[2,336,128], index: 8, kind: output, shape index: {}, may-alias: {7,8}]
  %s9 = sld [smem:[#allocation0]]
  $region148: #{conv_ffn_forward.7} parent=0
    _
  %s11 = ssub.s32 1, %s9
  %s12 = scalar_select 0, %s11, %s9
  $region1: #{conv_ffn_forward.7} parent=0
    #allocation3 [shape = 'u8[8192]{0}', space=vmem, size = 0x2000, scoped, tag = 'input window, operand 0']
    #allocation4 [shape = 'u8[16384]{0}', space=vmem, size = 0x4000, scoped, tag = 'input window, operand 3']
    #allocation5 [shape = 'u8[16384]{0}', space=vmem, size = 0x4000, scoped, tag = 'output window, operand 0']
    #allocation6 [shape = 's32[2]{0}', space=sflag, size = 0x8, scoped, tag = 'scoped memory for conv_ffn_forward.7']
    %13 = vsyncpa [#allocation6], 0
    %s14 = scalar_lea.sflag [#allocation6], 1
    %15 = vsyncpa %s14, 0
    loop: start=0, step=1, limit=6
    $region2: #{conv_ffn_forward.7} parent=1 // loop_pre_header
      _
    $region3: #{conv_ffn_forward.7} parent=1 // loop_header
      %s17 = sphi 0, %s21
      %p18 = scmp.ge.s32.totalorder %s17, 6
      %s24 = sphi 0, %s36
      %s25 = sphi 0, %s32
      %s26 = sphi 0, %s24
      %s27 = sphi 0, %s25
      %s28 = sphi 0, %s26
      %s29 = sphi 0, %s27
      %s41 = sphi 0, %s43
      %s44 = sphi 0, %s41
      %s45 = sphi 0, %s44
      %s61 = sphi 0, %s45
      %s65 = sphi 0, %s65
      %s67 = sphi 0, %s65
      %s68 = sphi 0, %s67
      %s82 = sphi 0, %s68
      %s86 = sphi 0, %s86
      %s88 = sphi 0, %s86
      %s89 = sphi 0, %s88
      %s103 = sphi 0, %s89
      %s109 = sphi 0, %s111
      %s112 = sphi 0, %s109
      %s113 = sphi 0, %s112
      %s129 = sphi 0, %s113
      %s135 = sphi 0, %s137
      %s138 = sphi 0, %s135
      %s139 = sphi 0, %s138
      %s155 = sphi 0, %s139
      %s161 = sphi 0, %s163
      %s164 = sphi 0, %s161
      %s165 = sphi 0, %s164
      %s181 = sphi 0, %s165
      %s185 = sphi 0, %s185
      %s187 = sphi 0, %s185
      %s188 = sphi 0, %s187
      %s202 = sphi 0, %s188
      %s208 = sphi 0, %s210
      %s211 = sphi 0, %s208
      %s212 = sphi 0, %s211
      %s228 = sphi 0, %s212
    $region4: #{conv_ffn_forward.7} parent=1 // loop_header_branch
      %20 = sbr.rel (%p18) target = $region8
    $region5: #{conv_ffn_forward.7} parent=1 // loop_body
      %s22 = ssub.s32 %s17, 1
      %s23 = ssub.s32 %s17, 2
      %s30 = sadd.s32 1, %s25
      %p31 = scmp.ge.s32.totalorder %s30, 2
      %s32 = scalar_select %p31, 0, %s30
      %s33 = sadd.s32 1, %s24
      %s34 = scalar_select %p31, %s33, %s24
      %p35 = scmp.ge.s32.totalorder %s34, 2
      %s36 = scalar_select %p35, 0, %s34
      %s37 = ssub.s32 %s24, %s36
      %s38 = ssub.s32 %s25, %s32
      %s39 = sor.u32 %s37, %s38
      %p40 = scmp.eq.s32.totalorder %s39, 0
      %s42 = sadd.s32 %s41, 1
      %s43 = scalar_select %p40, %s41, %s42
      %p46 = pneg %p40
      %p47 = scmp.eq.s32.totalorder %s17, 3
      %p48 = por %p46, %p47
      %p49 = scmp.ne.s32.totalorder %s41, %s44
      %p50 = scmp.eq.s32.totalorder %s17, 0
      %p51 = por %p49, %p50
      %p52 = scmp.ne.s32.totalorder %s41, %s44
      %p53 = scmp.eq.s32.totalorder %s22, 3
      %p54 = por %p52, %p53
      %p55 = scmp.ne.s32.totalorder %s44, %s45
      %p56 = scmp.eq.s32.totalorder %s22, 0
      %p57 = por %p55, %p56
      %p58 = scmp.ne.s32.totalorder %s44, %s45
      %p59 = scmp.eq.s32.totalorder %s23, 3
      %p60 = por %p58, %p59
      %p62 = scmp.ne.s32.totalorder %s45, %s61
      %p63 = scmp.eq.s32.totalorder %s23, 0
      %p64 = por %p62, %p63
      %s66 = sadd.s32 %s65, 1
      %p69 = scmp.eq.s32.totalorder %s17, 3
      %p70 = scmp.ne.s32.totalorder %s65, %s67
      %p71 = scmp.eq.s32.totalorder %s17, 0
      %p72 = por %p70, %p71
      %p73 = scmp.ne.s32.totalorder %s65, %s67
      %p74 = scmp.eq.s32.totalorder %s22, 3
      %p75 = por %p73, %p74
      %p76 = scmp.ne.s32.totalorder %s67, %s68
      %p77 = scmp.eq.s32.totalorder %s22, 0
      %p78 = por %p76, %p77
      %p79 = scmp.ne.s32.totalorder %s67, %s68
      %p80 = scmp.eq.s32.totalorder %s23, 3
      %p81 = por %p79, %p80
      %p83 = scmp.ne.s32.totalorder %s68, %s82
      %p84 = scmp.eq.s32.totalorder %s23, 0
      %p85 = por %p83, %p84
      %s87 = sadd.s32 %s86, 1
      %p90 = scmp.eq.s32.totalorder %s17, 3
      %p91 = scmp.ne.s32.totalorder %s86, %s88
      %p92 = scmp.eq.s32.totalorder %s17, 0
      %p93 = por %p91, %p92
      %p94 = scmp.ne.s32.totalorder %s86, %s88
      %p95 = scmp.eq.s32.totalorder %s22, 3
      %p96 = por %p94, %p95
      %p97 = scmp.ne.s32.totalorder %s88, %s89
      %p98 = scmp.eq.s32.totalorder %s22, 0
      %p99 = por %p97, %p98
      %p100 = scmp.ne.s32.totalorder %s88, %s89
      %p101 = scmp.eq.s32.totalorder %s23, 3
      %p102 = por %p100, %p101
      %p104 = scmp.ne.s32.totalorder %s89, %s103
      %p105 = scmp.eq.s32.totalorder %s23, 0
      %p106 = por %p104, %p105
      %s107 = ssub.s32 %s25, %s32
      %p108 = scmp.eq.s32.totalorder %s107, 0
      %s110 = sadd.s32 %s109, 1
      %s111 = scalar_select %p108, %s109, %s110
      %p114 = pneg %p108
      %p115 = scmp.eq.s32.totalorder %s17, 3
      %p116 = por %p114, %p115
      %p117 = scmp.ne.s32.totalorder %s109, %s112
      %p118 = scmp.eq.s32.totalorder %s17, 0
      %p119 = por %p117, %p118
      %p120 = scmp.ne.s32.totalorder %s109, %s112
      %p121 = scmp.eq.s32.totalorder %s22, 3
      %p122 = por %p120, %p121
      %p123 = scmp.ne.s32.totalorder %s112, %s113
      %p124 = scmp.eq.s32.totalorder %s22, 0
      %p125 = por %p123, %p124
      %p126 = scmp.ne.s32.totalorder %s112, %s113
      %p127 = scmp.eq.s32.totalorder %s23, 3
      %p128 = por %p126, %p127
      %p130 = scmp.ne.s32.totalorder %s113, %s129
      %p131 = scmp.eq.s32.totalorder %s23, 0
      %p132 = por %p130, %p131
      %s133 = ssub.s32 %s25, %s32
      %p134 = scmp.eq.s32.totalorder %s133, 0
      %s136 = sadd.s32 %s135, 1
      %s137 = scalar_select %p134, %s135, %s136
      %p140 = pneg %p134
      %p141 = scmp.eq.s32.totalorder %s17, 3
      %p142 = por %p140, %p141
      %p143 = scmp.ne.s32.totalorder %s135, %s138
      %p144 = scmp.eq.s32.totalorder %s17, 0
      %p145 = por %p143, %p144
      %p146 = scmp.ne.s32.totalorder %s135, %s138
      %p147 = scmp.eq.s32.totalorder %s22, 3
      %p148 = por %p146, %p147
      %p149 = scmp.ne.s32.totalorder %s138, %s139
      %p150 = scmp.eq.s32.totalorder %s22, 0
      %p151 = por %p149, %p150
      %p152 = scmp.ne.s32.totalorder %s138, %s139
      %p153 = scmp.eq.s32.totalorder %s23, 3
      %p154 = por %p152, %p153
      %p156 = scmp.ne.s32.totalorder %s139, %s155
      %p157 = scmp.eq.s32.totalorder %s23, 0
      %p158 = por %p156, %p157
      %s159 = ssub.s32 %s25, %s32
      %p160 = scmp.eq.s32.totalorder %s159, 0
      %s162 = sadd.s32 %s161, 1
      %s163 = scalar_select %p160, %s161, %s162
      %p166 = pneg %p160
      %p167 = scmp.eq.s32.totalorder %s17, 3
      %p168 = por %p166, %p167
      %p169 = scmp.ne.s32.totalorder %s161, %s164
      %p170 = scmp.eq.s32.totalorder %s17, 0
      %p171 = por %p169, %p170
      %p172 = scmp.ne.s32.totalorder %s161, %s164
      %p173 = scmp.eq.s32.totalorder %s22, 3
      %p174 = por %p172, %p173
      %p175 = scmp.ne.s32.totalorder %s164, %s165
      %p176 = scmp.eq.s32.totalorder %s22, 0
      %p177 = por %p175, %p176
      %p178 = scmp.ne.s32.totalorder %s164, %s165
      %p179 = scmp.eq.s32.totalorder %s23, 3
      %p180 = por %p178, %p179
      %p182 = scmp.ne.s32.totalorder %s165, %s181
      %p183 = scmp.eq.s32.totalorder %s23, 0
      %p184 = por %p182, %p183
      %s186 = sadd.s32 %s185, 1
      %p189 = scmp.eq.s32.totalorder %s17, 3
      %p190 = scmp.ne.s32.totalorder %s185, %s187
      %p191 = scmp.eq.s32.totalorder %s17, 0
      %p192 = por %p190, %p191
      %p193 = scmp.ne.s32.totalorder %s185, %s187
      %p194 = scmp.eq.s32.totalorder %s22, 3
      %p195 = por %p193, %p194
      %p196 = scmp.ne.s32.totalorder %s187, %s188
      %p197 = scmp.eq.s32.totalorder %s22, 0
      %p198 = por %p196, %p197
      %p199 = scmp.ne.s32.totalorder %s187, %s188
      %p200 = scmp.eq.s32.totalorder %s23, 3
      %p201 = por %p199, %p200
      %p203 = scmp.ne.s32.totalorder %s188, %s202
      %p204 = scmp.eq.s32.totalorder %s23, 0
      %p205 = por %p203, %p204
      %s206 = ssub.s32 %s24, %s36
      %p207 = scmp.eq.s32.totalorder %s206, 0
      %s209 = sadd.s32 %s208, 1
      %s210 = scalar_select %p207, %s208, %s209
      %p213 = pneg %p207
      %p214 = scmp.eq.s32.totalorder %s17, 3
      %p215 = por %p213, %p214
      %p216 = scmp.ne.s32.totalorder %s208, %s211
      %p217 = scmp.eq.s32.totalorder %s17, 0
      %p218 = por %p216, %p217
      %p219 = scmp.ne.s32.totalorder %s208, %s211
      %p220 = scmp.eq.s32.totalorder %s22, 3
      %p221 = por %p219, %p220
      %p222 = scmp.ne.s32.totalorder %s211, %s212
      %p223 = scmp.eq.s32.totalorder %s22, 0
      %p224 = por %p222, %p223
      %p225 = scmp.ne.s32.totalorder %s211, %s212
      %p226 = scmp.eq.s32.totalorder %s23, 3
      %p227 = por %p225, %p226
      %p229 = scmp.ne.s32.totalorder %s212, %s228
      %p230 = scmp.eq.s32.totalorder %s23, 0
      %p231 = por %p229, %p230
      %p232 = scmp.le.s32.totalorder 1, %s17
      %p233 = scmp.lt.s32.totalorder %s17, 5
      %p234 = pnand %p232, %p233
      %p235 = pneg %p234
      // Predicated region
      $region9: #{conv_ffn_forward.7} parent=5 // pred_check
        _
      $region10: #{conv_ffn_forward.7} parent=5 // pred_check_branch
        %237 = sbr.rel (%p234) target = $region12
      $region11: #{conv_ffn_forward.7} parent=5 // pred_region
        %s238 = ssub.s32 %s17, 1
        // Predicated region
        $region13: #{conv_ffn_forward.7} parent=11 // pred_check
          %p239 = pneg %p78
        $region14: #{conv_ffn_forward.7} parent=11 // pred_check_branch
          %241 = sbr.rel (%p239) target = $region16
        $region15: #{conv_ffn_forward.7} parent=11 // pred_region
          _
        $region16: #{conv_ffn_forward.7} parent=11 // pred_fallthru
          _
        // Predicated region
        $region17: #{conv_ffn_forward.7} parent=11 // pred_check
          %p242 = pneg %p99
        $region18: #{conv_ffn_forward.7} parent=11 // pred_check_branch
          %244 = sbr.rel (%p242) target = $region20
        $region19: #{conv_ffn_forward.7} parent=11 // pred_region
          _
        $region20: #{conv_ffn_forward.7} parent=11 // pred_fallthru
          _
        // Predicated region
        $region21: #{conv_ffn_forward.7} parent=11 // pred_check
          %p245 = pneg %p198
        $region22: #{conv_ffn_forward.7} parent=11 // pred_check_branch
          %247 = sbr.rel (%p245) target = $region24
        $region23: #{conv_ffn_forward.7} parent=11 // pred_region
          _
        $region24: #{conv_ffn_forward.7} parent=11 // pred_fallthru
          _
      $region12: #{conv_ffn_forward.7} parent=5 // pred_fallthru
        _
      %p248 = scmp.lt.s32.totalorder %s17, 4
      // Predicated region
      $region25: #{conv_ffn_forward.7} parent=5 // pred_check
        %p249 = pneg %p248
      $region26: #{conv_ffn_forward.7} parent=5 // pred_check_branch
        %251 = sbr.rel (%p249) target = $region28
      $region27: #{conv_ffn_forward.7} parent=5 // pred_region
        // Predicated region
        $region29: #{conv_ffn_forward.7} parent=27 // pred_check
          %p252 = pneg %p51
        $region30: #{conv_ffn_forward.7} parent=27 // pred_check_branch
          %254 = sbr.rel (%p252) target = $region32
        $region31: #{conv_ffn_forward.7} parent=27 // pred_region
          %s255 = sand.u32 %s41, 1
          %s256 = sand.u32 %s41, 1
          %s257 = smul.addr %s256, 8
          %s258 = scalar_lea.vmem [#allocation3], %s257
          %s259 = sadd.s32 %s25, 80
          %s260 = smul.addr %s24, 84
          %s261 = sadd.s32 %s259, %s260
          %s262 = smul.addr %s261, 4
          %s263 = scalar_lea.vmem %s0, %s262
          // Predicated region
          $region33: #{conv_ffn_forward.7} parent=31 // pred_check
            _
          $region34: #{conv_ffn_forward.7} parent=31 // pred_check_branch
            %265 = sbr.rel (0) target = $region36
          $region35: #{conv_ffn_forward.7} parent=31 // pred_region
            // Predicated region
            $region37: #{conv_ffn_forward.7} parent=35 // pred_check
              _
            $region38: #{conv_ffn_forward.7} parent=35 // pred_check_branch
              %267 = sbr.rel target = $region40
            $region39: #{conv_ffn_forward.7} parent=35 // pred_region
              // Predicated region
              $region52: #{conv_ffn_forward.7} parent=39 // pred_check
                _
              $region53: #{conv_ffn_forward.7} parent=39 // pred_check_branch
                %285 = sbr.rel (0) target = $region55
              $region54: #{conv_ffn_forward.7} parent=39 // pred_region
                loop: start=0, step=1, limit=1
                $region56: #{conv_ffn_forward.7} parent=54 // loop_pre_header
                  _
                $region57: #{conv_ffn_forward.7} parent=54 // loop_header
                  %s287 = sphi 0, %s291
                  %p288 = scmp.ge.s32.totalorder %s287, 1
                  %s292 = sphi %s263, %s263
                  %s293 = sphi %s258, %s258
                $region58: #{conv_ffn_forward.7} parent=54 // loop_header_branch
                  %290 = sbr.rel (%p288) target = $region62
                $region59: #{conv_ffn_forward.7} parent=54 // loop_body
                  _
                $region60: #{conv_ffn_forward.7} parent=54 // loop_footer
                  %s291 = sadd.s32 1, %s287
                $region61: #{conv_ffn_forward.7} parent=54 // loop_footer_branch
                  %286 = sbr.rel target = $region57
                $region62: #{conv_ffn_forward.7} parent=54 // loop_exit
                  _
                %s295 = ssub.s32 16, 1
                loop: start=0, step=1, limit=1
                $region63: #{conv_ffn_forward.7} parent=54 // loop_pre_header
                  _
                $region64: #{conv_ffn_forward.7} parent=54 // loop_header
                  %s297 = sphi 0, %s301
                  %p298 = scmp.ge.s32.totalorder %s297, 1
                  %s302 = sphi %s263, %s263
                  %s303 = sphi %s258, %s258
                $region65: #{conv_ffn_forward.7} parent=54 // loop_header_branch
                  %300 = sbr.rel (%p298) target = $region69
                $region66: #{conv_ffn_forward.7} parent=54 // loop_body
                  %v304 = vld [vmem:[%s302] sm:%s295]
                  %305 = vst [vmem:[%s303] sm:%s295] %v304
                  %v306 = vld [vmem:[%s302 + $0x8] sm:%s295]
                  %307 = vst [vmem:[%s303 + $0x4] sm:%s295] %v306
                $region67: #{conv_ffn_forward.7} parent=54 // loop_footer
                  %s301 = sadd.s32 1, %s297
                $region68: #{conv_ffn_forward.7} parent=54 // loop_footer_branch
                  %296 = sbr.rel target = $region64
                $region69: #{conv_ffn_forward.7} parent=54 // loop_exit
                  _
              $region55: #{conv_ffn_forward.7} parent=39 // pred_fallthru
                _
            $region40: #{conv_ffn_forward.7} parent=35 // pred_fallthru
              _
            // Predicated region
            $region41: #{conv_ffn_forward.7} parent=35 // pred_check
              _
            $region42: #{conv_ffn_forward.7} parent=35 // pred_check_branch
              %269 = sbr.rel (0) target = $region44
            $region43: #{conv_ffn_forward.7} parent=35 // pred_region
              %s271 = ssub.s32 16, 1
              loop: start=0, step=1, limit=1
              $region45: #{conv_ffn_forward.7} parent=43 // loop_pre_header
                _
              $region46: #{conv_ffn_forward.7} parent=43 // loop_header
                %s273 = sphi 0, %s277
                %p274 = scmp.ge.s32.totalorder %s273, 1
                %s278 = sphi %s263, %s263
                %s279 = sphi %s258, %s258
              $region47: #{conv_ffn_forward.7} parent=43 // loop_header_branch
                %276 = sbr.rel (%p274) target = $region51
              $region48: #{conv_ffn_forward.7} parent=43 // loop_body
                %v280 = vld [vmem:[%s278] sm:%s271]
                %281 = vst [vmem:[%s279] sm:%s271] %v280
                %v282 = vld [vmem:[%s278 + $0x8] sm:%s271]
                %283 = vst [vmem:[%s279 + $0x4] sm:%s271] %v282
              $region49: #{conv_ffn_forward.7} parent=43 // loop_footer
                %s277 = sadd.s32 1, %s273
              $region50: #{conv_ffn_forward.7} parent=43 // loop_footer_branch
                %272 = sbr.rel target = $region46
              $region51: #{conv_ffn_forward.7} parent=43 // loop_exit
                _
            $region44: #{conv_ffn_forward.7} parent=35 // pred_fallthru
              _
          $region36: #{conv_ffn_forward.7} parent=31 // pred_fallthru
            _
          %308 = vnop
        $region32: #{conv_ffn_forward.7} parent=27 // pred_fallthru
          _
        // Predicated region
        $region70: #{conv_ffn_forward.7} parent=27 // pred_check
          %p309 = pneg %p119
        $region71: #{conv_ffn_forward.7} parent=27 // pred_check_branch
          %311 = sbr.rel (%p309) target = $region73
        $region72: #{conv_ffn_forward.7} parent=27 // pred_region
          %s312 = sand.u32 %s109, 1
          %s313 = sand.u32 %s109, 1
          %s314 = smul.addr %s313, 16
          %s315 = scalar_lea.vmem [#allocation4], %s314
          %s316 = smul.addr %s25, 8
          %s317 = scalar_lea.vmem %s3, %s316
          // Predicated region
          $region74: #{conv_ffn_forward.7} parent=72 // pred_check
            _
          $region75: #{conv_ffn_forward.7} parent=72 // pred_check_branch
            %319 = sbr.rel (0) target = $region77
          $region76: #{conv_ffn_forward.7} parent=72 // pred_region
            // Predicated region
            $region78: #{conv_ffn_forward.7} parent=76 // pred_check
              _
            $region79: #{conv_ffn_forward.7} parent=76 // pred_check_branch
              %321 = sbr.rel (0) target = $region81
            $region80: #{conv_ffn_forward.7} parent=76 // pred_region
              // Predicated region
              $region93: #{conv_ffn_forward.7} parent=80 // pred_check
                _
              $region94: #{conv_ffn_forward.7} parent=80 // pred_check_branch
                %339 = sbr.rel (0) target = $region96
              $region95: #{conv_ffn_forward.7} parent=80 // pred_region
                loop: start=0, step=1, limit=1
                $region97: #{conv_ffn_forward.7} parent=95 // loop_pre_header
                  _
                $region98: #{conv_ffn_forward.7} parent=95 // loop_header
                  %s341 = sphi 0, %s345
                  %p342 = scmp.ge.s32.totalorder %s341, 1
                  %s346 = sphi %s317, %s317
                  %s347 = sphi %s315, %s315
                $region99: #{conv_ffn_forward.7} parent=95 // loop_header_branch
                  %344 = sbr.rel (%p342) target = $region103
                $region100: #{conv_ffn_forward.7} parent=95 // loop_body
                  %v348 = vld [vmem:[%s346] sm:$0xff]
                  %349 = vst [vmem:[%s347] sm:$0xff] %v348
                  %v350 = vld [vmem:[%s346 + $0x10] sm:$0xff]
                  %351 = vst [vmem:[%s347 + $0x8] sm:$0xff] %v350
                $region101: #{conv_ffn_forward.7} parent=95 // loop_footer
                  %s345 = sadd.s32 1, %s341
                $region102: #{conv_ffn_forward.7} parent=95 // loop_footer_branch
                  %340 = sbr.rel target = $region98
                $region103: #{conv_ffn_forward.7} parent=95 // loop_exit
                  _
              $region96: #{conv_ffn_forward.7} parent=80 // pred_fallthru
                _
              // Predicated region
              $region104: #{conv_ffn_forward.7} parent=80 // pred_check
                _
              $region105: #{conv_ffn_forward.7} parent=80 // pred_check_branch
                %353 = sbr.rel target = $region107
              $region106: #{conv_ffn_forward.7} parent=80 // pred_region
                _
              $region107: #{conv_ffn_forward.7} parent=80 // pred_fallthru
                _
            $region81: #{conv_ffn_forward.7} parent=76 // pred_fallthru
              _
            // Predicated region
            $region82: #{conv_ffn_forward.7} parent=76 // pred_check
              _
            $region83: #{conv_ffn_forward.7} parent=76 // pred_check_branch
              %323 = sbr.rel target = $region85
            $region84: #{conv_ffn_forward.7} parent=76 // pred_region
              %s325 = ssub.s32 256, 1
              loop: start=0, step=1, limit=1
              $region86: #{conv_ffn_forward.7} parent=84 // loop_pre_header
                _
              $region87: #{conv_ffn_forward.7} parent=84 // loop_header
                %s327 = sphi 0, %s331
                %p328 = scmp.ge.s32.totalorder %s327, 1
                %s332 = sphi %s317, %s317
                %s333 = sphi %s315, %s315
              $region88: #{conv_ffn_forward.7} parent=84 // loop_header_branch
                %330 = sbr.rel (%p328) target = $region92
              $region89: #{conv_ffn_forward.7} parent=84 // loop_body
                %v334 = vld [vmem:[%s332] sm:%s325]
                %335 = vst [vmem:[%s333] sm:%s325] %v334
                %v336 = vld [vmem:[%s332 + $0x10] sm:%s325]
                %337 = vst [vmem:[%s333 + $0x8] sm:%s325] %v336
              $region90: #{conv_ffn_forward.7} parent=84 // loop_footer
                %s331 = sadd.s32 1, %s327
              $region91: #{conv_ffn_forward.7} parent=84 // loop_footer_branch
                %326 = sbr.rel target = $region87
              $region92: #{conv_ffn_forward.7} parent=84 // loop_exit
                _
            $region85: #{conv_ffn_forward.7} parent=76 // pred_fallthru
              _
          $region77: #{conv_ffn_forward.7} parent=72 // pred_fallthru
            _
          %354 = vnop
        $region73: #{conv_ffn_forward.7} parent=27 // pred_fallthru
          _
        // Predicated region
        $region108: #{conv_ffn_forward.7} parent=27 // pred_check
          %p355 = pneg %p145
        $region109: #{conv_ffn_forward.7} parent=27 // pred_check_branch
          %357 = sbr.rel (%p355) target = $region111
        $region110: #{conv_ffn_forward.7} parent=27 // pred_region
          %p358 = scmp.lt.s32.totalorder %s25, 1
          %s359 = scalar_select %p358, %s25, 1
          %s360 = scalar_lea.vmem %s4, %s359
        $region111: #{conv_ffn_forward.7} parent=27 // pred_fallthru
          _
        // Predicated region
        $region112: #{conv_ffn_forward.7} parent=27 // pred_check
          %p361 = pneg %p171
        $region113: #{conv_ffn_forward.7} parent=27 // pred_check_branch
          %363 = sbr.rel (%p361) target = $region115
        $region114: #{conv_ffn_forward.7} parent=27 // pred_region
          %s364 = smul.u32 16, %s25
          %p365 = scmp.lt.s32.totalorder %s364, 31
          %s366 = scalar_select %p365, %s364, 31
          %s367 = smul.addr %s366, 4
          %s368 = scalar_lea.vmem %s5, %s367
          %s369 = smul.u32 16, %s25
        $region115: #{conv_ffn_forward.7} parent=27 // pred_fallthru
          _
      $region28: #{conv_ffn_forward.7} parent=5 // pred_fallthru
        _
      %p370 = scmp.le.s32.totalorder 1, %s17
      %p371 = scmp.lt.s32.totalorder %s17, 5
      %p372 = pnand %p370, %p371
      %p373 = pneg %p372
      // Predicated region
      $region116: #{conv_ffn_forward.7} parent=5 // pred_check
        _
      $region117: #{conv_ffn_forward.7} parent=5 // pred_check_branch
        %375 = sbr.rel (%p372) target = $region119
      $region118: #{conv_ffn_forward.7} parent=5 // pred_region
        %s376 = ssub.s32 %s17, 1
        %s377 = sand.u32 %s44, 1
        %s378 = sand.u32 %s44, 1
        %s379 = smul.addr %s378, 8
        %s380 = scalar_lea.vmem [#allocation3], %s379
        // Predicated region
        $region120: #{conv_ffn_forward.7} parent=118 // pred_check
          %p381 = pneg %p57
        $region121: #{conv_ffn_forward.7} parent=118 // pred_check_branch
          %383 = sbr.rel (%p381) target = $region123
        $region122: #{conv_ffn_forward.7} parent=118 // pred_region
          _
        $region123: #{conv_ffn_forward.7} parent=118 // pred_fallthru
          _
        %s384 = sand.u32 %s112, 1
        %s385 = sand.u32 %s112, 1
        %s386 = smul.addr %s385, 16
        %s387 = scalar_lea.vmem [#allocation4], %s386
        // Predicated region
        $region124: #{conv_ffn_forward.7} parent=118 // pred_check
          %p388 = pneg %p125
        $region125: #{conv_ffn_forward.7} parent=118 // pred_check_branch
          %390 = sbr.rel (%p388) target = $region127
        $region126: #{conv_ffn_forward.7} parent=118 // pred_region
          _
        $region127: #{conv_ffn_forward.7} parent=118 // pred_fallthru
          _
        %s391 = sand.u32 %s44, 1
        %s392 = sand.u32 %s44, 1
        %s393 = smul.addr %s392, 8
        %s394 = scalar_lea.vmem [#allocation3], %s393
        %p395 = pneg %p57
        %p396 = pneg %p54
        %p397 = pneg %p78
        %p398 = pneg %p75
        %p399 = pneg %p99
        %p400 = pneg %p96
        %s401 = sand.u32 %s112, 1
        %s402 = sand.u32 %s112, 1
        %s403 = smul.addr %s402, 16
        %s404 = scalar_lea.vmem [#allocation4], %s403
        %p405 = pneg %p125
        %p406 = pneg %p122
        %p407 = scmp.lt.s32.totalorder %s27, 1
        %s408 = scalar_select %p407, %s27, 1
        %s409 = scalar_lea.vmem %s4, %s408
        %p410 = pneg %p151
        %p411 = pneg %p148
        %s412 = smul.u32 16, %s27
        %p413 = scmp.lt.s32.totalorder %s412, 31
        %s414 = scalar_select %p413, %s412, 31
        %s415 = smul.addr %s414, 4
        %s416 = scalar_lea.vmem %s5, %s415
        %p417 = pneg %p177
        %p418 = pneg %p174
        %p419 = pneg %p198
        %p420 = pneg %p195
        %p421 = pneg %p224
        %p422 = pneg %p221
        %s423 = sand.u32 %s211, 1
        %s424 = scalar_lea.sflag [#allocation6], %s423
        %s425 = sand.u32 %s211, 1
        %s426 = smul.addr %s425, 16
        %s427 = scalar_lea.vmem [#allocation5], %s426
        %p428 = scmp.lt.s32.totalorder %s27, 1
        %s429 = scalar_select %p428, %s27, 1
        %s430 = scalar_lea.vmem %s4, %s429
        %s431 = smul.u32 16, %s27
        %p432 = scmp.lt.s32.totalorder %s431, 31
        %s433 = scalar_select %p432, %s431, 31
        %s434 = smul.addr %s433, 4
        %s435 = scalar_lea.vmem %s5, %s434
        %s436 = smul.u32 16, %s27
        %p438 = scmp.eq.s32.totalorder %s27, 0
        // Predicated region
        $region128: #{conv_ffn_forward.7} parent=118 // pred_check
          %p439 = pneg %p438
        $region129: #{conv_ffn_forward.7} parent=118 // pred_check_branch
          %441 = sbr.rel (%p439) target = $region131
        $region130: #{conv_ffn_forward.7} parent=118 // pred_region
          %442 = vst [vmem:[#allocation2] sm:$0xff] 0.0
          %443 = vst [vmem:[#allocation2 + $0x8] sm:$0xff] 0.0
        $region131: #{conv_ffn_forward.7} parent=118 // pred_fallthru
          _
        %v444 = vld [vmem:[%s380] sm:$0xf]
        %v445 = vld [vmem:[%s380 + $0x4] sm:$0xf]
        %v446 = vunpack.c.l.bf16 %v444
        %v447 = vunpack.c.l.bf16 %v445
        %v448 = vld [vmem:[%s1] sm:$0xff]
        %v449 = vld [vmem:[%s1 + $0x8] sm:$0xff]
        %v450 = vld [vmem:[%s2] sm:$0xff]
        %v451 = vld [vmem:[%s2 + $0x8] sm:$0xff]
        %v452 = vld [vmem:[%s387] sm:$0xff]
        %v453 = vld [vmem:[%s387 + $0x8] sm:$0x1]
        %vm456 = vcmask 1040384
        %v457 = vrot.slane %v446, 7
        %v458 = vrot.slane %v447, 7
        %v459 = vsel %vm456, %v457, %v458
        %v462 = vsel %vm456, 0.0, %v457
        %464 = vset.pattern.permute.xlu0 0
        %465 = vperm.xlu0 %464, %v448
        %v466 = vpop.permute.xlu0 %465
        %469 = vset.pattern.permute.xlu0 0
        %470 = vperm.xlu0 %469, %v449
        %v471 = vpop.permute.xlu0 %470
        %v473 = vmul.f32 %v462, %v466
        %v474 = vmul.f32 %v459, %v471
        %vm475 = vcmask 1046528
        %v476 = vrot.slane %v446, 1
        %v477 = vrot.slane %v447, 1
        %v478 = vsel %vm475, %v476, %v477
        %v481 = vsel %vm475, %v477, 0.0
        %483 = vset.pattern.permute.xlu0 0
        %484 = vperm.xlu0 %483, %v450
        %v485 = vpop.permute.xlu0 %484
        %488 = vset.pattern.permute.xlu0 0
        %489 = vperm.xlu0 %488, %v451
        %v490 = vpop.permute.xlu0 %489
        %v492 = vmul.f32 %v478, %v485
        %v493 = vmul.f32 %v481, %v490
        %vm496 = vcmask 1043456
        %v497 = vrot.slane %v473, 4
        %v498 = vrot.slane %v474, 4
        %v499 = vsel %vm496, %v497, %v498
        %v502 = vsel %vm496, 0.0, %v497
        %v503 = vlaneseq
        %v504 = vshrl.u32 %v503, 7
        %v505 = vsub.s32 0, %v504
        %v506 = vrot.slane %v452, %v505
        %v507 = vmul.f32 %v502, %v506
        %v508 = vmul.f32 %v499, %v506
        %v509 = vadd.f32 %v507, 0.0
        %v510 = vadd.f32 %v508, 0.0
        %v511 = vrot.slane %v446, 4
        %v512 = vrot.slane %v447, 4
        %v513 = vsel %vm496, %v511, %v512
        %v516 = vsel %vm496, 0.0, %v511
        %v517 = vlaneseq
        %v518 = vshrl.u32 %v517, 7
        %v519 = vsub.s32 1, %v518
        %v520 = vrot.slane %v452, %v519
        %v521 = vmul.f32 %v516, %v520
        %v522 = vmul.f32 %v513, %v520
        %v523 = vadd.f32 %v509, %v521
        %v524 = vadd.f32 %v510, %v522
        %v527 = vrot.slane %v492, 4
        %v528 = vrot.slane %v493, 4
        %v529 = vsel %vm496, %v527, %v528
        %v532 = vsel %vm496, 0.0, %v527
        %v533 = vlaneseq
        %v534 = vshrl.u32 %v533, 7
        %v535 = vsub.s32 2, %v534
        %v536 = vrot.slane %v452, %v535
        %v537 = vmul.f32 %v532, %v536
        %v538 = vmul.f32 %v529, %v536
        %v539 = vadd.f32 %v523, %v537
        %v540 = vadd.f32 %v524, %v538
        %v541 = vlaneseq
        %v542 = vshrl.u32 %v541, 7
        %v543 = vsub.s32 3, %v542
        %v544 = vrot.slane %v452, %v543
        %v545 = vmul.f32 %v473, %v544
        %v546 = vmul.f32 %v474, %v544
        %v547 = vadd.f32 %v539, %v545
        %v548 = vadd.f32 %v540, %v546
        %v549 = vlaneseq
        %v550 = vshrl.u32 %v549, 7
        %v551 = vsub.s32 4, %v550
        %v552 = vrot.slane %v452, %v551
        %v553 = vmul.f32 %v446, %v552
        %v554 = vmul.f32 %v447, %v552
        %v555 = vadd.f32 %v547, %v553
        %v556 = vadd.f32 %v548, %v554
        %v557 = vlaneseq
        %v558 = vshrl.u32 %v557, 7
        %v559 = vsub.s32 5, %v558
        %v560 = vrot.slane %v452, %v559
        %v561 = vmul.f32 %v492, %v560
        %v562 = vmul.f32 %v493, %v560
        %v563 = vadd.f32 %v555, %v561
        %v564 = vadd.f32 %v556, %v562
        %v566 = vsel %vm496, %v498, 0.0
        %v567 = vlaneseq
        %v568 = vshrl.u32 %v567, 7
        %v569 = vsub.s32 6, %v568
        %v570 = vrot.slane %v452, %v569
        %v571 = vmul.f32 %v499, %v570
        %v572 = vmul.f32 %v566, %v570
        %v573 = vadd.f32 %v563, %v571
        %v574 = vadd.f32 %v564, %v572
        %v576 = vsel %vm496, %v512, 0.0
        %v577 = vlaneseq
        %v578 = vshrl.u32 %v577, 7
        %v579 = vsub.s32 7, %v578
        %v580 = vrot.slane %v452, %v579
        %v581 = vmul.f32 %v513, %v580
        %v582 = vmul.f32 %v576, %v580
        %v583 = vadd.f32 %v573, %v581
        %v584 = vadd.f32 %v574, %v582
        %v586 = vsel %vm496, %v528, 0.0
        %v587 = vlaneseq
        %v588 = vshrl.u32 %v587, 7
        %v589 = vsub.s32 0, %v588
        %v590 = vrot.slane %v453, %v589
        %v591 = vmul.f32 %v529, %v590
        %v592 = vmul.f32 %v586, %v590
        %v593 = vadd.f32 %v583, %v591
        %v594 = vadd.f32 %v584, %v592
        %v595 = vld [vmem:[%s430] sm:$0x1]
        %v597 = vlaneseq
        %v598 = vshrl.u32 %v597, 7
        %v599 = vsub.s32 0, %v598
        %v600 = vrot.slane %v595, %v599
        %v602 = vadd.f32 %v593, %v600
        %v603 = vadd.f32 %v594, %v600
        %v604 = vmul.f32 %v602, 0.70710677
        %v605 = vmul.f32 %v603, 0.70710677
        %v606 = vand.u32 2147483647, %v604
        %v607 = vand.u32 2147483647, %v605
        %v608 = vmul.f32 %v606, 0.3275911
        %v609 = vmul.f32 %v607, 0.3275911
        %v610 = vadd.f32 %v608, 1.0
        %v611 = vadd.f32 %v609, 1.0
        %v612 = vrcp.pop %v610
        %v613 = vrcp.pop %v611
        %v614 = vmul.f32 %v612, 1.0614054
        %v615 = vmul.f32 %v613, 1.0614054
        %v616 = vadd.f32 %v614, -1.4531521
        %v617 = vadd.f32 %v615, -1.4531521
        %v618 = vmul.f32 %v612, %v616
        %v619 = vmul.f32 %v613, %v617
        %v620 = vadd.f32 %v618, 1.4214138
        %v621 = vadd.f32 %v619, 1.4214138
        %v622 = vmul.f32 %v612, %v620
        %v623 = vmul.f32 %v613, %v621
        %v624 = vadd.f32 %v622, -0.28449672
        %v625 = vadd.f32 %v623, -0.28449672
        %v626 = vmul.f32 %v612, %v624
        %v627 = vmul.f32 %v613, %v625
        %v628 = vadd.f32 %v626, 0.2548296
        %v629 = vadd.f32 %v627, 0.2548296
        %v630 = vmul.f32 %v612, %v628
        %v631 = vmul.f32 %v613, %v629
        %v632 = vsub.f32 0.0, %v606
        %v633 = vsub.f32 0.0, %v607
        %v634 = vmul.f32 %v632, %v606
        %v635 = vmul.f32 %v633, %v607
        %v636 = vmul.f32 %v634, 1.442695
        %v637 = vpow.pop %v636
        %v638 = vmul.f32 %v635, 1.442695
        %v639 = vpow.pop %v638
        %v640 = vmul.f32 %v630, %v637
        %v641 = vmul.f32 %v631, %v639
        %v642 = vsub.f32 1.0, %v640
        %v643 = vsub.f32 1.0, %v641
        %vm644 = vcmp.ge.f32.partialorder %v604, 0.0
        %vm645 = vcmp.ge.f32.partialorder %v605, 0.0
        %v646 = vsub.f32 0.0, %v642
        %v647 = vsub.f32 0.0, %v643
        %v648 = vsel %vm644, %v642, %v646
        %v649 = vsel %vm645, %v643, %v647
        %v650 = vmul.f32 %v602, 0.5
        %v651 = vmul.f32 %v603, 0.5
        %v652 = vadd.f32 %v648, 1.0
        %v653 = vadd.f32 %v649, 1.0
        %v654 = vmul.f32 %v650, %v652
        %v655 = vmul.f32 %v651, %v653
        %v656 = vld [vmem:[#allocation2] sm:$0xff]
        %v657 = vld [vmem:[#allocation2 + $0x8] sm:$0xff]
        %v658 = vpack.c.bf16 %v655, %v654
        %v659 = vld [vmem:[%s435] sm:$0xf]
        %v660 = vld [vmem:[%s435 + $0x4] sm:$0xf]
        %v661 = vld [vmem:[%s435 + $0x8] sm:$0xf]
        %v662 = vld [vmem:[%s435 + $0xc] sm:$0xf]
        %v663 = vld [vmem:[%s435 + $0x10] sm:$0xf]
        %v664 = vld [vmem:[%s435 + $0x14] sm:$0xf]
        %v665 = vld [vmem:[%s435 + $0x18] sm:$0xf]
        %v666 = vld [vmem:[%s435 + $0x1c] sm:$0xf]
        %v667 = vld [vmem:[%s435 + $0x20] sm:$0xf]
        %v668 = vld [vmem:[%s435 + $0x24] sm:$0xf]
        %v669 = vld [vmem:[%s435 + $0x28] sm:$0xf]
        %v670 = vld [vmem:[%s435 + $0x2c] sm:$0xf]
        %v671 = vld [vmem:[%s435 + $0x30] sm:$0xf]
        %v672 = vld [vmem:[%s435 + $0x34] sm:$0xf]
        %v673 = vld [vmem:[%s435 + $0x38] sm:$0xf]
        %v674 = vld [vmem:[%s435 + $0x3c] sm:$0xf]
        %v691 = vunpack.c.l.b16 %v659
        %v692 = vunpack.c.l.b16 %v660
        %v693 = vunpack.c.l.b16 %v661
        %v694 = vunpack.c.l.b16 %v662
        %v695 = vunpack.c.l.b16 %v663
        %v696 = vunpack.c.l.b16 %v664
        %v697 = vunpack.c.l.b16 %v665
        %v698 = vunpack.c.l.b16 %v666
        %v699 = vunpack.c.l.b16 %v667
        %v700 = vunpack.c.l.b16 %v668
        %v701 = vunpack.c.l.b16 %v669
        %v702 = vunpack.c.l.b16 %v670
        %v703 = vunpack.c.l.b16 %v671
        %v704 = vunpack.c.l.b16 %v672
        %v705 = vunpack.c.l.b16 %v673
        %v706 = vunpack.c.l.b16 %v674
        %v707 = vpack.c.b16 %v692, %v691
        %v708 = vpack.c.b16 %v694, %v693
        %v709 = vpack.c.b16 %v696, %v695
        %v710 = vpack.c.b16 %v698, %v697
        %v711 = vpack.c.b16 %v700, %v699
        %v712 = vpack.c.b16 %v702, %v701
        %v713 = vpack.c.b16 %v704, %v703
        %v714 = vpack.c.b16 %v706, %v705
        %723 = vmatprep.subr.bf16.mxu0 0
        %724 = vmatpush1.bf16.msra.mxu0 %v714
        %725 = vmatprep.subr.bf16.mxu0 0
        %726 = vmatpush1.bf16.msra.mxu0 %v713
        %727 = vmatprep.subr.bf16.mxu0 0
        %728 = vmatpush1.bf16.msra.mxu0 %v712
        %729 = vmatprep.subr.bf16.mxu0 0
        %730 = vmatpush1.bf16.msra.mxu0 %v711
        %731 = vmatprep.subr.bf16.mxu0 0
        %732 = vmatpush1.bf16.msra.mxu0 %v710
        %733 = vmatprep.subr.bf16.mxu0 0
        %734 = vmatpush1.bf16.msra.mxu0 %v709
        %735 = vmatprep.subr.bf16.mxu0 0
        %736 = vmatpush1.bf16.msra.mxu0 %v708
        %737 = vmatprep.subr.bf16.mxu0 0
        %738 = vmatpush1.bf16.msra.mxu0 %v707
        %739 = vmatprep.subr.bf16.mxu0 0
        %740 = vmatpush2.bf16.msra.mxu0 0
        %741 = vmatprep.subr.bf16.mxu0 0
        %742 = vmatpush2.bf16.msra.mxu0 0
        %743 = vmatprep.subr.bf16.mxu0 0
        %744 = vmatpush2.bf16.msra.mxu0 0
        %745 = vmatprep.subr.bf16.mxu0 0
        %746 = vmatpush2.bf16.msra.mxu0 0
        %747 = vmatprep.subr.bf16.mxu0 0
        %748 = vmatpush2.bf16.msra.mxu0 0
        %749 = vmatprep.subr.bf16.mxu0 0
        %750 = vmatpush2.bf16.msra.mxu0 0
        %751 = vmatprep.subr.bf16.mxu0 0
        %752 = vmatpush2.bf16.msra.mxu0 0
        %753 = vmatprep.subr.bf16.mxu0 0
        %754 = vmatpush2.bf16.msra.mxu0 0
        %755 = vmatprep.mubr.bf16.mxu0 0
        %756 = vmatmul.mubr.bf16.gmra.mxu0 %v658
        %v757 = vpop.f32.mrf.mxu0
        %v758 = vadd.f32 0.0, %v757
        %v759 = vpop.f32.mrf.mxu0
        %v760 = vpop.f32.mrf.mxu0
        %v761 = vadd.f32 0.0, %v760
        %v762 = vpop.f32.mrf.mxu0
        %763 = vdwg.mxu0
        %v764 = vadd.f32 %v656, %v758
        %v765 = vadd.f32 %v657, %v761
        %766 = vst [vmem:[#allocation2] sm:$0xff] %v764
        %767 = vst [vmem:[#allocation2 + $0x8] sm:$0xff] %v765
        %p768 = scmp.eq.s32.totalorder %s27, 1
        // Predicated region
        $region132: #{conv_ffn_forward.7} parent=118 // pred_check
          %p769 = pneg %p768
        $region133: #{conv_ffn_forward.7} parent=118 // pred_check_branch
          %771 = sbr.rel (%p769) target = $region135
        $region134: #{conv_ffn_forward.7} parent=118 // pred_region
          %v772 = vld [vmem:[#allocation2] sm:$0xff]
          %v773 = vld [vmem:[#allocation2 + $0x8] sm:$0xff]
          %v774 = vld [vmem:[%s6] sm:$0x1]
          %v776 = vlaneseq
          %v777 = vshrl.u32 %v776, 7
          %v778 = vsub.s32 0, %v777
          %v779 = vrot.slane %v774, %v778
          %v781 = vadd.f32 %v772, %v779
          %v782 = vadd.f32 %v773, %v779
          %783 = vst [vmem:[%s427] sm:$0xff] %v781
          %784 = vst [vmem:[%s427 + $0x8] sm:$0xff] %v782
        $region135: #{conv_ffn_forward.7} parent=118 // pred_fallthru
          _
        %s785 = sand.u32 %s211, 1
        %s786 = scalar_lea.sflag [#allocation6], %s785
        %s787 = sand.u32 %s211, 1
        %s788 = smul.addr %s787, 16
        %s789 = scalar_lea.vmem [#allocation5], %s788
        // Predicated region
        $region136: #{conv_ffn_forward.7} parent=118 // pred_check
          %p790 = pneg %p221
        $region137: #{conv_ffn_forward.7} parent=118 // pred_check_branch
          %792 = sbr.rel (%p790) target = $region139
        $region138: #{conv_ffn_forward.7} parent=118 // pred_region
          %s794 = ssub.s32 256, 256
          %795 = vsyncadd %s786, %s794
          %s796 = smul.addr %s26, 42
          %s797 = sadd.s32 40, %s796
          %s798 = smul.addr %s797, 128
          %s799 = scalar_lea.hbm %s8, %s798
          %s800 = sshll.u32 %s789, 4
          %s801 = int_to_ptr.vmem [resolvable:$true] %s800
          %806 = dma.vmem_to_hbm [thread:$0]  %s801, 256, %s799, %s786, 128, 128, 8
        $region139: #{conv_ffn_forward.7} parent=118 // pred_fallthru
          _
      $region119: #{conv_ffn_forward.7} parent=5 // pred_fallthru
        _
      %p807 = scmp.le.s32.totalorder 2, %s17
      // Predicated region
      $region140: #{conv_ffn_forward.7} parent=5 // pred_check
        %p808 = pneg %p807
      $region141: #{conv_ffn_forward.7} parent=5 // pred_check_branch
        %810 = sbr.rel (%p808) target = $region143
      $region142: #{conv_ffn_forward.7} parent=5 // pred_region
        %s811 = ssub.s32 %s17, 2
        // Predicated region
        $region144: #{conv_ffn_forward.7} parent=142 // pred_check
          %p812 = pneg %p227
        $region145: #{conv_ffn_forward.7} parent=142 // pred_check_branch
          %814 = sbr.rel (%p812) target = $region147
        $region146: #{conv_ffn_forward.7} parent=142 // pred_region
          %s815 = sand.u32 %s212, 1
          %s816 = scalar_lea.sflag [#allocation6], %s815
          %s817 = sand.u32 %s212, 1
          %s818 = smul.addr %s817, 16
          %s819 = scalar_lea.vmem [#allocation5], %s818
          %820 = dma.done %s816, 256
        $region147: #{conv_ffn_forward.7} parent=142 // pred_fallthru
          _
      $region143: #{conv_ffn_forward.7} parent=5 // pred_fallthru
        _
    $region6: #{conv_ffn_forward.7} parent=1 // loop_footer
      %s21 = sadd.s32 1, %s17
    $region7: #{conv_ffn_forward.7} parent=1 // loop_footer_branch
      %16 = sbr.rel target = $region3
    $region8: #{conv_ffn_forward.7} parent=1 // loop_exit
      _
    %821 = vsyncpa [#allocation6], 1
    %s822 = scalar_lea.sflag [#allocation6], 1
    %823 = vsyncpa %s822, 1

// kernel: conv_ffn_forward.5
$region0: #{conv_ffn_forward.5}
  #allocation0 [shape = 'u32[]', space=smem, size = 0x4, offset = 0x4, fixed_abs, tag = 'smem constant byte address 0x4 - core index']
  #allocation1 [shape = 'u32[144,128]{1,0:T(1,128)}', space=vmem, size = 0x12000, scoped, tag = 'internal scratch']
  #allocation2 [shape = 'f32[256,128]{1,0:T(8,128)}', space=vmem, size = 0x20000, scoped, tag = 'scratch operand']
  %s0 = inlined_call_operand.vmem [shape: bf16[2,336,256], index: 0, kind: input, shape index: {}]
  %s1 = inlined_call_operand.vmem [shape: f32[256,1], index: 1, kind: input, shape index: {}]
  %s2 = inlined_call_operand.vmem [shape: f32[256,1], index: 2, kind: input, shape index: {}]
  %s3 = inlined_call_operand.vmem [shape: f32[9,256], index: 3, kind: input, shape index: {}]
  %s4 = inlined_call_operand.vmem [shape: f32[1,256], index: 4, kind: input, shape index: {}]
  %s5 = inlined_call_operand.vmem [shape: bf16[256,128], index: 5, kind: input, shape index: {}]
  %s6 = inlined_call_operand.vmem [shape: f32[1,128], index: 6, kind: input, shape index: {}]
  %s7 = inlined_call_operand.vmem [shape: f32[2,336,128], index: 7, kind: output, shape index: {}]
  %s8 = sld [smem:[#allocation0]]
  $region182: #{conv_ffn_forward.5} parent=0
    _
  %s10 = ssub.s32 1, %s8
  %s11 = scalar_select 0, %s10, %s8
  $region1: #{conv_ffn_forward.5} parent=0
    #allocation3 [shape = 'u8[131072]{0}', space=vmem, size = 0x20000, scoped, tag = 'input window, operand 0']
    #allocation4 [shape = 'u8[16384]{0}', space=vmem, size = 0x4000, scoped, tag = 'input window, operand 3']
    #allocation5 [shape = 'u8[262144]{0}', space=vmem, size = 0x40000, scoped, tag = 'output window, operand 0']
    loop: start=0, step=1, limit=6
    $region2: #{conv_ffn_forward.5} parent=1 // loop_pre_header
      _
    $region3: #{conv_ffn_forward.5} parent=1 // loop_header
      %s13 = sphi 0, %s17
      %p14 = scmp.ge.s32.totalorder %s13, 6
      %s20 = sphi 0, %s32
      %s21 = sphi 0, %s28
      %s22 = sphi 0, %s20
      %s23 = sphi 0, %s21
      %s24 = sphi 0, %s22
      %s25 = sphi 0, %s23
      %s37 = sphi 0, %s39
      %s40 = sphi 0, %s37
      %s41 = sphi 0, %s40
      %s57 = sphi 0, %s41
      %s61 = sphi 0, %s61
      %s63 = sphi 0, %s61
      %s64 = sphi 0, %s63
      %s78 = sphi 0, %s64
      %s82 = sphi 0, %s82
      %s84 = sphi 0, %s82
      %s85 = sphi 0, %s84
      %s99 = sphi 0, %s85
      %s105 = sphi 0, %s107
      %s108 = sphi 0, %s105
      %s109 = sphi 0, %s108
      %s125 = sphi 0, %s109
      %s131 = sphi 0, %s133
      %s134 = sphi 0, %s131
      %s135 = sphi 0, %s134
      %s151 = sphi 0, %s135
      %s157 = sphi 0, %s159
      %s160 = sphi 0, %s157
      %s161 = sphi 0, %s160
      %s177 = sphi 0, %s161
      %s181 = sphi 0, %s181
      %s183 = sphi 0, %s181
      %s184 = sphi 0, %s183
      %s198 = sphi 0, %s184
      %s204 = sphi 0, %s206
      %s207 = sphi 0, %s204
      %s208 = sphi 0, %s207
      %s224 = sphi 0, %s208
    $region4: #{conv_ffn_forward.5} parent=1 // loop_header_branch
      %16 = sbr.rel (%p14) target = $region8
    $region5: #{conv_ffn_forward.5} parent=1 // loop_body
      %s18 = ssub.s32 %s13, 1
      %s19 = ssub.s32 %s13, 2
      %s26 = sadd.s32 1, %s21
      %p27 = scmp.ge.s32.totalorder %s26, 2
      %s28 = scalar_select %p27, 0, %s26
      %s29 = sadd.s32 1, %s20
      %s30 = scalar_select %p27, %s29, %s20
      %p31 = scmp.ge.s32.totalorder %s30, 2
      %s32 = scalar_select %p31, 0, %s30
      %s33 = ssub.s32 %s20, %s32
      %s34 = ssub.s32 %s21, %s28
      %s35 = sor.u32 %s33, %s34
      %p36 = scmp.eq.s32.totalorder %s35, 0
      %s38 = sadd.s32 %s37, 1
      %s39 = scalar_select %p36, %s37, %s38
      %p42 = pneg %p36
      %p43 = scmp.eq.s32.totalorder %s13, 3
      %p44 = por %p42, %p43
      %p45 = scmp.ne.s32.totalorder %s37, %s40
      %p46 = scmp.eq.s32.totalorder %s13, 0
      %p47 = por %p45, %p46
      %p48 = scmp.ne.s32.totalorder %s37, %s40
      %p49 = scmp.eq.s32.totalorder %s18, 3
      %p50 = por %p48, %p49
      %p51 = scmp.ne.s32.totalorder %s40, %s41
      %p52 = scmp.eq.s32.totalorder %s18, 0
      %p53 = por %p51, %p52
      %p54 = scmp.ne.s32.totalorder %s40, %s41
      %p55 = scmp.eq.s32.totalorder %s19, 3
      %p56 = por %p54, %p55
      %p58 = scmp.ne.s32.totalorder %s41, %s57
      %p59 = scmp.eq.s32.totalorder %s19, 0
      %p60 = por %p58, %p59
      %s62 = sadd.s32 %s61, 1
      %p65 = scmp.eq.s32.totalorder %s13, 3
      %p66 = scmp.ne.s32.totalorder %s61, %s63
      %p67 = scmp.eq.s32.totalorder %s13, 0
      %p68 = por %p66, %p67
      %p69 = scmp.ne.s32.totalorder %s61, %s63
      %p70 = scmp.eq.s32.totalorder %s18, 3
      %p71 = por %p69, %p70
      %p72 = scmp.ne.s32.totalorder %s63, %s64
      %p73 = scmp.eq.s32.totalorder %s18, 0
      %p74 = por %p72, %p73
      %p75 = scmp.ne.s32.totalorder %s63, %s64
      %p76 = scmp.eq.s32.totalorder %s19, 3
      %p77 = por %p75, %p76
      %p79 = scmp.ne.s32.totalorder %s64, %s78
      %p80 = scmp.eq.s32.totalorder %s19, 0
      %p81 = por %p79, %p80
      %s83 = sadd.s32 %s82, 1
      %p86 = scmp.eq.s32.totalorder %s13, 3
      %p87 = scmp.ne.s32.totalorder %s82, %s84
      %p88 = scmp.eq.s32.totalorder %s13, 0
      %p89 = por %p87, %p88
      %p90 = scmp.ne.s32.totalorder %s82, %s84
      %p91 = scmp.eq.s32.totalorder %s18, 3
      %p92 = por %p90, %p91
      %p93 = scmp.ne.s32.totalorder %s84, %s85
      %p94 = scmp.eq.s32.totalorder %s18, 0
      %p95 = por %p93, %p94
      %p96 = scmp.ne.s32.totalorder %s84, %s85
      %p97 = scmp.eq.s32.totalorder %s19, 3
      %p98 = por %p96, %p97
      %p100 = scmp.ne.s32.totalorder %s85, %s99
      %p101 = scmp.eq.s32.totalorder %s19, 0
      %p102 = por %p100, %p101
      %s103 = ssub.s32 %s21, %s28
      %p104 = scmp.eq.s32.totalorder %s103, 0
      %s106 = sadd.s32 %s105, 1
      %s107 = scalar_select %p104, %s105, %s106
      %p110 = pneg %p104
      %p111 = scmp.eq.s32.totalorder %s13, 3
      %p112 = por %p110, %p111
      %p113 = scmp.ne.s32.totalorder %s105, %s108
      %p114 = scmp.eq.s32.totalorder %s13, 0
      %p115 = por %p113, %p114
      %p116 = scmp.ne.s32.totalorder %s105, %s108
      %p117 = scmp.eq.s32.totalorder %s18, 3
      %p118 = por %p116, %p117
      %p119 = scmp.ne.s32.totalorder %s108, %s109
      %p120 = scmp.eq.s32.totalorder %s18, 0
      %p121 = por %p119, %p120
      %p122 = scmp.ne.s32.totalorder %s108, %s109
      %p123 = scmp.eq.s32.totalorder %s19, 3
      %p124 = por %p122, %p123
      %p126 = scmp.ne.s32.totalorder %s109, %s125
      %p127 = scmp.eq.s32.totalorder %s19, 0
      %p128 = por %p126, %p127
      %s129 = ssub.s32 %s21, %s28
      %p130 = scmp.eq.s32.totalorder %s129, 0
      %s132 = sadd.s32 %s131, 1
      %s133 = scalar_select %p130, %s131, %s132
      %p136 = pneg %p130
      %p137 = scmp.eq.s32.totalorder %s13, 3
      %p138 = por %p136, %p137
      %p139 = scmp.ne.s32.totalorder %s131, %s134
      %p140 = scmp.eq.s32.totalorder %s13, 0
      %p141 = por %p139, %p140
      %p142 = scmp.ne.s32.totalorder %s131, %s134
      %p143 = scmp.eq.s32.totalorder %s18, 3
      %p144 = por %p142, %p143
      %p145 = scmp.ne.s32.totalorder %s134, %s135
      %p146 = scmp.eq.s32.totalorder %s18, 0
      %p147 = por %p145, %p146
      %p148 = scmp.ne.s32.totalorder %s134, %s135
      %p149 = scmp.eq.s32.totalorder %s19, 3
      %p150 = por %p148, %p149
      %p152 = scmp.ne.s32.totalorder %s135, %s151
      %p153 = scmp.eq.s32.totalorder %s19, 0
      %p154 = por %p152, %p153
      %s155 = ssub.s32 %s21, %s28
      %p156 = scmp.eq.s32.totalorder %s155, 0
      %s158 = sadd.s32 %s157, 1
      %s159 = scalar_select %p156, %s157, %s158
      %p162 = pneg %p156
      %p163 = scmp.eq.s32.totalorder %s13, 3
      %p164 = por %p162, %p163
      %p165 = scmp.ne.s32.totalorder %s157, %s160
      %p166 = scmp.eq.s32.totalorder %s13, 0
      %p167 = por %p165, %p166
      %p168 = scmp.ne.s32.totalorder %s157, %s160
      %p169 = scmp.eq.s32.totalorder %s18, 3
      %p170 = por %p168, %p169
      %p171 = scmp.ne.s32.totalorder %s160, %s161
      %p172 = scmp.eq.s32.totalorder %s18, 0
      %p173 = por %p171, %p172
      %p174 = scmp.ne.s32.totalorder %s160, %s161
      %p175 = scmp.eq.s32.totalorder %s19, 3
      %p176 = por %p174, %p175
      %p178 = scmp.ne.s32.totalorder %s161, %s177
      %p179 = scmp.eq.s32.totalorder %s19, 0
      %p180 = por %p178, %p179
      %s182 = sadd.s32 %s181, 1
      %p185 = scmp.eq.s32.totalorder %s13, 3
      %p186 = scmp.ne.s32.totalorder %s181, %s183
      %p187 = scmp.eq.s32.totalorder %s13, 0
      %p188 = por %p186, %p187
      %p189 = scmp.ne.s32.totalorder %s181, %s183
      %p190 = scmp.eq.s32.totalorder %s18, 3
      %p191 = por %p189, %p190
      %p192 = scmp.ne.s32.totalorder %s183, %s184
      %p193 = scmp.eq.s32.totalorder %s18, 0
      %p194 = por %p192, %p193
      %p195 = scmp.ne.s32.totalorder %s183, %s184
      %p196 = scmp.eq.s32.totalorder %s19, 3
      %p197 = por %p195, %p196
      %p199 = scmp.ne.s32.totalorder %s184, %s198
      %p200 = scmp.eq.s32.totalorder %s19, 0
      %p201 = por %p199, %p200
      %s202 = ssub.s32 %s20, %s32
      %p203 = scmp.eq.s32.totalorder %s202, 0
      %s205 = sadd.s32 %s204, 1
      %s206 = scalar_select %p203, %s204, %s205
      %p209 = pneg %p203
      %p210 = scmp.eq.s32.totalorder %s13, 3
      %p211 = por %p209, %p210
      %p212 = scmp.ne.s32.totalorder %s204, %s207
      %p213 = scmp.eq.s32.totalorder %s13, 0
      %p214 = por %p212, %p213
      %p215 = scmp.ne.s32.totalorder %s204, %s207
      %p216 = scmp.eq.s32.totalorder %s18, 3
      %p217 = por %p215, %p216
      %p218 = scmp.ne.s32.totalorder %s207, %s208
      %p219 = scmp.eq.s32.totalorder %s18, 0
      %p220 = por %p218, %p219
      %p221 = scmp.ne.s32.totalorder %s207, %s208
      %p222 = scmp.eq.s32.totalorder %s19, 3
      %p223 = por %p221, %p222
      %p225 = scmp.ne.s32.totalorder %s208, %s224
      %p226 = scmp.eq.s32.totalorder %s19, 0
      %p227 = por %p225, %p226
      %p228 = scmp.le.s32.totalorder 1, %s13
      %p229 = scmp.lt.s32.totalorder %s13, 5
      %p230 = pnand %p228, %p229
      %p231 = pneg %p230
      // Predicated region
      $region9: #{conv_ffn_forward.5} parent=5 // pred_check
        _
      $region10: #{conv_ffn_forward.5} parent=5 // pred_check_branch
        %233 = sbr.rel (%p230) target = $region12
      $region11: #{conv_ffn_forward.5} parent=5 // pred_region
        %s234 = ssub.s32 %s13, 1
        // Predicated region
        $region13: #{conv_ffn_forward.5} parent=11 // pred_check
          %p235 = pneg %p74
        $region14: #{conv_ffn_forward.5} parent=11 // pred_check_branch
          %237 = sbr.rel (%p235) target = $region16
        $region15: #{conv_ffn_forward.5} parent=11 // pred_region
          _
        $region16: #{conv_ffn_forward.5} parent=11 // pred_fallthru
          _
        // Predicated region
        $region17: #{conv_ffn_forward.5} parent=11 // pred_check
          %p238 = pneg %p95
        $region18: #{conv_ffn_forward.5} parent=11 // pred_check_branch
          %240 = sbr.rel (%p238) target = $region20
        $region19: #{conv_ffn_forward.5} parent=11 // pred_region
          _
        $region20: #{conv_ffn_forward.5} parent=11 // pred_fallthru
          _
        // Predicated region
        $region21: #{conv_ffn_forward.5} parent=11 // pred_check
          %p241 = pneg %p194
        $region22: #{conv_ffn_forward.5} parent=11 // pred_check_branch
          %243 = sbr.rel (%p241) target = $region24
        $region23: #{conv_ffn_forward.5} parent=11 // pred_region
          _
        $region24: #{conv_ffn_forward.5} parent=11 // pred_fallthru
          _
      $region12: #{conv_ffn_forward.5} parent=5 // pred_fallthru
        _
      %p244 = scmp.lt.s32.totalorder %s13, 4
      // Predicated region
      $region25: #{conv_ffn_forward.5} parent=5 // pred_check
        %p245 = pneg %p244
      $region26: #{conv_ffn_forward.5} parent=5 // pred_check_branch
        %247 = sbr.rel (%p245) target = $region28
      $region27: #{conv_ffn_forward.5} parent=5 // pred_region
        // Predicated region
        $region29: #{conv_ffn_forward.5} parent=27 // pred_check
          %p248 = pneg %p47
        $region30: #{conv_ffn_forward.5} parent=27 // pred_check_branch
          %250 = sbr.rel (%p248) target = $region32
        $region31: #{conv_ffn_forward.5} parent=27 // pred_region
          %s251 = sand.u32 %s37, 1
          %s252 = sand.u32 %s37, 1
          %s253 = smul.addr %s252, 128
          %s254 = scalar_lea.vmem [#allocation3], %s253
          %s255 = smul.addr %s20, 84
          %s256 = sadd.s32 %s21, %s255
          %s257 = smul.addr %s256, 4
          %s258 = scalar_lea.vmem %s0, %s257
          // Predicated region
          $region33: #{conv_ffn_forward.5} parent=31 // pred_check
            _
          $region34: #{conv_ffn_forward.5} parent=31 // pred_check_branch
            %260 = sbr.rel (0) target = $region36
          $region35: #{conv_ffn_forward.5} parent=31 // pred_region
            // Predicated region
            $region37: #{conv_ffn_forward.5} parent=35 // pred_check
              _
            $region38: #{conv_ffn_forward.5} parent=35 // pred_check_branch
              %262 = sbr.rel target = $region40
            $region39: #{conv_ffn_forward.5} parent=35 // pred_region
              // Predicated region
              $region52: #{conv_ffn_forward.5} parent=39 // pred_check
                _
              $region53: #{conv_ffn_forward.5} parent=39 // pred_check_branch
                %340 = sbr.rel (0) target = $region55
              $region54: #{conv_ffn_forward.5} parent=39 // pred_region
                loop: start=0, step=1, limit=1
                $region56: #{conv_ffn_forward.5} parent=54 // loop_pre_header
                  _
                $region57: #{conv_ffn_forward.5} parent=54 // loop_header
                  %s342 = sphi 0, %s346
                  %p343 = scmp.ge.s32.totalorder %s342, 1
                  %s347 = sphi %s258, %s258
                  %s348 = sphi %s254, %s254
                $region58: #{conv_ffn_forward.5} parent=54 // loop_header_branch
                  %345 = sbr.rel (%p343) target = $region62
                $region59: #{conv_ffn_forward.5} parent=54 // loop_body
                  _
                $region60: #{conv_ffn_forward.5} parent=54 // loop_footer
                  %s346 = sadd.s32 1, %s342
                $region61: #{conv_ffn_forward.5} parent=54 // loop_footer_branch
                  %341 = sbr.rel target = $region57
                $region62: #{conv_ffn_forward.5} parent=54 // loop_exit
                  _
                %s350 = ssub.s32 16, 1
                loop: start=0, step=1, limit=1
                $region63: #{conv_ffn_forward.5} parent=54 // loop_pre_header
                  _
                $region64: #{conv_ffn_forward.5} parent=54 // loop_header
                  %s352 = sphi 0, %s356
                  %p353 = scmp.ge.s32.totalorder %s352, 1
                  %s357 = sphi %s258, %s258
                  %s358 = sphi %s254, %s254
                $region65: #{conv_ffn_forward.5} parent=54 // loop_header_branch
                  %355 = sbr.rel (%p353) target = $region69
                $region66: #{conv_ffn_forward.5} parent=54 // loop_body
                  %v359 = vld [vmem:[%s357] sm:%s350]
                  %360 = vst [vmem:[%s358] sm:%s350] %v359
                  %v361 = vld [vmem:[%s357 + $0x8] sm:%s350]
                  %362 = vst [vmem:[%s358 + $0x4] sm:%s350] %v361
                  %v363 = vld [vmem:[%s357 + $0x10] sm:%s350]
                  %364 = vst [vmem:[%s358 + $0x8] sm:%s350] %v363
                  %v365 = vld [vmem:[%s357 + $0x18] sm:%s350]
                  %366 = vst [vmem:[%s358 + $0xc] sm:%s350] %v365
                  %v367 = vld [vmem:[%s357 + $0x20] sm:%s350]
                  %368 = vst [vmem:[%s358 + $0x10] sm:%s350] %v367
                  %v369 = vld [vmem:[%s357 + $0x28] sm:%s350]
                  %370 = vst [vmem:[%s358 + $0x14] sm:%s350] %v369
                  %v371 = vld [vmem:[%s357 + $0x30] sm:%s350]
                  %372 = vst [vmem:[%s358 + $0x18] sm:%s350] %v371
                  %v373 = vld [vmem:[%s357 + $0x38] sm:%s350]
                  %374 = vst [vmem:[%s358 + $0x1c] sm:%s350] %v373
                  %v375 = vld [vmem:[%s357 + $0x40] sm:%s350]
                  %376 = vst [vmem:[%s358 + $0x20] sm:%s350] %v375
                  %v377 = vld [vmem:[%s357 + $0x48] sm:%s350]
                  %378 = vst [vmem:[%s358 + $0x24] sm:%s350] %v377
                  %v379 = vld [vmem:[%s357 + $0x50] sm:%s350]
                  %380 = vst [vmem:[%s358 + $0x28] sm:%s350] %v379
                  %v381 = vld [vmem:[%s357 + $0x58] sm:%s350]
                  %382 = vst [vmem:[%s358 + $0x2c] sm:%s350] %v381
                  %v383 = vld [vmem:[%s357 + $0x60] sm:%s350]
                  %384 = vst [vmem:[%s358 + $0x30] sm:%s350] %v383
                  %v385 = vld [vmem:[%s357 + $0x68] sm:%s350]
                  %386 = vst [vmem:[%s358 + $0x34] sm:%s350] %v385
                  %v387 = vld [vmem:[%s357 + $0x70] sm:%s350]
                  %388 = vst [vmem:[%s358 + $0x38] sm:%s350] %v387
                  %v389 = vld [vmem:[%s357 + $0x78] sm:%s350]
                  %390 = vst [vmem:[%s358 + $0x3c] sm:%s350] %v389
                  %v391 = vld [vmem:[%s357 + $0x80] sm:%s350]
                  %392 = vst [vmem:[%s358 + $0x40] sm:%s350] %v391
                  %v393 = vld [vmem:[%s357 + $0x88] sm:%s350]
                  %394 = vst [vmem:[%s358 + $0x44] sm:%s350] %v393
                  %v395 = vld [vmem:[%s357 + $0x90] sm:%s350]
                  %396 = vst [vmem:[%s358 + $0x48] sm:%s350] %v395
                  %v397 = vld [vmem:[%s357 + $0x98] sm:%s350]
                  %398 = vst [vmem:[%s358 + $0x4c] sm:%s350] %v397
                  %v399 = vld [vmem:[%s357 + $0xa0] sm:%s350]
                  %400 = vst [vmem:[%s358 + $0x50] sm:%s350] %v399
                  %v401 = vld [vmem:[%s357 + $0xa8] sm:%s350]
                  %402 = vst [vmem:[%s358 + $0x54] sm:%s350] %v401
                  %v403 = vld [vmem:[%s357 + $0xb0] sm:%s350]
                  %404 = vst [vmem:[%s358 + $0x58] sm:%s350] %v403
                  %v405 = vld [vmem:[%s357 + $0xb8] sm:%s350]
                  %406 = vst [vmem:[%s358 + $0x5c] sm:%s350] %v405
                  %v407 = vld [vmem:[%s357 + $0xc0] sm:%s350]
                  %408 = vst [vmem:[%s358 + $0x60] sm:%s350] %v407
                  %v409 = vld [vmem:[%s357 + $0xc8] sm:%s350]
                  %410 = vst [vmem:[%s358 + $0x64] sm:%s350] %v409
                  %v411 = vld [vmem:[%s357 + $0xd0] sm:%s350]
                  %412 = vst [vmem:[%s358 + $0x68] sm:%s350] %v411
                  %v413 = vld [vmem:[%s357 + $0xd8] sm:%s350]
                  %414 = vst [vmem:[%s358 + $0x6c] sm:%s350] %v413
                  %v415 = vld [vmem:[%s357 + $0xe0] sm:%s350]
                  %416 = vst [vmem:[%s358 + $0x70] sm:%s350] %v415
                  %v417 = vld [vmem:[%s357 + $0xe8] sm:%s350]
                  %418 = vst [vmem:[%s358 + $0x74] sm:%s350] %v417
                  %v419 = vld [vmem:[%s357 + $0xf0] sm:%s350]
                  %420 = vst [vmem:[%s358 + $0x78] sm:%s350] %v419
                  %v421 = vld [vmem:[%s357 + $0xf8] sm:%s350]
                  %422 = vst [vmem:[%s358 + $0x7c] sm:%s350] %v421
                $region67: #{conv_ffn_forward.5} parent=54 // loop_footer
                  %s356 = sadd.s32 1, %s352
                $region68: #{conv_ffn_forward.5} parent=54 // loop_footer_branch
                  %351 = sbr.rel target = $region64
                $region69: #{conv_ffn_forward.5} parent=54 // loop_exit
                  _
              $region55: #{conv_ffn_forward.5} parent=39 // pred_fallthru
                _
            $region40: #{conv_ffn_forward.5} parent=35 // pred_fallthru
              _
            // Predicated region
            $region41: #{conv_ffn_forward.5} parent=35 // pred_check
              _
            $region42: #{conv_ffn_forward.5} parent=35 // pred_check_branch
              %264 = sbr.rel (0) target = $region44
            $region43: #{conv_ffn_forward.5} parent=35 // pred_region
              %s266 = ssub.s32 16, 1
              loop: start=0, step=1, limit=1
              $region45: #{conv_ffn_forward.5} parent=43 // loop_pre_header
                _
              $region46: #{conv_ffn_forward.5} parent=43 // loop_header
                %s268 = sphi 0, %s272
                %p269 = scmp.ge.s32.totalorder %s268, 1
                %s273 = sphi %s258, %s258
                %s274 = sphi %s254, %s254
              $region47: #{conv_ffn_forward.5} parent=43 // loop_header_branch
                %271 = sbr.rel (%p269) target = $region51
              $region48: #{conv_ffn_forward.5} parent=43 // loop_body
                %v275 = vld [vmem:[%s273] sm:%s266]
                %276 = vst [vmem:[%s274] sm:%s266] %v275
                %v277 = vld [vmem:[%s273 + $0x8] sm:%s266]
                %278 = vst [vmem:[%s274 + $0x4] sm:%s266] %v277
                %v279 = vld [vmem:[%s273 + $0x10] sm:%s266]
                %280 = vst [vmem:[%s274 + $0x8] sm:%s266] %v279
                %v281 = vld [vmem:[%s273 + $0x18] sm:%s266]
                %282 = vst [vmem:[%s274 + $0xc] sm:%s266] %v281
                %v283 = vld [vmem:[%s273 + $0x20] sm:%s266]
                %284 = vst [vmem:[%s274 + $0x10] sm:%s266] %v283
                %v285 = vld [vmem:[%s273 + $0x28] sm:%s266]
                %286 = vst [vmem:[%s274 + $0x14] sm:%s266] %v285
                %v287 = vld [vmem:[%s273 + $0x30] sm:%s266]
                %288 = vst [vmem:[%s274 + $0x18] sm:%s266] %v287
                %v289 = vld [vmem:[%s273 + $0x38] sm:%s266]
                %290 = vst [vmem:[%s274 + $0x1c] sm:%s266] %v289
                %v291 = vld [vmem:[%s273 + $0x40] sm:%s266]
                %292 = vst [vmem:[%s274 + $0x20] sm:%s266] %v291
                %v293 = vld [vmem:[%s273 + $0x48] sm:%s266]
                %294 = vst [vmem:[%s274 + $0x24] sm:%s266] %v293
                %v295 = vld [vmem:[%s273 + $0x50] sm:%s266]
                %296 = vst [vmem:[%s274 + $0x28] sm:%s266] %v295
                %v297 = vld [vmem:[%s273 + $0x58] sm:%s266]
                %298 = vst [vmem:[%s274 + $0x2c] sm:%s266] %v297
                %v299 = vld [vmem:[%s273 + $0x60] sm:%s266]
                %300 = vst [vmem:[%s274 + $0x30] sm:%s266] %v299
                %v301 = vld [vmem:[%s273 + $0x68] sm:%s266]
                %302 = vst [vmem:[%s274 + $0x34] sm:%s266] %v301
                %v303 = vld [vmem:[%s273 + $0x70] sm:%s266]
                %304 = vst [vmem:[%s274 + $0x38] sm:%s266] %v303
                %v305 = vld [vmem:[%s273 + $0x78] sm:%s266]
                %306 = vst [vmem:[%s274 + $0x3c] sm:%s266] %v305
                %v307 = vld [vmem:[%s273 + $0x80] sm:%s266]
                %308 = vst [vmem:[%s274 + $0x40] sm:%s266] %v307
                %v309 = vld [vmem:[%s273 + $0x88] sm:%s266]
                %310 = vst [vmem:[%s274 + $0x44] sm:%s266] %v309
                %v311 = vld [vmem:[%s273 + $0x90] sm:%s266]
                %312 = vst [vmem:[%s274 + $0x48] sm:%s266] %v311
                %v313 = vld [vmem:[%s273 + $0x98] sm:%s266]
                %314 = vst [vmem:[%s274 + $0x4c] sm:%s266] %v313
                %v315 = vld [vmem:[%s273 + $0xa0] sm:%s266]
                %316 = vst [vmem:[%s274 + $0x50] sm:%s266] %v315
                %v317 = vld [vmem:[%s273 + $0xa8] sm:%s266]
                %318 = vst [vmem:[%s274 + $0x54] sm:%s266] %v317
                %v319 = vld [vmem:[%s273 + $0xb0] sm:%s266]
                %320 = vst [vmem:[%s274 + $0x58] sm:%s266] %v319
                %v321 = vld [vmem:[%s273 + $0xb8] sm:%s266]
                %322 = vst [vmem:[%s274 + $0x5c] sm:%s266] %v321
                %v323 = vld [vmem:[%s273 + $0xc0] sm:%s266]
                %324 = vst [vmem:[%s274 + $0x60] sm:%s266] %v323
                %v325 = vld [vmem:[%s273 + $0xc8] sm:%s266]
                %326 = vst [vmem:[%s274 + $0x64] sm:%s266] %v325
                %v327 = vld [vmem:[%s273 + $0xd0] sm:%s266]
                %328 = vst [vmem:[%s274 + $0x68] sm:%s266] %v327
                %v329 = vld [vmem:[%s273 + $0xd8] sm:%s266]
                %330 = vst [vmem:[%s274 + $0x6c] sm:%s266] %v329
                %v331 = vld [vmem:[%s273 + $0xe0] sm:%s266]
                %332 = vst [vmem:[%s274 + $0x70] sm:%s266] %v331
                %v333 = vld [vmem:[%s273 + $0xe8] sm:%s266]
                %334 = vst [vmem:[%s274 + $0x74] sm:%s266] %v333
                %v335 = vld [vmem:[%s273 + $0xf0] sm:%s266]
                %336 = vst [vmem:[%s274 + $0x78] sm:%s266] %v335
                %v337 = vld [vmem:[%s273 + $0xf8] sm:%s266]
                %338 = vst [vmem:[%s274 + $0x7c] sm:%s266] %v337
              $region49: #{conv_ffn_forward.5} parent=43 // loop_footer
                %s272 = sadd.s32 1, %s268
              $region50: #{conv_ffn_forward.5} parent=43 // loop_footer_branch
                %267 = sbr.rel target = $region46
              $region51: #{conv_ffn_forward.5} parent=43 // loop_exit
                _
            $region44: #{conv_ffn_forward.5} parent=35 // pred_fallthru
              _
          $region36: #{conv_ffn_forward.5} parent=31 // pred_fallthru
            _
          %423 = vnop
        $region32: #{conv_ffn_forward.5} parent=27 // pred_fallthru
          _
        // Predicated region
        $region70: #{conv_ffn_forward.5} parent=27 // pred_check
          %p424 = pneg %p115
        $region71: #{conv_ffn_forward.5} parent=27 // pred_check_branch
          %426 = sbr.rel (%p424) target = $region73
        $region72: #{conv_ffn_forward.5} parent=27 // pred_region
          %s427 = sand.u32 %s105, 1
          %s428 = sand.u32 %s105, 1
          %s429 = smul.addr %s428, 16
          %s430 = scalar_lea.vmem [#allocation4], %s429
          %s431 = smul.addr %s21, 8
          %s432 = scalar_lea.vmem %s3, %s431
          // Predicated region
          $region74: #{conv_ffn_forward.5} parent=72 // pred_check
            _
          $region75: #{conv_ffn_forward.5} parent=72 // pred_check_branch
            %434 = sbr.rel (0) target = $region77
          $region76: #{conv_ffn_forward.5} parent=72 // pred_region
            // Predicated region
            $region78: #{conv_ffn_forward.5} parent=76 // pred_check
              _
            $region79: #{conv_ffn_forward.5} parent=76 // pred_check_branch
              %436 = sbr.rel (0) target = $region81
            $region80: #{conv_ffn_forward.5} parent=76 // pred_region
              // Predicated region
              $region93: #{conv_ffn_forward.5} parent=80 // pred_check
                _
              $region94: #{conv_ffn_forward.5} parent=80 // pred_check_branch
                %454 = sbr.rel (0) target = $region96
              $region95: #{conv_ffn_forward.5} parent=80 // pred_region
                loop: start=0, step=1, limit=1
                $region97: #{conv_ffn_forward.5} parent=95 // loop_pre_header
                  _
                $region98: #{conv_ffn_forward.5} parent=95 // loop_header
                  %s456 = sphi 0, %s460
                  %p457 = scmp.ge.s32.totalorder %s456, 1
                  %s461 = sphi %s432, %s432
                  %s462 = sphi %s430, %s430
                $region99: #{conv_ffn_forward.5} parent=95 // loop_header_branch
                  %459 = sbr.rel (%p457) target = $region103
                $region100: #{conv_ffn_forward.5} parent=95 // loop_body
                  %v463 = vld [vmem:[%s461] sm:$0xff]
                  %464 = vst [vmem:[%s462] sm:$0xff] %v463
                  %v465 = vld [vmem:[%s461 + $0x10] sm:$0xff]
                  %466 = vst [vmem:[%s462 + $0x8] sm:$0xff] %v465
                $region101: #{conv_ffn_forward.5} parent=95 // loop_footer
                  %s460 = sadd.s32 1, %s456
                $region102: #{conv_ffn_forward.5} parent=95 // loop_footer_branch
                  %455 = sbr.rel target = $region98
                $region103: #{conv_ffn_forward.5} parent=95 // loop_exit
                  _
              $region96: #{conv_ffn_forward.5} parent=80 // pred_fallthru
                _
              // Predicated region
              $region104: #{conv_ffn_forward.5} parent=80 // pred_check
                _
              $region105: #{conv_ffn_forward.5} parent=80 // pred_check_branch
                %468 = sbr.rel target = $region107
              $region106: #{conv_ffn_forward.5} parent=80 // pred_region
                _
              $region107: #{conv_ffn_forward.5} parent=80 // pred_fallthru
                _
            $region81: #{conv_ffn_forward.5} parent=76 // pred_fallthru
              _
            // Predicated region
            $region82: #{conv_ffn_forward.5} parent=76 // pred_check
              _
            $region83: #{conv_ffn_forward.5} parent=76 // pred_check_branch
              %438 = sbr.rel target = $region85
            $region84: #{conv_ffn_forward.5} parent=76 // pred_region
              %s440 = ssub.s32 256, 1
              loop: start=0, step=1, limit=1
              $region86: #{conv_ffn_forward.5} parent=84 // loop_pre_header
                _
              $region87: #{conv_ffn_forward.5} parent=84 // loop_header
                %s442 = sphi 0, %s446
                %p443 = scmp.ge.s32.totalorder %s442, 1
                %s447 = sphi %s432, %s432
                %s448 = sphi %s430, %s430
              $region88: #{conv_ffn_forward.5} parent=84 // loop_header_branch
                %445 = sbr.rel (%p443) target = $region92
              $region89: #{conv_ffn_forward.5} parent=84 // loop_body
                %v449 = vld [vmem:[%s447] sm:%s440]
                %450 = vst [vmem:[%s448] sm:%s440] %v449
                %v451 = vld [vmem:[%s447 + $0x10] sm:%s440]
                %452 = vst [vmem:[%s448 + $0x8] sm:%s440] %v451
              $region90: #{conv_ffn_forward.5} parent=84 // loop_footer
                %s446 = sadd.s32 1, %s442
              $region91: #{conv_ffn_forward.5} parent=84 // loop_footer_branch
                %441 = sbr.rel target = $region87
              $region92: #{conv_ffn_forward.5} parent=84 // loop_exit
                _
            $region85: #{conv_ffn_forward.5} parent=76 // pred_fallthru
              _
          $region77: #{conv_ffn_forward.5} parent=72 // pred_fallthru
            _
          %469 = vnop
        $region73: #{conv_ffn_forward.5} parent=27 // pred_fallthru
          _
        // Predicated region
        $region108: #{conv_ffn_forward.5} parent=27 // pred_check
          %p470 = pneg %p141
        $region109: #{conv_ffn_forward.5} parent=27 // pred_check_branch
          %472 = sbr.rel (%p470) target = $region111
        $region110: #{conv_ffn_forward.5} parent=27 // pred_region
          %p473 = scmp.lt.s32.totalorder %s21, 1
          %s474 = scalar_select %p473, %s21, 1
          %s475 = scalar_lea.vmem %s4, %s474
        $region111: #{conv_ffn_forward.5} parent=27 // pred_fallthru
          _
        // Predicated region
        $region112: #{conv_ffn_forward.5} parent=27 // pred_check
          %p476 = pneg %p167
        $region113: #{conv_ffn_forward.5} parent=27 // pred_check_branch
          %478 = sbr.rel (%p476) target = $region115
        $region114: #{conv_ffn_forward.5} parent=27 // pred_region
          %s479 = smul.u32 16, %s21
          %p480 = scmp.lt.s32.totalorder %s479, 31
          %s481 = scalar_select %p480, %s479, 31
          %s482 = smul.addr %s481, 4
          %s483 = scalar_lea.vmem %s5, %s482
          %s484 = smul.u32 16, %s21
        $region115: #{conv_ffn_forward.5} parent=27 // pred_fallthru
          _
      $region28: #{conv_ffn_forward.5} parent=5 // pred_fallthru
        _
      %p485 = scmp.le.s32.totalorder 1, %s13
      %p486 = scmp.lt.s32.totalorder %s13, 5
      %p487 = pnand %p485, %p486
      %p488 = pneg %p487
      // Predicated region
      $region116: #{conv_ffn_forward.5} parent=5 // pred_check
        _
      $region117: #{conv_ffn_forward.5} parent=5 // pred_check_branch
        %490 = sbr.rel (%p487) target = $region119
      $region118: #{conv_ffn_forward.5} parent=5 // pred_region
        %s491 = ssub.s32 %s13, 1
        %s492 = sand.u32 %s40, 1
        %s493 = sand.u32 %s40, 1
        %s494 = smul.addr %s493, 128
        %s495 = scalar_lea.vmem [#allocation3], %s494
        // Predicated region
        $region120: #{conv_ffn_forward.5} parent=118 // pred_check
          %p496 = pneg %p53
        $region121: #{conv_ffn_forward.5} parent=118 // pred_check_branch
          %498 = sbr.rel (%p496) target = $region123
        $region122: #{conv_ffn_forward.5} parent=118 // pred_region
          _
        $region123: #{conv_ffn_forward.5} parent=118 // pred_fallthru
          _
        %s499 = sand.u32 %s108, 1
        %s500 = sand.u32 %s108, 1
        %s501 = smul.addr %s500, 16
        %s502 = scalar_lea.vmem [#allocation4], %s501
        // Predicated region
        $region124: #{conv_ffn_forward.5} parent=118 // pred_check
          %p503 = pneg %p121
        $region125: #{conv_ffn_forward.5} parent=118 // pred_check_branch
          %505 = sbr.rel (%p503) target = $region127
        $region126: #{conv_ffn_forward.5} parent=118 // pred_region
          _
        $region127: #{conv_ffn_forward.5} parent=118 // pred_fallthru
          _
        %s506 = sand.u32 %s40, 1
        %s507 = sand.u32 %s40, 1
        %s508 = smul.addr %s507, 128
        %s509 = scalar_lea.vmem [#allocation3], %s508
        %p510 = pneg %p53
        %p511 = pneg %p50
        %p512 = pneg %p74
        %p513 = pneg %p71
        %p514 = pneg %p95
        %p515 = pneg %p92
        %s516 = sand.u32 %s108, 1
        %s517 = sand.u32 %s108, 1
        %s518 = smul.addr %s517, 16
        %s519 = scalar_lea.vmem [#allocation4], %s518
        %p520 = pneg %p121
        %p521 = pneg %p118
        %p522 = scmp.lt.s32.totalorder %s23, 1
        %s523 = scalar_select %p522, %s23, 1
        %s524 = scalar_lea.vmem %s4, %s523
        %p525 = pneg %p147
        %p526 = pneg %p144
        %s527 = smul.u32 16, %s23
        %p528 = scmp.lt.s32.totalorder %s527, 31
        %s529 = scalar_select %p528, %s527, 31
        %s530 = smul.addr %s529, 4
        %s531 = scalar_lea.vmem %s5, %s530
        %p532 = pneg %p173
        %p533 = pneg %p170
        %p534 = pneg %p194
        %p535 = pneg %p191
        %p536 = pneg %p220
        %p537 = pneg %p217
        %s538 = sand.u32 %s207, 1
        %s539 = sand.u32 %s207, 1
        %s540 = smul.addr %s539, 256
        %s541 = scalar_lea.vmem [#allocation5], %s540
        %p542 = scmp.lt.s32.totalorder %s23, 1
        %s543 = scalar_select %p542, %s23, 1
        %s544 = scalar_lea.vmem %s4, %s543
        %s545 = smul.u32 16, %s23
        %p546 = scmp.lt.s32.totalorder %s545, 31
        %s547 = scalar_select %p546, %s545, 31
        %s548 = smul.addr %s547, 4
        %s549 = scalar_lea.vmem %s5, %s548
        %s550 = smul.u32 16, %s23
        %p552 = scmp.eq.s32.totalorder %s23, 0
        // Predicated region
        $region128: #{conv_ffn_forward.5} parent=118 // pred_check
          %p553 = pneg %p552
        $region129: #{conv_ffn_forward.5} parent=118 // pred_check_branch
          %555 = sbr.rel (%p553) target = $region131
        $region130: #{conv_ffn_forward.5} parent=118 // pred_region
          %556 = vst [vmem:[#allocation2] sm:$0xff] 0.0
          %557 = vst [vmem:[#allocation2 + $0x8] sm:$0xff] 0.0
          %558 = vst [vmem:[#allocation2 + $0x10] sm:$0xff] 0.0
          %559 = vst [vmem:[#allocation2 + $0x18] sm:$0xff] 0.0
          %560 = vst [vmem:[#allocation2 + $0x20] sm:$0xff] 0.0
          %561 = vst [vmem:[#allocation2 + $0x28] sm:$0xff] 0.0
          %562 = vst [vmem:[#allocation2 + $0x30] sm:$0xff] 0.0
          %563 = vst [vmem:[#allocation2 + $0x38] sm:$0xff] 0.0
          %564 = vst [vmem:[#allocation2 + $0x40] sm:$0xff] 0.0
          %565 = vst [vmem:[#allocation2 + $0x48] sm:$0xff] 0.0
          %566 = vst [vmem:[#allocation2 + $0x50] sm:$0xff] 0.0
          %567 = vst [vmem:[#allocation2 + $0x58] sm:$0xff] 0.0
          %568 = vst [vmem:[#allocation2 + $0x60] sm:$0xff] 0.0
          %569 = vst [vmem:[#allocation2 + $0x68] sm:$0xff] 0.0
          %570 = vst [vmem:[#allocation2 + $0x70] sm:$0xff] 0.0
          %571 = vst [vmem:[#allocation2 + $0x78] sm:$0xff] 0.0
          %572 = vst [vmem:[#allocation2 + $0x80] sm:$0xff] 0.0
          %573 = vst [vmem:[#allocation2 + $0x88] sm:$0xff] 0.0
          %574 = vst [vmem:[#allocation2 + $0x90] sm:$0xff] 0.0
          %575 = vst [vmem:[#allocation2 + $0x98] sm:$0xff] 0.0
          %576 = vst [vmem:[#allocation2 + $0xa0] sm:$0xff] 0.0
          %577 = vst [vmem:[#allocation2 + $0xa8] sm:$0xff] 0.0
          %578 = vst [vmem:[#allocation2 + $0xb0] sm:$0xff] 0.0
          %579 = vst [vmem:[#allocation2 + $0xb8] sm:$0xff] 0.0
          %580 = vst [vmem:[#allocation2 + $0xc0] sm:$0xff] 0.0
          %581 = vst [vmem:[#allocation2 + $0xc8] sm:$0xff] 0.0
          %582 = vst [vmem:[#allocation2 + $0xd0] sm:$0xff] 0.0
          %583 = vst [vmem:[#allocation2 + $0xd8] sm:$0xff] 0.0
          %584 = vst [vmem:[#allocation2 + $0xe0] sm:$0xff] 0.0
          %585 = vst [vmem:[#allocation2 + $0xe8] sm:$0xff] 0.0
          %586 = vst [vmem:[#allocation2 + $0xf0] sm:$0xff] 0.0
          %587 = vst [vmem:[#allocation2 + $0xf8] sm:$0xff] 0.0
        $region131: #{conv_ffn_forward.5} parent=118 // pred_fallthru
          _
        %v588 = vld [vmem:[%s495] sm:$0xf]
        %v589 = vld [vmem:[%s495 + $0x4] sm:$0xf]
        %v590 = vld [vmem:[%s495 + $0x8] sm:$0xf]
        %v591 = vld [vmem:[%s495 + $0xc] sm:$0xf]
        %v592 = vld [vmem:[%s495 + $0x10] sm:$0xf]
        %v593 = vld [vmem:[%s495 + $0x14] sm:$0xf]
        %v594 = vld [vmem:[%s495 + $0x18] sm:$0xf]
        %v595 = vld [vmem:[%s495 + $0x1c] sm:$0xf]
        %v596 = vld [vmem:[%s495 + $0x20] sm:$0xf]
        %v597 = vld [vmem:[%s495 + $0x24] sm:$0xf]
        %v598 = vld [vmem:[%s495 + $0x28] sm:$0xf]
        %v599 = vld [vmem:[%s495 + $0x2c] sm:$0xf]
        %v600 = vld [vmem:[%s495 + $0x30] sm:$0xf]
        %v601 = vld [vmem:[%s495 + $0x34] sm:$0xf]
        %v602 = vld [vmem:[%s495 + $0x38] sm:$0xf]
        %v603 = vld [vmem:[%s495 + $0x3c] sm:$0xf]
        %v604 = vld [vmem:[%s495 + $0x40] sm:$0xf]
        %v605 = vld [vmem:[%s495 + $0x44] sm:$0xf]
        %v606 = vld [vmem:[%s495 + $0x48] sm:$0xf]
        %v607 = vld [vmem:[%s495 + $0x4c] sm:$0xf]
        %v608 = vld [vmem:[%s495 + $0x50] sm:$0xf]
        %v609 = vld [vmem:[%s495 + $0x54] sm:$0xf]
        %v610 = vld [vmem:[%s495 + $0x58] sm:$0xf]
        %v611 = vld [vmem:[%s495 + $0x5c] sm:$0xf]
        %v612 = vld [vmem:[%s495 + $0x60] sm:$0xf]
        %v613 = vld [vmem:[%s495 + $0x64] sm:$0xf]
        %v614 = vld [vmem:[%s495 + $0x68] sm:$0xf]
        %v615 = vld [vmem:[%s495 + $0x6c] sm:$0xf]
        %v616 = vld [vmem:[%s495 + $0x70] sm:$0xf]
        %v617 = vld [vmem:[%s495 + $0x74] sm:$0xf]
        %v618 = vld [vmem:[%s495 + $0x78] sm:$0xf]
        %v619 = vld [vmem:[%s495 + $0x7c] sm:$0xf]
        %v620 = vunpack.c.l.bf16 %v588
        %v621 = vunpack.c.l.bf16 %v589
        %v622 = vunpack.c.l.bf16 %v590
        %v623 = vunpack.c.l.bf16 %v591
        %v624 = vunpack.c.l.bf16 %v592
        %v625 = vunpack.c.l.bf16 %v593
        %v626 = vunpack.c.l.bf16 %v594
        %v627 = vunpack.c.l.bf16 %v595
        %v628 = vunpack.c.l.bf16 %v596
        %v629 = vunpack.c.l.bf16 %v597
        %v630 = vunpack.c.l.bf16 %v598
        %v631 = vunpack.c.l.bf16 %v599
        %v632 = vunpack.c.l.bf16 %v600
        %v633 = vunpack.c.l.bf16 %v601
        %v634 = vunpack.c.l.bf16 %v602
        %v635 = vunpack.c.l.bf16 %v603
        %v636 = vunpack.c.l.bf16 %v604
        %v637 = vunpack.c.l.bf16 %v605
        %v638 = vunpack.c.l.bf16 %v606
        %v639 = vunpack.c.l.bf16 %v607
        %v640 = vunpack.c.l.bf16 %v608
        %v641 = vunpack.c.l.bf16 %v609
        %v642 = vunpack.c.l.bf16 %v610
        %v643 = vunpack.c.l.bf16 %v611
        %v644 = vunpack.c.l.bf16 %v612
        %v645 = vunpack.c.l.bf16 %v613
        %v646 = vunpack.c.l.bf16 %v614
        %v647 = vunpack.c.l.bf16 %v615
        %v648 = vunpack.c.l.bf16 %v616
        %v649 = vunpack.c.l.bf16 %v617
        %v650 = vunpack.c.l.bf16 %v618
        %v651 = vunpack.c.l.bf16 %v619
        %v652 = vld [vmem:[%s1] sm:$0xff]
        %v653 = vld [vmem:[%s1 + $0x8] sm:$0xff]
        %v654 = vld [vmem:[%s1 + $0x10] sm:$0xff]
        %v655 = vld [vmem:[%s1 + $0x18] sm:$0xff]
        %v656 = vld [vmem:[%s1 + $0x20] sm:$0xff]
        %v657 = vld [vmem:[%s1 + $0x28] sm:$0xff]
        %v658 = vld [vmem:[%s1 + $0x30] sm:$0xff]
        %v659 = vld [vmem:[%s1 + $0x38] sm:$0xff]
        %v660 = vld [vmem:[%s1 + $0x40] sm:$0xff]
        %v661 = vld [vmem:[%s1 + $0x48] sm:$0xff]
        %v662 = vld [vmem:[%s1 + $0x50] sm:$0xff]
        %v663 = vld [vmem:[%s1 + $0x58] sm:$0xff]
        %v664 = vld [vmem:[%s1 + $0x60] sm:$0xff]
        %v665 = vld [vmem:[%s1 + $0x68] sm:$0xff]
        %v666 = vld [vmem:[%s1 + $0x70] sm:$0xff]
        %v667 = vld [vmem:[%s1 + $0x78] sm:$0xff]
        %v668 = vld [vmem:[%s1 + $0x80] sm:$0xff]
        %v669 = vld [vmem:[%s1 + $0x88] sm:$0xff]
        %v670 = vld [vmem:[%s1 + $0x90] sm:$0xff]
        %v671 = vld [vmem:[%s1 + $0x98] sm:$0xff]
        %v672 = vld [vmem:[%s1 + $0xa0] sm:$0xff]
        %v673 = vld [vmem:[%s1 + $0xa8] sm:$0xff]
        %v674 = vld [vmem:[%s1 + $0xb0] sm:$0xff]
        %v675 = vld [vmem:[%s1 + $0xb8] sm:$0xff]
        %v676 = vld [vmem:[%s1 + $0xc0] sm:$0xff]
        %v677 = vld [vmem:[%s1 + $0xc8] sm:$0xff]
        %v678 = vld [vmem:[%s1 + $0xd0] sm:$0xff]
        %v679 = vld [vmem:[%s1 + $0xd8] sm:$0xff]
        %v680 = vld [vmem:[%s1 + $0xe0] sm:$0xff]
        %v681 = vld [vmem:[%s1 + $0xe8] sm:$0xff]
        %v682 = vld [vmem:[%s1 + $0xf0] sm:$0xff]
        %v683 = vld [vmem:[%s1 + $0xf8] sm:$0xff]
        %v684 = vld [vmem:[%s2] sm:$0xff]
        %v685 = vld [vmem:[%s2 + $0x8] sm:$0xff]
        %v686 = vld [vmem:[%s2 + $0x10] sm:$0xff]
        %v687 = vld [vmem:[%s2 + $0x18] sm:$0xff]
        %v688 = vld [vmem:[%s2 + $0x20] sm:$0xff]
        %v689 = vld [vmem:[%s2 + $0x28] sm:$0xff]
        %v690 = vld [vmem:[%s2 + $0x30] sm:$0xff]
        %v691 = vld [vmem:[%s2 + $0x38] sm:$0xff]
        %v692 = vld [vmem:[%s2 + $0x40] sm:$0xff]
        %v693 = vld [vmem:[%s2 + $0x48] sm:$0xff]
        %v694 = vld [vmem:[%s2 + $0x50] sm:$0xff]
        %v695 = vld [vmem:[%s2 + $0x58] sm:$0xff]
        %v696 = vld [vmem:[%s2 + $0x60] sm:$0xff]
        %v697 = vld [vmem:[%s2 + $0x68] sm:$0xff]
        %v698 = vld [vmem:[%s2 + $0x70] sm:$0xff]
        %v699 = vld [vmem:[%s2 + $0x78] sm:$0xff]
        %v700 = vld [vmem:[%s2 + $0x80] sm:$0xff]
        %v701 = vld [vmem:[%s2 + $0x88] sm:$0xff]
        %v702 = vld [vmem:[%s2 + $0x90] sm:$0xff]
        %v703 = vld [vmem:[%s2 + $0x98] sm:$0xff]
        %v704 = vld [vmem:[%s2 + $0xa0] sm:$0xff]
        %v705 = vld [vmem:[%s2 + $0xa8] sm:$0xff]
        %v706 = vld [vmem:[%s2 + $0xb0] sm:$0xff]
        %v707 = vld [vmem:[%s2 + $0xb8] sm:$0xff]
        %v708 = vld [vmem:[%s2 + $0xc0] sm:$0xff]
        %v709 = vld [vmem:[%s2 + $0xc8] sm:$0xff]
        %v710 = vld [vmem:[%s2 + $0xd0] sm:$0xff]
        %v711 = vld [vmem:[%s2 + $0xd8] sm:$0xff]
        %v712 = vld [vmem:[%s2 + $0xe0] sm:$0xff]
        %v713 = vld [vmem:[%s2 + $0xe8] sm:$0xff]
        %v714 = vld [vmem:[%s2 + $0xf0] sm:$0xff]
        %v715 = vld [vmem:[%s2 + $0xf8] sm:$0xff]
        %v716 = vld [vmem:[%s502] sm:$0xff]
        %v717 = vld [vmem:[%s502 + $0x8] sm:$0x1]
        %vm750 = vcmask 1040384
        %v751 = vrot.slane %v620, 7
        %v752 = vrot.slane %v621, 7
        %v753 = vsel %vm750, %v751, %v752
        %v754 = vrot.slane %v622, 7
        %v755 = vsel %vm750, %v752, %v754
        %v756 = vrot.slane %v623, 7
        %v757 = vsel %vm750, %v754, %v756
        %v758 = vrot.slane %v624, 7
        %v759 = vsel %vm750, %v756, %v758
        %v760 = vrot.slane %v625, 7
        %v761 = vsel %vm750, %v758, %v760
        %v762 = vrot.slane %v626, 7
        %v763 = vsel %vm750, %v760, %v762
        %v764 = vrot.slane %v627, 7
        %v765 = vsel %vm750, %v762, %v764
        %v766 = vrot.slane %v628, 7
        %v767 = vsel %vm750, %v764, %v766
        %v768 = vrot.slane %v629, 7
        %v769 = vsel %vm750, %v766, %v768
        %v770 = vrot.slane %v630, 7
        %v771 = vsel %vm750, %v768, %v770
        %v772 = vrot.slane %v631, 7
        %v773 = vsel %vm750, %v770, %v772
        %v774 = vrot.slane %v632, 7
        %v775 = vsel %vm750, %v772, %v774
        %v776 = vrot.slane %v633, 7
        %v777 = vsel %vm750, %v774, %v776
        %v778 = vrot.slane %v634, 7
        %v779 = vsel %vm750, %v776, %v778
        %v780 = vrot.slane %v635, 7
        %v781 = vsel %vm750, %v778, %v780
        %v782 = vrot.slane %v636, 7
        %v783 = vsel %vm750, %v780, %v782
        %v784 = vrot.slane %v637, 7
        %v785 = vsel %vm750, %v782, %v784
        %v786 = vrot.slane %v638, 7
        %v787 = vsel %vm750, %v784, %v786
        %v788 = vrot.slane %v639, 7
        %v789 = vsel %vm750, %v786, %v788
        %v790 = vrot.slane %v640, 7
        %v791 = vsel %vm750, %v788, %v790
        %v792 = vrot.slane %v641, 7
        %v793 = vsel %vm750, %v790, %v792
        %v794 = vrot.slane %v642, 7
        %v795 = vsel %vm750, %v792, %v794
        %v796 = vrot.slane %v643, 7
        %v797 = vsel %vm750, %v794, %v796
        %v798 = vrot.slane %v644, 7
        %v799 = vsel %vm750, %v796, %v798
        %v800 = vrot.slane %v645, 7
        %v801 = vsel %vm750, %v798, %v800
        %v802 = vrot.slane %v646, 7
        %v803 = vsel %vm750, %v800, %v802
        %v804 = vrot.slane %v647, 7
        %v805 = vsel %vm750, %v802, %v804
        %v806 = vrot.slane %v648, 7
        %v807 = vsel %vm750, %v804, %v806
        %v808 = vrot.slane %v649, 7
        %v809 = vsel %vm750, %v806, %v808
        %v810 = vrot.slane %v650, 7
        %v811 = vsel %vm750, %v808, %v810
        %v812 = vrot.slane %v651, 7
        %v813 = vsel %vm750, %v810, %v812
        %v846 = vsel %vm750, 0.0, %v751
        %848 = vset.pattern.permute.xlu0 0
        %849 = vperm.xlu0 %848, %v652
        %v850 = vpop.permute.xlu0 %849
        %853 = vset.pattern.permute.xlu0 0
        %854 = vperm.xlu0 %853, %v653
        %v855 = vpop.permute.xlu0 %854
        %858 = vset.pattern.permute.xlu0 0
        %859 = vperm.xlu0 %858, %v654
        %v860 = vpop.permute.xlu0 %859
        %863 = vset.pattern.permute.xlu0 0
        %864 = vperm.xlu0 %863, %v655
        %v865 = vpop.permute.xlu0 %864
        %868 = vset.pattern.permute.xlu0 0
        %869 = vperm.xlu0 %868, %v656
        %v870 = vpop.permute.xlu0 %869
        %873 = vset.pattern.permute.xlu0 0
        %874 = vperm.xlu0 %873, %v657
        %v875 = vpop.permute.xlu0 %874
        %878 = vset.pattern.permute.xlu0 0
        %879 = vperm.xlu0 %878, %v658
        %v880 = vpop.permute.xlu0 %879
        %883 = vset.pattern.permute.xlu0 0
        %884 = vperm.xlu0 %883, %v659
        %v885 = vpop.permute.xlu0 %884
        %888 = vset.pattern.permute.xlu0 0
        %889 = vperm.xlu0 %888, %v660
        %v890 = vpop.permute.xlu0 %889
        %893 = vset.pattern.permute.xlu0 0
        %894 = vperm.xlu0 %893, %v661
        %v895 = vpop.permute.xlu0 %894
        %898 = vset.pattern.permute.xlu0 0
        %899 = vperm.xlu0 %898, %v662
        %v900 = vpop.permute.xlu0 %899
        %903 = vset.pattern.permute.xlu0 0
        %904 = vperm.xlu0 %903, %v663
        %v905 = vpop.permute.xlu0 %904
        %908 = vset.pattern.permute.xlu0 0
        %909 = vperm.xlu0 %908, %v664
        %v910 = vpop.permute.xlu0 %909
        %913 = vset.pattern.permute.xlu0 0
        %914 = vperm.xlu0 %913, %v665
        %v915 = vpop.permute.xlu0 %914
        %918 = vset.pattern.permute.xlu0 0
        %919 = vperm.xlu0 %918, %v666
        %v920 = vpop.permute.xlu0 %919
        %923 = vset.pattern.permute.xlu0 0
        %924 = vperm.xlu0 %923, %v667
        %v925 = vpop.permute.xlu0 %924
        %928 = vset.pattern.permute.xlu0 0
        %929 = vperm.xlu0 %928, %v668
        %v930 = vpop.permute.xlu0 %929
        %933 = vset.pattern.permute.xlu0 0
        %934 = vperm.xlu0 %933, %v669
        %v935 = vpop.permute.xlu0 %934
        %938 = vset.pattern.permute.xlu0 0
        %939 = vperm.xlu0 %938, %v670
        %v940 = vpop.permute.xlu0 %939
        %943 = vset.pattern.permute.xlu0 0
        %944 = vperm.xlu0 %943, %v671
        %v945 = vpop.permute.xlu0 %944
        %948 = vset.pattern.permute.xlu0 0
        %949 = vperm.xlu0 %948, %v672
        %v950 = vpop.permute.xlu0 %949
        %953 = vset.pattern.permute.xlu0 0
        %954 = vperm.xlu0 %953, %v673
        %v955 = vpop.permute.xlu0 %954
        %958 = vset.pattern.permute.xlu0 0
        %959 = vperm.xlu0 %958, %v674
        %v960 = vpop.permute.xlu0 %959
        %963 = vset.pattern.permute.xlu0 0
        %964 = vperm.xlu0 %963, %v675
        %v965 = vpop.permute.xlu0 %964
        %968 = vset.pattern.permute.xlu0 0
        %969 = vperm.xlu0 %968, %v676
        %v970 = vpop.permute.xlu0 %969
        %973 = vset.pattern.permute.xlu0 0
        %974 = vperm.xlu0 %973, %v677
        %v975 = vpop.permute.xlu0 %974
        %978 = vset.pattern.permute.xlu0 0
        %979 = vperm.xlu0 %978, %v678
        %v980 = vpop.permute.xlu0 %979
        %983 = vset.pattern.permute.xlu0 0
        %984 = vperm.xlu0 %983, %v679
        %v985 = vpop.permute.xlu0 %984
        %988 = vset.pattern.permute.xlu0 0
        %989 = vperm.xlu0 %988, %v680
        %v990 = vpop.permute.xlu0 %989
        %993 = vset.pattern.permute.xlu0 0
        %994 = vperm.xlu0 %993, %v681
        %v995 = vpop.permute.xlu0 %994
        %998 = vset.pattern.permute.xlu0 0
        %999 = vperm.xlu0 %998, %v682
        %v1000 = vpop.permute.xlu0 %999
        %1003 = vset.pattern.permute.xlu0 0
        %1004 = vperm.xlu0 %1003, %v683
        %v1005 = vpop.permute.xlu0 %1004
        %v1007 = vmul.f32 %v846, %v850
        %v1008 = vmul.f32 %v753, %v855
        %v1009 = vmul.f32 %v755, %v860
        %v1010 = vmul.f32 %v757, %v865
        %v1011 = vmul.f32 %v759, %v870
        %v1012 = vmul.f32 %v761, %v875
        %v1013 = vmul.f32 %v763, %v880
        %v1014 = vmul.f32 %v765, %v885
        %v1015 = vmul.f32 %v767, %v890
        %v1016 = vmul.f32 %v769, %v895
        %v1017 = vmul.f32 %v771, %v900
        %v1018 = vmul.f32 %v773, %v905
        %v1019 = vmul.f32 %v775, %v910
        %v1020 = vmul.f32 %v777, %v915
        %v1021 = vmul.f32 %v779, %v920
        %v1022 = vmul.f32 %v781, %v925
        %v1023 = vmul.f32 %v783, %v930
        %v1024 = vmul.f32 %v785, %v935
        %v1025 = vmul.f32 %v787, %v940
        %v1026 = vmul.f32 %v789, %v945
        %v1027 = vmul.f32 %v791, %v950
        %v1028 = vmul.f32 %v793, %v955
        %v1029 = vmul.f32 %v795, %v960
        %v1030 = vmul.f32 %v797, %v965
        %v1031 = vmul.f32 %v799, %v970
        %v1032 = vmul.f32 %v801, %v975
        %v1033 = vmul.f32 %v803, %v980
        %v1034 = vmul.f32 %v805, %v985
        %v1035 = vmul.f32 %v807, %v990
        %v1036 = vmul.f32 %v809, %v995
        %v1037 = vmul.f32 %v811, %v1000
        %v1038 = vmul.f32 %v813, %v1005
        %vm1039 = vcmask 1046528
        %v1040 = vrot.slane %v620, 1
        %v1041 = vrot.slane %v621, 1
        %v1042 = vsel %vm1039, %v1040, %v1041
        %v1043 = vrot.slane %v622, 1
        %v1044 = vsel %vm1039, %v1041, %v1043
        %v1045 = vrot.slane %v623, 1
        %v1046 = vsel %vm1039, %v1043, %v1045
        %v1047 = vrot.slane %v624, 1
        %v1048 = vsel %vm1039, %v1045, %v1047
        %v1049 = vrot.slane %v625, 1
        %v1050 = vsel %vm1039, %v1047, %v1049
        %v1051 = vrot.slane %v626, 1
        %v1052 = vsel %vm1039, %v1049, %v1051
        %v1053 = vrot.slane %v627, 1
        %v1054 = vsel %vm1039, %v1051, %v1053
        %v1055 = vrot.slane %v628, 1
        %v1056 = vsel %vm1039, %v1053, %v1055
        %v1057 = vrot.slane %v629, 1
        %v1058 = vsel %vm1039, %v1055, %v1057
        %v1059 = vrot.slane %v630, 1
        %v1060 = vsel %vm1039, %v1057, %v1059
        %v1061 = vrot.slane %v631, 1
        %v1062 = vsel %vm1039, %v1059, %v1061
        %v1063 = vrot.slane %v632, 1
        %v1064 = vsel %vm1039, %v1061, %v1063
        %v1065 = vrot.slane %v633, 1
        %v1066 = vsel %vm1039, %v1063, %v1065
        %v1067 = vrot.slane %v634, 1
        %v1068 = vsel %vm1039, %v1065, %v1067
        %v1069 = vrot.slane %v635, 1
        %v1070 = vsel %vm1039, %v1067, %v1069
        %v1071 = vrot.slane %v636, 1
        %v1072 = vsel %vm1039, %v1069, %v1071
        %v1073 = vrot.slane %v637, 1
        %v1074 = vsel %vm1039, %v1071, %v1073
        %v1075 = vrot.slane %v638, 1
        %v1076 = vsel %vm1039, %v1073, %v1075
        %v1077 = vrot.slane %v639, 1
        %v1078 = vsel %vm1039, %v1075, %v1077
        %v1079 = vrot.slane %v640, 1
        %v1080 = vsel %vm1039, %v1077, %v1079
        %v1081 = vrot.slane %v641, 1
        %v1082 = vsel %vm1039, %v1079, %v1081
        %v1083 = vrot.slane %v642, 1
        %v1084 = vsel %vm1039, %v1081, %v1083
        %v1085 = vrot.slane %v643, 1
        %v1086 = vsel %vm1039, %v1083, %v1085
        %v1087 = vrot.slane %v644, 1
        %v1088 = vsel %vm1039, %v1085, %v1087
        %v1089 = vrot.slane %v645, 1
        %v1090 = vsel %vm1039, %v1087, %v1089
        %v1091 = vrot.slane %v646, 1
        %v1092 = vsel %vm1039, %v1089, %v1091
        %v1093 = vrot.slane %v647, 1
        %v1094 = vsel %vm1039, %v1091, %v1093
        %v1095 = vrot.slane %v648, 1
        %v1096 = vsel %vm1039, %v1093, %v1095
        %v1097 = vrot.slane %v649, 1
        %v1098 = vsel %vm1039, %v1095, %v1097
        %v1099 = vrot.slane %v650, 1
        %v1100 = vsel %vm1039, %v1097, %v1099
        %v1101 = vrot.slane %v651, 1
        %v1102 = vsel %vm1039, %v1099, %v1101
        %v1135 = vsel %vm1039, %v1101, 0.0
        %1137 = vset.pattern.permute.xlu0 0
        %1138 = vperm.xlu0 %1137, %v684
        %v1139 = vpop.permute.xlu0 %1138
        %1142 = vset.pattern.permute.xlu0 0
        %1143 = vperm.xlu0 %1142, %v685
        %v1144 = vpop.permute.xlu0 %1143
        %1147 = vset.pattern.permute.xlu0 0
        %1148 = vperm.xlu0 %1147, %v686
        %v1149 = vpop.permute.xlu0 %1148
        %1152 = vset.pattern.permute.xlu0 0
        %1153 = vperm.xlu0 %1152, %v687
        %v1154 = vpop.permute.xlu0 %1153
        %1157 = vset.pattern.permute.xlu0 0
        %1158 = vperm.xlu0 %1157, %v688
        %v1159 = vpop.permute.xlu0 %1158
        %1162 = vset.pattern.permute.xlu0 0
        %1163 = vperm.xlu0 %1162, %v689
        %v1164 = vpop.permute.xlu0 %1163
        %1167 = vset.pattern.permute.xlu0 0
        %1168 = vperm.xlu0 %1167, %v690
        %v1169 = vpop.permute.xlu0 %1168
        %1172 = vset.pattern.permute.xlu0 0
        %1173 = vperm.xlu0 %1172, %v691
        %v1174 = vpop.permute.xlu0 %1173
        %1177 = vset.pattern.permute.xlu0 0
        %1178 = vperm.xlu0 %1177, %v692
        %v1179 = vpop.permute.xlu0 %1178
        %1182 = vset.pattern.permute.xlu0 0
        %1183 = vperm.xlu0 %1182, %v693
        %v1184 = vpop.permute.xlu0 %1183
        %1187 = vset.pattern.permute.xlu0 0
        %1188 = vperm.xlu0 %1187, %v694
        %v1189 = vpop.permute.xlu0 %1188
        %1192 = vset.pattern.permute.xlu0 0
        %1193 = vperm.xlu0 %1192, %v695
        %v1194 = vpop.permute.xlu0 %1193
        %1197 = vset.pattern.permute.xlu0 0
        %1198 = vperm.xlu0 %1197, %v696
        %v1199 = vpop.permute.xlu0 %1198
        %1202 = vset.pattern.permute.xlu0 0
        %1203 = vperm.xlu0 %1202, %v697
        %v1204 = vpop.permute.xlu0 %1203
        %1207 = vset.pattern.permute.xlu0 0
        %1208 = vperm.xlu0 %1207, %v698
        %v1209 = vpop.permute.xlu0 %1208
        %1212 = vset.pattern.permute.xlu0 0
        %1213 = vperm.xlu0 %1212, %v699
        %v1214 = vpop.permute.xlu0 %1213
        %1217 = vset.pattern.permute.xlu0 0
        %1218 = vperm.xlu0 %1217, %v700
        %v1219 = vpop.permute.xlu0 %1218
        %1222 = vset.pattern.permute.xlu0 0
        %1223 = vperm.xlu0 %1222, %v701
        %v1224 = vpop.permute.xlu0 %1223
        %1227 = vset.pattern.permute.xlu0 0
        %1228 = vperm.xlu0 %1227, %v702
        %v1229 = vpop.permute.xlu0 %1228
        %1232 = vset.pattern.permute.xlu0 0
        %1233 = vperm.xlu0 %1232, %v703
        %v1234 = vpop.permute.xlu0 %1233
        %1237 = vset.pattern.permute.xlu0 0
        %1238 = vperm.xlu0 %1237, %v704
        %v1239 = vpop.permute.xlu0 %1238
        %1242 = vset.pattern.permute.xlu0 0
        %1243 = vperm.xlu0 %1242, %v705
        %v1244 = vpop.permute.xlu0 %1243
        %1247 = vset.pattern.permute.xlu0 0
        %1248 = vperm.xlu0 %1247, %v706
        %v1249 = vpop.permute.xlu0 %1248
        %1252 = vset.pattern.permute.xlu0 0
        %1253 = vperm.xlu0 %1252, %v707
        %v1254 = vpop.permute.xlu0 %1253
        %1257 = vset.pattern.permute.xlu0 0
        %1258 = vperm.xlu0 %1257, %v708
        %v1259 = vpop.permute.xlu0 %1258
        %1262 = vset.pattern.permute.xlu0 0
        %1263 = vperm.xlu0 %1262, %v709
        %v1264 = vpop.permute.xlu0 %1263
        %1267 = vset.pattern.permute.xlu0 0
        %1268 = vperm.xlu0 %1267, %v710
        %v1269 = vpop.permute.xlu0 %1268
        %1272 = vset.pattern.permute.xlu0 0
        %1273 = vperm.xlu0 %1272, %v711
        %v1274 = vpop.permute.xlu0 %1273
        %1277 = vset.pattern.permute.xlu0 0
        %1278 = vperm.xlu0 %1277, %v712
        %v1279 = vpop.permute.xlu0 %1278
        %1282 = vset.pattern.permute.xlu0 0
        %1283 = vperm.xlu0 %1282, %v713
        %v1284 = vpop.permute.xlu0 %1283
        %1287 = vset.pattern.permute.xlu0 0
        %1288 = vperm.xlu0 %1287, %v714
        %v1289 = vpop.permute.xlu0 %1288
        %1292 = vset.pattern.permute.xlu0 0
        %1293 = vperm.xlu0 %1292, %v715
        %v1294 = vpop.permute.xlu0 %1293
        %v1296 = vmul.f32 %v1042, %v1139
        %v1297 = vmul.f32 %v1044, %v1144
        %v1298 = vmul.f32 %v1046, %v1149
        %v1299 = vmul.f32 %v1048, %v1154
        %v1300 = vmul.f32 %v1050, %v1159
        %v1301 = vmul.f32 %v1052, %v1164
        %v1302 = vmul.f32 %v1054, %v1169
        %v1303 = vmul.f32 %v1056, %v1174
        %v1304 = vmul.f32 %v1058, %v1179
        %v1305 = vmul.f32 %v1060, %v1184
        %v1306 = vmul.f32 %v1062, %v1189
        %v1307 = vmul.f32 %v1064, %v1194
        %v1308 = vmul.f32 %v1066, %v1199
        %v1309 = vmul.f32 %v1068, %v1204
        %v1310 = vmul.f32 %v1070, %v1209
        %v1311 = vmul.f32 %v1072, %v1214
        %v1312 = vmul.f32 %v1074, %v1219
        %v1313 = vmul.f32 %v1076, %v1224
        %v1314 = vmul.f32 %v1078, %v1229
        %v1315 = vmul.f32 %v1080, %v1234
        %v1316 = vmul.f32 %v1082, %v1239
        %v1317 = vmul.f32 %v1084, %v1244
        %v1318 = vmul.f32 %v1086, %v1249
        %v1319 = vmul.f32 %v1088, %v1254
        %v1320 = vmul.f32 %v1090, %v1259
        %v1321 = vmul.f32 %v1092, %v1264
        %v1322 = vmul.f32 %v1094, %v1269
        %v1323 = vmul.f32 %v1096, %v1274
        %v1324 = vmul.f32 %v1098, %v1279
        %v1325 = vmul.f32 %v1100, %v1284
        %v1326 = vmul.f32 %v1102, %v1289
        %v1327 = vmul.f32 %v1135, %v1294
        %v1328 = vlaneseq
        %v1329 = vshrl.u32 %v1328, 7
        %v1330 = vsub.s32 0, %v1329
        %v1331 = vrot.slane %v716, %v1330
        %v1332 = vmul.f32 %v1331, 0.0
        %v1333 = vmul.f32 %v1007, %v1331
        %v1334 = vmul.f32 %v1008, %v1331
        %v1335 = vmul.f32 %v1009, %v1331
        %v1336 = vmul.f32 %v1010, %v1331
        %v1337 = vmul.f32 %v1011, %v1331
        %v1338 = vmul.f32 %v1012, %v1331
        %v1339 = vmul.f32 %v1013, %v1331
        %v1340 = vmul.f32 %v1014, %v1331
        %v1341 = vmul.f32 %v1015, %v1331
        %v1342 = vmul.f32 %v1016, %v1331
        %v1343 = vmul.f32 %v1017, %v1331
        %v1344 = vmul.f32 %v1018, %v1331
        %v1345 = vmul.f32 %v1019, %v1331
        %v1346 = vmul.f32 %v1020, %v1331
        %v1347 = vmul.f32 %v1021, %v1331
        %v1348 = vmul.f32 %v1022, %v1331
        %v1349 = vmul.f32 %v1023, %v1331
        %v1350 = vmul.f32 %v1024, %v1331
        %v1351 = vmul.f32 %v1025, %v1331
        %v1352 = vmul.f32 %v1026, %v1331
        %v1353 = vmul.f32 %v1027, %v1331
        %v1354 = vmul.f32 %v1028, %v1331
        %v1355 = vmul.f32 %v1029, %v1331
        %v1356 = vmul.f32 %v1030, %v1331
        %v1357 = vmul.f32 %v1031, %v1331
        %v1358 = vmul.f32 %v1032, %v1331
        %v1359 = vmul.f32 %v1033, %v1331
        %v1360 = vmul.f32 %v1034, %v1331
        %v1361 = vmul.f32 %v1035, %v1331
        %v1362 = vmul.f32 %v1036, %v1331
        %v1363 = vadd.f32 %v1332, 0.0
        %v1364 = vadd.f32 %v1333, 0.0
        %v1365 = vadd.f32 %v1334, 0.0
        %v1366 = vadd.f32 %v1335, 0.0
        %v1367 = vadd.f32 %v1336, 0.0
        %v1368 = vadd.f32 %v1337, 0.0
        %v1369 = vadd.f32 %v1338, 0.0
        %v1370 = vadd.f32 %v1339, 0.0
        %v1371 = vadd.f32 %v1340, 0.0
        %v1372 = vadd.f32 %v1341, 0.0
        %v1373 = vadd.f32 %v1342, 0.0
        %v1374 = vadd.f32 %v1343, 0.0
        %v1375 = vadd.f32 %v1344, 0.0
        %v1376 = vadd.f32 %v1345, 0.0
        %v1377 = vadd.f32 %v1346, 0.0
        %v1378 = vadd.f32 %v1347, 0.0
        %v1379 = vadd.f32 %v1348, 0.0
        %v1380 = vadd.f32 %v1349, 0.0
        %v1381 = vadd.f32 %v1350, 0.0
        %v1382 = vadd.f32 %v1351, 0.0
        %v1383 = vadd.f32 %v1352, 0.0
        %v1384 = vadd.f32 %v1353, 0.0
        %v1385 = vadd.f32 %v1354, 0.0
        %v1386 = vadd.f32 %v1355, 0.0
        %v1387 = vadd.f32 %v1356, 0.0
        %v1388 = vadd.f32 %v1357, 0.0
        %v1389 = vadd.f32 %v1358, 0.0
        %v1390 = vadd.f32 %v1359, 0.0
        %v1391 = vadd.f32 %v1360, 0.0
        %v1392 = vadd.f32 %v1361, 0.0
        %v1393 = vadd.f32 %v1362, 0.0
        %v1394 = vlaneseq
        %v1395 = vshrl.u32 %v1394, 7
        %v1396 = vsub.s32 1, %v1395
        %v1397 = vrot.slane %v716, %v1396
        %v1398 = vmul.f32 %v1397, 0.0
        %v1399 = vmul.f32 %v620, %v1397
        %v1400 = vmul.f32 %v621, %v1397
        %v1401 = vmul.f32 %v622, %v1397
        %v1402 = vmul.f32 %v623, %v1397
        %v1403 = vmul.f32 %v624, %v1397
        %v1404 = vmul.f32 %v625, %v1397
        %v1405 = vmul.f32 %v626, %v1397
        %v1406 = vmul.f32 %v627, %v1397
        %v1407 = vmul.f32 %v628, %v1397
        %v1408 = vmul.f32 %v629, %v1397
        %v1409 = vmul.f32 %v630, %v1397
        %v1410 = vmul.f32 %v631, %v1397
        %v1411 = vmul.f32 %v632, %v1397
        %v1412 = vmul.f32 %v633, %v1397
        %v1413 = vmul.f32 %v634, %v1397
        %v1414 = vmul.f32 %v635, %v1397
        %v1415 = vmul.f32 %v636, %v1397
        %v1416 = vmul.f32 %v637, %v1397
        %v1417 = vmul.f32 %v638, %v1397
        %v1418 = vmul.f32 %v639, %v1397
        %v1419 = vmul.f32 %v640, %v1397
        %v1420 = vmul.f32 %v641, %v1397
        %v1421 = vmul.f32 %v642, %v1397
        %v1422 = vmul.f32 %v643, %v1397
        %v1423 = vmul.f32 %v644, %v1397
        %v1424 = vmul.f32 %v645, %v1397
        %v1425 = vmul.f32 %v646, %v1397
        %v1426 = vmul.f32 %v647, %v1397
        %v1427 = vmul.f32 %v648, %v1397
        %v1428 = vmul.f32 %v649, %v1397
        %v1429 = vadd.f32 %v1363, %v1398
        %v1430 = vadd.f32 %v1364, %v1399
        %v1431 = vadd.f32 %v1365, %v1400
        %v1432 = vadd.f32 %v1366, %v1401
        %v1433 = vadd.f32 %v1367, %v1402
        %v1434 = vadd.f32 %v1368, %v1403
        %v1435 = vadd.f32 %v1369, %v1404
        %v1436 = vadd.f32 %v1370, %v1405
        %v1437 = vadd.f32 %v1371, %v1406
        %v1438 = vadd.f32 %v1372, %v1407
        %v1439 = vadd.f32 %v1373, %v1408
        %v1440 = vadd.f32 %v1374, %v1409
        %v1441 = vadd.f32 %v1375, %v1410
        %v1442 = vadd.f32 %v1376, %v1411
        %v1443 = vadd.f32 %v1377, %v1412
        %v1444 = vadd.f32 %v1378, %v1413
        %v1445 = vadd.f32 %v1379, %v1414
        %v1446 = vadd.f32 %v1380, %v1415
        %v1447 = vadd.f32 %v1381, %v1416
        %v1448 = vadd.f32 %v1382, %v1417
        %v1449 = vadd.f32 %v1383, %v1418
        %v1450 = vadd.f32 %v1384, %v1419
        %v1451 = vadd.f32 %v1385, %v1420
        %v1452 = vadd.f32 %v1386, %v1421
        %v1453 = vadd.f32 %v1387, %v1422
        %v1454 = vadd.f32 %v1388, %v1423
        %v1455 = vadd.f32 %v1389, %v1424
        %v1456 = vadd.f32 %v1390, %v1425
        %v1457 = vadd.f32 %v1391, %v1426
        %v1458 = vadd.f32 %v1392, %v1427
        %v1459 = vadd.f32 %v1393, %v1428
        %v1460 = vlaneseq
        %v1461 = vshrl.u32 %v1460, 7
        %v1462 = vsub.s32 2, %v1461
        %v1463 = vrot.slane %v716, %v1462
        %v1464 = vmul.f32 %v1463, 0.0
        %v1465 = vmul.f32 %v1296, %v1463
        %v1466 = vmul.f32 %v1297, %v1463
        %v1467 = vmul.f32 %v1298, %v1463
        %v1468 = vmul.f32 %v1299, %v1463
        %v1469 = vmul.f32 %v1300, %v1463
        %v1470 = vmul.f32 %v1301, %v1463
        %v1471 = vmul.f32 %v1302, %v1463
        %v1472 = vmul.f32 %v1303, %v1463
        %v1473 = vmul.f32 %v1304, %v1463
        %v1474 = vmul.f32 %v1305, %v1463
        %v1475 = vmul.f32 %v1306, %v1463
        %v1476 = vmul.f32 %v1307, %v1463
        %v1477 = vmul.f32 %v1308, %v1463
        %v1478 = vmul.f32 %v1309, %v1463
        %v1479 = vmul.f32 %v1310, %v1463
        %v1480 = vmul.f32 %v1311, %v1463
        %v1481 = vmul.f32 %v1312, %v1463
        %v1482 = vmul.f32 %v1313, %v1463
        %v1483 = vmul.f32 %v1314, %v1463
        %v1484 = vmul.f32 %v1315, %v1463
        %v1485 = vmul.f32 %v1316, %v1463
        %v1486 = vmul.f32 %v1317, %v1463
        %v1487 = vmul.f32 %v1318, %v1463
        %v1488 = vmul.f32 %v1319, %v1463
        %v1489 = vmul.f32 %v1320, %v1463
        %v1490 = vmul.f32 %v1321, %v1463
        %v1491 = vmul.f32 %v1322, %v1463
        %v1492 = vmul.f32 %v1323, %v1463
        %v1493 = vmul.f32 %v1324, %v1463
        %v1494 = vmul.f32 %v1325, %v1463
        %v1495 = vadd.f32 %v1429, %v1464
        %v1496 = vadd.f32 %v1430, %v1465
        %v1497 = vadd.f32 %v1431, %v1466
        %v1498 = vadd.f32 %v1432, %v1467
        %v1499 = vadd.f32 %v1433, %v1468
        %v1500 = vadd.f32 %v1434, %v1469
        %v1501 = vadd.f32 %v1435, %v1470
        %v1502 = vadd.f32 %v1436, %v1471
        %v1503 = vadd.f32 %v1437, %v1472
        %v1504 = vadd.f32 %v1438, %v1473
        %v1505 = vadd.f32 %v1439, %v1474
        %v1506 = vadd.f32 %v1440, %v1475
        %v1507 = vadd.f32 %v1441, %v1476
        %v1508 = vadd.f32 %v1442, %v1477
        %v1509 = vadd.f32 %v1443, %v1478
        %v1510 = vadd.f32 %v1444, %v1479
        %v1511 = vadd.f32 %v1445, %v1480
        %v1512 = vadd.f32 %v1446, %v1481
        %v1513 = vadd.f32 %v1447, %v1482
        %v1514 = vadd.f32 %v1448, %v1483
        %v1515 = vadd.f32 %v1449, %v1484
        %v1516 = vadd.f32 %v1450, %v1485
        %v1517 = vadd.f32 %v1451, %v1486
        %v1518 = vadd.f32 %v1452, %v1487
        %v1519 = vadd.f32 %v1453, %v1488
        %v1520 = vadd.f32 %v1454, %v1489
        %v1521 = vadd.f32 %v1455, %v1490
        %v1522 = vadd.f32 %v1456, %v1491
        %v1523 = vadd.f32 %v1457, %v1492
        %v1524 = vadd.f32 %v1458, %v1493
        %v1525 = vadd.f32 %v1459, %v1494
        %v1526 = vlaneseq
        %v1527 = vshrl.u32 %v1526, 7
        %v1528 = vsub.s32 3, %v1527
        %v1529 = vrot.slane %v716, %v1528
        %v1530 = vmul.f32 %v1007, %v1529
        %v1531 = vmul.f32 %v1008, %v1529
        %v1532 = vmul.f32 %v1009, %v1529
        %v1533 = vmul.f32 %v1010, %v1529
        %v1534 = vmul.f32 %v1011, %v1529
        %v1535 = vmul.f32 %v1012, %v1529
        %v1536 = vmul.f32 %v1013, %v1529
        %v1537 = vmul.f32 %v1014, %v1529
        %v1538 = vmul.f32 %v1015, %v1529
        %v1539 = vmul.f32 %v1016, %v1529
        %v1540 = vmul.f32 %v1017, %v1529
        %v1541 = vmul.f32 %v1018, %v1529
        %v1542 = vmul.f32 %v1019, %v1529
        %v1543 = vmul.f32 %v1020, %v1529
        %v1544 = vmul.f32 %v1021, %v1529
        %v1545 = vmul.f32 %v1022, %v1529
        %v1546 = vmul.f32 %v1023, %v1529
        %v1547 = vmul.f32 %v1024, %v1529
        %v1548 = vmul.f32 %v1025, %v1529
        %v1549 = vmul.f32 %v1026, %v1529
        %v1550 = vmul.f32 %v1027, %v1529
        %v1551 = vmul.f32 %v1028, %v1529
        %v1552 = vmul.f32 %v1029, %v1529
        %v1553 = vmul.f32 %v1030, %v1529
        %v1554 = vmul.f32 %v1031, %v1529
        %v1555 = vmul.f32 %v1032, %v1529
        %v1556 = vmul.f32 %v1033, %v1529
        %v1557 = vmul.f32 %v1034, %v1529
        %v1558 = vmul.f32 %v1035, %v1529
        %v1559 = vmul.f32 %v1036, %v1529
        %v1560 = vmul.f32 %v1037, %v1529
        %v1561 = vmul.f32 %v1038, %v1529
        %v1562 = vadd.f32 %v1495, %v1530
        %v1563 = vadd.f32 %v1495, %v1531
        %v1564 = vadd.f32 %v1496, %v1532
        %v1565 = vadd.f32 %v1497, %v1533
        %v1566 = vadd.f32 %v1498, %v1534
        %v1567 = vadd.f32 %v1499, %v1535
        %v1568 = vadd.f32 %v1500, %v1536
        %v1569 = vadd.f32 %v1501, %v1537
        %v1570 = vadd.f32 %v1502, %v1538
        %v1571 = vadd.f32 %v1503, %v1539
        %v1572 = vadd.f32 %v1504, %v1540
        %v1573 = vadd.f32 %v1505, %v1541
        %v1574 = vadd.f32 %v1506, %v1542
        %v1575 = vadd.f32 %v1507, %v1543
        %v1576 = vadd.f32 %v1508, %v1544
        %v1577 = vadd.f32 %v1509, %v1545
        %v1578 = vadd.f32 %v1510, %v1546
        %v1579 = vadd.f32 %v1511, %v1547
        %v1580 = vadd.f32 %v1512, %v1548
        %v1581 = vadd.f32 %v1513, %v1549
        %v1582 = vadd.f32 %v1514, %v1550
        %v1583 = vadd.f32 %v1515, %v1551
        %v1584 = vadd.f32 %v1516, %v1552
        %v1585 = vadd.f32 %v1517, %v1553
        %v1586 = vadd.f32 %v1518, %v1554
        %v1587 = vadd.f32 %v1519, %v1555
        %v1588 = vadd.f32 %v1520, %v1556
        %v1589 = vadd.f32 %v1521, %v1557
        %v1590 = vadd.f32 %v1522, %v1558
        %v1591 = vadd.f32 %v1523, %v1559
        %v1592 = vadd.f32 %v1524, %v1560
        %v1593 = vadd.f32 %v1525, %v1561
        %v1594 = vlaneseq
        %v1595 = vshrl.u32 %v1594, 7
        %v1596 = vsub.s32 4, %v1595
        %v1597 = vrot.slane %v716, %v1596
        %v1598 = vmul.f32 %v620, %v1597
        %v1599 = vmul.f32 %v621, %v1597
        %v1600 = vmul.f32 %v622, %v1597
        %v1601 = vmul.f32 %v623, %v1597
        %v1602 = vmul.f32 %v624, %v1597
        %v1603 = vmul.f32 %v625, %v1597
        %v1604 = vmul.f32 %v626, %v1597
        %v1605 = vmul.f32 %v627, %v1597
        %v1606 = vmul.f32 %v628, %v1597
        %v1607 = vmul.f32 %v629, %v1597
        %v1608 = vmul.f32 %v630, %v1597
        %v1609 = vmul.f32 %v631, %v1597
        %v1610 = vmul.f32 %v632, %v1597
        %v1611 = vmul.f32 %v633, %v1597
        %v1612 = vmul.f32 %v634, %v1597
        %v1613 = vmul.f32 %v635, %v1597
        %v1614 = vmul.f32 %v636, %v1597
        %v1615 = vmul.f32 %v637, %v1597
        %v1616 = vmul.f32 %v638, %v1597
        %v1617 = vmul.f32 %v639, %v1597
        %v1618 = vmul.f32 %v640, %v1597
        %v1619 = vmul.f32 %v641, %v1597
        %v1620 = vmul.f32 %v642, %v1597
        %v1621 = vmul.f32 %v643, %v1597
        %v1622 = vmul.f32 %v644, %v1597
        %v1623 = vmul.f32 %v645, %v1597
        %v1624 = vmul.f32 %v646, %v1597
        %v1625 = vmul.f32 %v647, %v1597
        %v1626 = vmul.f32 %v648, %v1597
        %v1627 = vmul.f32 %v649, %v1597
        %v1628 = vmul.f32 %v650, %v1597
        %v1629 = vmul.f32 %v651, %v1597
        %v1630 = vadd.f32 %v1562, %v1598
        %v1631 = vadd.f32 %v1563, %v1599
        %v1632 = vadd.f32 %v1564, %v1600
        %v1633 = vadd.f32 %v1565, %v1601
        %v1634 = vadd.f32 %v1566, %v1602
        %v1635 = vadd.f32 %v1567, %v1603
        %v1636 = vadd.f32 %v1568, %v1604
        %v1637 = vadd.f32 %v1569, %v1605
        %v1638 = vadd.f32 %v1570, %v1606
        %v1639 = vadd.f32 %v1571, %v1607
        %v1640 = vadd.f32 %v1572, %v1608
        %v1641 = vadd.f32 %v1573, %v1609
        %v1642 = vadd.f32 %v1574, %v1610
        %v1643 = vadd.f32 %v1575, %v1611
        %v1644 = vadd.f32 %v1576, %v1612
        %v1645 = vadd.f32 %v1577, %v1613
        %v1646 = vadd.f32 %v1578, %v1614
        %v1647 = vadd.f32 %v1579, %v1615
        %v1648 = vadd.f32 %v1580, %v1616
        %v1649 = vadd.f32 %v1581, %v1617
        %v1650 = vadd.f32 %v1582, %v1618
        %v1651 = vadd.f32 %v1583, %v1619
        %v1652 = vadd.f32 %v1584, %v1620
        %v1653 = vadd.f32 %v1585, %v1621
        %v1654 = vadd.f32 %v1586, %v1622
        %v1655 = vadd.f32 %v1587, %v1623
        %v1656 = vadd.f32 %v1588, %v1624
        %v1657 = vadd.f32 %v1589, %v1625
        %v1658 = vadd.f32 %v1590, %v1626
        %v1659 = vadd.f32 %v1591, %v1627
        %v1660 = vadd.f32 %v1592, %v1628
        %v1661 = vadd.f32 %v1593, %v1629
        %v1662 = vlaneseq
        %v1663 = vshrl.u32 %v1662, 7
        %v1664 = vsub.s32 5, %v1663
        %v1665 = vrot.slane %v716, %v1664
        %v1666 = vmul.f32 %v1296, %v1665
        %v1667 = vmul.f32 %v1297, %v1665
        %v1668 = vmul.f32 %v1298, %v1665
        %v1669 = vmul.f32 %v1299, %v1665
        %v1670 = vmul.f32 %v1300, %v1665
        %v1671 = vmul.f32 %v1301, %v1665
        %v1672 = vmul.f32 %v1302, %v1665
        %v1673 = vmul.f32 %v1303, %v1665
        %v1674 = vmul.f32 %v1304, %v1665
        %v1675 = vmul.f32 %v1305, %v1665
        %v1676 = vmul.f32 %v1306, %v1665
        %v1677 = vmul.f32 %v1307, %v1665
        %v1678 = vmul.f32 %v1308, %v1665
        %v1679 = vmul.f32 %v1309, %v1665
        %v1680 = vmul.f32 %v1310, %v1665
        %v1681 = vmul.f32 %v1311, %v1665
        %v1682 = vmul.f32 %v1312, %v1665
        %v1683 = vmul.f32 %v1313, %v1665
        %v1684 = vmul.f32 %v1314, %v1665
        %v1685 = vmul.f32 %v1315, %v1665
        %v1686 = vmul.f32 %v1316, %v1665
        %v1687 = vmul.f32 %v1317, %v1665
        %v1688 = vmul.f32 %v1318, %v1665
        %v1689 = vmul.f32 %v1319, %v1665
        %v1690 = vmul.f32 %v1320, %v1665
        %v1691 = vmul.f32 %v1321, %v1665
        %v1692 = vmul.f32 %v1322, %v1665
        %v1693 = vmul.f32 %v1323, %v1665
        %v1694 = vmul.f32 %v1324, %v1665
        %v1695 = vmul.f32 %v1325, %v1665
        %v1696 = vmul.f32 %v1326, %v1665
        %v1697 = vmul.f32 %v1327, %v1665
        %v1698 = vadd.f32 %v1630, %v1666
        %v1699 = vadd.f32 %v1631, %v1667
        %v1700 = vadd.f32 %v1632, %v1668
        %v1701 = vadd.f32 %v1633, %v1669
        %v1702 = vadd.f32 %v1634, %v1670
        %v1703 = vadd.f32 %v1635, %v1671
        %v1704 = vadd.f32 %v1636, %v1672
        %v1705 = vadd.f32 %v1637, %v1673
        %v1706 = vadd.f32 %v1638, %v1674
        %v1707 = vadd.f32 %v1639, %v1675
        %v1708 = vadd.f32 %v1640, %v1676
        %v1709 = vadd.f32 %v1641, %v1677
        %v1710 = vadd.f32 %v1642, %v1678
        %v1711 = vadd.f32 %v1643, %v1679
        %v1712 = vadd.f32 %v1644, %v1680
        %v1713 = vadd.f32 %v1645, %v1681
        %v1714 = vadd.f32 %v1646, %v1682
        %v1715 = vadd.f32 %v1647, %v1683
        %v1716 = vadd.f32 %v1648, %v1684
        %v1717 = vadd.f32 %v1649, %v1685
        %v1718 = vadd.f32 %v1650, %v1686
        %v1719 = vadd.f32 %v1651, %v1687
        %v1720 = vadd.f32 %v1652, %v1688
        %v1721 = vadd.f32 %v1653, %v1689
        %v1722 = vadd.f32 %v1654, %v1690
        %v1723 = vadd.f32 %v1655, %v1691
        %v1724 = vadd.f32 %v1656, %v1692
        %v1725 = vadd.f32 %v1657, %v1693
        %v1726 = vadd.f32 %v1658, %v1694
        %v1727 = vadd.f32 %v1659, %v1695
        %v1728 = vadd.f32 %v1660, %v1696
        %v1729 = vadd.f32 %v1661, %v1697
        %v1730 = vlaneseq
        %v1731 = vshrl.u32 %v1730, 7
        %v1732 = vsub.s32 6, %v1731
        %v1733 = vrot.slane %v716, %v1732
        %v1734 = vmul.f32 %v1009, %v1733
        %v1735 = vmul.f32 %v1010, %v1733
        %v1736 = vmul.f32 %v1011, %v1733
        %v1737 = vmul.f32 %v1012, %v1733
        %v1738 = vmul.f32 %v1013, %v1733
        %v1739 = vmul.f32 %v1014, %v1733
        %v1740 = vmul.f32 %v1015, %v1733
        %v1741 = vmul.f32 %v1016, %v1733
        %v1742 = vmul.f32 %v1017, %v1733
        %v1743 = vmul.f32 %v1018, %v1733
        %v1744 = vmul.f32 %v1019, %v1733
        %v1745 = vmul.f32 %v1020, %v1733
        %v1746 = vmul.f32 %v1021, %v1733
        %v1747 = vmul.f32 %v1022, %v1733
        %v1748 = vmul.f32 %v1023, %v1733
        %v1749 = vmul.f32 %v1024, %v1733
        %v1750 = vmul.f32 %v1025, %v1733
        %v1751 = vmul.f32 %v1026, %v1733
        %v1752 = vmul.f32 %v1027, %v1733
        %v1753 = vmul.f32 %v1028, %v1733
        %v1754 = vmul.f32 %v1029, %v1733
        %v1755 = vmul.f32 %v1030, %v1733
        %v1756 = vmul.f32 %v1031, %v1733
        %v1757 = vmul.f32 %v1032, %v1733
        %v1758 = vmul.f32 %v1033, %v1733
        %v1759 = vmul.f32 %v1034, %v1733
        %v1760 = vmul.f32 %v1035, %v1733
        %v1761 = vmul.f32 %v1036, %v1733
        %v1762 = vmul.f32 %v1037, %v1733
        %v1763 = vmul.f32 %v1038, %v1733
        %v1764 = vmul.f32 %v1733, 0.0
        %v1765 = vadd.f32 %v1698, %v1734
        %v1766 = vadd.f32 %v1699, %v1735
        %v1767 = vadd.f32 %v1700, %v1736
        %v1768 = vadd.f32 %v1701, %v1737
        %v1769 = vadd.f32 %v1702, %v1738
        %v1770 = vadd.f32 %v1703, %v1739
        %v1771 = vadd.f32 %v1704, %v1740
        %v1772 = vadd.f32 %v1705, %v1741
        %v1773 = vadd.f32 %v1706, %v1742
        %v1774 = vadd.f32 %v1707, %v1743
        %v1775 = vadd.f32 %v1708, %v1744
        %v1776 = vadd.f32 %v1709, %v1745
        %v1777 = vadd.f32 %v1710, %v1746
        %v1778 = vadd.f32 %v1711, %v1747
        %v1779 = vadd.f32 %v1712, %v1748
        %v1780 = vadd.f32 %v1713, %v1749
        %v1781 = vadd.f32 %v1714, %v1750
        %v1782 = vadd.f32 %v1715, %v1751
        %v1783 = vadd.f32 %v1716, %v1752
        %v1784 = vadd.f32 %v1717, %v1753
        %v1785 = vadd.f32 %v1718, %v1754
        %v1786 = vadd.f32 %v1719, %v1755
        %v1787 = vadd.f32 %v1720, %v1756
        %v1788 = vadd.f32 %v1721, %v1757
        %v1789 = vadd.f32 %v1722, %v1758
        %v1790 = vadd.f32 %v1723, %v1759
        %v1791 = vadd.f32 %v1724, %v1760
        %v1792 = vadd.f32 %v1725, %v1761
        %v1793 = vadd.f32 %v1726, %v1762
        %v1794 = vadd.f32 %v1727, %v1763
        %v1795 = vadd.f32 %v1728, %v1764
        %v1796 = vadd.f32 %v1729, %v1764
        %v1797 = vlaneseq
        %v1798 = vshrl.u32 %v1797, 7
        %v1799 = vsub.s32 7, %v1798
        %v1800 = vrot.slane %v716, %v1799
        %v1801 = vmul.f32 %v622, %v1800
        %v1802 = vmul.f32 %v623, %v1800
        %v1803 = vmul.f32 %v624, %v1800
        %v1804 = vmul.f32 %v625, %v1800
        %v1805 = vmul.f32 %v626, %v1800
        %v1806 = vmul.f32 %v627, %v1800
        %v1807 = vmul.f32 %v628, %v1800
        %v1808 = vmul.f32 %v629, %v1800
        %v1809 = vmul.f32 %v630, %v1800
        %v1810 = vmul.f32 %v631, %v1800
        %v1811 = vmul.f32 %v632, %v1800
        %v1812 = vmul.f32 %v633, %v1800
        %v1813 = vmul.f32 %v634, %v1800
        %v1814 = vmul.f32 %v635, %v1800
        %v1815 = vmul.f32 %v636, %v1800
        %v1816 = vmul.f32 %v637, %v1800
        %v1817 = vmul.f32 %v638, %v1800
        %v1818 = vmul.f32 %v639, %v1800
        %v1819 = vmul.f32 %v640, %v1800
        %v1820 = vmul.f32 %v641, %v1800
        %v1821 = vmul.f32 %v642, %v1800
        %v1822 = vmul.f32 %v643, %v1800
        %v1823 = vmul.f32 %v644, %v1800
        %v1824 = vmul.f32 %v645, %v1800
        %v1825 = vmul.f32 %v646, %v1800
        %v1826 = vmul.f32 %v647, %v1800
        %v1827 = vmul.f32 %v648, %v1800
        %v1828 = vmul.f32 %v649, %v1800
        %v1829 = vmul.f32 %v650, %v1800
        %v1830 = vmul.f32 %v651, %v1800
        %v1831 = vmul.f32 %v1800, 0.0
        %v1832 = vadd.f32 %v1765, %v1801
        %v1833 = vadd.f32 %v1766, %v1802
        %v1834 = vadd.f32 %v1767, %v1803
        %v1835 = vadd.f32 %v1768, %v1804
        %v1836 = vadd.f32 %v1769, %v1805
        %v1837 = vadd.f32 %v1770, %v1806
        %v1838 = vadd.f32 %v1771, %v1807
        %v1839 = vadd.f32 %v1772, %v1808
        %v1840 = vadd.f32 %v1773, %v1809
        %v1841 = vadd.f32 %v1774, %v1810
        %v1842 = vadd.f32 %v1775, %v1811
        %v1843 = vadd.f32 %v1776, %v1812
        %v1844 = vadd.f32 %v1777, %v1813
        %v1845 = vadd.f32 %v1778, %v1814
        %v1846 = vadd.f32 %v1779, %v1815
        %v1847 = vadd.f32 %v1780, %v1816
        %v1848 = vadd.f32 %v1781, %v1817
        %v1849 = vadd.f32 %v1782, %v1818
        %v1850 = vadd.f32 %v1783, %v1819
        %v1851 = vadd.f32 %v1784, %v1820
        %v1852 = vadd.f32 %v1785, %v1821
        %v1853 = vadd.f32 %v1786, %v1822
        %v1854 = vadd.f32 %v1787, %v1823
        %v1855 = vadd.f32 %v1788, %v1824
        %v1856 = vadd.f32 %v1789, %v1825
        %v1857 = vadd.f32 %v1790, %v1826
        %v1858 = vadd.f32 %v1791, %v1827
        %v1859 = vadd.f32 %v1792, %v1828
        %v1860 = vadd.f32 %v1793, %v1829
        %v1861 = vadd.f32 %v1794, %v1830
        %v1862 = vadd.f32 %v1795, %v1831
        %v1863 = vadd.f32 %v1796, %v1831
        %v1864 = vlaneseq
        %v1865 = vshrl.u32 %v1864, 7
        %v1866 = vsub.s32 0, %v1865
        %v1867 = vrot.slane %v717, %v1866
        %v1868 = vmul.f32 %v1298, %v1867
        %v1869 = vmul.f32 %v1299, %v1867
        %v1870 = vmul.f32 %v1300, %v1867
        %v1871 = vmul.f32 %v1301, %v1867
        %v1872 = vmul.f32 %v1302, %v1867
        %v1873 = vmul.f32 %v1303, %v1867
        %v1874 = vmul.f32 %v1304, %v1867
        %v1875 = vmul.f32 %v1305, %v1867
        %v1876 = vmul.f32 %v1306, %v1867
        %v1877 = vmul.f32 %v1307, %v1867
        %v1878 = vmul.f32 %v1308, %v1867
        %v1879 = vmul.f32 %v1309, %v1867
        %v1880 = vmul.f32 %v1310, %v1867
        %v1881 = vmul.f32 %v1311, %v1867
        %v1882 = vmul.f32 %v1312, %v1867
        %v1883 = vmul.f32 %v1313, %v1867
        %v1884 = vmul.f32 %v1314, %v1867
        %v1885 = vmul.f32 %v1315, %v1867
        %v1886 = vmul.f32 %v1316, %v1867
        %v1887 = vmul.f32 %v1317, %v1867
        %v1888 = vmul.f32 %v1318, %v1867
        %v1889 = vmul.f32 %v1319, %v1867
        %v1890 = vmul.f32 %v1320, %v1867
        %v1891 = vmul.f32 %v1321, %v1867
        %v1892 = vmul.f32 %v1322, %v1867
        %v1893 = vmul.f32 %v1323, %v1867
        %v1894 = vmul.f32 %v1324, %v1867
        %v1895 = vmul.f32 %v1325, %v1867
        %v1896 = vmul.f32 %v1326, %v1867
        %v1897 = vmul.f32 %v1327, %v1867
        %v1898 = vmul.f32 %v1867, 0.0
        %v1899 = vadd.f32 %v1832, %v1868
        %v1900 = vadd.f32 %v1833, %v1869
        %v1901 = vadd.f32 %v1834, %v1870
        %v1902 = vadd.f32 %v1835, %v1871
        %v1903 = vadd.f32 %v1836, %v1872
        %v1904 = vadd.f32 %v1837, %v1873
        %v1905 = vadd.f32 %v1838, %v1874
        %v1906 = vadd.f32 %v1839, %v1875
        %v1907 = vadd.f32 %v1840, %v1876
        %v1908 = vadd.f32 %v1841, %v1877
        %v1909 = vadd.f32 %v1842, %v1878
        %v1910 = vadd.f32 %v1843, %v1879
        %v1911 = vadd.f32 %v1844, %v1880
        %v1912 = vadd.f32 %v1845, %v1881
        %v1913 = vadd.f32 %v1846, %v1882
        %v1914 = vadd.f32 %v1847, %v1883
        %v1915 = vadd.f32 %v1848, %v1884
        %v1916 = vadd.f32 %v1849, %v1885
        %v1917 = vadd.f32 %v1850, %v1886
        %v1918 = vadd.f32 %v1851, %v1887
        %v1919 = vadd.f32 %v1852, %v1888
        %v1920 = vadd.f32 %v1853, %v1889
        %v1921 = vadd.f32 %v1854, %v1890
        %v1922 = vadd.f32 %v1855, %v1891
        %v1923 = vadd.f32 %v1856, %v1892
        %v1924 = vadd.f32 %v1857, %v1893
        %v1925 = vadd.f32 %v1858, %v1894
        %v1926 = vadd.f32 %v1859, %v1895
        %v1927 = vadd.f32 %v1860, %v1896
        %v1928 = vadd.f32 %v1861, %v1897
        %v1929 = vadd.f32 %v1862, %v1898
        %v1930 = vadd.f32 %v1863, %v1898
        %v1931 = vld [vmem:[%s544] sm:$0x1]
        %v1933 = vlaneseq
        %v1934 = vshrl.u32 %v1933, 7
        %v1935 = vsub.s32 0, %v1934
        %v1936 = vrot.slane %v1931, %v1935
        %v1938 = vadd.f32 %v1899, %v1936
        %v1939 = vadd.f32 %v1900, %v1936
        %v1940 = vadd.f32 %v1901, %v1936
        %v1941 = vadd.f32 %v1902, %v1936
        %v1942 = vadd.f32 %v1903, %v1936
        %v1943 = vadd.f32 %v1904, %v1936
        %v1944 = vadd.f32 %v1905, %v1936
        %v1945 = vadd.f32 %v1906, %v1936
        %v1946 = vadd.f32 %v1907, %v1936
        %v1947 = vadd.f32 %v1908, %v1936
        %v1948 = vadd.f32 %v1909, %v1936
        %v1949 = vadd.f32 %v1910, %v1936
        %v1950 = vadd.f32 %v1911, %v1936
        %v1951 = vadd.f32 %v1912, %v1936
        %v1952 = vadd.f32 %v1913, %v1936
        %v1953 = vadd.f32 %v1914, %v1936
        %v1954 = vadd.f32 %v1915, %v1936
        %v1955 = vadd.f32 %v1916, %v1936
        %v1956 = vadd.f32 %v1917, %v1936
        %v1957 = vadd.f32 %v1918, %v1936
        %v1958 = vadd.f32 %v1919, %v1936
        %v1959 = vadd.f32 %v1920, %v1936
        %v1960 = vadd.f32 %v1921, %v1936
        %v1961 = vadd.f32 %v1922, %v1936
        %v1962 = vadd.f32 %v1923, %v1936
        %v1963 = vadd.f32 %v1924, %v1936
        %v1964 = vadd.f32 %v1925, %v1936
        %v1965 = vadd.f32 %v1926, %v1936
        %v1966 = vadd.f32 %v1927, %v1936
        %v1967 = vadd.f32 %v1928, %v1936
        %v1968 = vadd.f32 %v1929, %v1936
        %v1969 = vadd.f32 %v1930, %v1936
        %v1970 = vmul.f32 %v1938, 0.70710677
        %v1971 = vmul.f32 %v1939, 0.70710677
        %v1972 = vmul.f32 %v1940, 0.70710677
        %v1973 = vmul.f32 %v1941, 0.70710677
        %v1974 = vmul.f32 %v1942, 0.70710677
        %v1975 = vmul.f32 %v1943, 0.70710677
        %v1976 = vmul.f32 %v1944, 0.70710677
        %v1977 = vmul.f32 %v1945, 0.70710677
        %v1978 = vmul.f32 %v1946, 0.70710677
        %v1979 = vmul.f32 %v1947, 0.70710677
        %v1980 = vmul.f32 %v1948, 0.70710677
        %v1981 = vmul.f32 %v1949, 0.70710677
        %v1982 = vmul.f32 %v1950, 0.70710677
        %v1983 = vmul.f32 %v1951, 0.70710677
        %v1984 = vmul.f32 %v1952, 0.70710677
        %v1985 = vmul.f32 %v1953, 0.70710677
        %v1986 = vmul.f32 %v1954, 0.70710677
        %v1987 = vmul.f32 %v1955, 0.70710677
        %v1988 = vmul.f32 %v1956, 0.70710677
        %v1989 = vmul.f32 %v1957, 0.70710677
        %v1990 = vmul.f32 %v1958, 0.70710677
        %v1991 = vmul.f32 %v1959, 0.70710677
        %v1992 = vmul.f32 %v1960, 0.70710677
        %v1993 = vmul.f32 %v1961, 0.70710677
        %v1994 = vmul.f32 %v1962, 0.70710677
        %v1995 = vmul.f32 %v1963, 0.70710677
        %v1996 = vmul.f32 %v1964, 0.70710677
        %v1997 = vmul.f32 %v1965, 0.70710677
        %v1998 = vmul.f32 %v1966, 0.70710677
        %v1999 = vmul.f32 %v1967, 0.70710677
        %v2000 = vmul.f32 %v1968, 0.70710677
        %v2001 = vmul.f32 %v1969, 0.70710677
        %v2002 = vand.u32 2147483647, %v1970
        %v2003 = vand.u32 2147483647, %v1971
        %v2004 = vand.u32 2147483647, %v1972
        %v2005 = vand.u32 2147483647, %v1973
        %v2006 = vand.u32 2147483647, %v1974
        %v2007 = vand.u32 2147483647, %v1975
        %v2008 = vand.u32 2147483647, %v1976
        %v2009 = vand.u32 2147483647, %v1977
        %v2010 = vand.u32 2147483647, %v1978
        %v2011 = vand.u32 2147483647, %v1979
        %v2012 = vand.u32 2147483647, %v1980
        %v2013 = vand.u32 2147483647, %v1981
        %v2014 = vand.u32 2147483647, %v1982
        %v2015 = vand.u32 2147483647, %v1983
        %v2016 = vand.u32 2147483647, %v1984
        %v2017 = vand.u32 2147483647, %v1985
        %v2018 = vand.u32 2147483647, %v1986
        %v2019 = vand.u32 2147483647, %v1987
        %v2020 = vand.u32 2147483647, %v1988
        %v2021 = vand.u32 2147483647, %v1989
        %v2022 = vand.u32 2147483647, %v1990
        %v2023 = vand.u32 2147483647, %v1991
        %v2024 = vand.u32 2147483647, %v1992
        %v2025 = vand.u32 2147483647, %v1993
        %v2026 = vand.u32 2147483647, %v1994
        %v2027 = vand.u32 2147483647, %v1995
        %v2028 = vand.u32 2147483647, %v1996
        %v2029 = vand.u32 2147483647, %v1997
        %v2030 = vand.u32 2147483647, %v1998
        %v2031 = vand.u32 2147483647, %v1999
        %v2032 = vand.u32 2147483647, %v2000
        %v2033 = vand.u32 2147483647, %v2001
        %v2034 = vmul.f32 %v2002, 0.3275911
        %v2035 = vmul.f32 %v2003, 0.3275911
        %v2036 = vmul.f32 %v2004, 0.3275911
        %v2037 = vmul.f32 %v2005, 0.3275911
        %v2038 = vmul.f32 %v2006, 0.3275911
        %v2039 = vmul.f32 %v2007, 0.3275911
        %v2040 = vmul.f32 %v2008, 0.3275911
        %v2041 = vmul.f32 %v2009, 0.3275911
        %v2042 = vmul.f32 %v2010, 0.3275911
        %v2043 = vmul.f32 %v2011, 0.3275911
        %v2044 = vmul.f32 %v2012, 0.3275911
        %v2045 = vmul.f32 %v2013, 0.3275911
        %v2046 = vmul.f32 %v2014, 0.3275911
        %v2047 = vmul.f32 %v2015, 0.3275911
        %v2048 = vmul.f32 %v2016, 0.3275911
        %v2049 = vmul.f32 %v2017, 0.3275911
        %v2050 = vmul.f32 %v2018, 0.3275911
        %v2051 = vmul.f32 %v2019, 0.3275911
        %v2052 = vmul.f32 %v2020, 0.3275911
        %v2053 = vmul.f32 %v2021, 0.3275911
        %v2054 = vmul.f32 %v2022, 0.3275911
        %v2055 = vmul.f32 %v2023, 0.3275911
        %v2056 = vmul.f32 %v2024, 0.3275911
        %v2057 = vmul.f32 %v2025, 0.3275911
        %v2058 = vmul.f32 %v2026, 0.3275911
        %v2059 = vmul.f32 %v2027, 0.3275911
        %v2060 = vmul.f32 %v2028, 0.3275911
        %v2061 = vmul.f32 %v2029, 0.3275911
        %v2062 = vmul.f32 %v2030, 0.3275911
        %v2063 = vmul.f32 %v2031, 0.3275911
        %v2064 = vmul.f32 %v2032, 0.3275911
        %v2065 = vmul.f32 %v2033, 0.3275911
        %v2066 = vadd.f32 %v2034, 1.0
        %v2067 = vadd.f32 %v2035, 1.0
        %v2068 = vadd.f32 %v2036, 1.0
        %v2069 = vadd.f32 %v2037, 1.0
        %v2070 = vadd.f32 %v2038, 1.0
        %v2071 = vadd.f32 %v2039, 1.0
        %v2072 = vadd.f32 %v2040, 1.0
        %v2073 = vadd.f32 %v2041, 1.0
        %v2074 = vadd.f32 %v2042, 1.0
        %v2075 = vadd.f32 %v2043, 1.0
        %v2076 = vadd.f32 %v2044, 1.0
        %v2077 = vadd.f32 %v2045, 1.0
        %v2078 = vadd.f32 %v2046, 1.0
        %v2079 = vadd.f32 %v2047, 1.0
        %v2080 = vadd.f32 %v2048, 1.0
        %v2081 = vadd.f32 %v2049, 1.0
        %v2082 = vadd.f32 %v2050, 1.0
        %v2083 = vadd.f32 %v2051, 1.0
        %v2084 = vadd.f32 %v2052, 1.0
        %v2085 = vadd.f32 %v2053, 1.0
        %v2086 = vadd.f32 %v2054, 1.0
        %v2087 = vadd.f32 %v2055, 1.0
        %v2088 = vadd.f32 %v2056, 1.0
        %v2089 = vadd.f32 %v2057, 1.0
        %v2090 = vadd.f32 %v2058, 1.0
        %v2091 = vadd.f32 %v2059, 1.0
        %v2092 = vadd.f32 %v2060, 1.0
        %v2093 = vadd.f32 %v2061, 1.0
        %v2094 = vadd.f32 %v2062, 1.0
        %v2095 = vadd.f32 %v2063, 1.0
        %v2096 = vadd.f32 %v2064, 1.0
        %v2097 = vadd.f32 %v2065, 1.0
        %v2098 = vrcp.pop %v2066
        %v2099 = vrcp.pop %v2067
        %v2100 = vrcp.pop %v2068
        %v2101 = vrcp.pop %v2069
        %v2102 = vrcp.pop %v2070
        %v2103 = vrcp.pop %v2071
        %v2104 = vrcp.pop %v2072
        %v2105 = vrcp.pop %v2073
        %v2106 = vrcp.pop %v2074
        %v2107 = vrcp.pop %v2075
        %v2108 = vrcp.pop %v2076
        %v2109 = vrcp.pop %v2077
        %v2110 = vrcp.pop %v2078
        %v2111 = vrcp.pop %v2079
        %v2112 = vrcp.pop %v2080
        %v2113 = vrcp.pop %v2081
        %v2114 = vrcp.pop %v2082
        %v2115 = vrcp.pop %v2083
        %v2116 = vrcp.pop %v2084
        %v2117 = vrcp.pop %v2085
        %v2118 = vrcp.pop %v2086
        %v2119 = vrcp.pop %v2087
        %v2120 = vrcp.pop %v2088
        %v2121 = vrcp.pop %v2089
        %v2122 = vrcp.pop %v2090
        %v2123 = vrcp.pop %v2091
        %v2124 = vrcp.pop %v2092
        %v2125 = vrcp.pop %v2093
        %v2126 = vrcp.pop %v2094
        %v2127 = vrcp.pop %v2095
        %v2128 = vrcp.pop %v2096
        %v2129 = vrcp.pop %v2097
        %v2130 = vmul.f32 %v2098, 1.0614054
        %v2131 = vmul.f32 %v2099, 1.0614054
        %v2132 = vmul.f32 %v2100, 1.0614054
        %v2133 = vmul.f32 %v2101, 1.0614054
        %v2134 = vmul.f32 %v2102, 1.0614054
        %v2135 = vmul.f32 %v2103, 1.0614054
        %v2136 = vmul.f32 %v2104, 1.0614054
        %v2137 = vmul.f32 %v2105, 1.0614054
        %v2138 = vmul.f32 %v2106, 1.0614054
        %v2139 = vmul.f32 %v2107, 1.0614054
        %v2140 = vmul.f32 %v2108, 1.0614054
        %v2141 = vmul.f32 %v2109, 1.0614054
        %v2142 = vmul.f32 %v2110, 1.0614054
        %v2143 = vmul.f32 %v2111, 1.0614054
        %v2144 = vmul.f32 %v2112, 1.0614054
        %v2145 = vmul.f32 %v2113, 1.0614054
        %v2146 = vmul.f32 %v2114, 1.0614054
        %v2147 = vmul.f32 %v2115, 1.0614054
        %v2148 = vmul.f32 %v2116, 1.0614054
        %v2149 = vmul.f32 %v2117, 1.0614054
        %v2150 = vmul.f32 %v2118, 1.0614054
        %v2151 = vmul.f32 %v2119, 1.0614054
        %v2152 = vmul.f32 %v2120, 1.0614054
        %v2153 = vmul.f32 %v2121, 1.0614054
        %v2154 = vmul.f32 %v2122, 1.0614054
        %v2155 = vmul.f32 %v2123, 1.0614054
        %v2156 = vmul.f32 %v2124, 1.0614054
        %v2157 = vmul.f32 %v2125, 1.0614054
        %v2158 = vmul.f32 %v2126, 1.0614054
        %v2159 = vmul.f32 %v2127, 1.0614054
        %v2160 = vmul.f32 %v2128, 1.0614054
        %v2161 = vmul.f32 %v2129, 1.0614054
        %v2162 = vadd.f32 %v2130, -1.4531521
        %v2163 = vadd.f32 %v2131, -1.4531521
        %v2164 = vadd.f32 %v2132, -1.4531521
        %v2165 = vadd.f32 %v2133, -1.4531521
        %v2166 = vadd.f32 %v2134, -1.4531521
        %v2167 = vadd.f32 %v2135, -1.4531521
        %v2168 = vadd.f32 %v2136, -1.4531521
        %v2169 = vadd.f32 %v2137, -1.4531521
        %v2170 = vadd.f32 %v2138, -1.4531521
        %v2171 = vadd.f32 %v2139, -1.4531521
        %v2172 = vadd.f32 %v2140, -1.4531521
        %v2173 = vadd.f32 %v2141, -1.4531521
        %v2174 = vadd.f32 %v2142, -1.4531521
        %v2175 = vadd.f32 %v2143, -1.4531521
        %v2176 = vadd.f32 %v2144, -1.4531521
        %v2177 = vadd.f32 %v2145, -1.4531521
        %v2178 = vadd.f32 %v2146, -1.4531521
        %v2179 = vadd.f32 %v2147, -1.4531521
        %v2180 = vadd.f32 %v2148, -1.4531521
        %v2181 = vadd.f32 %v2149, -1.4531521
        %v2182 = vadd.f32 %v2150, -1.4531521
        %v2183 = vadd.f32 %v2151, -1.4531521
        %v2184 = vadd.f32 %v2152, -1.4531521
        %v2185 = vadd.f32 %v2153, -1.4531521
        %v2186 = vadd.f32 %v2154, -1.4531521
        %v2187 = vadd.f32 %v2155, -1.4531521
        %v2188 = vadd.f32 %v2156, -1.4531521
        %v2189 = vadd.f32 %v2157, -1.4531521
        %v2190 = vadd.f32 %v2158, -1.4531521
        %v2191 = vadd.f32 %v2159, -1.4531521
        %v2192 = vadd.f32 %v2160, -1.4531521
        %v2193 = vadd.f32 %v2161, -1.4531521
        %v2194 = vmul.f32 %v2098, %v2162
        %v2195 = vmul.f32 %v2099, %v2163
        %v2196 = vmul.f32 %v2100, %v2164
        %v2197 = vmul.f32 %v2101, %v2165
        %v2198 = vmul.f32 %v2102, %v2166
        %v2199 = vmul.f32 %v2103, %v2167
        %v2200 = vmul.f32 %v2104, %v2168
        %v2201 = vmul.f32 %v2105, %v2169
        %v2202 = vmul.f32 %v2106, %v2170
        %v2203 = vmul.f32 %v2107, %v2171
        %v2204 = vmul.f32 %v2108, %v2172
        %v2205 = vmul.f32 %v2109, %v2173
        %v2206 = vmul.f32 %v2110, %v2174
        %v2207 = vmul.f32 %v2111, %v2175
        %v2208 = vmul.f32 %v2112, %v2176
        %v2209 = vmul.f32 %v2113, %v2177
        %v2210 = vmul.f32 %v2114, %v2178
        %v2211 = vmul.f32 %v2115, %v2179
        %v2212 = vmul.f32 %v2116, %v2180
        %v2213 = vmul.f32 %v2117, %v2181
        %v2214 = vmul.f32 %v2118, %v2182
        %v2215 = vmul.f32 %v2119, %v2183
        %v2216 = vmul.f32 %v2120, %v2184
        %v2217 = vmul.f32 %v2121, %v2185
        %v2218 = vmul.f32 %v2122, %v2186
        %v2219 = vmul.f32 %v2123, %v2187
        %v2220 = vmul.f32 %v2124, %v2188
        %v2221 = vmul.f32 %v2125, %v2189
        %v2222 = vmul.f32 %v2126, %v2190
        %v2223 = vmul.f32 %v2127, %v2191
        %v2224 = vmul.f32 %v2128, %v2192
        %v2225 = vmul.f32 %v2129, %v2193
        %v2226 = vadd.f32 %v2194, 1.4214138
        %v2227 = vadd.f32 %v2195, 1.4214138
        %v2228 = vadd.f32 %v2196, 1.4214138
        %v2229 = vadd.f32 %v2197, 1.4214138
        %v2230 = vadd.f32 %v2198, 1.4214138
        %v2231 = vadd.f32 %v2199, 1.4214138
        %v2232 = vadd.f32 %v2200, 1.4214138
        %v2233 = vadd.f32 %v2201, 1.4214138
        %v2234 = vadd.f32 %v2202, 1.4214138
        %v2235 = vadd.f32 %v2203, 1.4214138
        %v2236 = vadd.f32 %v2204, 1.4214138
        %v2237 = vadd.f32 %v2205, 1.4214138
        %v2238 = vadd.f32 %v2206, 1.4214138
        %v2239 = vadd.f32 %v2207, 1.4214138
        %v2240 = vadd.f32 %v2208, 1.4214138
        %v2241 = vadd.f32 %v2209, 1.4214138
        %v2242 = vadd.f32 %v2210, 1.4214138
        %v2243 = vadd.f32 %v2211, 1.4214138
        %v2244 = vadd.f32 %v2212, 1.4214138
        %v2245 = vadd.f32 %v2213, 1.4214138
        %v2246 = vadd.f32 %v2214, 1.4214138
        %v2247 = vadd.f32 %v2215, 1.4214138
        %v2248 = vadd.f32 %v2216, 1.4214138
        %v2249 = vadd.f32 %v2217, 1.4214138
        %v2250 = vadd.f32 %v2218, 1.4214138
        %v2251 = vadd.f32 %v2219, 1.4214138
        %v2252 = vadd.f32 %v2220, 1.4214138
        %v2253 = vadd.f32 %v2221, 1.4214138
        %v2254 = vadd.f32 %v2222, 1.4214138
        %v2255 = vadd.f32 %v2223, 1.4214138
        %v2256 = vadd.f32 %v2224, 1.4214138
        %v2257 = vadd.f32 %v2225, 1.4214138
        %v2258 = vmul.f32 %v2098, %v2226
        %v2259 = vmul.f32 %v2099, %v2227
        %v2260 = vmul.f32 %v2100, %v2228
        %v2261 = vmul.f32 %v2101, %v2229
        %v2262 = vmul.f32 %v2102, %v2230
        %v2263 = vmul.f32 %v2103, %v2231
        %v2264 = vmul.f32 %v2104, %v2232
        %v2265 = vmul.f32 %v2105, %v2233
        %v2266 = vmul.f32 %v2106, %v2234
        %v2267 = vmul.f32 %v2107, %v2235
        %v2268 = vmul.f32 %v2108, %v2236
        %v2269 = vmul.f32 %v2109, %v2237
        %v2270 = vmul.f32 %v2110, %v2238
        %v2271 = vmul.f32 %v2111, %v2239
        %v2272 = vmul.f32 %v2112, %v2240
        %v2273 = vmul.f32 %v2113, %v2241
        %v2274 = vmul.f32 %v2114, %v2242
        %v2275 = vmul.f32 %v2115, %v2243
        %v2276 = vmul.f32 %v2116, %v2244
        %v2277 = vmul.f32 %v2117, %v2245
        %v2278 = vmul.f32 %v2118, %v2246
        %v2279 = vmul.f32 %v2119, %v2247
        %v2280 = vmul.f32 %v2120, %v2248
        %v2281 = vmul.f32 %v2121, %v2249
        %v2282 = vmul.f32 %v2122, %v2250
        %v2283 = vmul.f32 %v2123, %v2251
        %v2284 = vmul.f32 %v2124, %v2252
        %v2285 = vmul.f32 %v2125, %v2253
        %v2286 = vmul.f32 %v2126, %v2254
        %v2287 = vmul.f32 %v2127, %v2255
        %v2288 = vmul.f32 %v2128, %v2256
        %v2289 = vmul.f32 %v2129, %v2257
        %v2290 = vadd.f32 %v2258, -0.28449672
        %v2291 = vadd.f32 %v2259, -0.28449672
        %v2292 = vadd.f32 %v2260, -0.28449672
        %v2293 = vadd.f32 %v2261, -0.28449672
        %v2294 = vadd.f32 %v2262, -0.28449672
        %v2295 = vadd.f32 %v2263, -0.28449672
        %v2296 = vadd.f32 %v2264, -0.28449672
        %v2297 = vadd.f32 %v2265, -0.28449672
        %v2298 = vadd.f32 %v2266, -0.28449672
        %v2299 = vadd.f32 %v2267, -0.28449672
        %v2300 = vadd.f32 %v2268, -0.28449672
        %v2301 = vadd.f32 %v2269, -0.28449672
        %v2302 = vadd.f32 %v2270, -0.28449672
        %v2303 = vadd.f32 %v2271, -0.28449672
        %v2304 = vadd.f32 %v2272, -0.28449672
        %v2305 = vadd.f32 %v2273, -0.28449672
        %v2306 = vadd.f32 %v2274, -0.28449672
        %v2307 = vadd.f32 %v2275, -0.28449672
        %v2308 = vadd.f32 %v2276, -0.28449672
        %v2309 = vadd.f32 %v2277, -0.28449672
        %v2310 = vadd.f32 %v2278, -0.28449672
        %v2311 = vadd.f32 %v2279, -0.28449672
        %v2312 = vadd.f32 %v2280, -0.28449672
        %v2313 = vadd.f32 %v2281, -0.28449672
        %v2314 = vadd.f32 %v2282, -0.28449672
        %v2315 = vadd.f32 %v2283, -0.28449672
        %v2316 = vadd.f32 %v2284, -0.28449672
        %v2317 = vadd.f32 %v2285, -0.28449672
        %v2318 = vadd.f32 %v2286, -0.28449672
        %v2319 = vadd.f32 %v2287, -0.28449672
        %v2320 = vadd.f32 %v2288, -0.28449672
        %v2321 = vadd.f32 %v2289, -0.28449672
        %v2322 = vmul.f32 %v2098, %v2290
        %v2323 = vmul.f32 %v2099, %v2291
        %v2324 = vmul.f32 %v2100, %v2292
        %v2325 = vmul.f32 %v2101, %v2293
        %v2326 = vmul.f32 %v2102, %v2294
        %v2327 = vmul.f32 %v2103, %v2295
        %v2328 = vmul.f32 %v2104, %v2296
        %v2329 = vmul.f32 %v2105, %v2297
        %v2330 = vmul.f32 %v2106, %v2298
        %v2331 = vmul.f32 %v2107, %v2299
        %v2332 = vmul.f32 %v2108, %v2300
        %v2333 = vmul.f32 %v2109, %v2301
        %v2334 = vmul.f32 %v2110, %v2302
        %v2335 = vmul.f32 %v2111, %v2303
        %v2336 = vmul.f32 %v2112, %v2304
        %v2337 = vmul.f32 %v2113, %v2305
        %v2338 = vmul.f32 %v2114, %v2306
        %v2339 = vmul.f32 %v2115, %v2307
        %v2340 = vmul.f32 %v2116, %v2308
        %v2341 = vmul.f32 %v2117, %v2309
        %v2342 = vmul.f32 %v2118, %v2310
        %v2343 = vmul.f32 %v2119, %v2311
        %v2344 = vmul.f32 %v2120, %v2312
        %v2345 = vmul.f32 %v2121, %v2313
        %v2346 = vmul.f32 %v2122, %v2314
        %v2347 = vmul.f32 %v2123, %v2315
        %v2348 = vmul.f32 %v2124, %v2316
        %v2349 = vmul.f32 %v2125, %v2317
        %v2350 = vmul.f32 %v2126, %v2318
        %v2351 = vmul.f32 %v2127, %v2319
        %v2352 = vmul.f32 %v2128, %v2320
        %v2353 = vmul.f32 %v2129, %v2321
        %v2354 = vadd.f32 %v2322, 0.2548296
        %v2355 = vadd.f32 %v2323, 0.2548296
        %v2356 = vadd.f32 %v2324, 0.2548296
        %v2357 = vadd.f32 %v2325, 0.2548296
        %v2358 = vadd.f32 %v2326, 0.2548296
        %v2359 = vadd.f32 %v2327, 0.2548296
        %v2360 = vadd.f32 %v2328, 0.2548296
        %v2361 = vadd.f32 %v2329, 0.2548296
        %v2362 = vadd.f32 %v2330, 0.2548296
        %v2363 = vadd.f32 %v2331, 0.2548296
        %v2364 = vadd.f32 %v2332, 0.2548296
        %v2365 = vadd.f32 %v2333, 0.2548296
        %v2366 = vadd.f32 %v2334, 0.2548296
        %v2367 = vadd.f32 %v2335, 0.2548296
        %v2368 = vadd.f32 %v2336, 0.2548296
        %v2369 = vadd.f32 %v2337, 0.2548296
        %v2370 = vadd.f32 %v2338, 0.2548296
        %v2371 = vadd.f32 %v2339, 0.2548296
        %v2372 = vadd.f32 %v2340, 0.2548296
        %v2373 = vadd.f32 %v2341, 0.2548296
        %v2374 = vadd.f32 %v2342, 0.2548296
        %v2375 = vadd.f32 %v2343, 0.2548296
        %v2376 = vadd.f32 %v2344, 0.2548296
        %v2377 = vadd.f32 %v2345, 0.2548296
        %v2378 = vadd.f32 %v2346, 0.2548296
        %v2379 = vadd.f32 %v2347, 0.2548296
        %v2380 = vadd.f32 %v2348, 0.2548296
        %v2381 = vadd.f32 %v2349, 0.2548296
        %v2382 = vadd.f32 %v2350, 0.2548296
        %v2383 = vadd.f32 %v2351, 0.2548296
        %v2384 = vadd.f32 %v2352, 0.2548296
        %v2385 = vadd.f32 %v2353, 0.2548296
        %v2386 = vmul.f32 %v2098, %v2354
        %v2387 = vmul.f32 %v2099, %v2355
        %v2388 = vmul.f32 %v2100, %v2356
        %v2389 = vmul.f32 %v2101, %v2357
        %v2390 = vmul.f32 %v2102, %v2358
        %v2391 = vmul.f32 %v2103, %v2359
        %v2392 = vmul.f32 %v2104, %v2360
        %v2393 = vmul.f32 %v2105, %v2361
        %v2394 = vmul.f32 %v2106, %v2362
        %v2395 = vmul.f32 %v2107, %v2363
        %v2396 = vmul.f32 %v2108, %v2364
        %v2397 = vmul.f32 %v2109, %v2365
        %v2398 = vmul.f32 %v2110, %v2366
        %v2399 = vmul.f32 %v2111, %v2367
        %v2400 = vmul.f32 %v2112, %v2368
        %v2401 = vmul.f32 %v2113, %v2369
        %v2402 = vmul.f32 %v2114, %v2370
        %v2403 = vmul.f32 %v2115, %v2371
        %v2404 = vmul.f32 %v2116, %v2372
        %v2405 = vmul.f32 %v2117, %v2373
        %v2406 = vmul.f32 %v2118, %v2374
        %v2407 = vmul.f32 %v2119, %v2375
        %v2408 = vmul.f32 %v2120, %v2376
        %v2409 = vmul.f32 %v2121, %v2377
        %v2410 = vmul.f32 %v2122, %v2378
        %v2411 = vmul.f32 %v2123, %v2379
        %v2412 = vmul.f32 %v2124, %v2380
        %v2413 = vmul.f32 %v2125, %v2381
        %v2414 = vmul.f32 %v2126, %v2382
        %v2415 = vmul.f32 %v2127, %v2383
        %v2416 = vmul.f32 %v2128, %v2384
        %v2417 = vmul.f32 %v2129, %v2385
        %v2418 = vsub.f32 0.0, %v2002
        %v2419 = vsub.f32 0.0, %v2003
        %v2420 = vsub.f32 0.0, %v2004
        %v2421 = vsub.f32 0.0, %v2005
        %v2422 = vsub.f32 0.0, %v2006
        %v2423 = vsub.f32 0.0, %v2007
        %v2424 = vsub.f32 0.0, %v2008
        %v2425 = vsub.f32 0.0, %v2009
        %v2426 = vsub.f32 0.0, %v2010
        %v2427 = vsub.f32 0.0, %v2011
        %v2428 = vsub.f32 0.0, %v2012
        %v2429 = vsub.f32 0.0, %v2013
        %v2430 = vsub.f32 0.0, %v2014
        %v2431 = vsub.f32 0.0, %v2015
        %v2432 = vsub.f32 0.0, %v2016
        %v2433 = vsub.f32 0.0, %v2017
        %v2434 = vsub.f32 0.0, %v2018
        %v2435 = vsub.f32 0.0, %v2019
        %v2436 = vsub.f32 0.0, %v2020
        %v2437 = vsub.f32 0.0, %v2021
        %v2438 = vsub.f32 0.0, %v2022
        %v2439 = vsub.f32 0.0, %v2023
        %v2440 = vsub.f32 0.0, %v2024
        %v2441 = vsub.f32 0.0, %v2025
        %v2442 = vsub.f32 0.0, %v2026
        %v2443 = vsub.f32 0.0, %v2027
        %v2444 = vsub.f32 0.0, %v2028
        %v2445 = vsub.f32 0.0, %v2029
        %v2446 = vsub.f32 0.0, %v2030
        %v2447 = vsub.f32 0.0, %v2031
        %v2448 = vsub.f32 0.0, %v2032
        %v2449 = vsub.f32 0.0, %v2033
        %v2450 = vmul.f32 %v2418, %v2002
        %v2451 = vmul.f32 %v2419, %v2003
        %v2452 = vmul.f32 %v2420, %v2004
        %v2453 = vmul.f32 %v2421, %v2005
        %v2454 = vmul.f32 %v2422, %v2006
        %v2455 = vmul.f32 %v2423, %v2007
        %v2456 = vmul.f32 %v2424, %v2008
        %v2457 = vmul.f32 %v2425, %v2009
        %v2458 = vmul.f32 %v2426, %v2010
        %v2459 = vmul.f32 %v2427, %v2011
        %v2460 = vmul.f32 %v2428, %v2012
        %v2461 = vmul.f32 %v2429, %v2013
        %v2462 = vmul.f32 %v2430, %v2014
        %v2463 = vmul.f32 %v2431, %v2015
        %v2464 = vmul.f32 %v2432, %v2016
        %v2465 = vmul.f32 %v2433, %v2017
        %v2466 = vmul.f32 %v2434, %v2018
        %v2467 = vmul.f32 %v2435, %v2019
        %v2468 = vmul.f32 %v2436, %v2020
        %v2469 = vmul.f32 %v2437, %v2021
        %v2470 = vmul.f32 %v2438, %v2022
        %v2471 = vmul.f32 %v2439, %v2023
        %v2472 = vmul.f32 %v2440, %v2024
        %v2473 = vmul.f32 %v2441, %v2025
        %v2474 = vmul.f32 %v2442, %v2026
        %v2475 = vmul.f32 %v2443, %v2027
        %v2476 = vmul.f32 %v2444, %v2028
        %v2477 = vmul.f32 %v2445, %v2029
        %v2478 = vmul.f32 %v2446, %v2030
        %v2479 = vmul.f32 %v2447, %v2031
        %v2480 = vmul.f32 %v2448, %v2032
        %v2481 = vmul.f32 %v2449, %v2033
        %v2482 = vmul.f32 %v2450, 1.442695
        %v2483 = vpow.pop %v2482
        %v2484 = vmul.f32 %v2451, 1.442695
        %v2485 = vpow.pop %v2484
        %v2486 = vmul.f32 %v2452, 1.442695
        %v2487 = vpow.pop %v2486
        %v2488 = vmul.f32 %v2453, 1.442695
        %v2489 = vpow.pop %v2488
        %v2490 = vmul.f32 %v2454, 1.442695
        %v2491 = vpow.pop %v2490
        %v2492 = vmul.f32 %v2455, 1.442695
        %v2493 = vpow.pop %v2492
        %v2494 = vmul.f32 %v2456, 1.442695
        %v2495 = vpow.pop %v2494
        %v2496 = vmul.f32 %v2457, 1.442695
        %v2497 = vpow.pop %v2496
        %v2498 = vmul.f32 %v2458, 1.442695
        %v2499 = vpow.pop %v2498
        %v2500 = vmul.f32 %v2459, 1.442695
        %v2501 = vpow.pop %v2500
        %v2502 = vmul.f32 %v2460, 1.442695
        %v2503 = vpow.pop %v2502
        %v2504 = vmul.f32 %v2461, 1.442695
        %v2505 = vpow.pop %v2504
        %v2506 = vmul.f32 %v2462, 1.442695
        %v2507 = vpow.pop %v2506
        %v2508 = vmul.f32 %v2463, 1.442695
        %v2509 = vpow.pop %v2508
        %v2510 = vmul.f32 %v2464, 1.442695
        %v2511 = vpow.pop %v2510
        %v2512 = vmul.f32 %v2465, 1.442695
        %v2513 = vpow.pop %v2512
        %v2514 = vmul.f32 %v2466, 1.442695
        %v2515 = vpow.pop %v2514
        %v2516 = vmul.f32 %v2467, 1.442695
        %v2517 = vpow.pop %v2516
        %v2518 = vmul.f32 %v2468, 1.442695
        %v2519 = vpow.pop %v2518
        %v2520 = vmul.f32 %v2469, 1.442695
        %v2521 = vpow.pop %v2520
        %v2522 = vmul.f32 %v2470, 1.442695
        %v2523 = vpow.pop %v2522
        %v2524 = vmul.f32 %v2471, 1.442695
        %v2525 = vpow.pop %v2524
        %v2526 = vmul.f32 %v2472, 1.442695
        %v2527 = vpow.pop %v2526
        %v2528 = vmul.f32 %v2473, 1.442695
        %v2529 = vpow.pop %v2528
        %v2530 = vmul.f32 %v2474, 1.442695
        %v2531 = vpow.pop %v2530
        %v2532 = vmul.f32 %v2475, 1.442695
        %v2533 = vpow.pop %v2532
        %v2534 = vmul.f32 %v2476, 1.442695
        %v2535 = vpow.pop %v2534
        %v2536 = vmul.f32 %v2477, 1.442695
        %v2537 = vpow.pop %v2536
        %v2538 = vmul.f32 %v2478, 1.442695
        %v2539 = vpow.pop %v2538
        %v2540 = vmul.f32 %v2479, 1.442695
        %v2541 = vpow.pop %v2540
        %v2542 = vmul.f32 %v2480, 1.442695
        %v2543 = vpow.pop %v2542
        %v2544 = vmul.f32 %v2481, 1.442695
        %v2545 = vpow.pop %v2544
        %v2546 = vmul.f32 %v2386, %v2483
        %v2547 = vmul.f32 %v2387, %v2485
        %v2548 = vmul.f32 %v2388, %v2487
        %v2549 = vmul.f32 %v2389, %v2489
        %v2550 = vmul.f32 %v2390, %v2491
        %v2551 = vmul.f32 %v2391, %v2493
        %v2552 = vmul.f32 %v2392, %v2495
        %v2553 = vmul.f32 %v2393, %v2497
        %v2554 = vmul.f32 %v2394, %v2499
        %v2555 = vmul.f32 %v2395, %v2501
        %v2556 = vmul.f32 %v2396, %v2503
        %v2557 = vmul.f32 %v2397, %v2505
        %v2558 = vmul.f32 %v2398, %v2507
        %v2559 = vmul.f32 %v2399, %v2509
        %v2560 = vmul.f32 %v2400, %v2511
        %v2561 = vmul.f32 %v2401, %v2513
        %v2562 = vmul.f32 %v2402, %v2515
        %v2563 = vmul.f32 %v2403, %v2517
        %v2564 = vmul.f32 %v2404, %v2519
        %v2565 = vmul.f32 %v2405, %v2521
        %v2566 = vmul.f32 %v2406, %v2523
        %v2567 = vmul.f32 %v2407, %v2525
        %v2568 = vmul.f32 %v2408, %v2527
        %v2569 = vmul.f32 %v2409, %v2529
        %v2570 = vmul.f32 %v2410, %v2531
        %v2571 = vmul.f32 %v2411, %v2533
        %v2572 = vmul.f32 %v2412, %v2535
        %v2573 = vmul.f32 %v2413, %v2537
        %v2574 = vmul.f32 %v2414, %v2539
        %v2575 = vmul.f32 %v2415, %v2541
        %v2576 = vmul.f32 %v2416, %v2543
        %v2577 = vmul.f32 %v2417, %v2545
        %v2578 = vsub.f32 1.0, %v2546
        %v2579 = vsub.f32 1.0, %v2547
        %v2580 = vsub.f32 1.0, %v2548
        %v2581 = vsub.f32 1.0, %v2549
        %v2582 = vsub.f32 1.0, %v2550
        %v2583 = vsub.f32 1.0, %v2551
        %v2584 = vsub.f32 1.0, %v2552
        %v2585 = vsub.f32 1.0, %v2553
        %v2586 = vsub.f32 1.0, %v2554
        %v2587 = vsub.f32 1.0, %v2555
        %v2588 = vsub.f32 1.0, %v2556
        %v2589 = vsub.f32 1.0, %v2557
        %v2590 = vsub.f32 1.0, %v2558
        %v2591 = vsub.f32 1.0, %v2559
        %v2592 = vsub.f32 1.0, %v2560
        %v2593 = vsub.f32 1.0, %v2561
        %v2594 = vsub.f32 1.0, %v2562
        %v2595 = vsub.f32 1.0, %v2563
        %v2596 = vsub.f32 1.0, %v2564
        %v2597 = vsub.f32 1.0, %v2565
        %v2598 = vsub.f32 1.0, %v2566
        %v2599 = vsub.f32 1.0, %v2567
        %v2600 = vsub.f32 1.0, %v2568
        %v2601 = vsub.f32 1.0, %v2569
        %v2602 = vsub.f32 1.0, %v2570
        %v2603 = vsub.f32 1.0, %v2571
        %v2604 = vsub.f32 1.0, %v2572
        %v2605 = vsub.f32 1.0, %v2573
        %v2606 = vsub.f32 1.0, %v2574
        %v2607 = vsub.f32 1.0, %v2575
        %v2608 = vsub.f32 1.0, %v2576
        %v2609 = vsub.f32 1.0, %v2577
        %vm2610 = vcmp.ge.f32.partialorder %v1970, 0.0
        %vm2611 = vcmp.ge.f32.partialorder %v1971, 0.0
        %vm2612 = vcmp.ge.f32.partialorder %v1972, 0.0
        %vm2613 = vcmp.ge.f32.partialorder %v1973, 0.0
        %vm2614 = vcmp.ge.f32.partialorder %v1974, 0.0
        %vm2615 = vcmp.ge.f32.partialorder %v1975, 0.0
        %vm2616 = vcmp.ge.f32.partialorder %v1976, 0.0
        %vm2617 = vcmp.ge.f32.partialorder %v1977, 0.0
        %vm2618 = vcmp.ge.f32.partialorder %v1978, 0.0
        %vm2619 = vcmp.ge.f32.partialorder %v1979, 0.0
        %vm2620 = vcmp.ge.f32.partialorder %v1980, 0.0
        %vm2621 = vcmp.ge.f32.partialorder %v1981, 0.0
        %vm2622 = vcmp.ge.f32.partialorder %v1982, 0.0
        %vm2623 = vcmp.ge.f32.partialorder %v1983, 0.0
        %vm2624 = vcmp.ge.f32.partialorder %v1984, 0.0
        %vm2625 = vcmp.ge.f32.partialorder %v1985, 0.0
        %vm2626 = vcmp.ge.f32.partialorder %v1986, 0.0
        %vm2627 = vcmp.ge.f32.partialorder %v1987, 0.0
        %vm2628 = vcmp.ge.f32.partialorder %v1988, 0.0
        %vm2629 = vcmp.ge.f32.partialorder %v1989, 0.0
        %vm2630 = vcmp.ge.f32.partialorder %v1990, 0.0
        %vm2631 = vcmp.ge.f32.partialorder %v1991, 0.0
        %vm2632 = vcmp.ge.f32.partialorder %v1992, 0.0
        %vm2633 = vcmp.ge.f32.partialorder %v1993, 0.0
        %vm2634 = vcmp.ge.f32.partialorder %v1994, 0.0
        %vm2635 = vcmp.ge.f32.partialorder %v1995, 0.0
        %vm2636 = vcmp.ge.f32.partialorder %v1996, 0.0
        %vm2637 = vcmp.ge.f32.partialorder %v1997, 0.0
        %vm2638 = vcmp.ge.f32.partialorder %v1998, 0.0
        %vm2639 = vcmp.ge.f32.partialorder %v1999, 0.0
        %vm2640 = vcmp.ge.f32.partialorder %v2000, 0.0
        %vm2641 = vcmp.ge.f32.partialorder %v2001, 0.0
        %v2642 = vsub.f32 0.0, %v2578
        %v2643 = vsub.f32 0.0, %v2579
        %v2644 = vsub.f32 0.0, %v2580
        %v2645 = vsub.f32 0.0, %v2581
        %v2646 = vsub.f32 0.0, %v2582
        %v2647 = vsub.f32 0.0, %v2583
        %v2648 = vsub.f32 0.0, %v2584
        %v2649 = vsub.f32 0.0, %v2585
        %v2650 = vsub.f32 0.0, %v2586
        %v2651 = vsub.f32 0.0, %v2587
        %v2652 = vsub.f32 0.0, %v2588
        %v2653 = vsub.f32 0.0, %v2589
        %v2654 = vsub.f32 0.0, %v2590
        %v2655 = vsub.f32 0.0, %v2591
        %v2656 = vsub.f32 0.0, %v2592
        %v2657 = vsub.f32 0.0, %v2593
        %v2658 = vsub.f32 0.0, %v2594
        %v2659 = vsub.f32 0.0, %v2595
        %v2660 = vsub.f32 0.0, %v2596
        %v2661 = vsub.f32 0.0, %v2597
        %v2662 = vsub.f32 0.0, %v2598
        %v2663 = vsub.f32 0.0, %v2599
        %v2664 = vsub.f32 0.0, %v2600
        %v2665 = vsub.f32 0.0, %v2601
        %v2666 = vsub.f32 0.0, %v2602
        %v2667 = vsub.f32 0.0, %v2603
        %v2668 = vsub.f32 0.0, %v2604
        %v2669 = vsub.f32 0.0, %v2605
        %v2670 = vsub.f32 0.0, %v2606
        %v2671 = vsub.f32 0.0, %v2607
        %v2672 = vsub.f32 0.0, %v2608
        %v2673 = vsub.f32 0.0, %v2609
        %v2674 = vsel %vm2610, %v2578, %v2642
        %v2675 = vsel %vm2611, %v2579, %v2643
        %v2676 = vsel %vm2612, %v2580, %v2644
        %v2677 = vsel %vm2613, %v2581, %v2645
        %v2678 = vsel %vm2614, %v2582, %v2646
        %v2679 = vsel %vm2615, %v2583, %v2647
        %v2680 = vsel %vm2616, %v2584, %v2648
        %v2681 = vsel %vm2617, %v2585, %v2649
        %v2682 = vsel %vm2618, %v2586, %v2650
        %v2683 = vsel %vm2619, %v2587, %v2651
        %v2684 = vsel %vm2620, %v2588, %v2652
        %v2685 = vsel %vm2621, %v2589, %v2653
        %v2686 = vsel %vm2622, %v2590, %v2654
        %v2687 = vsel %vm2623, %v2591, %v2655
        %v2688 = vsel %vm2624, %v2592, %v2656
        %v2689 = vsel %vm2625, %v2593, %v2657
        %v2690 = vsel %vm2626, %v2594, %v2658
        %v2691 = vsel %vm2627, %v2595, %v2659
        %v2692 = vsel %vm2628, %v2596, %v2660
        %v2693 = vsel %vm2629, %v2597, %v2661
        %v2694 = vsel %vm2630, %v2598, %v2662
        %v2695 = vsel %vm2631, %v2599, %v2663
        %v2696 = vsel %vm2632, %v2600, %v2664
        %v2697 = vsel %vm2633, %v2601, %v2665
        %v2698 = vsel %vm2634, %v2602, %v2666
        %v2699 = vsel %vm2635, %v2603, %v2667
        %v2700 = vsel %vm2636, %v2604, %v2668
        %v2701 = vsel %vm2637, %v2605, %v2669
        %v2702 = vsel %vm2638, %v2606, %v2670
        %v2703 = vsel %vm2639, %v2607, %v2671
        %v2704 = vsel %vm2640, %v2608, %v2672
        %v2705 = vsel %vm2641, %v2609, %v2673
        %v2706 = vmul.f32 %v1938, 0.5
        %v2707 = vmul.f32 %v1939, 0.5
        %v2708 = vmul.f32 %v1940, 0.5
        %v2709 = vmul.f32 %v1941, 0.5
        %v2710 = vmul.f32 %v1942, 0.5
        %v2711 = vmul.f32 %v1943, 0.5
        %v2712 = vmul.f32 %v1944, 0.5
        %v2713 = vmul.f32 %v1945, 0.5
        %v2714 = vmul.f32 %v1946, 0.5
        %v2715 = vmul.f32 %v1947, 0.5
        %v2716 = vmul.f32 %v1948, 0.5
        %v2717 = vmul.f32 %v1949, 0.5
        %v2718 = vmul.f32 %v1950, 0.5
        %v2719 = vmul.f32 %v1951, 0.5
        %v2720 = vmul.f32 %v1952, 0.5
        %v2721 = vmul.f32 %v1953, 0.5
        %v2722 = vmul.f32 %v1954, 0.5
        %v2723 = vmul.f32 %v1955, 0.5
        %v2724 = vmul.f32 %v1956, 0.5
        %v2725 = vmul.f32 %v1957, 0.5
        %v2726 = vmul.f32 %v1958, 0.5
        %v2727 = vmul.f32 %v1959, 0.5
        %v2728 = vmul.f32 %v1960, 0.5
        %v2729 = vmul.f32 %v1961, 0.5
        %v2730 = vmul.f32 %v1962, 0.5
        %v2731 = vmul.f32 %v1963, 0.5
        %v2732 = vmul.f32 %v1964, 0.5
        %v2733 = vmul.f32 %v1965, 0.5
        %v2734 = vmul.f32 %v1966, 0.5
        %v2735 = vmul.f32 %v1967, 0.5
        %v2736 = vmul.f32 %v1968, 0.5
        %v2737 = vmul.f32 %v1969, 0.5
        %v2738 = vadd.f32 %v2674, 1.0
        %v2739 = vadd.f32 %v2675, 1.0
        %v2740 = vadd.f32 %v2676, 1.0
        %v2741 = vadd.f32 %v2677, 1.0
        %v2742 = vadd.f32 %v2678, 1.0
        %v2743 = vadd.f32 %v2679, 1.0
        %v2744 = vadd.f32 %v2680, 1.0
        %v2745 = vadd.f32 %v2681, 1.0
        %v2746 = vadd.f32 %v2682, 1.0
        %v2747 = vadd.f32 %v2683, 1.0
        %v2748 = vadd.f32 %v2684, 1.0
        %v2749 = vadd.f32 %v2685, 1.0
        %v2750 = vadd.f32 %v2686, 1.0
        %v2751 = vadd.f32 %v2687, 1.0
        %v2752 = vadd.f32 %v2688, 1.0
        %v2753 = vadd.f32 %v2689, 1.0
        %v2754 = vadd.f32 %v2690, 1.0
        %v2755 = vadd.f32 %v2691, 1.0
        %v2756 = vadd.f32 %v2692, 1.0
        %v2757 = vadd.f32 %v2693, 1.0
        %v2758 = vadd.f32 %v2694, 1.0
        %v2759 = vadd.f32 %v2695, 1.0
        %v2760 = vadd.f32 %v2696, 1.0
        %v2761 = vadd.f32 %v2697, 1.0
        %v2762 = vadd.f32 %v2698, 1.0
        %v2763 = vadd.f32 %v2699, 1.0
        %v2764 = vadd.f32 %v2700, 1.0
        %v2765 = vadd.f32 %v2701, 1.0
        %v2766 = vadd.f32 %v2702, 1.0
        %v2767 = vadd.f32 %v2703, 1.0
        %v2768 = vadd.f32 %v2704, 1.0
        %v2769 = vadd.f32 %v2705, 1.0
        %v2770 = vmul.f32 %v2706, %v2738
        %v2771 = vmul.f32 %v2707, %v2739
        %v2772 = vmul.f32 %v2708, %v2740
        %v2773 = vmul.f32 %v2709, %v2741
        %v2774 = vmul.f32 %v2710, %v2742
        %v2775 = vmul.f32 %v2711, %v2743
        %v2776 = vmul.f32 %v2712, %v2744
        %v2777 = vmul.f32 %v2713, %v2745
        %v2778 = vmul.f32 %v2714, %v2746
        %v2779 = vmul.f32 %v2715, %v2747
        %v2780 = vmul.f32 %v2716, %v2748
        %v2781 = vmul.f32 %v2717, %v2749
        %v2782 = vmul.f32 %v2718, %v2750
        %v2783 = vmul.f32 %v2719, %v2751
        %v2784 = vmul.f32 %v2720, %v2752
        %v2785 = vmul.f32 %v2721, %v2753
        %v2786 = vmul.f32 %v2722, %v2754
        %v2787 = vmul.f32 %v2723, %v2755
        %v2788 = vmul.f32 %v2724, %v2756
        %v2789 = vmul.f32 %v2725, %v2757
        %v2790 = vmul.f32 %v2726, %v2758
        %v2791 = vmul.f32 %v2727, %v2759
        %v2792 = vmul.f32 %v2728, %v2760
        %v2793 = vmul.f32 %v2729, %v2761
        %v2794 = vmul.f32 %v2730, %v2762
        %v2795 = vmul.f32 %v2731, %v2763
        %v2796 = vmul.f32 %v2732, %v2764
        %v2797 = vmul.f32 %v2733, %v2765
        %v2798 = vmul.f32 %v2734, %v2766
        %v2799 = vmul.f32 %v2735, %v2767
        %v2800 = vmul.f32 %v2736, %v2768
        %v2801 = vmul.f32 %v2737, %v2769
        %v2802 = vld [vmem:[#allocation2] sm:$0xff]
        %v2803 = vld [vmem:[#allocation2 + $0x8] sm:$0xff]
        %v2804 = vld [vmem:[#allocation2 + $0x10] sm:$0xff]
        %v2805 = vld [vmem:[#allocation2 + $0x18] sm:$0xff]
        %v2806 = vld [vmem:[#allocation2 + $0x20] sm:$0xff]
        %v2807 = vld [vmem:[#allocation2 + $0x28] sm:$0xff]
        %v2808 = vld [vmem:[#allocation2 + $0x30] sm:$0xff]
        %v2809 = vld [vmem:[#allocation2 + $0x38] sm:$0xff]
        %v2810 = vld [vmem:[#allocation2 + $0x40] sm:$0xff]
        %v2811 = vld [vmem:[#allocation2 + $0x48] sm:$0xff]
        %v2812 = vld [vmem:[#allocation2 + $0x50] sm:$0xff]
        %v2813 = vld [vmem:[#allocation2 + $0x58] sm:$0xff]
        %v2814 = vld [vmem:[#allocation2 + $0x60] sm:$0xff]
        %v2815 = vld [vmem:[#allocation2 + $0x68] sm:$0xff]
        %v2816 = vld [vmem:[#allocation2 + $0x70] sm:$0xff]
        %v2817 = vld [vmem:[#allocation2 + $0x78] sm:$0xff]
        %v2818 = vld [vmem:[#allocation2 + $0x80] sm:$0xff]
        %v2819 = vld [vmem:[#allocation2 + $0x88] sm:$0xff]
        %v2820 = vld [vmem:[#allocation2 + $0x90] sm:$0xff]
        %v2821 = vld [vmem:[#allocation2 + $0x98] sm:$0xff]
        %v2822 = vld [vmem:[#allocation2 + $0xa0] sm:$0xff]
        %v2823 = vld [vmem:[#allocation2 + $0xa8] sm:$0xff]
        %v2824 = vld [vmem:[#allocation2 + $0xb0] sm:$0xff]
        %v2825 = vld [vmem:[#allocation2 + $0xb8] sm:$0xff]
        %v2826 = vld [vmem:[#allocation2 + $0xc0] sm:$0xff]
        %v2827 = vld [vmem:[#allocation2 + $0xc8] sm:$0xff]
        %v2828 = vld [vmem:[#allocation2 + $0xd0] sm:$0xff]
        %v2829 = vld [vmem:[#allocation2 + $0xd8] sm:$0xff]
        %v2830 = vld [vmem:[#allocation2 + $0xe0] sm:$0xff]
        %v2831 = vld [vmem:[#allocation2 + $0xe8] sm:$0xff]
        %v2832 = vld [vmem:[#allocation2 + $0xf0] sm:$0xff]
        %v2833 = vld [vmem:[#allocation2 + $0xf8] sm:$0xff]
        %v2834 = vpack.c.bf16 %v2771, %v2770
        %v2835 = vpack.c.bf16 %v2773, %v2772
        %v2836 = vpack.c.bf16 %v2775, %v2774
        %v2837 = vpack.c.bf16 %v2777, %v2776
        %v2838 = vpack.c.bf16 %v2779, %v2778
        %v2839 = vpack.c.bf16 %v2781, %v2780
        %v2840 = vpack.c.bf16 %v2783, %v2782
        %v2841 = vpack.c.bf16 %v2785, %v2784
        %v2842 = vpack.c.bf16 %v2787, %v2786
        %v2843 = vpack.c.bf16 %v2789, %v2788
        %v2844 = vpack.c.bf16 %v2791, %v2790
        %v2845 = vpack.c.bf16 %v2793, %v2792
        %v2846 = vpack.c.bf16 %v2795, %v2794
        %v2847 = vpack.c.bf16 %v2797, %v2796
        %v2848 = vpack.c.bf16 %v2799, %v2798
        %v2849 = vpack.c.bf16 %v2801, %v2800
        %v2850 = vld [vmem:[%s549] sm:$0xf]
        %v2851 = vld [vmem:[%s549 + $0x4] sm:$0xf]
        %v2852 = vld [vmem:[%s549 + $0x8] sm:$0xf]
        %v2853 = vld [vmem:[%s549 + $0xc] sm:$0xf]
        %v2854 = vld [vmem:[%s549 + $0x10] sm:$0xf]
        %v2855 = vld [vmem:[%s549 + $0x14] sm:$0xf]
        %v2856 = vld [vmem:[%s549 + $0x18] sm:$0xf]
        %v2857 = vld [vmem:[%s549 + $0x1c] sm:$0xf]
        %v2858 = vld [vmem:[%s549 + $0x20] sm:$0xf]
        %v2859 = vld [vmem:[%s549 + $0x24] sm:$0xf]
        %v2860 = vld [vmem:[%s549 + $0x28] sm:$0xf]
        %v2861 = vld [vmem:[%s549 + $0x2c] sm:$0xf]
        %v2862 = vld [vmem:[%s549 + $0x30] sm:$0xf]
        %v2863 = vld [vmem:[%s549 + $0x34] sm:$0xf]
        %v2864 = vld [vmem:[%s549 + $0x38] sm:$0xf]
        %v2865 = vld [vmem:[%s549 + $0x3c] sm:$0xf]
        %v2882 = vunpack.c.l.b16 %v2850
        %v2883 = vunpack.c.l.b16 %v2851
        %v2884 = vunpack.c.l.b16 %v2852
        %v2885 = vunpack.c.l.b16 %v2853
        %v2886 = vunpack.c.l.b16 %v2854
        %v2887 = vunpack.c.l.b16 %v2855
        %v2888 = vunpack.c.l.b16 %v2856
        %v2889 = vunpack.c.l.b16 %v2857
        %v2890 = vunpack.c.l.b16 %v2858
        %v2891 = vunpack.c.l.b16 %v2859
        %v2892 = vunpack.c.l.b16 %v2860
        %v2893 = vunpack.c.l.b16 %v2861
        %v2894 = vunpack.c.l.b16 %v2862
        %v2895 = vunpack.c.l.b16 %v2863
        %v2896 = vunpack.c.l.b16 %v2864
        %v2897 = vunpack.c.l.b16 %v2865
        %v2898 = vpack.c.b16 %v2883, %v2882
        %v2899 = vpack.c.b16 %v2885, %v2884
        %v2900 = vpack.c.b16 %v2887, %v2886
        %v2901 = vpack.c.b16 %v2889, %v2888
        %v2902 = vpack.c.b16 %v2891, %v2890
        %v2903 = vpack.c.b16 %v2893, %v2892
        %v2904 = vpack.c.b16 %v2895, %v2894
        %v2905 = vpack.c.b16 %v2897, %v2896
        %2914 = vmatprep.subr.bf16.mxu0 0
        %2915 = vmatpush1.bf16.msra.mxu0 %v2905
        %2916 = vmatprep.subr.bf16.mxu0 0
        %2917 = vmatpush1.bf16.msra.mxu0 %v2904
        %2918 = vmatprep.subr.bf16.mxu0 0
        %2919 = vmatpush1.bf16.msra.mxu0 %v2903
        %2920 = vmatprep.subr.bf16.mxu0 0
        %2921 = vmatpush1.bf16.msra.mxu0 %v2902
        %2922 = vmatprep.subr.bf16.mxu0 0
        %2923 = vmatpush1.bf16.msra.mxu0 %v2901
        %2924 = vmatprep.subr.bf16.mxu0 0
        %2925 = vmatpush1.bf16.msra.mxu0 %v2900
        %2926 = vmatprep.subr.bf16.mxu0 0
        %2927 = vmatpush1.bf16.msra.mxu0 %v2899
        %2928 = vmatprep.subr.bf16.mxu0 0
        %2929 = vmatpush1.bf16.msra.mxu0 %v2898
        %2930 = vmatprep.subr.bf16.mxu0 0
        %2931 = vmatpush2.bf16.msra.mxu0 0
        %2932 = vmatprep.subr.bf16.mxu0 0
        %2933 = vmatpush2.bf16.msra.mxu0 0
        %2934 = vmatprep.subr.bf16.mxu0 0
        %2935 = vmatpush2.bf16.msra.mxu0 0
        %2936 = vmatprep.subr.bf16.mxu0 0
        %2937 = vmatpush2.bf16.msra.mxu0 0
        %2938 = vmatprep.subr.bf16.mxu0 0
        %2939 = vmatpush2.bf16.msra.mxu0 0
        %2940 = vmatprep.subr.bf16.mxu0 0
        %2941 = vmatpush2.bf16.msra.mxu0 0
        %2942 = vmatprep.subr.bf16.mxu0 0
        %2943 = vmatpush2.bf16.msra.mxu0 0
        %2944 = vmatprep.subr.bf16.mxu0 0
        %2945 = vmatpush2.bf16.msra.mxu0 0
        %2946 = vmatprep.mubr.bf16.mxu0 0
        %2947 = vmatmul.mubr.bf16.gmra.mxu0 %v2834
        %v2948 = vpop.f32.mrf.mxu0
        %v2949 = vadd.f32 0.0, %v2948
        %v2950 = vpop.f32.mrf.mxu0
        %v2951 = vpop.f32.mrf.mxu0
        %v2952 = vadd.f32 0.0, %v2951
        %v2953 = vpop.f32.mrf.mxu0
        %2954 = vmatprep.mubr.bf16.mxu0 0
        %2955 = vmatmul.mubr.bf16.gmra.mxu0 %v2835
        %v2956 = vpop.f32.mrf.mxu0
        %v2957 = vadd.f32 0.0, %v2956
        %v2958 = vpop.f32.mrf.mxu0
        %v2959 = vpop.f32.mrf.mxu0
        %v2960 = vadd.f32 0.0, %v2959
        %v2961 = vpop.f32.mrf.mxu0
        %2962 = vmatprep.mubr.bf16.mxu0 0
        %2963 = vmatmul.mubr.bf16.gmra.mxu0 %v2836
        %v2964 = vpop.f32.mrf.mxu0
        %v2965 = vadd.f32 0.0, %v2964
        %v2966 = vpop.f32.mrf.mxu0
        %v2967 = vpop.f32.mrf.mxu0
        %v2968 = vadd.f32 0.0, %v2967
        %v2969 = vpop.f32.mrf.mxu0
        %2970 = vmatprep.mubr.bf16.mxu0 0
        %2971 = vmatmul.mubr.bf16.gmra.mxu0 %v2837
        %v2972 = vpop.f32.mrf.mxu0
        %v2973 = vadd.f32 0.0, %v2972
        %v2974 = vpop.f32.mrf.mxu0
        %v2975 = vpop.f32.mrf.mxu0
        %v2976 = vadd.f32 0.0, %v2975
        %v2977 = vpop.f32.mrf.mxu0
        %2978 = vmatprep.mubr.bf16.mxu0 0
        %2979 = vmatmul.mubr.bf16.gmra.mxu0 %v2838
        %v2980 = vpop.f32.mrf.mxu0
        %v2981 = vadd.f32 0.0, %v2980
        %v2982 = vpop.f32.mrf.mxu0
        %v2983 = vpop.f32.mrf.mxu0
        %v2984 = vadd.f32 0.0, %v2983
        %v2985 = vpop.f32.mrf.mxu0
        %2986 = vmatprep.mubr.bf16.mxu0 0
        %2987 = vmatmul.mubr.bf16.gmra.mxu0 %v2839
        %v2988 = vpop.f32.mrf.mxu0
        %v2989 = vadd.f32 0.0, %v2988
        %v2990 = vpop.f32.mrf.mxu0
        %v2991 = vpop.f32.mrf.mxu0
        %v2992 = vadd.f32 0.0, %v2991
        %v2993 = vpop.f32.mrf.mxu0
        %2994 = vmatprep.mubr.bf16.mxu0 0
        %2995 = vmatmul.mubr.bf16.gmra.mxu0 %v2840
        %v2996 = vpop.f32.mrf.mxu0
        %v2997 = vadd.f32 0.0, %v2996
        %v2998 = vpop.f32.mrf.mxu0
        %v2999 = vpop.f32.mrf.mxu0
        %v3000 = vadd.f32 0.0, %v2999
        %v3001 = vpop.f32.mrf.mxu0
        %3002 = vmatprep.mubr.bf16.mxu0 0
        %3003 = vmatmul.mubr.bf16.gmra.mxu0 %v2841
        %v3004 = vpop.f32.mrf.mxu0
        %v3005 = vadd.f32 0.0, %v3004
        %v3006 = vpop.f32.mrf.mxu0
        %v3007 = vpop.f32.mrf.mxu0
        %v3008 = vadd.f32 0.0, %v3007
        %v3009 = vpop.f32.mrf.mxu0
        %3010 = vmatprep.mubr.bf16.mxu0 0
        %3011 = vmatmul.mubr.bf16.gmra.mxu0 %v2842
        %v3012 = vpop.f32.mrf.mxu0
        %v3013 = vadd.f32 0.0, %v3012
        %v3014 = vpop.f32.mrf.mxu0
        %v3015 = vpop.f32.mrf.mxu0
        %v3016 = vadd.f32 0.0, %v3015
        %v3017 = vpop.f32.mrf.mxu0
        %3018 = vmatprep.mubr.bf16.mxu0 0
        %3019 = vmatmul.mubr.bf16.gmra.mxu0 %v2843
        %v3020 = vpop.f32.mrf.mxu0
        %v3021 = vadd.f32 0.0, %v3020
        %v3022 = vpop.f32.mrf.mxu0
        %v3023 = vpop.f32.mrf.mxu0
        %v3024 = vadd.f32 0.0, %v3023
        %v3025 = vpop.f32.mrf.mxu0
        %3026 = vmatprep.mubr.bf16.mxu0 0
        %3027 = vmatmul.mubr.bf16.gmra.mxu0 %v2844
        %v3028 = vpop.f32.mrf.mxu0
        %v3029 = vadd.f32 0.0, %v3028
        %v3030 = vpop.f32.mrf.mxu0
        %v3031 = vpop.f32.mrf.mxu0
        %v3032 = vadd.f32 0.0, %v3031
        %v3033 = vpop.f32.mrf.mxu0
        %3034 = vmatprep.mubr.bf16.mxu0 0
        %3035 = vmatmul.mubr.bf16.gmra.mxu0 %v2845
        %v3036 = vpop.f32.mrf.mxu0
        %v3037 = vadd.f32 0.0, %v3036
        %v3038 = vpop.f32.mrf.mxu0
        %v3039 = vpop.f32.mrf.mxu0
        %v3040 = vadd.f32 0.0, %v3039
        %v3041 = vpop.f32.mrf.mxu0
        %3042 = vmatprep.mubr.bf16.mxu0 0
        %3043 = vmatmul.mubr.bf16.gmra.mxu0 %v2846
        %v3044 = vpop.f32.mrf.mxu0
        %v3045 = vadd.f32 0.0, %v3044
        %v3046 = vpop.f32.mrf.mxu0
        %v3047 = vpop.f32.mrf.mxu0
        %v3048 = vadd.f32 0.0, %v3047
        %v3049 = vpop.f32.mrf.mxu0
        %3050 = vmatprep.mubr.bf16.mxu0 0
        %3051 = vmatmul.mubr.bf16.gmra.mxu0 %v2847
        %v3052 = vpop.f32.mrf.mxu0
        %v3053 = vadd.f32 0.0, %v3052
        %v3054 = vpop.f32.mrf.mxu0
        %v3055 = vpop.f32.mrf.mxu0
        %v3056 = vadd.f32 0.0, %v3055
        %v3057 = vpop.f32.mrf.mxu0
        %3058 = vmatprep.mubr.bf16.mxu0 0
        %3059 = vmatmul.mubr.bf16.gmra.mxu0 %v2848
        %v3060 = vpop.f32.mrf.mxu0
        %v3061 = vadd.f32 0.0, %v3060
        %v3062 = vpop.f32.mrf.mxu0
        %v3063 = vpop.f32.mrf.mxu0
        %v3064 = vadd.f32 0.0, %v3063
        %v3065 = vpop.f32.mrf.mxu0
        %3066 = vmatprep.mubr.bf16.mxu0 0
        %3067 = vmatmul.mubr.bf16.gmra.mxu0 %v2849
        %v3068 = vpop.f32.mrf.mxu0
        %v3069 = vadd.f32 0.0, %v3068
        %v3070 = vpop.f32.mrf.mxu0
        %v3071 = vpop.f32.mrf.mxu0
        %v3072 = vadd.f32 0.0, %v3071
        %v3073 = vpop.f32.mrf.mxu0
        %3074 = vdwg.mxu0
        %v3075 = vadd.f32 %v2802, %v2949
        %v3076 = vadd.f32 %v2803, %v2952
        %v3077 = vadd.f32 %v2804, %v2957
        %v3078 = vadd.f32 %v2805, %v2960
        %v3079 = vadd.f32 %v2806, %v2965
        %v3080 = vadd.f32 %v2807, %v2968
        %v3081 = vadd.f32 %v2808, %v2973
        %v3082 = vadd.f32 %v2809, %v2976
        %v3083 = vadd.f32 %v2810, %v2981
        %v3084 = vadd.f32 %v2811, %v2984
        %v3085 = vadd.f32 %v2812, %v2989
        %v3086 = vadd.f32 %v2813, %v2992
        %v3087 = vadd.f32 %v2814, %v2997
        %v3088 = vadd.f32 %v2815, %v3000
        %v3089 = vadd.f32 %v2816, %v3005
        %v3090 = vadd.f32 %v2817, %v3008
        %v3091 = vadd.f32 %v2818, %v3013
        %v3092 = vadd.f32 %v2819, %v3016
        %v3093 = vadd.f32 %v2820, %v3021
        %v3094 = vadd.f32 %v2821, %v3024
        %v3095 = vadd.f32 %v2822, %v3029
        %v3096 = vadd.f32 %v2823, %v3032
        %v3097 = vadd.f32 %v2824, %v3037
        %v3098 = vadd.f32 %v2825, %v3040
        %v3099 = vadd.f32 %v2826, %v3045
        %v3100 = vadd.f32 %v2827, %v3048
        %v3101 = vadd.f32 %v2828, %v3053
        %v3102 = vadd.f32 %v2829, %v3056
        %v3103 = vadd.f32 %v2830, %v3061
        %v3104 = vadd.f32 %v2831, %v3064
        %v3105 = vadd.f32 %v2832, %v3069
        %v3106 = vadd.f32 %v2833, %v3072
        %3107 = vst [vmem:[#allocation2] sm:$0xff] %v3075
        %3108 = vst [vmem:[#allocation2 + $0x8] sm:$0xff] %v3076
        %3109 = vst [vmem:[#allocation2 + $0x10] sm:$0xff] %v3077
        %3110 = vst [vmem:[#allocation2 + $0x18] sm:$0xff] %v3078
        %3111 = vst [vmem:[#allocation2 + $0x20] sm:$0xff] %v3079
        %3112 = vst [vmem:[#allocation2 + $0x28] sm:$0xff] %v3080
        %3113 = vst [vmem:[#allocation2 + $0x30] sm:$0xff] %v3081
        %3114 = vst [vmem:[#allocation2 + $0x38] sm:$0xff] %v3082
        %3115 = vst [vmem:[#allocation2 + $0x40] sm:$0xff] %v3083
        %3116 = vst [vmem:[#allocation2 + $0x48] sm:$0xff] %v3084
        %3117 = vst [vmem:[#allocation2 + $0x50] sm:$0xff] %v3085
        %3118 = vst [vmem:[#allocation2 + $0x58] sm:$0xff] %v3086
        %3119 = vst [vmem:[#allocation2 + $0x60] sm:$0xff] %v3087
        %3120 = vst [vmem:[#allocation2 + $0x68] sm:$0xff] %v3088
        %3121 = vst [vmem:[#allocation2 + $0x70] sm:$0xff] %v3089
        %3122 = vst [vmem:[#allocation2 + $0x78] sm:$0xff] %v3090
        %3123 = vst [vmem:[#allocation2 + $0x80] sm:$0xff] %v3091
        %3124 = vst [vmem:[#allocation2 + $0x88] sm:$0xff] %v3092
        %3125 = vst [vmem:[#allocation2 + $0x90] sm:$0xff] %v3093
        %3126 = vst [vmem:[#allocation2 + $0x98] sm:$0xff] %v3094
        %3127 = vst [vmem:[#allocation2 + $0xa0] sm:$0xff] %v3095
        %3128 = vst [vmem:[#allocation2 + $0xa8] sm:$0xff] %v3096
        %3129 = vst [vmem:[#allocation2 + $0xb0] sm:$0xff] %v3097
        %3130 = vst [vmem:[#allocation2 + $0xb8] sm:$0xff] %v3098
        %3131 = vst [vmem:[#allocation2 + $0xc0] sm:$0xff] %v3099
        %3132 = vst [vmem:[#allocation2 + $0xc8] sm:$0xff] %v3100
        %3133 = vst [vmem:[#allocation2 + $0xd0] sm:$0xff] %v3101
        %3134 = vst [vmem:[#allocation2 + $0xd8] sm:$0xff] %v3102
        %3135 = vst [vmem:[#allocation2 + $0xe0] sm:$0xff] %v3103
        %3136 = vst [vmem:[#allocation2 + $0xe8] sm:$0xff] %v3104
        %3137 = vst [vmem:[#allocation2 + $0xf0] sm:$0xff] %v3105
        %3138 = vst [vmem:[#allocation2 + $0xf8] sm:$0xff] %v3106
        %p3139 = scmp.eq.s32.totalorder %s23, 1
        // Predicated region
        $region132: #{conv_ffn_forward.5} parent=118 // pred_check
          %p3140 = pneg %p3139
        $region133: #{conv_ffn_forward.5} parent=118 // pred_check_branch
          %3142 = sbr.rel (%p3140) target = $region135
        $region134: #{conv_ffn_forward.5} parent=118 // pred_region
          %v3143 = vld [vmem:[#allocation2] sm:$0xff]
          %v3144 = vld [vmem:[#allocation2 + $0x8] sm:$0xff]
          %v3145 = vld [vmem:[#allocation2 + $0x10] sm:$0xff]
          %v3146 = vld [vmem:[#allocation2 + $0x18] sm:$0xff]
          %v3147 = vld [vmem:[#allocation2 + $0x20] sm:$0xff]
          %v3148 = vld [vmem:[#allocation2 + $0x28] sm:$0xff]
          %v3149 = vld [vmem:[#allocation2 + $0x30] sm:$0xff]
          %v3150 = vld [vmem:[#allocation2 + $0x38] sm:$0xff]
          %v3151 = vld [vmem:[#allocation2 + $0x40] sm:$0xff]
          %v3152 = vld [vmem:[#allocation2 + $0x48] sm:$0xff]
          %v3153 = vld [vmem:[#allocation2 + $0x50] sm:$0xff]
          %v3154 = vld [vmem:[#allocation2 + $0x58] sm:$0xff]
          %v3155 = vld [vmem:[#allocation2 + $0x60] sm:$0xff]
          %v3156 = vld [vmem:[#allocation2 + $0x68] sm:$0xff]
          %v3157 = vld [vmem:[#allocation2 + $0x70] sm:$0xff]
          %v3158 = vld [vmem:[#allocation2 + $0x78] sm:$0xff]
          %v3159 = vld [vmem:[#allocation2 + $0x80] sm:$0xff]
          %v3160 = vld [vmem:[#allocation2 + $0x88] sm:$0xff]
          %v3161 = vld [vmem:[#allocation2 + $0x90] sm:$0xff]
          %v3162 = vld [vmem:[#allocation2 + $0x98] sm:$0xff]
          %v3163 = vld [vmem:[#allocation2 + $0xa0] sm:$0xff]
          %v3164 = vld [vmem:[#allocation2 + $0xa8] sm:$0xff]
          %v3165 = vld [vmem:[#allocation2 + $0xb0] sm:$0xff]
          %v3166 = vld [vmem:[#allocation2 + $0xb8] sm:$0xff]
          %v3167 = vld [vmem:[#allocation2 + $0xc0] sm:$0xff]
          %v3168 = vld [vmem:[#allocation2 + $0xc8] sm:$0xff]
          %v3169 = vld [vmem:[#allocation2 + $0xd0] sm:$0xff]
          %v3170 = vld [vmem:[#allocation2 + $0xd8] sm:$0xff]
          %v3171 = vld [vmem:[#allocation2 + $0xe0] sm:$0xff]
          %v3172 = vld [vmem:[#allocation2 + $0xe8] sm:$0xff]
          %v3173 = vld [vmem:[#allocation2 + $0xf0] sm:$0xff]
          %v3174 = vld [vmem:[#allocation2 + $0xf8] sm:$0xff]
          %v3175 = vld [vmem:[%s6] sm:$0x1]
          %v3177 = vlaneseq
          %v3178 = vshrl.u32 %v3177, 7
          %v3179 = vsub.s32 0, %v3178
          %v3180 = vrot.slane %v3175, %v3179
          %v3182 = vadd.f32 %v3143, %v3180
          %v3183 = vadd.f32 %v3144, %v3180
          %v3184 = vadd.f32 %v3145, %v3180
          %v3185 = vadd.f32 %v3146, %v3180
          %v3186 = vadd.f32 %v3147, %v3180
          %v3187 = vadd.f32 %v3148, %v3180
          %v3188 = vadd.f32 %v3149, %v3180
          %v3189 = vadd.f32 %v3150, %v3180
          %v3190 = vadd.f32 %v3151, %v3180
          %v3191 = vadd.f32 %v3152, %v3180
          %v3192 = vadd.f32 %v3153, %v3180
          %v3193 = vadd.f32 %v3154, %v3180
          %v3194 = vadd.f32 %v3155, %v3180
          %v3195 = vadd.f32 %v3156, %v3180
          %v3196 = vadd.f32 %v3157, %v3180
          %v3197 = vadd.f32 %v3158, %v3180
          %v3198 = vadd.f32 %v3159, %v3180
          %v3199 = vadd.f32 %v3160, %v3180
          %v3200 = vadd.f32 %v3161, %v3180
          %v3201 = vadd.f32 %v3162, %v3180
          %v3202 = vadd.f32 %v3163, %v3180
          %v3203 = vadd.f32 %v3164, %v3180
          %v3204 = vadd.f32 %v3165, %v3180
          %v3205 = vadd.f32 %v3166, %v3180
          %v3206 = vadd.f32 %v3167, %v3180
          %v3207 = vadd.f32 %v3168, %v3180
          %v3208 = vadd.f32 %v3169, %v3180
          %v3209 = vadd.f32 %v3170, %v3180
          %v3210 = vadd.f32 %v3171, %v3180
          %v3211 = vadd.f32 %v3172, %v3180
          %v3212 = vadd.f32 %v3173, %v3180
          %v3213 = vadd.f32 %v3174, %v3180
          %3214 = vst [vmem:[%s541] sm:$0xff] %v3182
          %3215 = vst [vmem:[%s541 + $0x8] sm:$0xff] %v3183
          %3216 = vst [vmem:[%s541 + $0x10] sm:$0xff] %v3184
          %3217 = vst [vmem:[%s541 + $0x18] sm:$0xff] %v3185
          %3218 = vst [vmem:[%s541 + $0x20] sm:$0xff] %v3186
          %3219 = vst [vmem:[%s541 + $0x28] sm:$0xff] %v3187
          %3220 = vst [vmem:[%s541 + $0x30] sm:$0xff] %v3188
          %3221 = vst [vmem:[%s541 + $0x38] sm:$0xff] %v3189
          %3222 = vst [vmem:[%s541 + $0x40] sm:$0xff] %v3190
          %3223 = vst [vmem:[%s541 + $0x48] sm:$0xff] %v3191
          %3224 = vst [vmem:[%s541 + $0x50] sm:$0xff] %v3192
          %3225 = vst [vmem:[%s541 + $0x58] sm:$0xff] %v3193
          %3226 = vst [vmem:[%s541 + $0x60] sm:$0xff] %v3194
          %3227 = vst [vmem:[%s541 + $0x68] sm:$0xff] %v3195
          %3228 = vst [vmem:[%s541 + $0x70] sm:$0xff] %v3196
          %3229 = vst [vmem:[%s541 + $0x78] sm:$0xff] %v3197
          %3230 = vst [vmem:[%s541 + $0x80] sm:$0xff] %v3198
          %3231 = vst [vmem:[%s541 + $0x88] sm:$0xff] %v3199
          %3232 = vst [vmem:[%s541 + $0x90] sm:$0xff] %v3200
          %3233 = vst [vmem:[%s541 + $0x98] sm:$0xff] %v3201
          %3234 = vst [vmem:[%s541 + $0xa0] sm:$0xff] %v3202
          %3235 = vst [vmem:[%s541 + $0xa8] sm:$0xff] %v3203
          %3236 = vst [vmem:[%s541 + $0xb0] sm:$0xff] %v3204
          %3237 = vst [vmem:[%s541 + $0xb8] sm:$0xff] %v3205
          %3238 = vst [vmem:[%s541 + $0xc0] sm:$0xff] %v3206
          %3239 = vst [vmem:[%s541 + $0xc8] sm:$0xff] %v3207
          %3240 = vst [vmem:[%s541 + $0xd0] sm:$0xff] %v3208
          %3241 = vst [vmem:[%s541 + $0xd8] sm:$0xff] %v3209
          %3242 = vst [vmem:[%s541 + $0xe0] sm:$0xff] %v3210
          %3243 = vst [vmem:[%s541 + $0xe8] sm:$0xff] %v3211
          %3244 = vst [vmem:[%s541 + $0xf0] sm:$0xff] %v3212
          %3245 = vst [vmem:[%s541 + $0xf8] sm:$0xff] %v3213
        $region135: #{conv_ffn_forward.5} parent=118 // pred_fallthru
          _
        %s3246 = sand.u32 %s207, 1
        %s3247 = sand.u32 %s207, 1
        %s3248 = smul.addr %s3247, 256
        %s3249 = scalar_lea.vmem [#allocation5], %s3248
        // Predicated region
        $region136: #{conv_ffn_forward.5} parent=118 // pred_check
          %p3250 = pneg %p217
        $region137: #{conv_ffn_forward.5} parent=118 // pred_check_branch
          %3252 = sbr.rel (%p3250) target = $region139
        $region138: #{conv_ffn_forward.5} parent=118 // pred_region
          %s3253 = smul.addr %s22, 42
          %s3254 = smul.addr %s3253, 8
          %s3255 = scalar_lea.vmem %s7, %s3254
          // Predicated region
          $region140: #{conv_ffn_forward.5} parent=138 // pred_check
            _
          $region141: #{conv_ffn_forward.5} parent=138 // pred_check_branch
            %3257 = sbr.rel (0) target = $region143
          $region142: #{conv_ffn_forward.5} parent=138 // pred_region
            // Predicated region
            $region144: #{conv_ffn_forward.5} parent=142 // pred_check
              _
            $region145: #{conv_ffn_forward.5} parent=142 // pred_check_branch
              %3259 = sbr.rel (0) target = $region147
            $region146: #{conv_ffn_forward.5} parent=142 // pred_region
              // Predicated region
              $region159: #{conv_ffn_forward.5} parent=146 // pred_check
                _
              $region160: #{conv_ffn_forward.5} parent=146 // pred_check_branch
                %3337 = sbr.rel (0) target = $region162
              $region161: #{conv_ffn_forward.5} parent=146 // pred_region
                loop: start=0, step=1, limit=1
                $region163: #{conv_ffn_forward.5} parent=161 // loop_pre_header
                  _
                $region164: #{conv_ffn_forward.5} parent=161 // loop_header
                  %s3339 = sphi 0, %s3343
                  %p3340 = scmp.ge.s32.totalorder %s3339, 1
                  %s3344 = sphi %s3249, %s3249
                  %s3345 = sphi %s3255, %s3255
                $region165: #{conv_ffn_forward.5} parent=161 // loop_header_branch
                  %3342 = sbr.rel (%p3340) target = $region169
                $region166: #{conv_ffn_forward.5} parent=161 // loop_body
                  %v3346 = vld [vmem:[%s3344] sm:$0xff]
                  %3347 = vst [vmem:[%s3345] sm:$0xff] %v3346
                  %v3348 = vld [vmem:[%s3344 + $0x8] sm:$0xff]
                  %3349 = vst [vmem:[%s3345 + $0x8] sm:$0xff] %v3348
                  %v3350 = vld [vmem:[%s3344 + $0x10] sm:$0xff]
                  %3351 = vst [vmem:[%s3345 + $0x10] sm:$0xff] %v3350
                  %v3352 = vld [vmem:[%s3344 + $0x18] sm:$0xff]
                  %3353 = vst [vmem:[%s3345 + $0x18] sm:$0xff] %v3352
                  %v3354 = vld [vmem:[%s3344 + $0x20] sm:$0xff]
                  %3355 = vst [vmem:[%s3345 + $0x20] sm:$0xff] %v3354
                  %v3356 = vld [vmem:[%s3344 + $0x28] sm:$0xff]
                  %3357 = vst [vmem:[%s3345 + $0x28] sm:$0xff] %v3356
                  %v3358 = vld [vmem:[%s3344 + $0x30] sm:$0xff]
                  %3359 = vst [vmem:[%s3345 + $0x30] sm:$0xff] %v3358
                  %v3360 = vld [vmem:[%s3344 + $0x38] sm:$0xff]
                  %3361 = vst [vmem:[%s3345 + $0x38] sm:$0xff] %v3360
                  %v3362 = vld [vmem:[%s3344 + $0x40] sm:$0xff]
                  %3363 = vst [vmem:[%s3345 + $0x40] sm:$0xff] %v3362
                  %v3364 = vld [vmem:[%s3344 + $0x48] sm:$0xff]
                  %3365 = vst [vmem:[%s3345 + $0x48] sm:$0xff] %v3364
                  %v3366 = vld [vmem:[%s3344 + $0x50] sm:$0xff]
                  %3367 = vst [vmem:[%s3345 + $0x50] sm:$0xff] %v3366
                  %v3368 = vld [vmem:[%s3344 + $0x58] sm:$0xff]
                  %3369 = vst [vmem:[%s3345 + $0x58] sm:$0xff] %v3368
                  %v3370 = vld [vmem:[%s3344 + $0x60] sm:$0xff]
                  %3371 = vst [vmem:[%s3345 + $0x60] sm:$0xff] %v3370
                  %v3372 = vld [vmem:[%s3344 + $0x68] sm:$0xff]
                  %3373 = vst [vmem:[%s3345 + $0x68] sm:$0xff] %v3372
                  %v3374 = vld [vmem:[%s3344 + $0x70] sm:$0xff]
                  %3375 = vst [vmem:[%s3345 + $0x70] sm:$0xff] %v3374
                  %v3376 = vld [vmem:[%s3344 + $0x78] sm:$0xff]
                  %3377 = vst [vmem:[%s3345 + $0x78] sm:$0xff] %v3376
                  %v3378 = vld [vmem:[%s3344 + $0x80] sm:$0xff]
                  %3379 = vst [vmem:[%s3345 + $0x80] sm:$0xff] %v3378
                  %v3380 = vld [vmem:[%s3344 + $0x88] sm:$0xff]
                  %3381 = vst [vmem:[%s3345 + $0x88] sm:$0xff] %v3380
                  %v3382 = vld [vmem:[%s3344 + $0x90] sm:$0xff]
                  %3383 = vst [vmem:[%s3345 + $0x90] sm:$0xff] %v3382
                  %v3384 = vld [vmem:[%s3344 + $0x98] sm:$0xff]
                  %3385 = vst [vmem:[%s3345 + $0x98] sm:$0xff] %v3384
                  %v3386 = vld [vmem:[%s3344 + $0xa0] sm:$0xff]
                  %3387 = vst [vmem:[%s3345 + $0xa0] sm:$0xff] %v3386
                  %v3388 = vld [vmem:[%s3344 + $0xa8] sm:$0xff]
                  %3389 = vst [vmem:[%s3345 + $0xa8] sm:$0xff] %v3388
                  %v3390 = vld [vmem:[%s3344 + $0xb0] sm:$0xff]
                  %3391 = vst [vmem:[%s3345 + $0xb0] sm:$0xff] %v3390
                  %v3392 = vld [vmem:[%s3344 + $0xb8] sm:$0xff]
                  %3393 = vst [vmem:[%s3345 + $0xb8] sm:$0xff] %v3392
                  %v3394 = vld [vmem:[%s3344 + $0xc0] sm:$0xff]
                  %3395 = vst [vmem:[%s3345 + $0xc0] sm:$0xff] %v3394
                  %v3396 = vld [vmem:[%s3344 + $0xc8] sm:$0xff]
                  %3397 = vst [vmem:[%s3345 + $0xc8] sm:$0xff] %v3396
                  %v3398 = vld [vmem:[%s3344 + $0xd0] sm:$0xff]
                  %3399 = vst [vmem:[%s3345 + $0xd0] sm:$0xff] %v3398
                  %v3400 = vld [vmem:[%s3344 + $0xd8] sm:$0xff]
                  %3401 = vst [vmem:[%s3345 + $0xd8] sm:$0xff] %v3400
                  %v3402 = vld [vmem:[%s3344 + $0xe0] sm:$0xff]
                  %3403 = vst [vmem:[%s3345 + $0xe0] sm:$0xff] %v3402
                  %v3404 = vld [vmem:[%s3344 + $0xe8] sm:$0xff]
                  %3405 = vst [vmem:[%s3345 + $0xe8] sm:$0xff] %v3404
                  %v3406 = vld [vmem:[%s3344 + $0xf0] sm:$0xff]
                  %3407 = vst [vmem:[%s3345 + $0xf0] sm:$0xff] %v3406
                  %v3408 = vld [vmem:[%s3344 + $0xf8] sm:$0xff]
                  %3409 = vst [vmem:[%s3345 + $0xf8] sm:$0xff] %v3408
                $region167: #{conv_ffn_forward.5} parent=161 // loop_footer
                  %s3343 = sadd.s32 1, %s3339
                $region168: #{conv_ffn_forward.5} parent=161 // loop_footer_branch
                  %3338 = sbr.rel target = $region164
                $region169: #{conv_ffn_forward.5} parent=161 // loop_exit
                  _
              $region162: #{conv_ffn_forward.5} parent=146 // pred_fallthru
                _
              // Predicated region
              $region170: #{conv_ffn_forward.5} parent=146 // pred_check
                _
              $region171: #{conv_ffn_forward.5} parent=146 // pred_check_branch
                %3411 = sbr.rel target = $region173
              $region172: #{conv_ffn_forward.5} parent=146 // pred_region
                _
              $region173: #{conv_ffn_forward.5} parent=146 // pred_fallthru
                _
            $region147: #{conv_ffn_forward.5} parent=142 // pred_fallthru
              _
            // Predicated region
            $region148: #{conv_ffn_forward.5} parent=142 // pred_check
              _
            $region149: #{conv_ffn_forward.5} parent=142 // pred_check_branch
              %3261 = sbr.rel target = $region151
            $region150: #{conv_ffn_forward.5} parent=142 // pred_region
              %s3263 = ssub.s32 256, 1
              loop: start=0, step=1, limit=1
              $region152: #{conv_ffn_forward.5} parent=150 // loop_pre_header
                _
              $region153: #{conv_ffn_forward.5} parent=150 // loop_header
                %s3265 = sphi 0, %s3269
                %p3266 = scmp.ge.s32.totalorder %s3265, 1
                %s3270 = sphi %s3249, %s3249
                %s3271 = sphi %s3255, %s3255
              $region154: #{conv_ffn_forward.5} parent=150 // loop_header_branch
                %3268 = sbr.rel (%p3266) target = $region158
              $region155: #{conv_ffn_forward.5} parent=150 // loop_body
                %v3272 = vld [vmem:[%s3270] sm:%s3263]
                %3273 = vst [vmem:[%s3271] sm:%s3263] %v3272
                %v3274 = vld [vmem:[%s3270 + $0x8] sm:%s3263]
                %3275 = vst [vmem:[%s3271 + $0x8] sm:%s3263] %v3274
                %v3276 = vld [vmem:[%s3270 + $0x10] sm:%s3263]
                %3277 = vst [vmem:[%s3271 + $0x10] sm:%s3263] %v3276
                %v3278 = vld [vmem:[%s3270 + $0x18] sm:%s3263]
                %3279 = vst [vmem:[%s3271 + $0x18] sm:%s3263] %v3278
                %v3280 = vld [vmem:[%s3270 + $0x20] sm:%s3263]
                %3281 = vst [vmem:[%s3271 + $0x20] sm:%s3263] %v3280
                %v3282 = vld [vmem:[%s3270 + $0x28] sm:%s3263]
                %3283 = vst [vmem:[%s3271 + $0x28] sm:%s3263] %v3282
                %v3284 = vld [vmem:[%s3270 + $0x30] sm:%s3263]
                %3285 = vst [vmem:[%s3271 + $0x30] sm:%s3263] %v3284
                %v3286 = vld [vmem:[%s3270 + $0x38] sm:%s3263]
                %3287 = vst [vmem:[%s3271 + $0x38] sm:%s3263] %v3286
                %v3288 = vld [vmem:[%s3270 + $0x40] sm:%s3263]
                %3289 = vst [vmem:[%s3271 + $0x40] sm:%s3263] %v3288
                %v3290 = vld [vmem:[%s3270 + $0x48] sm:%s3263]
                %3291 = vst [vmem:[%s3271 + $0x48] sm:%s3263] %v3290
                %v3292 = vld [vmem:[%s3270 + $0x50] sm:%s3263]
                %3293 = vst [vmem:[%s3271 + $0x50] sm:%s3263] %v3292
                %v3294 = vld [vmem:[%s3270 + $0x58] sm:%s3263]
                %3295 = vst [vmem:[%s3271 + $0x58] sm:%s3263] %v3294
                %v3296 = vld [vmem:[%s3270 + $0x60] sm:%s3263]
                %3297 = vst [vmem:[%s3271 + $0x60] sm:%s3263] %v3296
                %v3298 = vld [vmem:[%s3270 + $0x68] sm:%s3263]
                %3299 = vst [vmem:[%s3271 + $0x68] sm:%s3263] %v3298
                %v3300 = vld [vmem:[%s3270 + $0x70] sm:%s3263]
                %3301 = vst [vmem:[%s3271 + $0x70] sm:%s3263] %v3300
                %v3302 = vld [vmem:[%s3270 + $0x78] sm:%s3263]
                %3303 = vst [vmem:[%s3271 + $0x78] sm:%s3263] %v3302
                %v3304 = vld [vmem:[%s3270 + $0x80] sm:%s3263]
                %3305 = vst [vmem:[%s3271 + $0x80] sm:%s3263] %v3304
                %v3306 = vld [vmem:[%s3270 + $0x88] sm:%s3263]
                %3307 = vst [vmem:[%s3271 + $0x88] sm:%s3263] %v3306
                %v3308 = vld [vmem:[%s3270 + $0x90] sm:%s3263]
                %3309 = vst [vmem:[%s3271 + $0x90] sm:%s3263] %v3308
                %v3310 = vld [vmem:[%s3270 + $0x98] sm:%s3263]
                %3311 = vst [vmem:[%s3271 + $0x98] sm:%s3263] %v3310
                %v3312 = vld [vmem:[%s3270 + $0xa0] sm:%s3263]
                %3313 = vst [vmem:[%s3271 + $0xa0] sm:%s3263] %v3312
                %v3314 = vld [vmem:[%s3270 + $0xa8] sm:%s3263]
                %3315 = vst [vmem:[%s3271 + $0xa8] sm:%s3263] %v3314
                %v3316 = vld [vmem:[%s3270 + $0xb0] sm:%s3263]
                %3317 = vst [vmem:[%s3271 + $0xb0] sm:%s3263] %v3316
                %v3318 = vld [vmem:[%s3270 + $0xb8] sm:%s3263]
                %3319 = vst [vmem:[%s3271 + $0xb8] sm:%s3263] %v3318
                %v3320 = vld [vmem:[%s3270 + $0xc0] sm:%s3263]
                %3321 = vst [vmem:[%s3271 + $0xc0] sm:%s3263] %v3320
                %v3322 = vld [vmem:[%s3270 + $0xc8] sm:%s3263]
                %3323 = vst [vmem:[%s3271 + $0xc8] sm:%s3263] %v3322
                %v3324 = vld [vmem:[%s3270 + $0xd0] sm:%s3263]
                %3325 = vst [vmem:[%s3271 + $0xd0] sm:%s3263] %v3324
                %v3326 = vld [vmem:[%s3270 + $0xd8] sm:%s3263]
                %3327 = vst [vmem:[%s3271 + $0xd8] sm:%s3263] %v3326
                %v3328 = vld [vmem:[%s3270 + $0xe0] sm:%s3263]
                %3329 = vst [vmem:[%s3271 + $0xe0] sm:%s3263] %v3328
                %v3330 = vld [vmem:[%s3270 + $0xe8] sm:%s3263]
                %3331 = vst [vmem:[%s3271 + $0xe8] sm:%s3263] %v3330
                %v3332 = vld [vmem:[%s3270 + $0xf0] sm:%s3263]
                %3333 = vst [vmem:[%s3271 + $0xf0] sm:%s3263] %v3332
                %v3334 = vld [vmem:[%s3270 + $0xf8] sm:%s3263]
                %3335 = vst [vmem:[%s3271 + $0xf8] sm:%s3263] %v3334
              $region156: #{conv_ffn_forward.5} parent=150 // loop_footer
                %s3269 = sadd.s32 1, %s3265
              $region157: #{conv_ffn_forward.5} parent=150 // loop_footer_branch
                %3264 = sbr.rel target = $region153
              $region158: #{conv_ffn_forward.5} parent=150 // loop_exit
                _
            $region151: #{conv_ffn_forward.5} parent=142 // pred_fallthru
              _
          $region143: #{conv_ffn_forward.5} parent=138 // pred_fallthru
            _
          %3412 = vnop
        $region139: #{conv_ffn_forward.5} parent=118 // pred_fallthru
          _
      $region119: #{conv_ffn_forward.5} parent=5 // pred_fallthru
        _
      %p3413 = scmp.le.s32.totalorder 2, %s13
      // Predicated region
      $region174: #{conv_ffn_forward.5} parent=5 // pred_check
        %p3414 = pneg %p3413
      $region175: #{conv_ffn_forward.5} parent=5 // pred_check_branch
        %3416 = sbr.rel (%p3414) target = $region177
      $region176: #{conv_ffn_forward.5} parent=5 // pred_region
        %s3417 = ssub.s32 %s13, 2
        // Predicated region
        $region178: #{conv_ffn_forward.5} parent=176 // pred_check
          %p3418 = pneg %p223
        $region179: #{conv_ffn_forward.5} parent=176 // pred_check_branch
          %3420 = sbr.rel (%p3418) target = $region181
        $region180: #{conv_ffn_forward.5} parent=176 // pred_region
          %s3421 = sand.u32 %s208, 1
          %s3422 = sand.u32 %s208, 1
          %s3423 = smul.addr %s3422, 256
          %s3424 = scalar_lea.vmem [#allocation5], %s3423
        $region181: #{conv_ffn_forward.5} parent=176 // pred_fallthru
          _
      $region177: #{conv_ffn_forward.5} parent=5 // pred_fallthru
        _
    $region6: #{conv_ffn_forward.5} parent=1 // loop_footer
      %s17 = sadd.s32 1, %s13
    $region7: #{conv_ffn_forward.5} parent=1 // loop_footer_branch
      %12 = sbr.rel target = $region3
    $region8: #{conv_ffn_forward.5} parent=1 // loop_exit
      _

</llo_original>
